<compile_context>
chip_gen: v5e
topology: v5e:2x2
jax: 0.10.0
libtpu: 0.0.40
codegen_flags: <defaults>
</compile_context>

<pallas_src>
import math
from functools import partial

import jax
import jax.numpy as jnp
from jax.experimental import pallas as pl
from jax.experimental.pallas import tpu as pltpu

_LANE = 128
_TM_MAX = 512            # M-tile (lane axis); streamed + double buffered


def _round_up(a, b):
    return (a + b - 1) // b * b


# ----------------------------------------------------------------------------
# Pallas kernels
# ----------------------------------------------------------------------------
def _mm_kernel(x_ref, w_ref, b_ref, *rest, act, n_res):
    """o = act(w @ x + b + sum(res)).  Transposed layout: M is the lane axis."""
    res_refs, o_ref = rest[:n_res], rest[n_res]
    acc = jnp.dot(w_ref[...].astype(jnp.bfloat16),
                  x_ref[...].astype(jnp.bfloat16),
                  preferred_element_type=jnp.float32)      # MXU bf16, f32 acc
    acc = acc + b_ref[...]
    for r in res_refs:                                     # fused residual adds
        acc = acc + r[...]
    if act == 'relu':
        acc = jnp.maximum(acc, 0.0)
    elif act == 'leaky':
        acc = jnp.where(acc > 0, acc, 0.1 * acc)
    o_ref[...] = acc


def _bmm_kernel(x_ref, w_ref, b_ref, o_ref, *, act):
    """Grouped matmul: o[p] = act(w[p] @ x[p] + b)  (polyphase deconv phases)."""
    acc = jnp.einsum('pnk,pkm->pnm',
                     w_ref[...].astype(jnp.bfloat16),
                     x_ref[...].astype(jnp.bfloat16),
                     preferred_element_type=jnp.float32)
    acc = acc + b_ref[...]
    if act == 'relu':
        acc = jnp.maximum(acc, 0.0)
    elif act == 'leaky':
        acc = jnp.where(acc > 0, acc, 0.1 * acc)
    o_ref[...] = acc


def _cmul_kernel(a_ref, w_ref, o_ref):
    """Mode-batched real block-complex channel mixing (all 4 corners, 1 call)."""
    o_ref[...] = jnp.einsum('mbi,mio->mbo', a_ref[...], w_ref[...],
                            preferred_element_type=jnp.float32)


def _fc_tail_kernel(x_ref, w1_ref, b1_ref, w2_ref, b2_ref, o_ref):
    """Fused fc1(+ReLU)+fc2: the (128, TM) intermediate never leaves VMEM."""
    x = x_ref[...].astype(jnp.bfloat16)
    t = jnp.dot(w1_ref[...].astype(jnp.bfloat16), x,
                preferred_element_type=jnp.float32) + b1_ref[...]
    t = jnp.maximum(t, 0.0)
    o = jnp.dot(w2_ref[...].astype(jnp.bfloat16), t.astype(jnp.bfloat16),
                preferred_element_type=jnp.float32) + b2_ref[...]
    o_ref[...] = o


# ----------------------------------------------------------------------------
# Pallas wrappers: M-tiled grids, weights resident, outputs lane-dense
# ----------------------------------------------------------------------------
def matmul_t(wT, x, b=None, act=None, res=()):
    """out (N, M) = act(wT (N,K) @ x (K,M) + b + sum(res)); tiled over M."""
    N, K = wT.shape
    K2, M = x.shape
    assert K == K2
    TM = min(_TM_MAX, _round_up(M, _LANE))
    Mp = _round_up(M, TM)
    if Mp != M:
        x = jnp.pad(x, ((0, 0), (0, Mp - M)))
        res = tuple(jnp.pad(r, ((0, 0), (0, Mp - M))) for r in res)
    bias = (jnp.zeros((N, 1), jnp.float32) if b is None
            else b.reshape(N, 1).astype(jnp.float32))
    in_specs = ([pl.BlockSpec((K, TM), lambda i: (0, i)),     # streamed x tile
                 pl.BlockSpec((N, K), lambda i: (0, 0)),      # resident weight
                 pl.BlockSpec((N, 1), lambda i: (0, 0))]      # resident bias
                + [pl.BlockSpec((N, TM), lambda i: (0, i)) for _ in res])
    out = pl.pallas_call(
        partial(_mm_kernel, act=act, n_res=len(res)),
        out_shape=jax.ShapeDtypeStruct((N, Mp), jnp.float32),
        grid=(Mp // TM,),
        in_specs=in_specs,
        out_specs=pl.BlockSpec((N, TM), lambda i: (0, i)),
        compiler_params=pltpu.CompilerParams(dimension_semantics=("parallel",)),
    )(x, wT, bias, *res)
    return out[:, :M] if Mp != M else out


def batched_matmul_t(w_all, x_all, b=None, act=None):
    """out (P, N, M) = act(w_all (P,N,K) @ x_all (P,K,M) + b); tiled over M."""
    P, N, K = w_all.shape
    _, K2, M = x_all.shape
    assert K == K2
    TM = min(_TM_MAX, _round_up(M, _LANE))
    Mp = _round_up(M, TM)
    if Mp != M:
        x_all = jnp.pad(x_all, ((0, 0), (0, 0), (0, Mp - M)))
    bias = (jnp.zeros((N, 1), jnp.float32) if b is None
            else b.reshape(N, 1).astype(jnp.float32))
    out = pl.pallas_call(
        partial(_bmm_kernel, act=act),
        out_shape=jax.ShapeDtypeStruct((P, N, Mp), jnp.float32),
        grid=(Mp // TM,),
        in_specs=[pl.BlockSpec((P, K, TM), lambda i: (0, 0, i)),
                  pl.BlockSpec((P, N, K), lambda i: (0, 0, 0)),
                  pl.BlockSpec((N, 1), lambda i: (0, 0))],
        out_specs=pl.BlockSpec((P, N, TM), lambda i: (0, 0, i)),
        compiler_params=pltpu.CompilerParams(dimension_semantics=("parallel",)),
    )(x_all, w_all, bias)
    return out[..., :M] if Mp != M else out


def pallas_cmul(a, w):
    """a (Mb, B, 2Ci), w (Mb, 2Ci, 2Co) -> (Mb, B, 2Co); tiny, single block."""
    Mb, B, K = a.shape
    _, _, N = w.shape
    return pl.pallas_call(
        _cmul_kernel,
        out_shape=jax.ShapeDtypeStruct((Mb, B, N), jnp.float32),
        grid=(1,),
        in_specs=[pl.BlockSpec((Mb, B, K), lambda i: (0, 0, 0)),
                  pl.BlockSpec((Mb, K, N), lambda i: (0, 0, 0))],
        out_specs=pl.BlockSpec((Mb, B, N), lambda i: (0, 0, 0)),
    )(a, w)


def fc_tail(h, w1, b1, w2, b2):
    """out (1, M) = fc2(relu(fc1(h))) with the 128-wide hidden kept in VMEM."""
    C, M = h.shape
    Hd = w1.shape[0]
    TM = min(_TM_MAX, _round_up(M, _LANE))
    Mp = _round_up(M, TM)
    hp = jnp.pad(h, ((0, 0), (0, Mp - M))) if Mp != M else h
    b1c = b1.reshape(Hd, 1).astype(jnp.float32)
    w2p = jnp.zeros((8, Hd), jnp.float32).at[0, :].set(w2[0])   # pad N=1 -> 8 rows
    b2p = jnp.zeros((8, 1), jnp.float32).at[0, 0].set(b2[0])
    out = pl.pallas_call(
        _fc_tail_kernel,
        out_shape=jax.ShapeDtypeStruct((8, Mp), jnp.float32),
        grid=(Mp // TM,),
        in_specs=[pl.BlockSpec((C, TM), lambda i: (0, i)),
                  pl.BlockSpec((Hd, C), lambda i: (0, 0)),
                  pl.BlockSpec((Hd, 1), lambda i: (0, 0)),
                  pl.BlockSpec((8, Hd), lambda i: (0, 0)),
                  pl.BlockSpec((8, 1), lambda i: (0, 0))],
        out_specs=pl.BlockSpec((8, TM), lambda i: (0, i)),
        compiler_params=pltpu.CompilerParams(dimension_semantics=("parallel",)),
    )(hp, w1, b1c, w2p, b2p)
    return out[0:1, :M]


# ----------------------------------------------------------------------------
# Spectral conv (channels-first (C, B, X, Y, Z))
# ----------------------------------------------------------------------------
def make_block_weights(wts):
    """4 corners of (wr, wi) (Mm,Ci,Co) -> real block form (4*Mm, 2Ci, 2Co)."""
    blocks = []
    for wr, wi in wts:
        top = jnp.concatenate([wr, wi], axis=-1)
        bot = jnp.concatenate([-wi, wr], axis=-1)
        blocks.append(jnp.concatenate([top, bot], axis=-2))
    return jnp.concatenate(blocks, axis=0)


def spectral_conv3d(h, w_block, m1, m2, m3):
    # TODO(synk): FFT/IFFT have no Pallas primitive; they stay in XLA (jnp.fft).
    Ci, B, X, Y, Z = h.shape
    Co = w_block.shape[-1] // 2
    Zr = Z // 2 + 1
    x_ft = jnp.fft.rfftn(h, axes=(2, 3, 4))                 # (Ci, B, X, Y, Zr)
    corners = [(slice(0, m1), slice(0, m2)),
               (slice(X - m1, X), slice(0, m2)),
               (slice(0, m1), slice(Y - m2, Y)),
               (slice(X - m1, X), slice(Y - m2, Y))]
    Mm = m1 * m2 * m3
    blocks = []
    for sx, sy in corners:
        blk = x_ft[:, :, sx, sy, :m3]                       # (Ci, B, m1, m2, m3)
        blocks.append(blk.transpose(2, 3, 4, 1, 0).reshape(Mm, B, Ci))
    a_c = jnp.concatenate(blocks, axis=0)                   # (4Mm, B, Ci) complex
    a = jnp.concatenate([jnp.real(a_c), jnp.imag(a_c)], axis=-1).astype(jnp.float32)
    o = pallas_cmul(a, w_block)                             # (4Mm, B, 2Co)
    o_c = (o[..., :Co] + 1j * o[..., Co:]).astype(jnp.complex64)
    out_ft = jnp.zeros((Co, B, X, Y, Zr), jnp.complex64)
    for ci, (sx, sy) in enumerate(corners):
        ob = o_c[ci * Mm:(ci + 1) * Mm].reshape(m1, m2, m3, B, Co)
        out_ft = out_ft.at[:, :, sx, sy, :m3].set(ob.transpose(4, 3, 0, 1, 2))
    y = jnp.fft.irfftn(out_ft, s=(X, Y, Z), axes=(2, 3, 4))
    return y.astype(jnp.float32)


# ----------------------------------------------------------------------------
# Conv3d / ConvTranspose3d (channels-first) via Pallas matmuls
# ----------------------------------------------------------------------------
def conv3d_cf(x, w, b, stride, padding, act=None):
    # x: (Cin, B, D, H, W); w: (Cout, Cin, k, k, k)
    # TODO(synk): im2col is still materialized in XLA (in bf16); a fully fused
    # k^3-reduction-grid Pallas variant would remove this intermediate.
    Cin, B, D, H, W = x.shape
    Cout, _, k, _, _ = w.shape
    xp = jnp.pad(x, ((0, 0), (0, 0), (padding,) * 2, (padding,) * 2,
                     (padding,) * 2)).astype(jnp.bfloat16)
    Do = (D + 2 * padding - k) // stride + 1
    Ho = (H + 2 * padding - k) // stride + 1
    Wo = (W + 2 * padding - k) // stride + 1
    patches = []
    for kd in range(k):
        for kh in range(k):
            for kw in range(k):
                patches.append(
                    xp[:, :,
                       kd:kd + stride * (Do - 1) + 1:stride,
                       kh:kh + stride * (Ho - 1) + 1:stride,
                       kw:kw + stride * (Wo - 1) + 1:stride])
    col = jnp.stack(patches, axis=1).reshape(Cin * k ** 3, B * Do * Ho * Wo)
    wmat = w.reshape(Cout, Cin * k ** 3)
    out = matmul_t(wmat, col, b, act=act)
    return out.reshape(Cout, B, Do, Ho, Wo)


def conv_transpose3d_cf(x, w, b):
    # Polyphase (sub-pixel) decomposition of ConvTranspose3d(k=4, s=2, p=1):
    # 8 parity phases, each a stride-1 conv with a 2x2x2 sub-kernel on the
    # un-dilated input -> no zero-stuffed rows, 8x fewer MXU FLOPs, 8x smaller
    # im2col.  LeakyReLU(0.1) is fused into the matmul epilogue.
    Cin, B, D, H, W = x.shape
    _, Cout, k, _, _ = w.shape                                  # k == 4
    wf = jnp.flip(w, axis=(2, 3, 4)).transpose(1, 0, 2, 3, 4)   # (Cout, Cin, 4,4,4)
    xp = jnp.pad(x, ((0, 0), (0, 0), (1, 1), (1, 1), (1, 1))).astype(jnp.bfloat16)
    M = B * D * H * W
    cols, wmats = [], []
    for rd in (0, 1):
        for rh in (0, 1):
            for rw in (0, 1):
                patches, taps = [], []
                for td in (0, 1):
                    for th in (0, 1):
                        for tw in (0, 1):
                            patches.append(xp[:, :,
                                              rd + td:rd + td + D,
                                              rh + th:rh + th + H,
                                              rw + tw:rw + tw + W])
                            taps.append(wf[:, :, 2 * td + rd, 2 * th + rh, 2 * tw + rw])
                cols.append(jnp.stack(patches, axis=1).reshape(Cin * 8, M))
                wmats.append(jnp.stack(taps, axis=2).reshape(Cout, Cin * 8))
    col_all = jnp.stack(cols, axis=0)                           # (8, Cin*8, M)
    w_all = jnp.stack(wmats, axis=0)                            # (8, Cout, Cin*8)
    out = batched_matmul_t(w_all, col_all, b, act='leaky')      # (8, Cout, M)
    y = out.reshape(2, 2, 2, Cout, B, D, H, W)
    y = y.transpose(3, 4, 5, 0, 6, 1, 7, 2).reshape(Cout, B, 2 * D, 2 * H, 2 * W)
    return y


# ----------------------------------------------------------------------------
# Model pieces
# ----------------------------------------------------------------------------
def leaky_relu(x, slope=0.1):
    return jnp.where(x > 0, x, slope * x)


def batchnorm_cf(x, gamma, beta, eps=1e-5):
    # training-mode BatchNorm3d (batch statistics, biased variance).
    # TODO(synk): scale/shift + leaky_relu could be fused into the conv
    # epilogue with a two-pass stats scheme; left as elementwise XLA for now.
    mean = jnp.mean(x, axis=(1, 2, 3, 4), keepdims=True)
    var = jnp.mean((x - mean) ** 2, axis=(1, 2, 3, 4), keepdims=True)
    g = gamma.reshape(-1, 1, 1, 1, 1)
    bta = beta.reshape(-1, 1, 1, 1, 1)
    return g * (x - mean) * jax.lax.rsqrt(var + eps) + bta


def unet_forward(x, p):
    def block(h, name, stride):
        y = conv3d_cf(h, p[name + '_w'], None, stride=stride, padding=1)  # bias=False
        y = batchnorm_cf(y, p[name + '_g'], p[name + '_b'])
        return leaky_relu(y)                       # Dropout(0) == identity

    out_conv1 = block(x, 'conv1', 2)
    out_conv2 = block(block(out_conv1, 'conv2', 2), 'conv2_1', 1)
    out_conv3 = block(block(out_conv2, 'conv3', 2), 'conv3_1', 1)
    out_deconv2 = conv_transpose3d_cf(out_conv3, p['deconv2_w'], p['deconv2_b'])
    concat2 = jnp.concatenate([out_conv2, out_deconv2], axis=0)
    out_deconv1 = conv_transpose3d_cf(concat2, p['deconv1_w'], p['deconv1_b'])
    concat1 = jnp.concatenate([out_conv1, out_deconv1], axis=0)
    out_deconv0 = conv_transpose3d_cf(concat1, p['deconv0_w'], p['deconv0_b'])
    concat0 = jnp.concatenate([x, out_deconv0], axis=0)
    return conv3d_cf(concat0, p['out_w'], p['out_b'], stride=1, padding=1)


def simple_block3d_forward(params, x, width, m1, m2, m3):
    B, X, Y, Z, Cin0 = x.shape
    M = B * X * Y * Z
    xt = x.reshape(M, Cin0).T                              # (12, M): M -> lane axis
    h = matmul_t(params['fc0_w'], xt, params['fc0_b'])     # (width, M)
    for l in range(6):
        h5 = h.reshape(width, B, X, Y, Z)
        wb = make_block_weights(params[f'spec{l}'])
        x1 = spectral_conv3d(h5, wb, m1, m2, m3).reshape(width, M)
        res = (x1,)
        if l >= 3:
            x3 = unet_forward(h5, params[f'unet{l}']).reshape(width, M)
            res = (x1, x3)
        # pointwise Conv1d + residual add(s) + ReLU fused into one kernel
        h = matmul_t(params[f'w{l}_w'], h, params[f'w{l}_b'], act='relu', res=res)
    out = fc_tail(h, params['fc1_w'], params['fc1_b'],
                  params['fc2_w'], params['fc2_b'])        # (1, M)
    return out.reshape(B, X, Y, Z, 1)


# ----------------------------------------------------------------------------
# Deterministic parameter initialization (PyTorch-style distributions)
# ----------------------------------------------------------------------------
class KeyGen:
    def __init__(self, seed):
        self.key = jax.random.PRNGKey(seed)

    def __call__(self):
        self.key, sub = jax.random.split(self.key)
        return sub


def _uniform(kg, shape, scale):
    return jax.random.uniform(kg(), shape, jnp.float32, -scale, scale)


def init_conv3d_w(kg, cin, cout, k):
    s = 1.0 / math.sqrt(cin * k ** 3)
    return _uniform(kg, (cout, cin, k, k, k), s)


def init_deconv3d(kg, cin, cout, k=4):
    s = 1.0 / math.sqrt(cin * k ** 3)
    return _uniform(kg, (cin, cout, k, k, k), s), _uniform(kg, (cout,), s)


def init_spectral(kg, ci, co, m1, m2, m3):
    scale = 1.0 / (ci * co)
    Mm = m1 * m2 * m3
    wts = []
    for _ in range(4):
        wr = scale * jax.random.uniform(kg(), (Mm, ci, co), jnp.float32)
        wi = scale * jax.random.uniform(kg(), (Mm, ci, co), jnp.float32)
        wts.append((wr, wi))
    return tuple(wts)


def init_unet(kg, ch):
    p = {}
    for name in ['conv1', 'conv2', 'conv2_1', 'conv3', 'conv3_1']:
        p[name + '_w'] = init_conv3d_w(kg, ch, ch, 3)
        p[name + '_g'] = jnp.ones((ch,), jnp.float32)
        p[name + '_b'] = jnp.zeros((ch,), jnp.float32)
    p['deconv2_w'], p['deconv2_b'] = init_deconv3d(kg, ch, ch)
    p['deconv1_w'], p['deconv1_b'] = init_deconv3d(kg, 2 * ch, ch)
    p['deconv0_w'], p['deconv0_b'] = init_deconv3d(kg, 2 * ch, ch)
    p['out_w'] = init_conv3d_w(kg, 2 * ch, ch, 3)
    s = 1.0 / math.sqrt(2 * ch * 27)
    p['out_b'] = _uniform(kg, (ch,), s)
    return p


def init_params(kg, width, m1, m2, m3):
    P = {}
    s0 = 1.0 / math.sqrt(12)
    P['fc0_w'] = _uniform(kg, (width, 12), s0)        # stored (out, in)
    P['fc0_b'] = _uniform(kg, (width,), s0)
    for l in range(6):
        P[f'spec{l}'] = init_spectral(kg, width, width, m1, m2, m3)
        sw = 1.0 / math.sqrt(width)
        P[f'w{l}_w'] = _uniform(kg, (width, width), sw)   # (Cout, Cin)
        P[f'w{l}_b'] = _uniform(kg, (width,), sw)
    for u in (3, 4, 5):
        P[f'unet{u}'] = init_unet(kg, width)
    s1 = 1.0 / math.sqrt(width)
    P['fc1_w'] = _uniform(kg, (128, width), s1)       # (out, in)
    P['fc1_b'] = _uniform(kg, (128,), s1)
    s2 = 1.0 / math.sqrt(128)
    P['fc2_w'] = _uniform(kg, (1, 128), s2)
    P['fc2_b'] = _uniform(kg, (1,), s2)
    return P


# ----------------------------------------------------------------------------
if __name__ == "__main__":
    width, m1, m2, m3 = 8, 3, 3, 3
    B, X, Y, Z = 2, 8, 8, 8            # spatial dims divisible by 8 (3x stride-2 U-net)

    kg = KeyGen(0)
    params = init_params(kg, width, m1, m2, m3)
    x = jax.random.normal(jax.random.PRNGKey(0), (B, X, Y, Z, 12), jnp.float32)

    fwd = jax.jit(partial(simple_block3d_forward, width=width, m1=m1, m2=m2, m3=m3))
    out = fwd(params, x)
    out = jax.block_until_ready(out)

    assert out.shape == (B, X, Y, Z, 1), out.shape
    assert bool(jnp.all(jnp.isfinite(out)))
    print("KERNEL_OK")
</pallas_src>

<mosaic_0001>
module attributes {stable_mosaic.version = 11 : i64} {
  func.func @_mm_kernel(%arg0: i32, %arg1: memref<12x512xf32, #tpu.memory_space<vmem>>, %arg2: memref<8x12xf32, #tpu.memory_space<vmem>>, %arg3: memref<8x1xf32, #tpu.memory_space<vmem>>, %arg4: memref<8x512xf32, #tpu.memory_space<vmem>>) attributes {dimension_semantics = [#tpu.dimension_semantics<parallel>], iteration_bounds = array<i64: 2>, scalar_prefetch = 0 : i64, scratch_operands = 0 : i64, tpu.core_type = #tpu.core_type<tc>, window_params = [{transform_indices = @transform_0, window_bounds = array<i64: 12, 512>}, {pipeline_mode = #tpu.pipeline_mode<synchronous>, transform_indices = @transform_1, window_bounds = array<i64: 8, 12>}, {pipeline_mode = #tpu.pipeline_mode<synchronous>, transform_indices = @transform_2, window_bounds = array<i64: 8, 1>}, {transform_indices = @transform_3, window_bounds = array<i64: 8, 512>}]} {
    %c0 = arith.constant 0 : index
    %c0_0 = arith.constant 0 : index
    %0 = vector.load %arg2[%c0, %c0_0] : memref<8x12xf32, #tpu.memory_space<vmem>>, vector<8x12xf32>
    %1 = arith.truncf %0 : vector<8x12xf32> to vector<8x12xbf16>
    %c0_1 = arith.constant 0 : index
    %c0_2 = arith.constant 0 : index
    %2 = vector.load %arg1[%c0_1, %c0_2] : memref<12x512xf32, #tpu.memory_space<vmem>>, vector<12x512xf32>
    %3 = arith.truncf %2 : vector<12x512xf32> to vector<12x512xbf16>
    %cst = arith.constant dense<0.000000e+00> : vector<8x512xf32>
    %4 = tpu.matmul %1, %3, %cst {dimension_numbers = #tpu.dot_dimension_numbers<[1], [0], [0], [1], [0, 0, 1, 1], [], []>} : vector<8x12xbf16>, vector<12x512xbf16>, vector<8x512xf32> -> vector<8x512xf32>
    %c0_3 = arith.constant 0 : index
    %c0_4 = arith.constant 0 : index
    %5 = vector.load %arg3[%c0_3, %c0_4] : memref<8x1xf32, #tpu.memory_space<vmem>>, vector<8x1xf32>
    %6 = vector.broadcast %5 : vector<8x1xf32> to vector<8x512xf32>
    %7 = arith.addf %4, %6 : vector<8x512xf32>
    %c0_5 = arith.constant 0 : index
    %c0_6 = arith.constant 0 : index
    %8 = vector.load %arg4[%c0_5, %c0_6] : memref<8x512xf32, #tpu.memory_space<vmem>>, vector<8x512xf32>
    tpu.vector_store %arg4[%c0_5, %c0_6], %7 {strides = array<i32>} : memref<8x512xf32, #tpu.memory_space<vmem>>, vector<8x512xf32>,
    return
  }
  func.func @transform_0(%arg0: i32) -> (i32, i32) {
    %c0_i32 = arith.constant 0 : i32
    %c0_i32_0 = arith.constant 0 : i32
    return %c0_i32, %arg0 : i32, i32
  }
  func.func @transform_1(%arg0: i32) -> (i32, i32) {
    %c0_i32 = arith.constant 0 : i32
    %c0_i32_0 = arith.constant 0 : i32
    %c0_i32_1 = arith.constant 0 : i32
    return %c0_i32, %c0_i32_0 : i32, i32
  }
  func.func @transform_2(%arg0: i32) -> (i32, i32) {
    %c0_i32 = arith.constant 0 : i32
    %c0_i32_0 = arith.constant 0 : i32
    %c0_i32_1 = arith.constant 0 : i32
    return %c0_i32, %c0_i32_0 : i32, i32
  }
  func.func @transform_3(%arg0: i32) -> (i32, i32) {
    %c0_i32 = arith.constant 0 : i32
    %c0_i32_0 = arith.constant 0 : i32
    return %c0_i32, %arg0 : i32, i32
  }
}

module attributes {stable_mosaic.version = 11 : i64} {
  func.func @_cmul_kernel(%arg0: i32, %arg1: memref<108x2x16xf32, #tpu.memory_space<vmem>>, %arg2: memref<108x16x16xf32, #tpu.memory_space<vmem>>, %arg3: memref<108x2x16xf32, #tpu.memory_space<vmem>>) attributes {dimension_semantics = [#tpu.dimension_semantics<arbitrary>], iteration_bounds = array<i64: 1>, scalar_prefetch = 0 : i64, scratch_operands = 0 : i64, tpu.core_type = #tpu.core_type<tc>, window_params = [{pipeline_mode = #tpu.pipeline_mode<synchronous>, transform_indices = @transform_0, window_bounds = array<i64: 108, 2, 16>}, {pipeline_mode = #tpu.pipeline_mode<synchronous>, transform_indices = @transform_1, window_bounds = array<i64: 108, 16, 16>}, {pipeline_mode = #tpu.pipeline_mode<synchronous>, transform_indices = @transform_2, window_bounds = array<i64: 108, 2, 16>}]} {
    %c0 = arith.constant 0 : index
    %c0_0 = arith.constant 0 : index
    %c0_1 = arith.constant 0 : index
    %0 = vector.load %arg1[%c0, %c0_0, %c0_1] : memref<108x2x16xf32, #tpu.memory_space<vmem>>, vector<108x2x16xf32>
    %c0_2 = arith.constant 0 : index
    %c0_3 = arith.constant 0 : index
    %c0_4 = arith.constant 0 : index
    %1 = vector.load %arg2[%c0_2, %c0_3, %c0_4] : memref<108x16x16xf32, #tpu.memory_space<vmem>>, vector<108x16x16xf32>
    "tpu.trace_start"() <{level = 10 : i32, message = "mbi,mio->mbo"}> : () -> ()
    %cst = arith.constant dense<0.000000e+00> : vector<108x2x16xf32>
    %2 = tpu.matmul %0, %1, %cst {dimension_numbers = #tpu.dot_dimension_numbers<[2], [1], [1], [2], [0, 0, 0, 1, 1, 2], [0], [0]>} : vector<108x2x16xf32>, vector<108x16x16xf32>, vector<108x2x16xf32> -> vector<108x2x16xf32>
    "tpu.trace_stop"() : () -> ()
    %c0_5 = arith.constant 0 : index
    %c0_6 = arith.constant 0 : index
    %c0_7 = arith.constant 0 : index
    %3 = vector.load %arg3[%c0_5, %c0_6, %c0_7] : memref<108x2x16xf32, #tpu.memory_space<vmem>>, vector<108x2x16xf32>
    tpu.vector_store %arg3[%c0_5, %c0_6, %c0_7], %2 {strides = array<i32>} : memref<108x2x16xf32, #tpu.memory_space<vmem>>, vector<108x2x16xf32>,
    return
  }
  func.func @transform_0(%arg0: i32) -> (i32, i32, i32) {
    %c0_i32 = arith.constant 0 : i32
    %c0_i32_0 = arith.constant 0 : i32
    %c0_i32_1 = arith.constant 0 : i32
    %c0_i32_2 = arith.constant 0 : i32
    return %c0_i32, %c0_i32_0, %c0_i32_1 : i32, i32, i32
  }
  func.func @transform_1(%arg0: i32) -> (i32, i32, i32) {
    %c0_i32 = arith.constant 0 : i32
    %c0_i32_0 = arith.constant 0 : i32
    %c0_i32_1 = arith.constant 0 : i32
    %c0_i32_2 = arith.constant 0 : i32
    return %c0_i32, %c0_i32_0, %c0_i32_1 : i32, i32, i32
  }
  func.func @transform_2(%arg0: i32) -> (i32, i32, i32) {
    %c0_i32 = arith.constant 0 : i32
    %c0_i32_0 = arith.constant 0 : i32
    %c0_i32_1 = arith.constant 0 : i32
    %c0_i32_2 = arith.constant 0 : i32
    return %c0_i32, %c0_i32_0, %c0_i32_1 : i32, i32, i32
  }
}

module attributes {stable_mosaic.version = 11 : i64} {
  func.func @_mm_kernel(%arg0: i32, %arg1: memref<8x512xf32, #tpu.memory_space<vmem>>, %arg2: memref<8x8xf32, #tpu.memory_space<vmem>>, %arg3: memref<8x1xf32, #tpu.memory_space<vmem>>, %arg4: memref<8x512xf32, #tpu.memory_space<vmem>>, %arg5: memref<8x512xf32, #tpu.memory_space<vmem>>) attributes {dimension_semantics = [#tpu.dimension_semantics<parallel>], iteration_bounds = array<i64: 2>, scalar_prefetch = 0 : i64, scratch_operands = 0 : i64, tpu.core_type = #tpu.core_type<tc>, window_params = [{transform_indices = @transform_0, window_bounds = array<i64: 8, 512>}, {pipeline_mode = #tpu.pipeline_mode<synchronous>, transform_indices = @transform_1, window_bounds = array<i64: 8, 8>}, {pipeline_mode = #tpu.pipeline_mode<synchronous>, transform_indices = @transform_2, window_bounds = array<i64: 8, 1>}, {transform_indices = @transform_3, window_bounds = array<i64: 8, 512>}, {transform_indices = @transform_4, window_bounds = array<i64: 8, 512>}]} {
    %c0 = arith.constant 0 : index
    %c0_0 = arith.constant 0 : index
    %0 = vector.load %arg2[%c0, %c0_0] : memref<8x8xf32, #tpu.memory_space<vmem>>, vector<8x8xf32>
    %1 = arith.truncf %0 : vector<8x8xf32> to vector<8x8xbf16>
    %c0_1 = arith.constant 0 : index
    %c0_2 = arith.constant 0 : index
    %2 = vector.load %arg1[%c0_1, %c0_2] : memref<8x512xf32, #tpu.memory_space<vmem>>, vector<8x512xf32>
    %3 = arith.truncf %2 : vector<8x512xf32> to vector<8x512xbf16>
    %cst = arith.constant dense<0.000000e+00> : vector<8x512xf32>
    %4 = tpu.matmul %1, %3, %cst {dimension_numbers = #tpu.dot_dimension_numbers<[1], [0], [0], [1], [0, 0, 1, 1], [], []>} : vector<8x8xbf16>, vector<8x512xbf16>, vector<8x512xf32> -> vector<8x512xf32>
    %c0_3 = arith.constant 0 : index
    %c0_4 = arith.constant 0 : index
    %5 = vector.load %arg3[%c0_3, %c0_4] : memref<8x1xf32, #tpu.memory_space<vmem>>, vector<8x1xf32>
    %6 = vector.broadcast %5 : vector<8x1xf32> to vector<8x512xf32>
    %7 = arith.addf %4, %6 : vector<8x512xf32>
    %c0_5 = arith.constant 0 : index
    %c0_6 = arith.constant 0 : index
    %8 = vector.load %arg4[%c0_5, %c0_6] : memref<8x512xf32, #tpu.memory_space<vmem>>, vector<8x512xf32>
    %9 = arith.addf %7, %8 : vector<8x512xf32>
    %cst_7 = arith.constant 0.000000e+00 : f32
    %10 = vector.broadcast %cst_7 : f32 to vector<8x512xf32>
    %11 = arith.maximumf %9, %10 : vector<8x512xf32>
    %c0_8 = arith.constant 0 : index
    %c0_9 = arith.constant 0 : index
    %12 = vector.load %arg5[%c0_8, %c0_9] : memref<8x512xf32, #tpu.memory_space<vmem>>, vector<8x512xf32>
    tpu.vector_store %arg5[%c0_8, %c0_9], %11 {strides = array<i32>} : memref<8x512xf32, #tpu.memory_space<vmem>>, vector<8x512xf32>,
    return
  }
  func.func @transform_0(%arg0: i32) -> (i32, i32) {
    %c0_i32 = arith.constant 0 : i32
    %c0_i32_0 = arith.constant 0 : i32
    return %c0_i32, %arg0 : i32, i32
  }
  func.func @transform_1(%arg0: i32) -> (i32, i32) {
    %c0_i32 = arith.constant 0 : i32
    %c0_i32_0 = arith.constant 0 : i32
    %c0_i32_1 = arith.constant 0 : i32
    return %c0_i32, %c0_i32_0 : i32, i32
  }
  func.func @transform_2(%arg0: i32) -> (i32, i32) {
    %c0_i32 = arith.constant 0 : i32
    %c0_i32_0 = arith.constant 0 : i32
    %c0_i32_1 = arith.constant 0 : i32
    return %c0_i32, %c0_i32_0 : i32, i32
  }
  func.func @transform_3(%arg0: i32) -> (i32, i32) {
    %c0_i32 = arith.constant 0 : i32
    %c0_i32_0 = arith.constant 0 : i32
    return %c0_i32, %arg0 : i32, i32
  }
  func.func @transform_4(%arg0: i32) -> (i32, i32) {
    %c0_i32 = arith.constant 0 : i32
    %c0_i32_0 = arith.constant 0 : i32
    return %c0_i32, %arg0 : i32, i32
  }
}

module attributes {stable_mosaic.version = 11 : i64} {
  func.func @_mm_kernel(%arg0: i32, %arg1: memref<216x128xbf16, #tpu.memory_space<vmem>>, %arg2: memref<8x216xf32, #tpu.memory_space<vmem>>, %arg3: memref<8x1xf32, #tpu.memory_space<vmem>>, %arg4: memref<8x128xf32, #tpu.memory_space<vmem>>) attributes {dimension_semantics = [#tpu.dimension_semantics<parallel>], iteration_bounds = array<i64: 1>, scalar_prefetch = 0 : i64, scratch_operands = 0 : i64, tpu.core_type = #tpu.core_type<tc>, window_params = [{transform_indices = @transform_0, window_bounds = array<i64: 216, 128>}, {pipeline_mode = #tpu.pipeline_mode<synchronous>, transform_indices = @transform_1, window_bounds = array<i64: 8, 216>}, {pipeline_mode = #tpu.pipeline_mode<synchronous>, transform_indices = @transform_2, window_bounds = array<i64: 8, 1>}, {transform_indices = @transform_3, window_bounds = array<i64: 8, 128>}]} {
    %c0 = arith.constant 0 : index
    %c0_0 = arith.constant 0 : index
    %0 = vector.load %arg2[%c0, %c0_0] : memref<8x216xf32, #tpu.memory_space<vmem>>, vector<8x216xf32>
    %1 = arith.truncf %0 : vector<8x216xf32> to vector<8x216xbf16>
    %c0_1 = arith.constant 0 : index
    %c0_2 = arith.constant 0 : index
    %2 = vector.load %arg1[%c0_1, %c0_2] : memref<216x128xbf16, #tpu.memory_space<vmem>>, vector<216x128xbf16>
    %cst = arith.constant dense<0.000000e+00> : vector<8x128xf32>
    %3 = tpu.matmul %1, %2, %cst {dimension_numbers = #tpu.dot_dimension_numbers<[1], [0], [0], [1], [0, 0, 1, 1], [], []>} : vector<8x216xbf16>, vector<216x128xbf16>, vector<8x128xf32> -> vector<8x128xf32>
    %c0_3 = arith.constant 0 : index
    %c0_4 = arith.constant 0 : index
    %4 = vector.load %arg3[%c0_3, %c0_4] : memref<8x1xf32, #tpu.memory_space<vmem>>, vector<8x1xf32>
    %5 = vector.broadcast %4 : vector<8x1xf32> to vector<8x128xf32>
    %6 = arith.addf %3, %5 : vector<8x128xf32>
    %c0_5 = arith.constant 0 : index
    %c0_6 = arith.constant 0 : index
    %7 = vector.load %arg4[%c0_5, %c0_6] : memref<8x128xf32, #tpu.memory_space<vmem>>, vector<8x128xf32>
    tpu.vector_store %arg4[%c0_5, %c0_6], %6 {strides = array<i32>} : memref<8x128xf32, #tpu.memory_space<vmem>>, vector<8x128xf32>,
    return
  }
  func.func @transform_0(%arg0: i32) -> (i32, i32) {
    %c0_i32 = arith.constant 0 : i32
    %c0_i32_0 = arith.constant 0 : i32
    return %c0_i32, %arg0 : i32, i32
  }
  func.func @transform_1(%arg0: i32) -> (i32, i32) {
    %c0_i32 = arith.constant 0 : i32
    %c0_i32_0 = arith.constant 0 : i32
    %c0_i32_1 = arith.constant 0 : i32
    return %c0_i32, %c0_i32_0 : i32, i32
  }
  func.func @transform_2(%arg0: i32) -> (i32, i32) {
    %c0_i32 = arith.constant 0 : i32
    %c0_i32_0 = arith.constant 0 : i32
    %c0_i32_1 = arith.constant 0 : i32
    return %c0_i32, %c0_i32_0 : i32, i32
  }
  func.func @transform_3(%arg0: i32) -> (i32, i32) {
    %c0_i32 = arith.constant 0 : i32
    %c0_i32_0 = arith.constant 0 : i32
    return %c0_i32, %arg0 : i32, i32
  }
}

module attributes {stable_mosaic.version = 11 : i64} {
  func.func @_bmm_kernel(%arg0: i32, %arg1: memref<8x64x128xbf16, #tpu.memory_space<vmem>>, %arg2: memref<8x8x64xf32, #tpu.memory_space<vmem>>, %arg3: memref<8x1xf32, #tpu.memory_space<vmem>>, %arg4: memref<8x8x128xf32, #tpu.memory_space<vmem>>) attributes {dimension_semantics = [#tpu.dimension_semantics<parallel>], iteration_bounds = array<i64: 1>, scalar_prefetch = 0 : i64, scratch_operands = 0 : i64, tpu.core_type = #tpu.core_type<tc>, window_params = [{transform_indices = @transform_0, window_bounds = array<i64: 8, 64, 128>}, {pipeline_mode = #tpu.pipeline_mode<synchronous>, transform_indices = @transform_1, window_bounds = array<i64: 8, 8, 64>}, {pipeline_mode = #tpu.pipeline_mode<synchronous>, transform_indices = @transform_2, window_bounds = array<i64: 8, 1>}, {transform_indices = @transform_3, window_bounds = array<i64: 8, 8, 128>}]} {
    %c0 = arith.constant 0 : index
    %c0_0 = arith.constant 0 : index
    %c0_1 = arith.constant 0 : index
    %0 = vector.load %arg2[%c0, %c0_0, %c0_1] : memref<8x8x64xf32, #tpu.memory_space<vmem>>, vector<8x8x64xf32>
    %1 = arith.truncf %0 : vector<8x8x64xf32> to vector<8x8x64xbf16>
    %c0_2 = arith.constant 0 : index
    %c0_3 = arith.constant 0 : index
    %c0_4 = arith.constant 0 : index
    %2 = vector.load %arg1[%c0_2, %c0_3, %c0_4] : memref<8x64x128xbf16, #tpu.memory_space<vmem>>, vector<8x64x128xbf16>
    "tpu.trace_start"() <{level = 10 : i32, message = "pnk,pkm->pnm"}> : () -> ()
    %cst = arith.constant dense<0.000000e+00> : vector<8x8x128xf32>
    %3 = tpu.matmul %1, %2, %cst {dimension_numbers = #tpu.dot_dimension_numbers<[2], [1], [1], [2], [0, 0, 0, 1, 1, 2], [0], [0]>} : vector<8x8x64xbf16>, vector<8x64x128xbf16>, vector<8x8x128xf32> -> vector<8x8x128xf32>
    "tpu.trace_stop"() : () -> ()
    %c0_5 = arith.constant 0 : index
    %c0_6 = arith.constant 0 : index
    %4 = vector.load %arg3[%c0_5, %c0_6] : memref<8x1xf32, #tpu.memory_space<vmem>>, vector<8x1xf32>
    %5 = vector.shape_cast %4 : vector<8x1xf32> to vector<1x8x1xf32>
    %6 = vector.broadcast %5 : vector<1x8x1xf32> to vector<8x8x128xf32>
    %7 = arith.addf %3, %6 : vector<8x8x128xf32>
    %cst_7 = arith.constant 0.000000e+00 : f32
    %8 = vector.broadcast %cst_7 : f32 to vector<8x8x128xf32>
    %9 = arith.cmpf ogt, %7, %8 : vector<8x8x128xf32>
    %cst_8 = arith.constant 1.000000e-01 : f32
    %10 = vector.broadcast %cst_8 : f32 to vector<8x8x128xf32>
    %11 = arith.mulf %10, %7 : vector<8x8x128xf32>
    %12 = arith.select %9, %7, %11 : vector<8x8x128xi1>, vector<8x8x128xf32>
    %c0_9 = arith.constant 0 : index
    %c0_10 = arith.constant 0 : index
    %c0_11 = arith.constant 0 : index
    %13 = vector.load %arg4[%c0_9, %c0_10, %c0_11] : memref<8x8x128xf32, #tpu.memory_space<vmem>>, vector<8x8x128xf32>
    tpu.vector_store %arg4[%c0_9, %c0_10, %c0_11], %12 {strides = array<i32>} : memref<8x8x128xf32, #tpu.memory_space<vmem>>, vector<8x8x128xf32>,
    return
  }
  func.func @transform_0(%arg0: i32) -> (i32, i32, i32) {
    %c0_i32 = arith.constant 0 : i32
    %c0_i32_0 = arith.constant 0 : i32
    %c0_i32_1 = arith.constant 0 : i32
    return %c0_i32, %c0_i32_0, %arg0 : i32, i32, i32
  }
  func.func @transform_1(%arg0: i32) -> (i32, i32, i32) {
    %c0_i32 = arith.constant 0 : i32
    %c0_i32_0 = arith.constant 0 : i32
    %c0_i32_1 = arith.constant 0 : i32
    %c0_i32_2 = arith.constant 0 : i32
    return %c0_i32, %c0_i32_0, %c0_i32_1 : i32, i32, i32
  }
  func.func @transform_2(%arg0: i32) -> (i32, i32) {
    %c0_i32 = arith.constant 0 : i32
    %c0_i32_0 = arith.constant 0 : i32
    %c0_i32_1 = arith.constant 0 : i32
    return %c0_i32, %c0_i32_0 : i32, i32
  }
  func.func @transform_3(%arg0: i32) -> (i32, i32, i32) {
    %c0_i32 = arith.constant 0 : i32
    %c0_i32_0 = arith.constant 0 : i32
    %c0_i32_1 = arith.constant 0 : i32
    return %c0_i32, %c0_i32_0, %arg0 : i32, i32, i32
  }
}

module attributes {stable_mosaic.version = 11 : i64} {
  func.func @_bmm_kernel(%arg0: i32, %arg1: memref<8x128x128xbf16, #tpu.memory_space<vmem>>, %arg2: memref<8x8x128xf32, #tpu.memory_space<vmem>>, %arg3: memref<8x1xf32, #tpu.memory_space<vmem>>, %arg4: memref<8x8x128xf32, #tpu.memory_space<vmem>>) attributes {dimension_semantics = [#tpu.dimension_semantics<parallel>], iteration_bounds = array<i64: 1>, scalar_prefetch = 0 : i64, scratch_operands = 0 : i64, tpu.core_type = #tpu.core_type<tc>, window_params = [{transform_indices = @transform_0, window_bounds = array<i64: 8, 128, 128>}, {pipeline_mode = #tpu.pipeline_mode<synchronous>, transform_indices = @transform_1, window_bounds = array<i64: 8, 8, 128>}, {pipeline_mode = #tpu.pipeline_mode<synchronous>, transform_indices = @transform_2, window_bounds = array<i64: 8, 1>}, {transform_indices = @transform_3, window_bounds = array<i64: 8, 8, 128>}]} {
    %c0 = arith.constant 0 : index
    %c0_0 = arith.constant 0 : index
    %c0_1 = arith.constant 0 : index
    %0 = vector.load %arg2[%c0, %c0_0, %c0_1] : memref<8x8x128xf32, #tpu.memory_space<vmem>>, vector<8x8x128xf32>
    %1 = arith.truncf %0 : vector<8x8x128xf32> to vector<8x8x128xbf16>
    %c0_2 = arith.constant 0 : index
    %c0_3 = arith.constant 0 : index
    %c0_4 = arith.constant 0 : index
    %2 = vector.load %arg1[%c0_2, %c0_3, %c0_4] : memref<8x128x128xbf16, #tpu.memory_space<vmem>>, vector<8x128x128xbf16>
    "tpu.trace_start"() <{level = 10 : i32, message = "pnk,pkm->pnm"}> : () -> ()
    %cst = arith.constant dense<0.000000e+00> : vector<8x8x128xf32>
    %3 = tpu.matmul %1, %2, %cst {dimension_numbers = #tpu.dot_dimension_numbers<[2], [1], [1], [2], [0, 0, 0, 1, 1, 2], [0], [0]>} : vector<8x8x128xbf16>, vector<8x128x128xbf16>, vector<8x8x128xf32> -> vector<8x8x128xf32>
    "tpu.trace_stop"() : () -> ()
    %c0_5 = arith.constant 0 : index
    %c0_6 = arith.constant 0 : index
    %4 = vector.load %arg3[%c0_5, %c0_6] : memref<8x1xf32, #tpu.memory_space<vmem>>, vector<8x1xf32>
    %5 = vector.shape_cast %4 : vector<8x1xf32> to vector<1x8x1xf32>
    %6 = vector.broadcast %5 : vector<1x8x1xf32> to vector<8x8x128xf32>
    %7 = arith.addf %3, %6 : vector<8x8x128xf32>
    %cst_7 = arith.constant 0.000000e+00 : f32
    %8 = vector.broadcast %cst_7 : f32 to vector<8x8x128xf32>
    %9 = arith.cmpf ogt, %7, %8 : vector<8x8x128xf32>
    %cst_8 = arith.constant 1.000000e-01 : f32
    %10 = vector.broadcast %cst_8 : f32 to vector<8x8x128xf32>
    %11 = arith.mulf %10, %7 : vector<8x8x128xf32>
    %12 = arith.select %9, %7, %11 : vector<8x8x128xi1>, vector<8x8x128xf32>
    %c0_9 = arith.constant 0 : index
    %c0_10 = arith.constant 0 : index
    %c0_11 = arith.constant 0 : index
    %13 = vector.load %arg4[%c0_9, %c0_10, %c0_11] : memref<8x8x128xf32, #tpu.memory_space<vmem>>, vector<8x8x128xf32>
    tpu.vector_store %arg4[%c0_9, %c0_10, %c0_11], %12 {strides = array<i32>} : memref<8x8x128xf32, #tpu.memory_space<vmem>>, vector<8x8x128xf32>,
    return
  }
  func.func @transform_0(%arg0: i32) -> (i32, i32, i32) {
    %c0_i32 = arith.constant 0 : i32
    %c0_i32_0 = arith.constant 0 : i32
    %c0_i32_1 = arith.constant 0 : i32
    return %c0_i32, %c0_i32_0, %arg0 : i32, i32, i32
  }
  func.func @transform_1(%arg0: i32) -> (i32, i32, i32) {
    %c0_i32 = arith.constant 0 : i32
    %c0_i32_0 = arith.constant 0 : i32
    %c0_i32_1 = arith.constant 0 : i32
    %c0_i32_2 = arith.constant 0 : i32
    return %c0_i32, %c0_i32_0, %c0_i32_1 : i32, i32, i32
  }
  func.func @transform_2(%arg0: i32) -> (i32, i32) {
    %c0_i32 = arith.constant 0 : i32
    %c0_i32_0 = arith.constant 0 : i32
    %c0_i32_1 = arith.constant 0 : i32
    return %c0_i32, %c0_i32_0 : i32, i32
  }
  func.func @transform_3(%arg0: i32) -> (i32, i32, i32) {
    %c0_i32 = arith.constant 0 : i32
    %c0_i32_0 = arith.constant 0 : i32
    %c0_i32_1 = arith.constant 0 : i32
    return %c0_i32, %c0_i32_0, %arg0 : i32, i32, i32
  }
}

module attributes {stable_mosaic.version = 11 : i64} {
  func.func @_mm_kernel(%arg0: i32, %arg1: memref<432x512xbf16, #tpu.memory_space<vmem>>, %arg2: memref<8x432xf32, #tpu.memory_space<vmem>>, %arg3: memref<8x1xf32, #tpu.memory_space<vmem>>, %arg4: memref<8x512xf32, #tpu.memory_space<vmem>>) attributes {dimension_semantics = [#tpu.dimension_semantics<parallel>], iteration_bounds = array<i64: 2>, scalar_prefetch = 0 : i64, scratch_operands = 0 : i64, tpu.core_type = #tpu.core_type<tc>, window_params = [{transform_indices = @transform_0, window_bounds = array<i64: 432, 512>}, {pipeline_mode = #tpu.pipeline_mode<synchronous>, transform_indices = @transform_1, window_bounds = array<i64: 8, 432>}, {pipeline_mode = #tpu.pipeline_mode<synchronous>, transform_indices = @transform_2, window_bounds = array<i64: 8, 1>}, {transform_indices = @transform_3, window_bounds = array<i64: 8, 512>}]} {
    %c0 = arith.constant 0 : index
    %c0_0 = arith.constant 0 : index
    %0 = vector.load %arg2[%c0, %c0_0] : memref<8x432xf32, #tpu.memory_space<vmem>>, vector<8x432xf32>
    %1 = arith.truncf %0 : vector<8x432xf32> to vector<8x432xbf16>
    %c0_1 = arith.constant 0 : index
    %c0_2 = arith.constant 0 : index
    %2 = vector.load %arg1[%c0_1, %c0_2] : memref<432x512xbf16, #tpu.memory_space<vmem>>, vector<432x512xbf16>
    %cst = arith.constant dense<0.000000e+00> : vector<8x512xf32>
    %3 = tpu.matmul %1, %2, %cst {dimension_numbers = #tpu.dot_dimension_numbers<[1], [0], [0], [1], [0, 0, 1, 1], [], []>} : vector<8x432xbf16>, vector<432x512xbf16>, vector<8x512xf32> -> vector<8x512xf32>
    %c0_3 = arith.constant 0 : index
    %c0_4 = arith.constant 0 : index
    %4 = vector.load %arg3[%c0_3, %c0_4] : memref<8x1xf32, #tpu.memory_space<vmem>>, vector<8x1xf32>
    %5 = vector.broadcast %4 : vector<8x1xf32> to vector<8x512xf32>
    %6 = arith.addf %3, %5 : vector<8x512xf32>
    %c0_5 = arith.constant 0 : index
    %c0_6 = arith.constant 0 : index
    %7 = vector.load %arg4[%c0_5, %c0_6] : memref<8x512xf32, #tpu.memory_space<vmem>>, vector<8x512xf32>
    tpu.vector_store %arg4[%c0_5, %c0_6], %6 {strides = array<i32>} : memref<8x512xf32, #tpu.memory_space<vmem>>, vector<8x512xf32>,
    return
  }
  func.func @transform_0(%arg0: i32) -> (i32, i32) {
    %c0_i32 = arith.constant 0 : i32
    %c0_i32_0 = arith.constant 0 : i32
    return %c0_i32, %arg0 : i32, i32
  }
  func.func @transform_1(%arg0: i32) -> (i32, i32) {
    %c0_i32 = arith.constant 0 : i32
    %c0_i32_0 = arith.constant 0 : i32
    %c0_i32_1 = arith.constant 0 : i32
    return %c0_i32, %c0_i32_0 : i32, i32
  }
  func.func @transform_2(%arg0: i32) -> (i32, i32) {
    %c0_i32 = arith.constant 0 : i32
    %c0_i32_0 = arith.constant 0 : i32
    %c0_i32_1 = arith.constant 0 : i32
    return %c0_i32, %c0_i32_0 : i32, i32
  }
  func.func @transform_3(%arg0: i32) -> (i32, i32) {
    %c0_i32 = arith.constant 0 : i32
    %c0_i32_0 = arith.constant 0 : i32
    return %c0_i32, %arg0 : i32, i32
  }
}

module attributes {stable_mosaic.version = 11 : i64} {
  func.func @_mm_kernel(%arg0: i32, %arg1: memref<8x512xf32, #tpu.memory_space<vmem>>, %arg2: memref<8x8xf32, #tpu.memory_space<vmem>>, %arg3: memref<8x1xf32, #tpu.memory_space<vmem>>, %arg4: memref<8x512xf32, #tpu.memory_space<vmem>>, %arg5: memref<8x512xf32, #tpu.memory_space<vmem>>, %arg6: memref<8x512xf32, #tpu.memory_space<vmem>>) attributes {dimension_semantics = [#tpu.dimension_semantics<parallel>], iteration_bounds = array<i64: 2>, scalar_prefetch = 0 : i64, scratch_operands = 0 : i64, tpu.core_type = #tpu.core_type<tc>, window_params = [{transform_indices = @transform_0, window_bounds = array<i64: 8, 512>}, {pipeline_mode = #tpu.pipeline_mode<synchronous>, transform_indices = @transform_1, window_bounds = array<i64: 8, 8>}, {pipeline_mode = #tpu.pipeline_mode<synchronous>, transform_indices = @transform_2, window_bounds = array<i64: 8, 1>}, {transform_indices = @transform_3, window_bounds = array<i64: 8, 512>}, {transform_indices = @transform_4, window_bounds = array<i64: 8, 512>}, {transform_indices = @transform_5, window_bounds = array<i64: 8, 512>}]} {
    %c0 = arith.constant 0 : index
    %c0_0 = arith.constant 0 : index
    %0 = vector.load %arg2[%c0, %c0_0] : memref<8x8xf32, #tpu.memory_space<vmem>>, vector<8x8xf32>
    %1 = arith.truncf %0 : vector<8x8xf32> to vector<8x8xbf16>
    %c0_1 = arith.constant 0 : index
    %c0_2 = arith.constant 0 : index
    %2 = vector.load %arg1[%c0_1, %c0_2] : memref<8x512xf32, #tpu.memory_space<vmem>>, vector<8x512xf32>
    %3 = arith.truncf %2 : vector<8x512xf32> to vector<8x512xbf16>
    %cst = arith.constant dense<0.000000e+00> : vector<8x512xf32>
    %4 = tpu.matmul %1, %3, %cst {dimension_numbers = #tpu.dot_dimension_numbers<[1], [0], [0], [1], [0, 0, 1, 1], [], []>} : vector<8x8xbf16>, vector<8x512xbf16>, vector<8x512xf32> -> vector<8x512xf32>
    %c0_3 = arith.constant 0 : index
    %c0_4 = arith.constant 0 : index
    %5 = vector.load %arg3[%c0_3, %c0_4] : memref<8x1xf32, #tpu.memory_space<vmem>>, vector<8x1xf32>
    %6 = vector.broadcast %5 : vector<8x1xf32> to vector<8x512xf32>
    %7 = arith.addf %4, %6 : vector<8x512xf32>
    %c0_5 = arith.constant 0 : index
    %c0_6 = arith.constant 0 : index
    %8 = vector.load %arg4[%c0_5, %c0_6] : memref<8x512xf32, #tpu.memory_space<vmem>>, vector<8x512xf32>
    %9 = arith.addf %7, %8 : vector<8x512xf32>
    %c0_7 = arith.constant 0 : index
    %c0_8 = arith.constant 0 : index
    %10 = vector.load %arg5[%c0_7, %c0_8] : memref<8x512xf32, #tpu.memory_space<vmem>>, vector<8x512xf32>
    %11 = arith.addf %9, %10 : vector<8x512xf32>
    %cst_9 = arith.constant 0.000000e+00 : f32
    %12 = vector.broadcast %cst_9 : f32 to vector<8x512xf32>
    %13 = arith.maximumf %11, %12 : vector<8x512xf32>
    %c0_10 = arith.constant 0 : index
    %c0_11 = arith.constant 0 : index
    %14 = vector.load %arg6[%c0_10, %c0_11] : memref<8x512xf32, #tpu.memory_space<vmem>>, vector<8x512xf32>
    tpu.vector_store %arg6[%c0_10, %c0_11], %13 {strides = array<i32>} : memref<8x512xf32, #tpu.memory_space<vmem>>, vector<8x512xf32>,
    return
  }
  func.func @transform_0(%arg0: i32) -> (i32, i32) {
    %c0_i32 = arith.constant 0 : i32
    %c0_i32_0 = arith.constant 0 : i32
    return %c0_i32, %arg0 : i32, i32
  }
  func.func @transform_1(%arg0: i32) -> (i32, i32) {
    %c0_i32 = arith.constant 0 : i32
    %c0_i32_0 = arith.constant 0 : i32
    %c0_i32_1 = arith.constant 0 : i32
    return %c0_i32, %c0_i32_0 : i32, i32
  }
  func.func @transform_2(%arg0: i32) -> (i32, i32) {
    %c0_i32 = arith.constant 0 : i32
    %c0_i32_0 = arith.constant 0 : i32
    %c0_i32_1 = arith.constant 0 : i32
    return %c0_i32, %c0_i32_0 : i32, i32
  }
  func.func @transform_3(%arg0: i32) -> (i32, i32) {
    %c0_i32 = arith.constant 0 : i32
    %c0_i32_0 = arith.constant 0 : i32
    return %c0_i32, %arg0 : i32, i32
  }
  func.func @transform_4(%arg0: i32) -> (i32, i32) {
    %c0_i32 = arith.constant 0 : i32
    %c0_i32_0 = arith.constant 0 : i32
    return %c0_i32, %arg0 : i32, i32
  }
  func.func @transform_5(%arg0: i32) -> (i32, i32) {
    %c0_i32 = arith.constant 0 : i32
    %c0_i32_0 = arith.constant 0 : i32
    return %c0_i32, %arg0 : i32, i32
  }
}

module attributes {stable_mosaic.version = 11 : i64} {
  func.func @_fc_tail_kernel(%arg0: i32, %arg1: memref<8x512xf32, #tpu.memory_space<vmem>>, %arg2: memref<128x8xf32, #tpu.memory_space<vmem>>, %arg3: memref<128x1xf32, #tpu.memory_space<vmem>>, %arg4: memref<8x128xf32, #tpu.memory_space<vmem>>, %arg5: memref<8x1xf32, #tpu.memory_space<vmem>>, %arg6: memref<8x512xf32, #tpu.memory_space<vmem>>) attributes {dimension_semantics = [#tpu.dimension_semantics<parallel>], iteration_bounds = array<i64: 2>, scalar_prefetch = 0 : i64, scratch_operands = 0 : i64, tpu.core_type = #tpu.core_type<tc>, window_params = [{transform_indices = @transform_0, window_bounds = array<i64: 8, 512>}, {pipeline_mode = #tpu.pipeline_mode<synchronous>, transform_indices = @transform_1, window_bounds = array<i64: 128, 8>}, {pipeline_mode = #tpu.pipeline_mode<synchronous>, transform_indices = @transform_2, window_bounds = array<i64: 128, 1>}, {pipeline_mode = #tpu.pipeline_mode<synchronous>, transform_indices = @transform_3, window_bounds = array<i64: 8, 128>}, {pipeline_mode = #tpu.pipeline_mode<synchronous>, transform_indices = @transform_4, window_bounds = array<i64: 8, 1>}, {transform_indices = @transform_5, window_bounds = array<i64: 8, 512>}]} {
    %c0 = arith.constant 0 : index
    %c0_0 = arith.constant 0 : index
    %0 = vector.load %arg1[%c0, %c0_0] : memref<8x512xf32, #tpu.memory_space<vmem>>, vector<8x512xf32>
    %1 = arith.truncf %0 : vector<8x512xf32> to vector<8x512xbf16>
    %c0_1 = arith.constant 0 : index
    %c0_2 = arith.constant 0 : index
    %2 = vector.load %arg2[%c0_1, %c0_2] : memref<128x8xf32, #tpu.memory_space<vmem>>, vector<128x8xf32>
    %3 = arith.truncf %2 : vector<128x8xf32> to vector<128x8xbf16>
    %cst = arith.constant dense<0.000000e+00> : vector<128x512xf32>
    %4 = tpu.matmul %3, %1, %cst {dimension_numbers = #tpu.dot_dimension_numbers<[1], [0], [0], [1], [0, 0, 1, 1], [], []>} : vector<128x8xbf16>, vector<8x512xbf16>, vector<128x512xf32> -> vector<128x512xf32>
    %c0_3 = arith.constant 0 : index
    %c0_4 = arith.constant 0 : index
    %5 = vector.load %arg3[%c0_3, %c0_4] : memref<128x1xf32, #tpu.memory_space<vmem>>, vector<128x1xf32>
    %6 = vector.broadcast %5 : vector<128x1xf32> to vector<128x512xf32>
    %7 = arith.addf %4, %6 : vector<128x512xf32>
    %cst_5 = arith.constant 0.000000e+00 : f32
    %8 = vector.broadcast %cst_5 : f32 to vector<128x512xf32>
    %9 = arith.maximumf %7, %8 : vector<128x512xf32>
    %c0_6 = arith.constant 0 : index
    %c0_7 = arith.constant 0 : index
    %10 = vector.load %arg4[%c0_6, %c0_7] : memref<8x128xf32, #tpu.memory_space<vmem>>, vector<8x128xf32>
    %11 = arith.truncf %10 : vector<8x128xf32> to vector<8x128xbf16>
    %12 = arith.truncf %9 : vector<128x512xf32> to vector<128x512xbf16>
    %cst_8 = arith.constant dense<0.000000e+00> : vector<8x512xf32>
    %13 = tpu.matmul %11, %12, %cst_8 {dimension_numbers = #tpu.dot_dimension_numbers<[1], [0], [0], [1], [0, 0, 1, 1], [], []>} : vector<8x128xbf16>, vector<128x512xbf16>, vector<8x512xf32> -> vector<8x512xf32>
    %c0_9 = arith.constant 0 : index
    %c0_10 = arith.constant 0 : index
    %14 = vector.load %arg5[%c0_9, %c0_10] : memref<8x1xf32, #tpu.memory_space<vmem>>, vector<8x1xf32>
    %15 = vector.broadcast %14 : vector<8x1xf32> to vector<8x512xf32>
    %16 = arith.addf %13, %15 : vector<8x512xf32>
    %c0_11 = arith.constant 0 : index
    %c0_12 = arith.constant 0 : index
    %17 = vector.load %arg6[%c0_11, %c0_12] : memref<8x512xf32, #tpu.memory_space<vmem>>, vector<8x512xf32>
    tpu.vector_store %arg6[%c0_11, %c0_12], %16 {strides = array<i32>} : memref<8x512xf32, #tpu.memory_space<vmem>>, vector<8x512xf32>,
    return
  }
  func.func @transform_0(%arg0: i32) -> (i32, i32) {
    %c0_i32 = arith.constant 0 : i32
    %c0_i32_0 = arith.constant 0 : i32
    return %c0_i32, %arg0 : i32, i32
  }
  func.func @transform_1(%arg0: i32) -> (i32, i32) {
    %c0_i32 = arith.constant 0 : i32
    %c0_i32_0 = arith.constant 0 : i32
    %c0_i32_1 = arith.constant 0 : i32
    return %c0_i32, %c0_i32_0 : i32, i32
  }
  func.func @transform_2(%arg0: i32) -> (i32, i32) {
    %c0_i32 = arith.constant 0 : i32
    %c0_i32_0 = arith.constant 0 : i32
    %c0_i32_1 = arith.constant 0 : i32
    return %c0_i32, %c0_i32_0 : i32, i32
  }
  func.func @transform_3(%arg0: i32) -> (i32, i32) {
    %c0_i32 = arith.constant 0 : i32
    %c0_i32_0 = arith.constant 0 : i32
    %c0_i32_1 = arith.constant 0 : i32
    return %c0_i32, %c0_i32_0 : i32, i32
  }
  func.func @transform_4(%arg0: i32) -> (i32, i32) {
    %c0_i32 = arith.constant 0 : i32
    %c0_i32_0 = arith.constant 0 : i32
    %c0_i32_1 = arith.constant 0 : i32
    return %c0_i32, %c0_i32_0 : i32, i32
  }
  func.func @transform_5(%arg0: i32) -> (i32, i32) {
    %c0_i32 = arith.constant 0 : i32
    %c0_i32_0 = arith.constant 0 : i32
    return %c0_i32, %arg0 : i32, i32
  }
}

</mosaic_0001>

<llo_original>
// kernel: simple_block3d_forward.41
$region0: #{simple_block3d_forward.41}
  #allocation0 [shape = 'u32[]', space=smem, size = 0x4, offset = 0x4, fixed_abs, tag = 'smem constant byte address 0x4 - core index']
  #allocation1 [shape = 'u32[72,128]{1,0:T(1,128)}', space=vmem, size = 0x9000, scoped, tag = 'internal scratch']
  %s0 = inlined_call_operand.vmem [shape: f32[12,1024], index: 0, kind: input, shape index: {}]
  %s1 = inlined_call_operand.hbm [shape: f32[8,12], index: 1, kind: input, shape index: {}]
  %s2 = inlined_call_operand.vmem [shape: f32[8,1], index: 2, kind: input, shape index: {}]
  %s3 = inlined_call_operand.vmem [shape: f32[8,1024], index: 3, kind: output, shape index: {}]
  %s4 = sld [smem:[#allocation0]]
  $region72: #{simple_block3d_forward.41} parent=0
    _
  %s6 = ssub.s32 1, %s4
  %s7 = scalar_select 0, %s6, %s4
  $region1: #{simple_block3d_forward.41} parent=0
    #allocation2 [shape = 'u8[65536]{0}', space=vmem, size = 0x10000, scoped, tag = 'input window, operand 0']
    #allocation3 [shape = 'u8[4096]{0}', space=vmem, size = 0x1000, scoped, tag = 'input window, operand 1, single buffered']
    #allocation4 [shape = 's32[2]{0}', space=sflag, size = 0x8, scoped, tag = 'scoped memory for simple_block3d_forward.41']
    %8 = vsyncpa [#allocation4], 0
    loop: start=0, step=1, limit=4
    $region2: #{simple_block3d_forward.41} parent=1 // loop_pre_header
      _
    $region3: #{simple_block3d_forward.41} parent=1 // loop_header
      %s10 = sphi 0, %s14
      %p11 = scmp.ge.s32.totalorder %s10, 4
      %s20 = sphi 0, %s22
      %s23 = sphi 0, %s20
      %s24 = sphi 0, %s23
      %s40 = sphi 0, %s24
      %s44 = sphi 0, %s44
      %s46 = sphi 0, %s44
      %s47 = sphi 0, %s46
      %s61 = sphi 0, %s47
      %s65 = sphi 0, %s65
      %s67 = sphi 0, %s65
      %s68 = sphi 0, %s67
      %s82 = sphi 0, %s68
      %s88 = sphi 0, %s90
      %s91 = sphi 0, %s88
      %s92 = sphi 0, %s91
      %s108 = sphi 0, %s92
    $region4: #{simple_block3d_forward.41} parent=1 // loop_header_branch
      %13 = sbr.rel (%p11) target = $region8
    $region5: #{simple_block3d_forward.41} parent=1 // loop_body
      %s15 = ssub.s32 %s10, 1
      %s16 = ssub.s32 %s10, 2
      %s17 = sadd.s32 %s10, 1
      %s18 = ssub.s32 %s10, %s17
      %p19 = scmp.eq.s32.totalorder %s18, 0
      %s21 = sadd.s32 %s20, 1
      %s22 = scalar_select %p19, %s20, %s21
      %p25 = pneg %p19
      %p26 = scmp.eq.s32.totalorder %s10, 1
      %p27 = por %p25, %p26
      %p28 = scmp.ne.s32.totalorder %s20, %s23
      %p29 = scmp.eq.s32.totalorder %s10, 0
      %p30 = por %p28, %p29
      %p31 = scmp.ne.s32.totalorder %s20, %s23
      %p32 = scmp.eq.s32.totalorder %s15, 1
      %p33 = por %p31, %p32
      %p34 = scmp.ne.s32.totalorder %s23, %s24
      %p35 = scmp.eq.s32.totalorder %s15, 0
      %p36 = por %p34, %p35
      %p37 = scmp.ne.s32.totalorder %s23, %s24
      %p38 = scmp.eq.s32.totalorder %s16, 1
      %p39 = por %p37, %p38
      %p41 = scmp.ne.s32.totalorder %s24, %s40
      %p42 = scmp.eq.s32.totalorder %s16, 0
      %p43 = por %p41, %p42
      %s45 = sadd.s32 %s44, 1
      %p48 = scmp.eq.s32.totalorder %s10, 1
      %p49 = scmp.ne.s32.totalorder %s44, %s46
      %p50 = scmp.eq.s32.totalorder %s10, 0
      %p51 = por %p49, %p50
      %p52 = scmp.ne.s32.totalorder %s44, %s46
      %p53 = scmp.eq.s32.totalorder %s15, 1
      %p54 = por %p52, %p53
      %p55 = scmp.ne.s32.totalorder %s46, %s47
      %p56 = scmp.eq.s32.totalorder %s15, 0
      %p57 = por %p55, %p56
      %p58 = scmp.ne.s32.totalorder %s46, %s47
      %p59 = scmp.eq.s32.totalorder %s16, 1
      %p60 = por %p58, %p59
      %p62 = scmp.ne.s32.totalorder %s47, %s61
      %p63 = scmp.eq.s32.totalorder %s16, 0
      %p64 = por %p62, %p63
      %s66 = sadd.s32 %s65, 1
      %p69 = scmp.eq.s32.totalorder %s10, 1
      %p70 = scmp.ne.s32.totalorder %s65, %s67
      %p71 = scmp.eq.s32.totalorder %s10, 0
      %p72 = por %p70, %p71
      %p73 = scmp.ne.s32.totalorder %s65, %s67
      %p74 = scmp.eq.s32.totalorder %s15, 1
      %p75 = por %p73, %p74
      %p76 = scmp.ne.s32.totalorder %s67, %s68
      %p77 = scmp.eq.s32.totalorder %s15, 0
      %p78 = por %p76, %p77
      %p79 = scmp.ne.s32.totalorder %s67, %s68
      %p80 = scmp.eq.s32.totalorder %s16, 1
      %p81 = por %p79, %p80
      %p83 = scmp.ne.s32.totalorder %s68, %s82
      %p84 = scmp.eq.s32.totalorder %s16, 0
      %p85 = por %p83, %p84
      %s86 = ssub.s32 %s10, %s17
      %p87 = scmp.eq.s32.totalorder %s86, 0
      %s89 = sadd.s32 %s88, 1
      %s90 = scalar_select %p87, %s88, %s89
      %p93 = pneg %p87
      %p94 = scmp.eq.s32.totalorder %s10, 1
      %p95 = por %p93, %p94
      %p96 = scmp.ne.s32.totalorder %s88, %s91
      %p97 = scmp.eq.s32.totalorder %s10, 0
      %p98 = por %p96, %p97
      %p99 = scmp.ne.s32.totalorder %s88, %s91
      %p100 = scmp.eq.s32.totalorder %s15, 1
      %p101 = por %p99, %p100
      %p102 = scmp.ne.s32.totalorder %s91, %s92
      %p103 = scmp.eq.s32.totalorder %s15, 0
      %p104 = por %p102, %p103
      %p105 = scmp.ne.s32.totalorder %s91, %s92
      %p106 = scmp.eq.s32.totalorder %s16, 1
      %p107 = por %p105, %p106
      %p109 = scmp.ne.s32.totalorder %s92, %s108
      %p110 = scmp.eq.s32.totalorder %s16, 0
      %p111 = por %p109, %p110
      %p112 = scmp.le.s32.totalorder 1, %s10
      %p113 = scmp.lt.s32.totalorder %s10, 3
      %p114 = pnand %p112, %p113
      %p115 = pneg %p114
      // Predicated region
      $region9: #{simple_block3d_forward.41} parent=5 // pred_check
        _
      $region10: #{simple_block3d_forward.41} parent=5 // pred_check_branch
        %117 = sbr.rel (%p114) target = $region12
      $region11: #{simple_block3d_forward.41} parent=5 // pred_region
        %s118 = ssub.s32 %s10, 1
        // Predicated region
        $region13: #{simple_block3d_forward.41} parent=11 // pred_check
          %p119 = pneg %p57
        $region14: #{simple_block3d_forward.41} parent=11 // pred_check_branch
          %121 = sbr.rel (%p119) target = $region16
        $region15: #{simple_block3d_forward.41} parent=11 // pred_region
          %123 = vsyncadd [#allocation4], 0
          %s125 = sshll.u32 %s1, 4
          %s126 = int_to_ptr.hbm [resolvable:$true] %s125
          %s127 = sshll.u32 [#allocation3], 4
          %s128 = int_to_ptr.vmem [resolvable:$true] %s127
          %130 = dma.hbm_to_vmem [thread:$0]  %s126, 128, %s128, [#allocation4]
        $region16: #{simple_block3d_forward.41} parent=11 // pred_fallthru
          _
        // Predicated region
        $region17: #{simple_block3d_forward.41} parent=11 // pred_check
          %p131 = pneg %p78
        $region18: #{simple_block3d_forward.41} parent=11 // pred_check_branch
          %133 = sbr.rel (%p131) target = $region20
        $region19: #{simple_block3d_forward.41} parent=11 // pred_region
          _
        $region20: #{simple_block3d_forward.41} parent=11 // pred_fallthru
          _
      $region12: #{simple_block3d_forward.41} parent=5 // pred_fallthru
        _
      %p134 = scmp.lt.s32.totalorder %s10, 2
      // Predicated region
      $region21: #{simple_block3d_forward.41} parent=5 // pred_check
        %p135 = pneg %p134
      $region22: #{simple_block3d_forward.41} parent=5 // pred_check_branch
        %137 = sbr.rel (%p135) target = $region24
      $region23: #{simple_block3d_forward.41} parent=5 // pred_region
        // Predicated region
        $region25: #{simple_block3d_forward.41} parent=23 // pred_check
          %p138 = pneg %p30
        $region26: #{simple_block3d_forward.41} parent=23 // pred_check_branch
          %140 = sbr.rel (%p138) target = $region28
        $region27: #{simple_block3d_forward.41} parent=23 // pred_region
          %s141 = sand.u32 %s20, 1
          %s142 = sand.u32 %s20, 1
          %s143 = smul.addr %s142, 64
          %s144 = scalar_lea.vmem [#allocation2], %s143
          %s145 = smul.u32 4, %s10
          %s146 = smul.addr %s145, 8
          %s147 = scalar_lea.vmem %s0, %s146
          // Predicated region
          $region29: #{simple_block3d_forward.41} parent=27 // pred_check
            _
          $region30: #{simple_block3d_forward.41} parent=27 // pred_check_branch
            %149 = sbr.rel (0) target = $region32
          $region31: #{simple_block3d_forward.41} parent=27 // pred_region
            // Predicated region
            $region33: #{simple_block3d_forward.41} parent=31 // pred_check
              _
            $region34: #{simple_block3d_forward.41} parent=31 // pred_check_branch
              %151 = sbr.rel (0) target = $region36
            $region35: #{simple_block3d_forward.41} parent=31 // pred_region
              loop: start=0, step=1, limit=1
              $region37: #{simple_block3d_forward.41} parent=35 // loop_pre_header
                _
              $region38: #{simple_block3d_forward.41} parent=35 // loop_header
                %s153 = sphi 0, %s157
                %p154 = scmp.ge.s32.totalorder %s153, 1
                %s158 = sphi %s147, %s147
                %s159 = sphi %s144, %s144
              $region39: #{simple_block3d_forward.41} parent=35 // loop_header_branch
                %156 = sbr.rel (%p154) target = $region43
              $region40: #{simple_block3d_forward.41} parent=35 // loop_body
                %v160 = vld [vmem:[%s158] sm:$0xff]
                %161 = vst [vmem:[%s159] sm:$0xff] %v160
                %v162 = vld [vmem:[%s158 + $0x8] sm:$0xff]
                %163 = vst [vmem:[%s159 + $0x8] sm:$0xff] %v162
                %v164 = vld [vmem:[%s158 + $0x10] sm:$0xff]
                %165 = vst [vmem:[%s159 + $0x10] sm:$0xff] %v164
                %v166 = vld [vmem:[%s158 + $0x18] sm:$0xff]
                %167 = vst [vmem:[%s159 + $0x18] sm:$0xff] %v166
                %v168 = vld [vmem:[%s158 + $0x40] sm:$0xff]
                %169 = vst [vmem:[%s159 + $0x20] sm:$0xff] %v168
                %v170 = vld [vmem:[%s158 + $0x48] sm:$0xff]
                %171 = vst [vmem:[%s159 + $0x28] sm:$0xff] %v170
                %v172 = vld [vmem:[%s158 + $0x50] sm:$0xff]
                %173 = vst [vmem:[%s159 + $0x30] sm:$0xff] %v172
                %v174 = vld [vmem:[%s158 + $0x58] sm:$0xff]
                %175 = vst [vmem:[%s159 + $0x38] sm:$0xff] %v174
              $region41: #{simple_block3d_forward.41} parent=35 // loop_footer
                %s157 = sadd.s32 1, %s153
              $region42: #{simple_block3d_forward.41} parent=35 // loop_footer_branch
                %152 = sbr.rel target = $region38
              $region43: #{simple_block3d_forward.41} parent=35 // loop_exit
                _
            $region36: #{simple_block3d_forward.41} parent=31 // pred_fallthru
              _
            // Predicated region
            $region44: #{simple_block3d_forward.41} parent=31 // pred_check
              _
            $region45: #{simple_block3d_forward.41} parent=31 // pred_check_branch
              %177 = sbr.rel target = $region47
            $region46: #{simple_block3d_forward.41} parent=31 // pred_region
              _
            $region47: #{simple_block3d_forward.41} parent=31 // pred_fallthru
              _
          $region32: #{simple_block3d_forward.41} parent=27 // pred_fallthru
            _
          %178 = vnop
        $region28: #{simple_block3d_forward.41} parent=23 // pred_fallthru
          _
      $region24: #{simple_block3d_forward.41} parent=5 // pred_fallthru
        _
      %p179 = scmp.le.s32.totalorder 1, %s10
      %p180 = scmp.lt.s32.totalorder %s10, 3
      %p181 = pnand %p179, %p180
      %p182 = pneg %p181
      // Predicated region
      $region48: #{simple_block3d_forward.41} parent=5 // pred_check
        _
      $region49: #{simple_block3d_forward.41} parent=5 // pred_check_branch
        %184 = sbr.rel (%p181) target = $region51
      $region50: #{simple_block3d_forward.41} parent=5 // pred_region
        %s185 = ssub.s32 %s10, 1
        %s186 = sand.u32 %s23, 1
        %s187 = sand.u32 %s23, 1
        %s188 = smul.addr %s187, 64
        %s189 = scalar_lea.vmem [#allocation2], %s188
        // Predicated region
        $region52: #{simple_block3d_forward.41} parent=50 // pred_check
          %p190 = pneg %p36
        $region53: #{simple_block3d_forward.41} parent=50 // pred_check_branch
          %192 = sbr.rel (%p190) target = $region55
        $region54: #{simple_block3d_forward.41} parent=50 // pred_region
          _
        $region55: #{simple_block3d_forward.41} parent=50 // pred_fallthru
          _
        // Predicated region
        $region56: #{simple_block3d_forward.41} parent=50 // pred_check
          %p193 = pneg %p57
        $region57: #{simple_block3d_forward.41} parent=50 // pred_check_branch
          %195 = sbr.rel (%p193) target = $region59
        $region58: #{simple_block3d_forward.41} parent=50 // pred_region
          %197 = dma.done [#allocation4], 128
        $region59: #{simple_block3d_forward.41} parent=50 // pred_fallthru
          _
        %s198 = sand.u32 %s23, 1
        %s199 = sand.u32 %s23, 1
        %s200 = smul.addr %s199, 64
        %s201 = scalar_lea.vmem [#allocation2], %s200
        %p202 = pneg %p36
        %p203 = pneg %p33
        %p204 = pneg %p57
        %p205 = pneg %p54
        %p206 = pneg %p78
        %p207 = pneg %p75
        %p208 = pneg %p104
        %p209 = pneg %p101
        %s210 = smul.u32 4, %s15
        %p211 = scmp.lt.s32.totalorder %s210, 7
        %s212 = scalar_select %p211, %s210, 7
        %s213 = smul.addr %s212, 8
        %s214 = scalar_lea.vmem %s3, %s213
        %s215 = smul.u32 4, %s15
        %s216 = smul.u32 4, %s15
        %p217 = scmp.lt.s32.totalorder %s216, 7
        %s218 = scalar_select %p217, %s216, 7
        %s219 = smul.addr %s218, 8
        %s220 = scalar_lea.vmem %s3, %s219
        %s221 = smul.u32 4, %s15
        %v223 = vld [vmem:[#allocation3] sm:$0xff]
        %v224 = vpack.c.bf16 %v223, %v223
        %v225 = vld [vmem:[%s189] sm:$0xff]
        %v226 = vld [vmem:[%s189 + $0x8] sm:$0xff]
        %v227 = vld [vmem:[%s189 + $0x10] sm:$0xff]
        %v228 = vld [vmem:[%s189 + $0x18] sm:$0xff]
        %v229 = vld [vmem:[%s189 + $0x20] sm:$0xf]
        %v230 = vld [vmem:[%s189 + $0x28] sm:$0xf]
        %v231 = vld [vmem:[%s189 + $0x30] sm:$0xf]
        %v232 = vld [vmem:[%s189 + $0x38] sm:$0xf]
        %v233 = vpack.c.bf16 %v229, %v225
        %v234 = vpack.c.bf16 %v230, %v226
        %v235 = vpack.c.bf16 %v231, %v227
        %v236 = vpack.c.bf16 %v232, %v228
        %v237 = vld [vmem:[%s2] sm:$0xff]
        %239 = vset.pattern.permute.xlu0 0
        %240 = vperm.xlu0 %239, %v237
        %v241 = vpop.permute.xlu0 %240
        %vm243 = vcmask 97280
        %v245 = vsel %vm243, %v224, 0
        %vm247 = vcmask 1045504
        %v249 = vsel %vm247, %v233, 0
        %v252 = vsel %vm247, %v234, 0
        %v255 = vsel %vm247, %v235, 0
        %v258 = vsel %vm247, %v236, 0
        %260 = vmatpush.bf16.msra.mxu0 0
        %261 = vmatpush.bf16.msra.mxu0 0
        %262 = vmatpush.bf16.msra.mxu0 0
        %263 = vmatpush.bf16.msra.mxu0 0
        %264 = vmatpush.bf16.msra.mxu0 0
        %265 = vmatpush.bf16.msra.mxu0 0
        %266 = vmatpush.bf16.msra.mxu0 0
        %267 = vmatpush.bf16.msra.mxu0 %v249
        %268 = vmatmul.bf16.gmra.mxu0 %v245
        %v269 = vpop.f32.mrf.mxu0
        %v270 = vadd.f32 %v241, %v269
        %v271 = vpop.f32.mrf.mxu0
        %272 = vdwg.mxu0
        %273 = vmatpush.bf16.msra.mxu0 0
        %274 = vmatpush.bf16.msra.mxu0 0
        %275 = vmatpush.bf16.msra.mxu0 0
        %276 = vmatpush.bf16.msra.mxu0 0
        %277 = vmatpush.bf16.msra.mxu0 0
        %278 = vmatpush.bf16.msra.mxu0 0
        %279 = vmatpush.bf16.msra.mxu0 0
        %280 = vmatpush.bf16.msra.mxu0 %v252
        %281 = vmatmul.bf16.gmra.mxu0 %v245
        %v282 = vpop.f32.mrf.mxu0
        %v283 = vadd.f32 %v241, %v282
        %v284 = vpop.f32.mrf.mxu0
        %285 = vdwg.mxu0
        %286 = vmatpush.bf16.msra.mxu0 0
        %287 = vmatpush.bf16.msra.mxu0 0
        %288 = vmatpush.bf16.msra.mxu0 0
        %289 = vmatpush.bf16.msra.mxu0 0
        %290 = vmatpush.bf16.msra.mxu0 0
        %291 = vmatpush.bf16.msra.mxu0 0
        %292 = vmatpush.bf16.msra.mxu0 0
        %293 = vmatpush.bf16.msra.mxu0 %v255
        %294 = vmatmul.bf16.gmra.mxu0 %v245
        %v295 = vpop.f32.mrf.mxu0
        %v296 = vadd.f32 %v241, %v295
        %v297 = vpop.f32.mrf.mxu0
        %298 = vdwg.mxu0
        %299 = vmatpush.bf16.msra.mxu0 0
        %300 = vmatpush.bf16.msra.mxu0 0
        %301 = vmatpush.bf16.msra.mxu0 0
        %302 = vmatpush.bf16.msra.mxu0 0
        %303 = vmatpush.bf16.msra.mxu0 0
        %304 = vmatpush.bf16.msra.mxu0 0
        %305 = vmatpush.bf16.msra.mxu0 0
        %306 = vmatpush.bf16.msra.mxu0 %v258
        %307 = vmatmul.bf16.gmra.mxu0 %v245
        %v308 = vpop.f32.mrf.mxu0
        %v309 = vadd.f32 %v241, %v308
        %v310 = vpop.f32.mrf.mxu0
        %311 = vdwg.mxu0
        %312 = vst [vmem:[%s220] sm:$0xff] %v270
        %313 = vst [vmem:[%s220 + $0x8] sm:$0xff] %v283
        %314 = vst [vmem:[%s220 + $0x10] sm:$0xff] %v296
        %315 = vst [vmem:[%s220 + $0x18] sm:$0xff] %v309
        %s316 = smul.u32 4, %s15
        %p317 = scmp.lt.s32.totalorder %s316, 7
        %s318 = scalar_select %p317, %s316, 7
        %s319 = smul.addr %s318, 8
        %s320 = scalar_lea.vmem %s3, %s319
        // Predicated region
        $region60: #{simple_block3d_forward.41} parent=50 // pred_check
          %p321 = pneg %p101
        $region61: #{simple_block3d_forward.41} parent=50 // pred_check_branch
          %323 = sbr.rel (%p321) target = $region63
        $region62: #{simple_block3d_forward.41} parent=50 // pred_region
          %s324 = smul.u32 4, %s15
        $region63: #{simple_block3d_forward.41} parent=50 // pred_fallthru
          _
      $region51: #{simple_block3d_forward.41} parent=5 // pred_fallthru
        _
      %p325 = scmp.le.s32.totalorder 2, %s10
      // Predicated region
      $region64: #{simple_block3d_forward.41} parent=5 // pred_check
        %p326 = pneg %p325
      $region65: #{simple_block3d_forward.41} parent=5 // pred_check_branch
        %328 = sbr.rel (%p326) target = $region67
      $region66: #{simple_block3d_forward.41} parent=5 // pred_region
        %s329 = ssub.s32 %s10, 2
        // Predicated region
        $region68: #{simple_block3d_forward.41} parent=66 // pred_check
          %p330 = pneg %p107
        $region69: #{simple_block3d_forward.41} parent=66 // pred_check_branch
          %332 = sbr.rel (%p330) target = $region71
        $region70: #{simple_block3d_forward.41} parent=66 // pred_region
          %s333 = smul.u32 4, %s16
          %p334 = scmp.lt.s32.totalorder %s333, 7
          %s335 = scalar_select %p334, %s333, 7
          %s336 = smul.addr %s335, 8
          %s337 = scalar_lea.vmem %s3, %s336
        $region71: #{simple_block3d_forward.41} parent=66 // pred_fallthru
          _
      $region67: #{simple_block3d_forward.41} parent=5 // pred_fallthru
        _
    $region6: #{simple_block3d_forward.41} parent=1 // loop_footer
      %s14 = sadd.s32 1, %s10
    $region7: #{simple_block3d_forward.41} parent=1 // loop_footer_branch
      %9 = sbr.rel target = $region3
    $region8: #{simple_block3d_forward.41} parent=1 // loop_exit
      _
    %338 = vsyncpa [#allocation4], 1
    %s339 = scalar_lea.sflag [#allocation4], 1
    %340 = vsyncpa %s339, 1

// kernel: neg.27
$region0: #{neg.27}
  #allocation0 [shape = 's32[1]{0}', space=sflag, size = 0x4, scoped, tag = 'scoped memory for neg.27']
  %s0 = inlined_call_operand.vmem [shape: f32[27,8,8], index: 0, kind: input, shape index: {}]
  %s1 = inlined_call_operand.vmem [shape: f32[27,8,8], index: 1, kind: output, shape index: {}]
  %v2 = vld [vmem:[%s0] sm:$0xff]
  %3 = xla_tuple %v2
  %4 = xla_tuple %3
  %v5 = vxor.u32 %v2, 2147483648
  %6 = xla_tuple %v5
  %7 = vst [vmem:[%s1] sm:$0xff] %v5
  %s8 = scalar_lea.vmem %s0, 8
  %v9 = vld [vmem:[%s8] sm:$0xff]
  %10 = xla_tuple %v9
  %11 = xla_tuple %10
  %v12 = vxor.u32 %v9, 2147483648
  %13 = xla_tuple %v12
  %s14 = scalar_lea.vmem %s1, 8
  %15 = vst [vmem:[%s14] sm:$0xff] %v12
  %s16 = scalar_lea.vmem %s0, 16
  %v17 = vld [vmem:[%s16] sm:$0xff]
  %18 = xla_tuple %v17
  %19 = xla_tuple %18
  %v20 = vxor.u32 %v17, 2147483648
  %21 = xla_tuple %v20
  %s22 = scalar_lea.vmem %s1, 16
  %23 = vst [vmem:[%s22] sm:$0xff] %v20
  %s24 = scalar_lea.vmem %s0, 24
  %v25 = vld [vmem:[%s24] sm:$0xff]
  %26 = xla_tuple %v25
  %27 = xla_tuple %26
  %v28 = vxor.u32 %v25, 2147483648
  %29 = xla_tuple %v28
  %s30 = scalar_lea.vmem %s1, 24
  %31 = vst [vmem:[%s30] sm:$0xff] %v28
  %s32 = scalar_lea.vmem %s0, 32
  %v33 = vld [vmem:[%s32] sm:$0xff]
  %34 = xla_tuple %v33
  %35 = xla_tuple %34
  %v36 = vxor.u32 %v33, 2147483648
  %37 = xla_tuple %v36
  %s38 = scalar_lea.vmem %s1, 32
  %39 = vst [vmem:[%s38] sm:$0xff] %v36
  %s40 = scalar_lea.vmem %s0, 40
  %v41 = vld [vmem:[%s40] sm:$0xff]
  %42 = xla_tuple %v41
  %43 = xla_tuple %42
  %v44 = vxor.u32 %v41, 2147483648
  %45 = xla_tuple %v44
  %s46 = scalar_lea.vmem %s1, 40
  %47 = vst [vmem:[%s46] sm:$0xff] %v44
  %s48 = scalar_lea.vmem %s0, 48
  %v49 = vld [vmem:[%s48] sm:$0xff]
  %50 = xla_tuple %v49
  %51 = xla_tuple %50
  %v52 = vxor.u32 %v49, 2147483648
  %53 = xla_tuple %v52
  %s54 = scalar_lea.vmem %s1, 48
  %55 = vst [vmem:[%s54] sm:$0xff] %v52
  %s56 = scalar_lea.vmem %s0, 56
  %v57 = vld [vmem:[%s56] sm:$0xff]
  %58 = xla_tuple %v57
  %59 = xla_tuple %58
  %v60 = vxor.u32 %v57, 2147483648
  %61 = xla_tuple %v60
  %s62 = scalar_lea.vmem %s1, 56
  %63 = vst [vmem:[%s62] sm:$0xff] %v60

// kernel: simple_block3d_forward.42
$region0: #{simple_block3d_forward.42}
  #allocation0 [shape = 'u32[]', space=smem, size = 0x4, offset = 0x4, fixed_abs, tag = 'smem constant byte address 0x4 - core index']
  #allocation1 [shape = 'u32[72,128]{1,0:T(1,128)}', space=vmem, size = 0x9000, scoped, tag = 'internal scratch']
  %s0 = inlined_call_operand.vmem [shape: f32[108,2,16], index: 0, kind: input, shape index: {}]
  %s1 = inlined_call_operand.vmem [shape: f32[108,16,16], index: 1, kind: input, shape index: {}]
  %s2 = inlined_call_operand.vmem [shape: f32[108,2,16], index: 2, kind: output, shape index: {}]
  %s3 = sld [smem:[#allocation0]]
  $region18: #{simple_block3d_forward.42} parent=0
    _
  %s5 = ssub.s32 1, %s3
  %s6 = scalar_select 0, %s5, %s3
  // Predicated region
  $region2: #{simple_block3d_forward.42} parent=0 // pred_check
    _
  $region3: #{simple_block3d_forward.42} parent=0 // pred_check_branch
    %8 = sbr.rel (0) target = $region5
  $region4: #{simple_block3d_forward.42} parent=0 // pred_region
    _
  $region5: #{simple_block3d_forward.42} parent=0 // pred_fallthru
    _
  // Predicated region
  $region6: #{simple_block3d_forward.42} parent=0 // pred_check
    _
  $region7: #{simple_block3d_forward.42} parent=0 // pred_check_branch
    %10 = sbr.rel (0) target = $region9
  $region8: #{simple_block3d_forward.42} parent=0 // pred_region
    _
  $region9: #{simple_block3d_forward.42} parent=0 // pred_fallthru
    _
  %v11 = vld [vmem:[%s0] sm:$0x3]
  %v12 = vld [vmem:[%s0 + $0x2] sm:$0x3]
  %v13 = vld [vmem:[%s0 + $0x4] sm:$0x3]
  %v14 = vld [vmem:[%s0 + $0x6] sm:$0x3]
  %v15 = vld [vmem:[%s0 + $0x8] sm:$0x3]
  %v16 = vld [vmem:[%s0 + $0xa] sm:$0x3]
  %v17 = vld [vmem:[%s0 + $0xc] sm:$0x3]
  %v18 = vld [vmem:[%s0 + $0xe] sm:$0x3]
  %v19 = vld [vmem:[%s0 + $0x10] sm:$0x3]
  %v20 = vld [vmem:[%s0 + $0x12] sm:$0x3]
  %v21 = vld [vmem:[%s0 + $0x14] sm:$0x3]
  %v22 = vld [vmem:[%s0 + $0x16] sm:$0x3]
  %v23 = vld [vmem:[%s0 + $0x18] sm:$0x3]
  %v24 = vld [vmem:[%s0 + $0x1a] sm:$0x3]
  %v25 = vld [vmem:[%s0 + $0x1c] sm:$0x3]
  %v26 = vld [vmem:[%s0 + $0x1e] sm:$0x3]
  %v27 = vld [vmem:[%s0 + $0x20] sm:$0x3]
  %v28 = vld [vmem:[%s0 + $0x22] sm:$0x3]
  %v29 = vld [vmem:[%s0 + $0x24] sm:$0x3]
  %v30 = vld [vmem:[%s0 + $0x26] sm:$0x3]
  %v31 = vld [vmem:[%s0 + $0x28] sm:$0x3]
  %v32 = vld [vmem:[%s0 + $0x2a] sm:$0x3]
  %v33 = vld [vmem:[%s0 + $0x2c] sm:$0x3]
  %v34 = vld [vmem:[%s0 + $0x2e] sm:$0x3]
  %v35 = vld [vmem:[%s0 + $0x30] sm:$0x3]
  %v36 = vld [vmem:[%s0 + $0x32] sm:$0x3]
  %v37 = vld [vmem:[%s0 + $0x34] sm:$0x3]
  %v38 = vld [vmem:[%s0 + $0x36] sm:$0x3]
  %v39 = vld [vmem:[%s0 + $0x38] sm:$0x3]
  %v40 = vld [vmem:[%s0 + $0x3a] sm:$0x3]
  %v41 = vld [vmem:[%s0 + $0x3c] sm:$0x3]
  %v42 = vld [vmem:[%s0 + $0x3e] sm:$0x3]
  %v43 = vld [vmem:[%s0 + $0x40] sm:$0x3]
  %v44 = vld [vmem:[%s0 + $0x42] sm:$0x3]
  %v45 = vld [vmem:[%s0 + $0x44] sm:$0x3]
  %v46 = vld [vmem:[%s0 + $0x46] sm:$0x3]
  %v47 = vld [vmem:[%s0 + $0x48] sm:$0x3]
  %v48 = vld [vmem:[%s0 + $0x4a] sm:$0x3]
  %v49 = vld [vmem:[%s0 + $0x4c] sm:$0x3]
  %v50 = vld [vmem:[%s0 + $0x4e] sm:$0x3]
  %v51 = vld [vmem:[%s0 + $0x50] sm:$0x3]
  %v52 = vld [vmem:[%s0 + $0x52] sm:$0x3]
  %v53 = vld [vmem:[%s0 + $0x54] sm:$0x3]
  %v54 = vld [vmem:[%s0 + $0x56] sm:$0x3]
  %v55 = vld [vmem:[%s0 + $0x58] sm:$0x3]
  %v56 = vld [vmem:[%s0 + $0x5a] sm:$0x3]
  %v57 = vld [vmem:[%s0 + $0x5c] sm:$0x3]
  %v58 = vld [vmem:[%s0 + $0x5e] sm:$0x3]
  %v59 = vld [vmem:[%s0 + $0x60] sm:$0x3]
  %v60 = vld [vmem:[%s0 + $0x62] sm:$0x3]
  %v61 = vld [vmem:[%s0 + $0x64] sm:$0x3]
  %v62 = vld [vmem:[%s0 + $0x66] sm:$0x3]
  %v63 = vld [vmem:[%s0 + $0x68] sm:$0x3]
  %v64 = vld [vmem:[%s0 + $0x6a] sm:$0x3]
  %v65 = vld [vmem:[%s0 + $0x6c] sm:$0x3]
  %v66 = vld [vmem:[%s0 + $0x6e] sm:$0x3]
  %v67 = vld [vmem:[%s0 + $0x70] sm:$0x3]
  %v68 = vld [vmem:[%s0 + $0x72] sm:$0x3]
  %v69 = vld [vmem:[%s0 + $0x74] sm:$0x3]
  %v70 = vld [vmem:[%s0 + $0x76] sm:$0x3]
  %v71 = vld [vmem:[%s0 + $0x78] sm:$0x3]
  %v72 = vld [vmem:[%s0 + $0x7a] sm:$0x3]
  %v73 = vld [vmem:[%s0 + $0x7c] sm:$0x3]
  %v74 = vld [vmem:[%s0 + $0x7e] sm:$0x3]
  %v75 = vld [vmem:[%s0 + $0x80] sm:$0x3]
  %v76 = vld [vmem:[%s0 + $0x82] sm:$0x3]
  %v77 = vld [vmem:[%s0 + $0x84] sm:$0x3]
  %v78 = vld [vmem:[%s0 + $0x86] sm:$0x3]
  %v79 = vld [vmem:[%s0 + $0x88] sm:$0x3]
  %v80 = vld [vmem:[%s0 + $0x8a] sm:$0x3]
  %v81 = vld [vmem:[%s0 + $0x8c] sm:$0x3]
  %v82 = vld [vmem:[%s0 + $0x8e] sm:$0x3]
  %v83 = vld [vmem:[%s0 + $0x90] sm:$0x3]
  %v84 = vld [vmem:[%s0 + $0x92] sm:$0x3]
  %v85 = vld [vmem:[%s0 + $0x94] sm:$0x3]
  %v86 = vld [vmem:[%s0 + $0x96] sm:$0x3]
  %v87 = vld [vmem:[%s0 + $0x98] sm:$0x3]
  %v88 = vld [vmem:[%s0 + $0x9a] sm:$0x3]
  %v89 = vld [vmem:[%s0 + $0x9c] sm:$0x3]
  %v90 = vld [vmem:[%s0 + $0x9e] sm:$0x3]
  %v91 = vld [vmem:[%s0 + $0xa0] sm:$0x3]
  %v92 = vld [vmem:[%s0 + $0xa2] sm:$0x3]
  %v93 = vld [vmem:[%s0 + $0xa4] sm:$0x3]
  %v94 = vld [vmem:[%s0 + $0xa6] sm:$0x3]
  %v95 = vld [vmem:[%s0 + $0xa8] sm:$0x3]
  %v96 = vld [vmem:[%s0 + $0xaa] sm:$0x3]
  %v97 = vld [vmem:[%s0 + $0xac] sm:$0x3]
  %v98 = vld [vmem:[%s0 + $0xae] sm:$0x3]
  %v99 = vld [vmem:[%s0 + $0xb0] sm:$0x3]
  %v100 = vld [vmem:[%s0 + $0xb2] sm:$0x3]
  %v101 = vld [vmem:[%s0 + $0xb4] sm:$0x3]
  %v102 = vld [vmem:[%s0 + $0xb6] sm:$0x3]
  %v103 = vld [vmem:[%s0 + $0xb8] sm:$0x3]
  %v104 = vld [vmem:[%s0 + $0xba] sm:$0x3]
  %v105 = vld [vmem:[%s0 + $0xbc] sm:$0x3]
  %v106 = vld [vmem:[%s0 + $0xbe] sm:$0x3]
  %v107 = vld [vmem:[%s0 + $0xc0] sm:$0x3]
  %v108 = vld [vmem:[%s0 + $0xc2] sm:$0x3]
  %v109 = vld [vmem:[%s0 + $0xc4] sm:$0x3]
  %v110 = vld [vmem:[%s0 + $0xc6] sm:$0x3]
  %v111 = vld [vmem:[%s0 + $0xc8] sm:$0x3]
  %v112 = vld [vmem:[%s0 + $0xca] sm:$0x3]
  %v113 = vld [vmem:[%s0 + $0xcc] sm:$0x3]
  %v114 = vld [vmem:[%s0 + $0xce] sm:$0x3]
  %v115 = vld [vmem:[%s0 + $0xd0] sm:$0x3]
  %v116 = vld [vmem:[%s0 + $0xd2] sm:$0x3]
  %v117 = vld [vmem:[%s0 + $0xd4] sm:$0x3]
  %v118 = vld [vmem:[%s0 + $0xd6] sm:$0x3]
  %v119 = vld [vmem:[%s1] sm:$0xff]
  %v120 = vld [vmem:[%s1 + $0x8] sm:$0xff]
  %v121 = vld [vmem:[%s1 + $0x10] sm:$0xff]
  %v122 = vld [vmem:[%s1 + $0x18] sm:$0xff]
  %v123 = vld [vmem:[%s1 + $0x20] sm:$0xff]
  %v124 = vld [vmem:[%s1 + $0x28] sm:$0xff]
  %v125 = vld [vmem:[%s1 + $0x30] sm:$0xff]
  %v126 = vld [vmem:[%s1 + $0x38] sm:$0xff]
  %v127 = vld [vmem:[%s1 + $0x40] sm:$0xff]
  %v128 = vld [vmem:[%s1 + $0x48] sm:$0xff]
  %v129 = vld [vmem:[%s1 + $0x50] sm:$0xff]
  %v130 = vld [vmem:[%s1 + $0x58] sm:$0xff]
  %v131 = vld [vmem:[%s1 + $0x60] sm:$0xff]
  %v132 = vld [vmem:[%s1 + $0x68] sm:$0xff]
  %v133 = vld [vmem:[%s1 + $0x70] sm:$0xff]
  %v134 = vld [vmem:[%s1 + $0x78] sm:$0xff]
  %v135 = vld [vmem:[%s1 + $0x80] sm:$0xff]
  %v136 = vld [vmem:[%s1 + $0x88] sm:$0xff]
  %v137 = vld [vmem:[%s1 + $0x90] sm:$0xff]
  %v138 = vld [vmem:[%s1 + $0x98] sm:$0xff]
  %v139 = vld [vmem:[%s1 + $0xa0] sm:$0xff]
  %v140 = vld [vmem:[%s1 + $0xa8] sm:$0xff]
  %v141 = vld [vmem:[%s1 + $0xb0] sm:$0xff]
  %v142 = vld [vmem:[%s1 + $0xb8] sm:$0xff]
  %v143 = vld [vmem:[%s1 + $0xc0] sm:$0xff]
  %v144 = vld [vmem:[%s1 + $0xc8] sm:$0xff]
  %v145 = vld [vmem:[%s1 + $0xd0] sm:$0xff]
  %v146 = vld [vmem:[%s1 + $0xd8] sm:$0xff]
  %v147 = vld [vmem:[%s1 + $0xe0] sm:$0xff]
  %v148 = vld [vmem:[%s1 + $0xe8] sm:$0xff]
  %v149 = vld [vmem:[%s1 + $0xf0] sm:$0xff]
  %v150 = vld [vmem:[%s1 + $0xf8] sm:$0xff]
  %v151 = vld [vmem:[%s1 + $0x100] sm:$0xff]
  %v152 = vld [vmem:[%s1 + $0x108] sm:$0xff]
  %v153 = vld [vmem:[%s1 + $0x110] sm:$0xff]
  %v154 = vld [vmem:[%s1 + $0x118] sm:$0xff]
  %v155 = vld [vmem:[%s1 + $0x120] sm:$0xff]
  %v156 = vld [vmem:[%s1 + $0x128] sm:$0xff]
  %v157 = vld [vmem:[%s1 + $0x130] sm:$0xff]
  %v158 = vld [vmem:[%s1 + $0x138] sm:$0xff]
  %v159 = vld [vmem:[%s1 + $0x140] sm:$0xff]
  %v160 = vld [vmem:[%s1 + $0x148] sm:$0xff]
  %v161 = vld [vmem:[%s1 + $0x150] sm:$0xff]
  %v162 = vld [vmem:[%s1 + $0x158] sm:$0xff]
  %v163 = vld [vmem:[%s1 + $0x160] sm:$0xff]
  %v164 = vld [vmem:[%s1 + $0x168] sm:$0xff]
  %v165 = vld [vmem:[%s1 + $0x170] sm:$0xff]
  %v166 = vld [vmem:[%s1 + $0x178] sm:$0xff]
  %v167 = vld [vmem:[%s1 + $0x180] sm:$0xff]
  %v168 = vld [vmem:[%s1 + $0x188] sm:$0xff]
  %v169 = vld [vmem:[%s1 + $0x190] sm:$0xff]
  %v170 = vld [vmem:[%s1 + $0x198] sm:$0xff]
  %v171 = vld [vmem:[%s1 + $0x1a0] sm:$0xff]
  %v172 = vld [vmem:[%s1 + $0x1a8] sm:$0xff]
  %v173 = vld [vmem:[%s1 + $0x1b0] sm:$0xff]
  %v174 = vld [vmem:[%s1 + $0x1b8] sm:$0xff]
  %v175 = vld [vmem:[%s1 + $0x1c0] sm:$0xff]
  %v176 = vld [vmem:[%s1 + $0x1c8] sm:$0xff]
  %v177 = vld [vmem:[%s1 + $0x1d0] sm:$0xff]
  %v178 = vld [vmem:[%s1 + $0x1d8] sm:$0xff]
  %v179 = vld [vmem:[%s1 + $0x1e0] sm:$0xff]
  %v180 = vld [vmem:[%s1 + $0x1e8] sm:$0xff]
  %v181 = vld [vmem:[%s1 + $0x1f0] sm:$0xff]
  %v182 = vld [vmem:[%s1 + $0x1f8] sm:$0xff]
  %v183 = vld [vmem:[%s1 + $0x200] sm:$0xff]
  %v184 = vld [vmem:[%s1 + $0x208] sm:$0xff]
  %v185 = vld [vmem:[%s1 + $0x210] sm:$0xff]
  %v186 = vld [vmem:[%s1 + $0x218] sm:$0xff]
  %v187 = vld [vmem:[%s1 + $0x220] sm:$0xff]
  %v188 = vld [vmem:[%s1 + $0x228] sm:$0xff]
  %v189 = vld [vmem:[%s1 + $0x230] sm:$0xff]
  %v190 = vld [vmem:[%s1 + $0x238] sm:$0xff]
  %v191 = vld [vmem:[%s1 + $0x240] sm:$0xff]
  %v192 = vld [vmem:[%s1 + $0x248] sm:$0xff]
  %v193 = vld [vmem:[%s1 + $0x250] sm:$0xff]
  %v194 = vld [vmem:[%s1 + $0x258] sm:$0xff]
  %v195 = vld [vmem:[%s1 + $0x260] sm:$0xff]
  %v196 = vld [vmem:[%s1 + $0x268] sm:$0xff]
  %v197 = vld [vmem:[%s1 + $0x270] sm:$0xff]
  %v198 = vld [vmem:[%s1 + $0x278] sm:$0xff]
  %v199 = vld [vmem:[%s1 + $0x280] sm:$0xff]
  %v200 = vld [vmem:[%s1 + $0x288] sm:$0xff]
  %v201 = vld [vmem:[%s1 + $0x290] sm:$0xff]
  %v202 = vld [vmem:[%s1 + $0x298] sm:$0xff]
  %v203 = vld [vmem:[%s1 + $0x2a0] sm:$0xff]
  %v204 = vld [vmem:[%s1 + $0x2a8] sm:$0xff]
  %v205 = vld [vmem:[%s1 + $0x2b0] sm:$0xff]
  %v206 = vld [vmem:[%s1 + $0x2b8] sm:$0xff]
  %v207 = vld [vmem:[%s1 + $0x2c0] sm:$0xff]
  %v208 = vld [vmem:[%s1 + $0x2c8] sm:$0xff]
  %v209 = vld [vmem:[%s1 + $0x2d0] sm:$0xff]
  %v210 = vld [vmem:[%s1 + $0x2d8] sm:$0xff]
  %v211 = vld [vmem:[%s1 + $0x2e0] sm:$0xff]
  %v212 = vld [vmem:[%s1 + $0x2e8] sm:$0xff]
  %v213 = vld [vmem:[%s1 + $0x2f0] sm:$0xff]
  %v214 = vld [vmem:[%s1 + $0x2f8] sm:$0xff]
  %v215 = vld [vmem:[%s1 + $0x300] sm:$0xff]
  %v216 = vld [vmem:[%s1 + $0x308] sm:$0xff]
  %v217 = vld [vmem:[%s1 + $0x310] sm:$0xff]
  %v218 = vld [vmem:[%s1 + $0x318] sm:$0xff]
  %v219 = vld [vmem:[%s1 + $0x320] sm:$0xff]
  %v220 = vld [vmem:[%s1 + $0x328] sm:$0xff]
  %v221 = vld [vmem:[%s1 + $0x330] sm:$0xff]
  %v222 = vld [vmem:[%s1 + $0x338] sm:$0xff]
  %v223 = vld [vmem:[%s1 + $0x340] sm:$0xff]
  %v224 = vld [vmem:[%s1 + $0x348] sm:$0xff]
  %v225 = vld [vmem:[%s1 + $0x350] sm:$0xff]
  %v226 = vld [vmem:[%s1 + $0x358] sm:$0xff]
  %v227 = vld [vmem:[%s1 + $0x360] sm:$0xff]
  %v228 = vld [vmem:[%s1 + $0x368] sm:$0xff]
  %v229 = vld [vmem:[%s1 + $0x370] sm:$0xff]
  %v230 = vld [vmem:[%s1 + $0x378] sm:$0xff]
  %v231 = vld [vmem:[%s1 + $0x380] sm:$0xff]
  %v232 = vld [vmem:[%s1 + $0x388] sm:$0xff]
  %v233 = vld [vmem:[%s1 + $0x390] sm:$0xff]
  %v234 = vld [vmem:[%s1 + $0x398] sm:$0xff]
  %v235 = vld [vmem:[%s1 + $0x3a0] sm:$0xff]
  %v236 = vld [vmem:[%s1 + $0x3a8] sm:$0xff]
  %v237 = vld [vmem:[%s1 + $0x3b0] sm:$0xff]
  %v238 = vld [vmem:[%s1 + $0x3b8] sm:$0xff]
  %v239 = vld [vmem:[%s1 + $0x3c0] sm:$0xff]
  %v240 = vld [vmem:[%s1 + $0x3c8] sm:$0xff]
  %v241 = vld [vmem:[%s1 + $0x3d0] sm:$0xff]
  %v242 = vld [vmem:[%s1 + $0x3d8] sm:$0xff]
  %v243 = vld [vmem:[%s1 + $0x3e0] sm:$0xff]
  %v244 = vld [vmem:[%s1 + $0x3e8] sm:$0xff]
  %v245 = vld [vmem:[%s1 + $0x3f0] sm:$0xff]
  %v246 = vld [vmem:[%s1 + $0x3f8] sm:$0xff]
  %v247 = vld [vmem:[%s1 + $0x400] sm:$0xff]
  %v248 = vld [vmem:[%s1 + $0x408] sm:$0xff]
  %v249 = vld [vmem:[%s1 + $0x410] sm:$0xff]
  %v250 = vld [vmem:[%s1 + $0x418] sm:$0xff]
  %v251 = vld [vmem:[%s1 + $0x420] sm:$0xff]
  %v252 = vld [vmem:[%s1 + $0x428] sm:$0xff]
  %v253 = vld [vmem:[%s1 + $0x430] sm:$0xff]
  %v254 = vld [vmem:[%s1 + $0x438] sm:$0xff]
  %v255 = vld [vmem:[%s1 + $0x440] sm:$0xff]
  %v256 = vld [vmem:[%s1 + $0x448] sm:$0xff]
  %v257 = vld [vmem:[%s1 + $0x450] sm:$0xff]
  %v258 = vld [vmem:[%s1 + $0x458] sm:$0xff]
  %v259 = vld [vmem:[%s1 + $0x460] sm:$0xff]
  %v260 = vld [vmem:[%s1 + $0x468] sm:$0xff]
  %v261 = vld [vmem:[%s1 + $0x470] sm:$0xff]
  %v262 = vld [vmem:[%s1 + $0x478] sm:$0xff]
  %v263 = vld [vmem:[%s1 + $0x480] sm:$0xff]
  %v264 = vld [vmem:[%s1 + $0x488] sm:$0xff]
  %v265 = vld [vmem:[%s1 + $0x490] sm:$0xff]
  %v266 = vld [vmem:[%s1 + $0x498] sm:$0xff]
  %v267 = vld [vmem:[%s1 + $0x4a0] sm:$0xff]
  %v268 = vld [vmem:[%s1 + $0x4a8] sm:$0xff]
  %v269 = vld [vmem:[%s1 + $0x4b0] sm:$0xff]
  %v270 = vld [vmem:[%s1 + $0x4b8] sm:$0xff]
  %v271 = vld [vmem:[%s1 + $0x4c0] sm:$0xff]
  %v272 = vld [vmem:[%s1 + $0x4c8] sm:$0xff]
  %v273 = vld [vmem:[%s1 + $0x4d0] sm:$0xff]
  %v274 = vld [vmem:[%s1 + $0x4d8] sm:$0xff]
  %v275 = vld [vmem:[%s1 + $0x4e0] sm:$0xff]
  %v276 = vld [vmem:[%s1 + $0x4e8] sm:$0xff]
  %v277 = vld [vmem:[%s1 + $0x4f0] sm:$0xff]
  %v278 = vld [vmem:[%s1 + $0x4f8] sm:$0xff]
  %v279 = vld [vmem:[%s1 + $0x500] sm:$0xff]
  %v280 = vld [vmem:[%s1 + $0x508] sm:$0xff]
  %v281 = vld [vmem:[%s1 + $0x510] sm:$0xff]
  %v282 = vld [vmem:[%s1 + $0x518] sm:$0xff]
  %v283 = vld [vmem:[%s1 + $0x520] sm:$0xff]
  %v284 = vld [vmem:[%s1 + $0x528] sm:$0xff]
  %v285 = vld [vmem:[%s1 + $0x530] sm:$0xff]
  %v286 = vld [vmem:[%s1 + $0x538] sm:$0xff]
  %v287 = vld [vmem:[%s1 + $0x540] sm:$0xff]
  %v288 = vld [vmem:[%s1 + $0x548] sm:$0xff]
  %v289 = vld [vmem:[%s1 + $0x550] sm:$0xff]
  %v290 = vld [vmem:[%s1 + $0x558] sm:$0xff]
  %v291 = vld [vmem:[%s1 + $0x560] sm:$0xff]
  %v292 = vld [vmem:[%s1 + $0x568] sm:$0xff]
  %v293 = vld [vmem:[%s1 + $0x570] sm:$0xff]
  %v294 = vld [vmem:[%s1 + $0x578] sm:$0xff]
  %v295 = vld [vmem:[%s1 + $0x580] sm:$0xff]
  %v296 = vld [vmem:[%s1 + $0x588] sm:$0xff]
  %v297 = vld [vmem:[%s1 + $0x590] sm:$0xff]
  %v298 = vld [vmem:[%s1 + $0x598] sm:$0xff]
  %v299 = vld [vmem:[%s1 + $0x5a0] sm:$0xff]
  %v300 = vld [vmem:[%s1 + $0x5a8] sm:$0xff]
  %v301 = vld [vmem:[%s1 + $0x5b0] sm:$0xff]
  %v302 = vld [vmem:[%s1 + $0x5b8] sm:$0xff]
  %v303 = vld [vmem:[%s1 + $0x5c0] sm:$0xff]
  %v304 = vld [vmem:[%s1 + $0x5c8] sm:$0xff]
  %v305 = vld [vmem:[%s1 + $0x5d0] sm:$0xff]
  %v306 = vld [vmem:[%s1 + $0x5d8] sm:$0xff]
  %v307 = vld [vmem:[%s1 + $0x5e0] sm:$0xff]
  %v308 = vld [vmem:[%s1 + $0x5e8] sm:$0xff]
  %v309 = vld [vmem:[%s1 + $0x5f0] sm:$0xff]
  %v310 = vld [vmem:[%s1 + $0x5f8] sm:$0xff]
  %v311 = vld [vmem:[%s1 + $0x600] sm:$0xff]
  %v312 = vld [vmem:[%s1 + $0x608] sm:$0xff]
  %v313 = vld [vmem:[%s1 + $0x610] sm:$0xff]
  %v314 = vld [vmem:[%s1 + $0x618] sm:$0xff]
  %v315 = vld [vmem:[%s1 + $0x620] sm:$0xff]
  %v316 = vld [vmem:[%s1 + $0x628] sm:$0xff]
  %v317 = vld [vmem:[%s1 + $0x630] sm:$0xff]
  %v318 = vld [vmem:[%s1 + $0x638] sm:$0xff]
  %v319 = vld [vmem:[%s1 + $0x640] sm:$0xff]
  %v320 = vld [vmem:[%s1 + $0x648] sm:$0xff]
  %v321 = vld [vmem:[%s1 + $0x650] sm:$0xff]
  %v322 = vld [vmem:[%s1 + $0x658] sm:$0xff]
  %v323 = vld [vmem:[%s1 + $0x660] sm:$0xff]
  %v324 = vld [vmem:[%s1 + $0x668] sm:$0xff]
  %v325 = vld [vmem:[%s1 + $0x670] sm:$0xff]
  %v326 = vld [vmem:[%s1 + $0x678] sm:$0xff]
  %v327 = vld [vmem:[%s1 + $0x680] sm:$0xff]
  %v328 = vld [vmem:[%s1 + $0x688] sm:$0xff]
  %v329 = vld [vmem:[%s1 + $0x690] sm:$0xff]
  %v330 = vld [vmem:[%s1 + $0x698] sm:$0xff]
  %v331 = vld [vmem:[%s1 + $0x6a0] sm:$0xff]
  %v332 = vld [vmem:[%s1 + $0x6a8] sm:$0xff]
  %v333 = vld [vmem:[%s1 + $0x6b0] sm:$0xff]
  %v334 = vld [vmem:[%s1 + $0x6b8] sm:$0xff]
  %vm335 = vcmask 130048
  %v337 = vsel %vm335, %v11, 0
  %339 = vmatpush.msra.mxu0 0.0
  %340 = vmatpush.msra.mxu0 0.0
  %341 = vmatpush.msra.mxu0 0.0
  %342 = vmatpush.msra.mxu0 0.0
  %343 = vmatpush.msra.mxu0 0.0
  %344 = vmatpush.msra.mxu0 0.0
  %345 = vmatpush.msra.mxu0 0.0
  %346 = vmatpush.msra.mxu0 0.0
  %347 = vmatpush.msra.mxu0 0.0
  %348 = vmatpush.msra.mxu0 0.0
  %349 = vmatpush.msra.mxu0 0.0
  %350 = vmatpush.msra.mxu0 0.0
  %351 = vmatpush.msra.mxu0 0.0
  %352 = vmatpush.msra.mxu0 0.0
  %353 = vmatpush.msra.mxu0 %v120
  %354 = vmatpush.msra.mxu0 %v119
  %355 = vmatmul.f32.gmra.mxu0 %v337
  %v356 = vpop.f32.mrf.mxu0
  %v357 = vadd.f32 0.0, %v356
  %358 = vdwg.mxu0
  %v360 = vsel %vm335, %v12, 0
  %362 = vmatpush.msra.mxu0 0.0
  %363 = vmatpush.msra.mxu0 0.0
  %364 = vmatpush.msra.mxu0 0.0
  %365 = vmatpush.msra.mxu0 0.0
  %366 = vmatpush.msra.mxu0 0.0
  %367 = vmatpush.msra.mxu0 0.0
  %368 = vmatpush.msra.mxu0 0.0
  %369 = vmatpush.msra.mxu0 0.0
  %370 = vmatpush.msra.mxu0 0.0
  %371 = vmatpush.msra.mxu0 0.0
  %372 = vmatpush.msra.mxu0 0.0
  %373 = vmatpush.msra.mxu0 0.0
  %374 = vmatpush.msra.mxu0 0.0
  %375 = vmatpush.msra.mxu0 0.0
  %376 = vmatpush.msra.mxu0 %v122
  %377 = vmatpush.msra.mxu0 %v121
  %378 = vmatmul.f32.gmra.mxu0 %v360
  %v379 = vpop.f32.mrf.mxu0
  %v380 = vadd.f32 0.0, %v379
  %381 = vdwg.mxu0
  %v383 = vsel %vm335, %v13, 0
  %385 = vmatpush.msra.mxu0 0.0
  %386 = vmatpush.msra.mxu0 0.0
  %387 = vmatpush.msra.mxu0 0.0
  %388 = vmatpush.msra.mxu0 0.0
  %389 = vmatpush.msra.mxu0 0.0
  %390 = vmatpush.msra.mxu0 0.0
  %391 = vmatpush.msra.mxu0 0.0
  %392 = vmatpush.msra.mxu0 0.0
  %393 = vmatpush.msra.mxu0 0.0
  %394 = vmatpush.msra.mxu0 0.0
  %395 = vmatpush.msra.mxu0 0.0
  %396 = vmatpush.msra.mxu0 0.0
  %397 = vmatpush.msra.mxu0 0.0
  %398 = vmatpush.msra.mxu0 0.0
  %399 = vmatpush.msra.mxu0 %v124
  %400 = vmatpush.msra.mxu0 %v123
  %401 = vmatmul.f32.gmra.mxu0 %v383
  %v402 = vpop.f32.mrf.mxu0
  %v403 = vadd.f32 0.0, %v402
  %404 = vdwg.mxu0
  %v406 = vsel %vm335, %v14, 0
  %408 = vmatpush.msra.mxu0 0.0
  %409 = vmatpush.msra.mxu0 0.0
  %410 = vmatpush.msra.mxu0 0.0
  %411 = vmatpush.msra.mxu0 0.0
  %412 = vmatpush.msra.mxu0 0.0
  %413 = vmatpush.msra.mxu0 0.0
  %414 = vmatpush.msra.mxu0 0.0
  %415 = vmatpush.msra.mxu0 0.0
  %416 = vmatpush.msra.mxu0 0.0
  %417 = vmatpush.msra.mxu0 0.0
  %418 = vmatpush.msra.mxu0 0.0
  %419 = vmatpush.msra.mxu0 0.0
  %420 = vmatpush.msra.mxu0 0.0
  %421 = vmatpush.msra.mxu0 0.0
  %422 = vmatpush.msra.mxu0 %v126
  %423 = vmatpush.msra.mxu0 %v125
  %424 = vmatmul.f32.gmra.mxu0 %v406
  %v425 = vpop.f32.mrf.mxu0
  %v426 = vadd.f32 0.0, %v425
  %427 = vdwg.mxu0
  %v429 = vsel %vm335, %v15, 0
  %431 = vmatpush.msra.mxu0 0.0
  %432 = vmatpush.msra.mxu0 0.0
  %433 = vmatpush.msra.mxu0 0.0
  %434 = vmatpush.msra.mxu0 0.0
  %435 = vmatpush.msra.mxu0 0.0
  %436 = vmatpush.msra.mxu0 0.0
  %437 = vmatpush.msra.mxu0 0.0
  %438 = vmatpush.msra.mxu0 0.0
  %439 = vmatpush.msra.mxu0 0.0
  %440 = vmatpush.msra.mxu0 0.0
  %441 = vmatpush.msra.mxu0 0.0
  %442 = vmatpush.msra.mxu0 0.0
  %443 = vmatpush.msra.mxu0 0.0
  %444 = vmatpush.msra.mxu0 0.0
  %445 = vmatpush.msra.mxu0 %v128
  %446 = vmatpush.msra.mxu0 %v127
  %447 = vmatmul.f32.gmra.mxu0 %v429
  %v448 = vpop.f32.mrf.mxu0
  %v449 = vadd.f32 0.0, %v448
  %450 = vdwg.mxu0
  %v452 = vsel %vm335, %v16, 0
  %454 = vmatpush.msra.mxu0 0.0
  %455 = vmatpush.msra.mxu0 0.0
  %456 = vmatpush.msra.mxu0 0.0
  %457 = vmatpush.msra.mxu0 0.0
  %458 = vmatpush.msra.mxu0 0.0
  %459 = vmatpush.msra.mxu0 0.0
  %460 = vmatpush.msra.mxu0 0.0
  %461 = vmatpush.msra.mxu0 0.0
  %462 = vmatpush.msra.mxu0 0.0
  %463 = vmatpush.msra.mxu0 0.0
  %464 = vmatpush.msra.mxu0 0.0
  %465 = vmatpush.msra.mxu0 0.0
  %466 = vmatpush.msra.mxu0 0.0
  %467 = vmatpush.msra.mxu0 0.0
  %468 = vmatpush.msra.mxu0 %v130
  %469 = vmatpush.msra.mxu0 %v129
  %470 = vmatmul.f32.gmra.mxu0 %v452
  %v471 = vpop.f32.mrf.mxu0
  %v472 = vadd.f32 0.0, %v471
  %473 = vdwg.mxu0
  %v475 = vsel %vm335, %v17, 0
  %477 = vmatpush.msra.mxu0 0.0
  %478 = vmatpush.msra.mxu0 0.0
  %479 = vmatpush.msra.mxu0 0.0
  %480 = vmatpush.msra.mxu0 0.0
  %481 = vmatpush.msra.mxu0 0.0
  %482 = vmatpush.msra.mxu0 0.0
  %483 = vmatpush.msra.mxu0 0.0
  %484 = vmatpush.msra.mxu0 0.0
  %485 = vmatpush.msra.mxu0 0.0
  %486 = vmatpush.msra.mxu0 0.0
  %487 = vmatpush.msra.mxu0 0.0
  %488 = vmatpush.msra.mxu0 0.0
  %489 = vmatpush.msra.mxu0 0.0
  %490 = vmatpush.msra.mxu0 0.0
  %491 = vmatpush.msra.mxu0 %v132
  %492 = vmatpush.msra.mxu0 %v131
  %493 = vmatmul.f32.gmra.mxu0 %v475
  %v494 = vpop.f32.mrf.mxu0
  %v495 = vadd.f32 0.0, %v494
  %496 = vdwg.mxu0
  %v498 = vsel %vm335, %v18, 0
  %500 = vmatpush.msra.mxu0 0.0
  %501 = vmatpush.msra.mxu0 0.0
  %502 = vmatpush.msra.mxu0 0.0
  %503 = vmatpush.msra.mxu0 0.0
  %504 = vmatpush.msra.mxu0 0.0
  %505 = vmatpush.msra.mxu0 0.0
  %506 = vmatpush.msra.mxu0 0.0
  %507 = vmatpush.msra.mxu0 0.0
  %508 = vmatpush.msra.mxu0 0.0
  %509 = vmatpush.msra.mxu0 0.0
  %510 = vmatpush.msra.mxu0 0.0
  %511 = vmatpush.msra.mxu0 0.0
  %512 = vmatpush.msra.mxu0 0.0
  %513 = vmatpush.msra.mxu0 0.0
  %514 = vmatpush.msra.mxu0 %v134
  %515 = vmatpush.msra.mxu0 %v133
  %516 = vmatmul.f32.gmra.mxu0 %v498
  %v517 = vpop.f32.mrf.mxu0
  %v518 = vadd.f32 0.0, %v517
  %519 = vdwg.mxu0
  %v521 = vsel %vm335, %v19, 0
  %523 = vmatpush.msra.mxu0 0.0
  %524 = vmatpush.msra.mxu0 0.0
  %525 = vmatpush.msra.mxu0 0.0
  %526 = vmatpush.msra.mxu0 0.0
  %527 = vmatpush.msra.mxu0 0.0
  %528 = vmatpush.msra.mxu0 0.0
  %529 = vmatpush.msra.mxu0 0.0
  %530 = vmatpush.msra.mxu0 0.0
  %531 = vmatpush.msra.mxu0 0.0
  %532 = vmatpush.msra.mxu0 0.0
  %533 = vmatpush.msra.mxu0 0.0
  %534 = vmatpush.msra.mxu0 0.0
  %535 = vmatpush.msra.mxu0 0.0
  %536 = vmatpush.msra.mxu0 0.0
  %537 = vmatpush.msra.mxu0 %v136
  %538 = vmatpush.msra.mxu0 %v135
  %539 = vmatmul.f32.gmra.mxu0 %v521
  %v540 = vpop.f32.mrf.mxu0
  %v541 = vadd.f32 0.0, %v540
  %542 = vdwg.mxu0
  %v544 = vsel %vm335, %v20, 0
  %546 = vmatpush.msra.mxu0 0.0
  %547 = vmatpush.msra.mxu0 0.0
  %548 = vmatpush.msra.mxu0 0.0
  %549 = vmatpush.msra.mxu0 0.0
  %550 = vmatpush.msra.mxu0 0.0
  %551 = vmatpush.msra.mxu0 0.0
  %552 = vmatpush.msra.mxu0 0.0
  %553 = vmatpush.msra.mxu0 0.0
  %554 = vmatpush.msra.mxu0 0.0
  %555 = vmatpush.msra.mxu0 0.0
  %556 = vmatpush.msra.mxu0 0.0
  %557 = vmatpush.msra.mxu0 0.0
  %558 = vmatpush.msra.mxu0 0.0
  %559 = vmatpush.msra.mxu0 0.0
  %560 = vmatpush.msra.mxu0 %v138
  %561 = vmatpush.msra.mxu0 %v137
  %562 = vmatmul.f32.gmra.mxu0 %v544
  %v563 = vpop.f32.mrf.mxu0
  %v564 = vadd.f32 0.0, %v563
  %565 = vdwg.mxu0
  %v567 = vsel %vm335, %v21, 0
  %569 = vmatpush.msra.mxu0 0.0
  %570 = vmatpush.msra.mxu0 0.0
  %571 = vmatpush.msra.mxu0 0.0
  %572 = vmatpush.msra.mxu0 0.0
  %573 = vmatpush.msra.mxu0 0.0
  %574 = vmatpush.msra.mxu0 0.0
  %575 = vmatpush.msra.mxu0 0.0
  %576 = vmatpush.msra.mxu0 0.0
  %577 = vmatpush.msra.mxu0 0.0
  %578 = vmatpush.msra.mxu0 0.0
  %579 = vmatpush.msra.mxu0 0.0
  %580 = vmatpush.msra.mxu0 0.0
  %581 = vmatpush.msra.mxu0 0.0
  %582 = vmatpush.msra.mxu0 0.0
  %583 = vmatpush.msra.mxu0 %v140
  %584 = vmatpush.msra.mxu0 %v139
  %585 = vmatmul.f32.gmra.mxu0 %v567
  %v586 = vpop.f32.mrf.mxu0
  %v587 = vadd.f32 0.0, %v586
  %588 = vdwg.mxu0
  %v590 = vsel %vm335, %v22, 0
  %592 = vmatpush.msra.mxu0 0.0
  %593 = vmatpush.msra.mxu0 0.0
  %594 = vmatpush.msra.mxu0 0.0
  %595 = vmatpush.msra.mxu0 0.0
  %596 = vmatpush.msra.mxu0 0.0
  %597 = vmatpush.msra.mxu0 0.0
  %598 = vmatpush.msra.mxu0 0.0
  %599 = vmatpush.msra.mxu0 0.0
  %600 = vmatpush.msra.mxu0 0.0
  %601 = vmatpush.msra.mxu0 0.0
  %602 = vmatpush.msra.mxu0 0.0
  %603 = vmatpush.msra.mxu0 0.0
  %604 = vmatpush.msra.mxu0 0.0
  %605 = vmatpush.msra.mxu0 0.0
  %606 = vmatpush.msra.mxu0 %v142
  %607 = vmatpush.msra.mxu0 %v141
  %608 = vmatmul.f32.gmra.mxu0 %v590
  %v609 = vpop.f32.mrf.mxu0
  %v610 = vadd.f32 0.0, %v609
  %611 = vdwg.mxu0
  %v613 = vsel %vm335, %v23, 0
  %615 = vmatpush.msra.mxu0 0.0
  %616 = vmatpush.msra.mxu0 0.0
  %617 = vmatpush.msra.mxu0 0.0
  %618 = vmatpush.msra.mxu0 0.0
  %619 = vmatpush.msra.mxu0 0.0
  %620 = vmatpush.msra.mxu0 0.0
  %621 = vmatpush.msra.mxu0 0.0
  %622 = vmatpush.msra.mxu0 0.0
  %623 = vmatpush.msra.mxu0 0.0
  %624 = vmatpush.msra.mxu0 0.0
  %625 = vmatpush.msra.mxu0 0.0
  %626 = vmatpush.msra.mxu0 0.0
  %627 = vmatpush.msra.mxu0 0.0
  %628 = vmatpush.msra.mxu0 0.0
  %629 = vmatpush.msra.mxu0 %v144
  %630 = vmatpush.msra.mxu0 %v143
  %631 = vmatmul.f32.gmra.mxu0 %v613
  %v632 = vpop.f32.mrf.mxu0
  %v633 = vadd.f32 0.0, %v632
  %634 = vdwg.mxu0
  %v636 = vsel %vm335, %v24, 0
  %638 = vmatpush.msra.mxu0 0.0
  %639 = vmatpush.msra.mxu0 0.0
  %640 = vmatpush.msra.mxu0 0.0
  %641 = vmatpush.msra.mxu0 0.0
  %642 = vmatpush.msra.mxu0 0.0
  %643 = vmatpush.msra.mxu0 0.0
  %644 = vmatpush.msra.mxu0 0.0
  %645 = vmatpush.msra.mxu0 0.0
  %646 = vmatpush.msra.mxu0 0.0
  %647 = vmatpush.msra.mxu0 0.0
  %648 = vmatpush.msra.mxu0 0.0
  %649 = vmatpush.msra.mxu0 0.0
  %650 = vmatpush.msra.mxu0 0.0
  %651 = vmatpush.msra.mxu0 0.0
  %652 = vmatpush.msra.mxu0 %v146
  %653 = vmatpush.msra.mxu0 %v145
  %654 = vmatmul.f32.gmra.mxu0 %v636
  %v655 = vpop.f32.mrf.mxu0
  %v656 = vadd.f32 0.0, %v655
  %657 = vdwg.mxu0
  %v659 = vsel %vm335, %v25, 0
  %661 = vmatpush.msra.mxu0 0.0
  %662 = vmatpush.msra.mxu0 0.0
  %663 = vmatpush.msra.mxu0 0.0
  %664 = vmatpush.msra.mxu0 0.0
  %665 = vmatpush.msra.mxu0 0.0
  %666 = vmatpush.msra.mxu0 0.0
  %667 = vmatpush.msra.mxu0 0.0
  %668 = vmatpush.msra.mxu0 0.0
  %669 = vmatpush.msra.mxu0 0.0
  %670 = vmatpush.msra.mxu0 0.0
  %671 = vmatpush.msra.mxu0 0.0
  %672 = vmatpush.msra.mxu0 0.0
  %673 = vmatpush.msra.mxu0 0.0
  %674 = vmatpush.msra.mxu0 0.0
  %675 = vmatpush.msra.mxu0 %v148
  %676 = vmatpush.msra.mxu0 %v147
  %677 = vmatmul.f32.gmra.mxu0 %v659
  %v678 = vpop.f32.mrf.mxu0
  %v679 = vadd.f32 0.0, %v678
  %680 = vdwg.mxu0
  %v682 = vsel %vm335, %v26, 0
  %684 = vmatpush.msra.mxu0 0.0
  %685 = vmatpush.msra.mxu0 0.0
  %686 = vmatpush.msra.mxu0 0.0
  %687 = vmatpush.msra.mxu0 0.0
  %688 = vmatpush.msra.mxu0 0.0
  %689 = vmatpush.msra.mxu0 0.0
  %690 = vmatpush.msra.mxu0 0.0
  %691 = vmatpush.msra.mxu0 0.0
  %692 = vmatpush.msra.mxu0 0.0
  %693 = vmatpush.msra.mxu0 0.0
  %694 = vmatpush.msra.mxu0 0.0
  %695 = vmatpush.msra.mxu0 0.0
  %696 = vmatpush.msra.mxu0 0.0
  %697 = vmatpush.msra.mxu0 0.0
  %698 = vmatpush.msra.mxu0 %v150
  %699 = vmatpush.msra.mxu0 %v149
  %700 = vmatmul.f32.gmra.mxu0 %v682
  %v701 = vpop.f32.mrf.mxu0
  %v702 = vadd.f32 0.0, %v701
  %703 = vdwg.mxu0
  %v705 = vsel %vm335, %v27, 0
  %707 = vmatpush.msra.mxu0 0.0
  %708 = vmatpush.msra.mxu0 0.0
  %709 = vmatpush.msra.mxu0 0.0
  %710 = vmatpush.msra.mxu0 0.0
  %711 = vmatpush.msra.mxu0 0.0
  %712 = vmatpush.msra.mxu0 0.0
  %713 = vmatpush.msra.mxu0 0.0
  %714 = vmatpush.msra.mxu0 0.0
  %715 = vmatpush.msra.mxu0 0.0
  %716 = vmatpush.msra.mxu0 0.0
  %717 = vmatpush.msra.mxu0 0.0
  %718 = vmatpush.msra.mxu0 0.0
  %719 = vmatpush.msra.mxu0 0.0
  %720 = vmatpush.msra.mxu0 0.0
  %721 = vmatpush.msra.mxu0 %v152
  %722 = vmatpush.msra.mxu0 %v151
  %723 = vmatmul.f32.gmra.mxu0 %v705
  %v724 = vpop.f32.mrf.mxu0
  %v725 = vadd.f32 0.0, %v724
  %726 = vdwg.mxu0
  %v728 = vsel %vm335, %v28, 0
  %730 = vmatpush.msra.mxu0 0.0
  %731 = vmatpush.msra.mxu0 0.0
  %732 = vmatpush.msra.mxu0 0.0
  %733 = vmatpush.msra.mxu0 0.0
  %734 = vmatpush.msra.mxu0 0.0
  %735 = vmatpush.msra.mxu0 0.0
  %736 = vmatpush.msra.mxu0 0.0
  %737 = vmatpush.msra.mxu0 0.0
  %738 = vmatpush.msra.mxu0 0.0
  %739 = vmatpush.msra.mxu0 0.0
  %740 = vmatpush.msra.mxu0 0.0
  %741 = vmatpush.msra.mxu0 0.0
  %742 = vmatpush.msra.mxu0 0.0
  %743 = vmatpush.msra.mxu0 0.0
  %744 = vmatpush.msra.mxu0 %v154
  %745 = vmatpush.msra.mxu0 %v153
  %746 = vmatmul.f32.gmra.mxu0 %v728
  %v747 = vpop.f32.mrf.mxu0
  %v748 = vadd.f32 0.0, %v747
  %749 = vdwg.mxu0
  %v751 = vsel %vm335, %v29, 0
  %753 = vmatpush.msra.mxu0 0.0
  %754 = vmatpush.msra.mxu0 0.0
  %755 = vmatpush.msra.mxu0 0.0
  %756 = vmatpush.msra.mxu0 0.0
  %757 = vmatpush.msra.mxu0 0.0
  %758 = vmatpush.msra.mxu0 0.0
  %759 = vmatpush.msra.mxu0 0.0
  %760 = vmatpush.msra.mxu0 0.0
  %761 = vmatpush.msra.mxu0 0.0
  %762 = vmatpush.msra.mxu0 0.0
  %763 = vmatpush.msra.mxu0 0.0
  %764 = vmatpush.msra.mxu0 0.0
  %765 = vmatpush.msra.mxu0 0.0
  %766 = vmatpush.msra.mxu0 0.0
  %767 = vmatpush.msra.mxu0 %v156
  %768 = vmatpush.msra.mxu0 %v155
  %769 = vmatmul.f32.gmra.mxu0 %v751
  %v770 = vpop.f32.mrf.mxu0
  %v771 = vadd.f32 0.0, %v770
  %772 = vdwg.mxu0
  %v774 = vsel %vm335, %v30, 0
  %776 = vmatpush.msra.mxu0 0.0
  %777 = vmatpush.msra.mxu0 0.0
  %778 = vmatpush.msra.mxu0 0.0
  %779 = vmatpush.msra.mxu0 0.0
  %780 = vmatpush.msra.mxu0 0.0
  %781 = vmatpush.msra.mxu0 0.0
  %782 = vmatpush.msra.mxu0 0.0
  %783 = vmatpush.msra.mxu0 0.0
  %784 = vmatpush.msra.mxu0 0.0
  %785 = vmatpush.msra.mxu0 0.0
  %786 = vmatpush.msra.mxu0 0.0
  %787 = vmatpush.msra.mxu0 0.0
  %788 = vmatpush.msra.mxu0 0.0
  %789 = vmatpush.msra.mxu0 0.0
  %790 = vmatpush.msra.mxu0 %v158
  %791 = vmatpush.msra.mxu0 %v157
  %792 = vmatmul.f32.gmra.mxu0 %v774
  %v793 = vpop.f32.mrf.mxu0
  %v794 = vadd.f32 0.0, %v793
  %795 = vdwg.mxu0
  %v797 = vsel %vm335, %v31, 0
  %799 = vmatpush.msra.mxu0 0.0
  %800 = vmatpush.msra.mxu0 0.0
  %801 = vmatpush.msra.mxu0 0.0
  %802 = vmatpush.msra.mxu0 0.0
  %803 = vmatpush.msra.mxu0 0.0
  %804 = vmatpush.msra.mxu0 0.0
  %805 = vmatpush.msra.mxu0 0.0
  %806 = vmatpush.msra.mxu0 0.0
  %807 = vmatpush.msra.mxu0 0.0
  %808 = vmatpush.msra.mxu0 0.0
  %809 = vmatpush.msra.mxu0 0.0
  %810 = vmatpush.msra.mxu0 0.0
  %811 = vmatpush.msra.mxu0 0.0
  %812 = vmatpush.msra.mxu0 0.0
  %813 = vmatpush.msra.mxu0 %v160
  %814 = vmatpush.msra.mxu0 %v159
  %815 = vmatmul.f32.gmra.mxu0 %v797
  %v816 = vpop.f32.mrf.mxu0
  %v817 = vadd.f32 0.0, %v816
  %818 = vdwg.mxu0
  %v820 = vsel %vm335, %v32, 0
  %822 = vmatpush.msra.mxu0 0.0
  %823 = vmatpush.msra.mxu0 0.0
  %824 = vmatpush.msra.mxu0 0.0
  %825 = vmatpush.msra.mxu0 0.0
  %826 = vmatpush.msra.mxu0 0.0
  %827 = vmatpush.msra.mxu0 0.0
  %828 = vmatpush.msra.mxu0 0.0
  %829 = vmatpush.msra.mxu0 0.0
  %830 = vmatpush.msra.mxu0 0.0
  %831 = vmatpush.msra.mxu0 0.0
  %832 = vmatpush.msra.mxu0 0.0
  %833 = vmatpush.msra.mxu0 0.0
  %834 = vmatpush.msra.mxu0 0.0
  %835 = vmatpush.msra.mxu0 0.0
  %836 = vmatpush.msra.mxu0 %v162
  %837 = vmatpush.msra.mxu0 %v161
  %838 = vmatmul.f32.gmra.mxu0 %v820
  %v839 = vpop.f32.mrf.mxu0
  %v840 = vadd.f32 0.0, %v839
  %841 = vdwg.mxu0
  %v843 = vsel %vm335, %v33, 0
  %845 = vmatpush.msra.mxu0 0.0
  %846 = vmatpush.msra.mxu0 0.0
  %847 = vmatpush.msra.mxu0 0.0
  %848 = vmatpush.msra.mxu0 0.0
  %849 = vmatpush.msra.mxu0 0.0
  %850 = vmatpush.msra.mxu0 0.0
  %851 = vmatpush.msra.mxu0 0.0
  %852 = vmatpush.msra.mxu0 0.0
  %853 = vmatpush.msra.mxu0 0.0
  %854 = vmatpush.msra.mxu0 0.0
  %855 = vmatpush.msra.mxu0 0.0
  %856 = vmatpush.msra.mxu0 0.0
  %857 = vmatpush.msra.mxu0 0.0
  %858 = vmatpush.msra.mxu0 0.0
  %859 = vmatpush.msra.mxu0 %v164
  %860 = vmatpush.msra.mxu0 %v163
  %861 = vmatmul.f32.gmra.mxu0 %v843
  %v862 = vpop.f32.mrf.mxu0
  %v863 = vadd.f32 0.0, %v862
  %864 = vdwg.mxu0
  %v866 = vsel %vm335, %v34, 0
  %868 = vmatpush.msra.mxu0 0.0
  %869 = vmatpush.msra.mxu0 0.0
  %870 = vmatpush.msra.mxu0 0.0
  %871 = vmatpush.msra.mxu0 0.0
  %872 = vmatpush.msra.mxu0 0.0
  %873 = vmatpush.msra.mxu0 0.0
  %874 = vmatpush.msra.mxu0 0.0
  %875 = vmatpush.msra.mxu0 0.0
  %876 = vmatpush.msra.mxu0 0.0
  %877 = vmatpush.msra.mxu0 0.0
  %878 = vmatpush.msra.mxu0 0.0
  %879 = vmatpush.msra.mxu0 0.0
  %880 = vmatpush.msra.mxu0 0.0
  %881 = vmatpush.msra.mxu0 0.0
  %882 = vmatpush.msra.mxu0 %v166
  %883 = vmatpush.msra.mxu0 %v165
  %884 = vmatmul.f32.gmra.mxu0 %v866
  %v885 = vpop.f32.mrf.mxu0
  %v886 = vadd.f32 0.0, %v885
  %887 = vdwg.mxu0
  %v889 = vsel %vm335, %v35, 0
  %891 = vmatpush.msra.mxu0 0.0
  %892 = vmatpush.msra.mxu0 0.0
  %893 = vmatpush.msra.mxu0 0.0
  %894 = vmatpush.msra.mxu0 0.0
  %895 = vmatpush.msra.mxu0 0.0
  %896 = vmatpush.msra.mxu0 0.0
  %897 = vmatpush.msra.mxu0 0.0
  %898 = vmatpush.msra.mxu0 0.0
  %899 = vmatpush.msra.mxu0 0.0
  %900 = vmatpush.msra.mxu0 0.0
  %901 = vmatpush.msra.mxu0 0.0
  %902 = vmatpush.msra.mxu0 0.0
  %903 = vmatpush.msra.mxu0 0.0
  %904 = vmatpush.msra.mxu0 0.0
  %905 = vmatpush.msra.mxu0 %v168
  %906 = vmatpush.msra.mxu0 %v167
  %907 = vmatmul.f32.gmra.mxu0 %v889
  %v908 = vpop.f32.mrf.mxu0
  %v909 = vadd.f32 0.0, %v908
  %910 = vdwg.mxu0
  %v912 = vsel %vm335, %v36, 0
  %914 = vmatpush.msra.mxu0 0.0
  %915 = vmatpush.msra.mxu0 0.0
  %916 = vmatpush.msra.mxu0 0.0
  %917 = vmatpush.msra.mxu0 0.0
  %918 = vmatpush.msra.mxu0 0.0
  %919 = vmatpush.msra.mxu0 0.0
  %920 = vmatpush.msra.mxu0 0.0
  %921 = vmatpush.msra.mxu0 0.0
  %922 = vmatpush.msra.mxu0 0.0
  %923 = vmatpush.msra.mxu0 0.0
  %924 = vmatpush.msra.mxu0 0.0
  %925 = vmatpush.msra.mxu0 0.0
  %926 = vmatpush.msra.mxu0 0.0
  %927 = vmatpush.msra.mxu0 0.0
  %928 = vmatpush.msra.mxu0 %v170
  %929 = vmatpush.msra.mxu0 %v169
  %930 = vmatmul.f32.gmra.mxu0 %v912
  %v931 = vpop.f32.mrf.mxu0
  %v932 = vadd.f32 0.0, %v931
  %933 = vdwg.mxu0
  %v935 = vsel %vm335, %v37, 0
  %937 = vmatpush.msra.mxu0 0.0
  %938 = vmatpush.msra.mxu0 0.0
  %939 = vmatpush.msra.mxu0 0.0
  %940 = vmatpush.msra.mxu0 0.0
  %941 = vmatpush.msra.mxu0 0.0
  %942 = vmatpush.msra.mxu0 0.0
  %943 = vmatpush.msra.mxu0 0.0
  %944 = vmatpush.msra.mxu0 0.0
  %945 = vmatpush.msra.mxu0 0.0
  %946 = vmatpush.msra.mxu0 0.0
  %947 = vmatpush.msra.mxu0 0.0
  %948 = vmatpush.msra.mxu0 0.0
  %949 = vmatpush.msra.mxu0 0.0
  %950 = vmatpush.msra.mxu0 0.0
  %951 = vmatpush.msra.mxu0 %v172
  %952 = vmatpush.msra.mxu0 %v171
  %953 = vmatmul.f32.gmra.mxu0 %v935
  %v954 = vpop.f32.mrf.mxu0
  %v955 = vadd.f32 0.0, %v954
  %956 = vdwg.mxu0
  %v958 = vsel %vm335, %v38, 0
  %960 = vmatpush.msra.mxu0 0.0
  %961 = vmatpush.msra.mxu0 0.0
  %962 = vmatpush.msra.mxu0 0.0
  %963 = vmatpush.msra.mxu0 0.0
  %964 = vmatpush.msra.mxu0 0.0
  %965 = vmatpush.msra.mxu0 0.0
  %966 = vmatpush.msra.mxu0 0.0
  %967 = vmatpush.msra.mxu0 0.0
  %968 = vmatpush.msra.mxu0 0.0
  %969 = vmatpush.msra.mxu0 0.0
  %970 = vmatpush.msra.mxu0 0.0
  %971 = vmatpush.msra.mxu0 0.0
  %972 = vmatpush.msra.mxu0 0.0
  %973 = vmatpush.msra.mxu0 0.0
  %974 = vmatpush.msra.mxu0 %v174
  %975 = vmatpush.msra.mxu0 %v173
  %976 = vmatmul.f32.gmra.mxu0 %v958
  %v977 = vpop.f32.mrf.mxu0
  %v978 = vadd.f32 0.0, %v977
  %979 = vdwg.mxu0
  %v981 = vsel %vm335, %v39, 0
  %983 = vmatpush.msra.mxu0 0.0
  %984 = vmatpush.msra.mxu0 0.0
  %985 = vmatpush.msra.mxu0 0.0
  %986 = vmatpush.msra.mxu0 0.0
  %987 = vmatpush.msra.mxu0 0.0
  %988 = vmatpush.msra.mxu0 0.0
  %989 = vmatpush.msra.mxu0 0.0
  %990 = vmatpush.msra.mxu0 0.0
  %991 = vmatpush.msra.mxu0 0.0
  %992 = vmatpush.msra.mxu0 0.0
  %993 = vmatpush.msra.mxu0 0.0
  %994 = vmatpush.msra.mxu0 0.0
  %995 = vmatpush.msra.mxu0 0.0
  %996 = vmatpush.msra.mxu0 0.0
  %997 = vmatpush.msra.mxu0 %v176
  %998 = vmatpush.msra.mxu0 %v175
  %999 = vmatmul.f32.gmra.mxu0 %v981
  %v1000 = vpop.f32.mrf.mxu0
  %v1001 = vadd.f32 0.0, %v1000
  %1002 = vdwg.mxu0
  %v1004 = vsel %vm335, %v40, 0
  %1006 = vmatpush.msra.mxu0 0.0
  %1007 = vmatpush.msra.mxu0 0.0
  %1008 = vmatpush.msra.mxu0 0.0
  %1009 = vmatpush.msra.mxu0 0.0
  %1010 = vmatpush.msra.mxu0 0.0
  %1011 = vmatpush.msra.mxu0 0.0
  %1012 = vmatpush.msra.mxu0 0.0
  %1013 = vmatpush.msra.mxu0 0.0
  %1014 = vmatpush.msra.mxu0 0.0
  %1015 = vmatpush.msra.mxu0 0.0
  %1016 = vmatpush.msra.mxu0 0.0
  %1017 = vmatpush.msra.mxu0 0.0
  %1018 = vmatpush.msra.mxu0 0.0
  %1019 = vmatpush.msra.mxu0 0.0
  %1020 = vmatpush.msra.mxu0 %v178
  %1021 = vmatpush.msra.mxu0 %v177
  %1022 = vmatmul.f32.gmra.mxu0 %v1004
  %v1023 = vpop.f32.mrf.mxu0
  %v1024 = vadd.f32 0.0, %v1023
  %1025 = vdwg.mxu0
  %v1027 = vsel %vm335, %v41, 0
  %1029 = vmatpush.msra.mxu0 0.0
  %1030 = vmatpush.msra.mxu0 0.0
  %1031 = vmatpush.msra.mxu0 0.0
  %1032 = vmatpush.msra.mxu0 0.0
  %1033 = vmatpush.msra.mxu0 0.0
  %1034 = vmatpush.msra.mxu0 0.0
  %1035 = vmatpush.msra.mxu0 0.0
  %1036 = vmatpush.msra.mxu0 0.0
  %1037 = vmatpush.msra.mxu0 0.0
  %1038 = vmatpush.msra.mxu0 0.0
  %1039 = vmatpush.msra.mxu0 0.0
  %1040 = vmatpush.msra.mxu0 0.0
  %1041 = vmatpush.msra.mxu0 0.0
  %1042 = vmatpush.msra.mxu0 0.0
  %1043 = vmatpush.msra.mxu0 %v180
  %1044 = vmatpush.msra.mxu0 %v179
  %1045 = vmatmul.f32.gmra.mxu0 %v1027
  %v1046 = vpop.f32.mrf.mxu0
  %v1047 = vadd.f32 0.0, %v1046
  %1048 = vdwg.mxu0
  %v1050 = vsel %vm335, %v42, 0
  %1052 = vmatpush.msra.mxu0 0.0
  %1053 = vmatpush.msra.mxu0 0.0
  %1054 = vmatpush.msra.mxu0 0.0
  %1055 = vmatpush.msra.mxu0 0.0
  %1056 = vmatpush.msra.mxu0 0.0
  %1057 = vmatpush.msra.mxu0 0.0
  %1058 = vmatpush.msra.mxu0 0.0
  %1059 = vmatpush.msra.mxu0 0.0
  %1060 = vmatpush.msra.mxu0 0.0
  %1061 = vmatpush.msra.mxu0 0.0
  %1062 = vmatpush.msra.mxu0 0.0
  %1063 = vmatpush.msra.mxu0 0.0
  %1064 = vmatpush.msra.mxu0 0.0
  %1065 = vmatpush.msra.mxu0 0.0
  %1066 = vmatpush.msra.mxu0 %v182
  %1067 = vmatpush.msra.mxu0 %v181
  %1068 = vmatmul.f32.gmra.mxu0 %v1050
  %v1069 = vpop.f32.mrf.mxu0
  %v1070 = vadd.f32 0.0, %v1069
  %1071 = vdwg.mxu0
  %v1073 = vsel %vm335, %v43, 0
  %1075 = vmatpush.msra.mxu0 0.0
  %1076 = vmatpush.msra.mxu0 0.0
  %1077 = vmatpush.msra.mxu0 0.0
  %1078 = vmatpush.msra.mxu0 0.0
  %1079 = vmatpush.msra.mxu0 0.0
  %1080 = vmatpush.msra.mxu0 0.0
  %1081 = vmatpush.msra.mxu0 0.0
  %1082 = vmatpush.msra.mxu0 0.0
  %1083 = vmatpush.msra.mxu0 0.0
  %1084 = vmatpush.msra.mxu0 0.0
  %1085 = vmatpush.msra.mxu0 0.0
  %1086 = vmatpush.msra.mxu0 0.0
  %1087 = vmatpush.msra.mxu0 0.0
  %1088 = vmatpush.msra.mxu0 0.0
  %1089 = vmatpush.msra.mxu0 %v184
  %1090 = vmatpush.msra.mxu0 %v183
  %1091 = vmatmul.f32.gmra.mxu0 %v1073
  %v1092 = vpop.f32.mrf.mxu0
  %v1093 = vadd.f32 0.0, %v1092
  %1094 = vdwg.mxu0
  %v1096 = vsel %vm335, %v44, 0
  %1098 = vmatpush.msra.mxu0 0.0
  %1099 = vmatpush.msra.mxu0 0.0
  %1100 = vmatpush.msra.mxu0 0.0
  %1101 = vmatpush.msra.mxu0 0.0
  %1102 = vmatpush.msra.mxu0 0.0
  %1103 = vmatpush.msra.mxu0 0.0
  %1104 = vmatpush.msra.mxu0 0.0
  %1105 = vmatpush.msra.mxu0 0.0
  %1106 = vmatpush.msra.mxu0 0.0
  %1107 = vmatpush.msra.mxu0 0.0
  %1108 = vmatpush.msra.mxu0 0.0
  %1109 = vmatpush.msra.mxu0 0.0
  %1110 = vmatpush.msra.mxu0 0.0
  %1111 = vmatpush.msra.mxu0 0.0
  %1112 = vmatpush.msra.mxu0 %v186
  %1113 = vmatpush.msra.mxu0 %v185
  %1114 = vmatmul.f32.gmra.mxu0 %v1096
  %v1115 = vpop.f32.mrf.mxu0
  %v1116 = vadd.f32 0.0, %v1115
  %1117 = vdwg.mxu0
  %v1119 = vsel %vm335, %v45, 0
  %1121 = vmatpush.msra.mxu0 0.0
  %1122 = vmatpush.msra.mxu0 0.0
  %1123 = vmatpush.msra.mxu0 0.0
  %1124 = vmatpush.msra.mxu0 0.0
  %1125 = vmatpush.msra.mxu0 0.0
  %1126 = vmatpush.msra.mxu0 0.0
  %1127 = vmatpush.msra.mxu0 0.0
  %1128 = vmatpush.msra.mxu0 0.0
  %1129 = vmatpush.msra.mxu0 0.0
  %1130 = vmatpush.msra.mxu0 0.0
  %1131 = vmatpush.msra.mxu0 0.0
  %1132 = vmatpush.msra.mxu0 0.0
  %1133 = vmatpush.msra.mxu0 0.0
  %1134 = vmatpush.msra.mxu0 0.0
  %1135 = vmatpush.msra.mxu0 %v188
  %1136 = vmatpush.msra.mxu0 %v187
  %1137 = vmatmul.f32.gmra.mxu0 %v1119
  %v1138 = vpop.f32.mrf.mxu0
  %v1139 = vadd.f32 0.0, %v1138
  %1140 = vdwg.mxu0
  %v1142 = vsel %vm335, %v46, 0
  %1144 = vmatpush.msra.mxu0 0.0
  %1145 = vmatpush.msra.mxu0 0.0
  %1146 = vmatpush.msra.mxu0 0.0
  %1147 = vmatpush.msra.mxu0 0.0
  %1148 = vmatpush.msra.mxu0 0.0
  %1149 = vmatpush.msra.mxu0 0.0
  %1150 = vmatpush.msra.mxu0 0.0
  %1151 = vmatpush.msra.mxu0 0.0
  %1152 = vmatpush.msra.mxu0 0.0
  %1153 = vmatpush.msra.mxu0 0.0
  %1154 = vmatpush.msra.mxu0 0.0
  %1155 = vmatpush.msra.mxu0 0.0
  %1156 = vmatpush.msra.mxu0 0.0
  %1157 = vmatpush.msra.mxu0 0.0
  %1158 = vmatpush.msra.mxu0 %v190
  %1159 = vmatpush.msra.mxu0 %v189
  %1160 = vmatmul.f32.gmra.mxu0 %v1142
  %v1161 = vpop.f32.mrf.mxu0
  %v1162 = vadd.f32 0.0, %v1161
  %1163 = vdwg.mxu0
  %v1165 = vsel %vm335, %v47, 0
  %1167 = vmatpush.msra.mxu0 0.0
  %1168 = vmatpush.msra.mxu0 0.0
  %1169 = vmatpush.msra.mxu0 0.0
  %1170 = vmatpush.msra.mxu0 0.0
  %1171 = vmatpush.msra.mxu0 0.0
  %1172 = vmatpush.msra.mxu0 0.0
  %1173 = vmatpush.msra.mxu0 0.0
  %1174 = vmatpush.msra.mxu0 0.0
  %1175 = vmatpush.msra.mxu0 0.0
  %1176 = vmatpush.msra.mxu0 0.0
  %1177 = vmatpush.msra.mxu0 0.0
  %1178 = vmatpush.msra.mxu0 0.0
  %1179 = vmatpush.msra.mxu0 0.0
  %1180 = vmatpush.msra.mxu0 0.0
  %1181 = vmatpush.msra.mxu0 %v192
  %1182 = vmatpush.msra.mxu0 %v191
  %1183 = vmatmul.f32.gmra.mxu0 %v1165
  %v1184 = vpop.f32.mrf.mxu0
  %v1185 = vadd.f32 0.0, %v1184
  %1186 = vdwg.mxu0
  %v1188 = vsel %vm335, %v48, 0
  %1190 = vmatpush.msra.mxu0 0.0
  %1191 = vmatpush.msra.mxu0 0.0
  %1192 = vmatpush.msra.mxu0 0.0
  %1193 = vmatpush.msra.mxu0 0.0
  %1194 = vmatpush.msra.mxu0 0.0
  %1195 = vmatpush.msra.mxu0 0.0
  %1196 = vmatpush.msra.mxu0 0.0
  %1197 = vmatpush.msra.mxu0 0.0
  %1198 = vmatpush.msra.mxu0 0.0
  %1199 = vmatpush.msra.mxu0 0.0
  %1200 = vmatpush.msra.mxu0 0.0
  %1201 = vmatpush.msra.mxu0 0.0
  %1202 = vmatpush.msra.mxu0 0.0
  %1203 = vmatpush.msra.mxu0 0.0
  %1204 = vmatpush.msra.mxu0 %v194
  %1205 = vmatpush.msra.mxu0 %v193
  %1206 = vmatmul.f32.gmra.mxu0 %v1188
  %v1207 = vpop.f32.mrf.mxu0
  %v1208 = vadd.f32 0.0, %v1207
  %1209 = vdwg.mxu0
  %v1211 = vsel %vm335, %v49, 0
  %1213 = vmatpush.msra.mxu0 0.0
  %1214 = vmatpush.msra.mxu0 0.0
  %1215 = vmatpush.msra.mxu0 0.0
  %1216 = vmatpush.msra.mxu0 0.0
  %1217 = vmatpush.msra.mxu0 0.0
  %1218 = vmatpush.msra.mxu0 0.0
  %1219 = vmatpush.msra.mxu0 0.0
  %1220 = vmatpush.msra.mxu0 0.0
  %1221 = vmatpush.msra.mxu0 0.0
  %1222 = vmatpush.msra.mxu0 0.0
  %1223 = vmatpush.msra.mxu0 0.0
  %1224 = vmatpush.msra.mxu0 0.0
  %1225 = vmatpush.msra.mxu0 0.0
  %1226 = vmatpush.msra.mxu0 0.0
  %1227 = vmatpush.msra.mxu0 %v196
  %1228 = vmatpush.msra.mxu0 %v195
  %1229 = vmatmul.f32.gmra.mxu0 %v1211
  %v1230 = vpop.f32.mrf.mxu0
  %v1231 = vadd.f32 0.0, %v1230
  %1232 = vdwg.mxu0
  %v1234 = vsel %vm335, %v50, 0
  %1236 = vmatpush.msra.mxu0 0.0
  %1237 = vmatpush.msra.mxu0 0.0
  %1238 = vmatpush.msra.mxu0 0.0
  %1239 = vmatpush.msra.mxu0 0.0
  %1240 = vmatpush.msra.mxu0 0.0
  %1241 = vmatpush.msra.mxu0 0.0
  %1242 = vmatpush.msra.mxu0 0.0
  %1243 = vmatpush.msra.mxu0 0.0
  %1244 = vmatpush.msra.mxu0 0.0
  %1245 = vmatpush.msra.mxu0 0.0
  %1246 = vmatpush.msra.mxu0 0.0
  %1247 = vmatpush.msra.mxu0 0.0
  %1248 = vmatpush.msra.mxu0 0.0
  %1249 = vmatpush.msra.mxu0 0.0
  %1250 = vmatpush.msra.mxu0 %v198
  %1251 = vmatpush.msra.mxu0 %v197
  %1252 = vmatmul.f32.gmra.mxu0 %v1234
  %v1253 = vpop.f32.mrf.mxu0
  %v1254 = vadd.f32 0.0, %v1253
  %1255 = vdwg.mxu0
  %v1257 = vsel %vm335, %v51, 0
  %1259 = vmatpush.msra.mxu0 0.0
  %1260 = vmatpush.msra.mxu0 0.0
  %1261 = vmatpush.msra.mxu0 0.0
  %1262 = vmatpush.msra.mxu0 0.0
  %1263 = vmatpush.msra.mxu0 0.0
  %1264 = vmatpush.msra.mxu0 0.0
  %1265 = vmatpush.msra.mxu0 0.0
  %1266 = vmatpush.msra.mxu0 0.0
  %1267 = vmatpush.msra.mxu0 0.0
  %1268 = vmatpush.msra.mxu0 0.0
  %1269 = vmatpush.msra.mxu0 0.0
  %1270 = vmatpush.msra.mxu0 0.0
  %1271 = vmatpush.msra.mxu0 0.0
  %1272 = vmatpush.msra.mxu0 0.0
  %1273 = vmatpush.msra.mxu0 %v200
  %1274 = vmatpush.msra.mxu0 %v199
  %1275 = vmatmul.f32.gmra.mxu0 %v1257
  %v1276 = vpop.f32.mrf.mxu0
  %v1277 = vadd.f32 0.0, %v1276
  %1278 = vdwg.mxu0
  %v1280 = vsel %vm335, %v52, 0
  %1282 = vmatpush.msra.mxu0 0.0
  %1283 = vmatpush.msra.mxu0 0.0
  %1284 = vmatpush.msra.mxu0 0.0
  %1285 = vmatpush.msra.mxu0 0.0
  %1286 = vmatpush.msra.mxu0 0.0
  %1287 = vmatpush.msra.mxu0 0.0
  %1288 = vmatpush.msra.mxu0 0.0
  %1289 = vmatpush.msra.mxu0 0.0
  %1290 = vmatpush.msra.mxu0 0.0
  %1291 = vmatpush.msra.mxu0 0.0
  %1292 = vmatpush.msra.mxu0 0.0
  %1293 = vmatpush.msra.mxu0 0.0
  %1294 = vmatpush.msra.mxu0 0.0
  %1295 = vmatpush.msra.mxu0 0.0
  %1296 = vmatpush.msra.mxu0 %v202
  %1297 = vmatpush.msra.mxu0 %v201
  %1298 = vmatmul.f32.gmra.mxu0 %v1280
  %v1299 = vpop.f32.mrf.mxu0
  %v1300 = vadd.f32 0.0, %v1299
  %1301 = vdwg.mxu0
  %v1303 = vsel %vm335, %v53, 0
  %1305 = vmatpush.msra.mxu0 0.0
  %1306 = vmatpush.msra.mxu0 0.0
  %1307 = vmatpush.msra.mxu0 0.0
  %1308 = vmatpush.msra.mxu0 0.0
  %1309 = vmatpush.msra.mxu0 0.0
  %1310 = vmatpush.msra.mxu0 0.0
  %1311 = vmatpush.msra.mxu0 0.0
  %1312 = vmatpush.msra.mxu0 0.0
  %1313 = vmatpush.msra.mxu0 0.0
  %1314 = vmatpush.msra.mxu0 0.0
  %1315 = vmatpush.msra.mxu0 0.0
  %1316 = vmatpush.msra.mxu0 0.0
  %1317 = vmatpush.msra.mxu0 0.0
  %1318 = vmatpush.msra.mxu0 0.0
  %1319 = vmatpush.msra.mxu0 %v204
  %1320 = vmatpush.msra.mxu0 %v203
  %1321 = vmatmul.f32.gmra.mxu0 %v1303
  %v1322 = vpop.f32.mrf.mxu0
  %v1323 = vadd.f32 0.0, %v1322
  %1324 = vdwg.mxu0
  %v1326 = vsel %vm335, %v54, 0
  %1328 = vmatpush.msra.mxu0 0.0
  %1329 = vmatpush.msra.mxu0 0.0
  %1330 = vmatpush.msra.mxu0 0.0
  %1331 = vmatpush.msra.mxu0 0.0
  %1332 = vmatpush.msra.mxu0 0.0
  %1333 = vmatpush.msra.mxu0 0.0
  %1334 = vmatpush.msra.mxu0 0.0
  %1335 = vmatpush.msra.mxu0 0.0
  %1336 = vmatpush.msra.mxu0 0.0
  %1337 = vmatpush.msra.mxu0 0.0
  %1338 = vmatpush.msra.mxu0 0.0
  %1339 = vmatpush.msra.mxu0 0.0
  %1340 = vmatpush.msra.mxu0 0.0
  %1341 = vmatpush.msra.mxu0 0.0
  %1342 = vmatpush.msra.mxu0 %v206
  %1343 = vmatpush.msra.mxu0 %v205
  %1344 = vmatmul.f32.gmra.mxu0 %v1326
  %v1345 = vpop.f32.mrf.mxu0
  %v1346 = vadd.f32 0.0, %v1345
  %1347 = vdwg.mxu0
  %v1349 = vsel %vm335, %v55, 0
  %1351 = vmatpush.msra.mxu0 0.0
  %1352 = vmatpush.msra.mxu0 0.0
  %1353 = vmatpush.msra.mxu0 0.0
  %1354 = vmatpush.msra.mxu0 0.0
  %1355 = vmatpush.msra.mxu0 0.0
  %1356 = vmatpush.msra.mxu0 0.0
  %1357 = vmatpush.msra.mxu0 0.0
  %1358 = vmatpush.msra.mxu0 0.0
  %1359 = vmatpush.msra.mxu0 0.0
  %1360 = vmatpush.msra.mxu0 0.0
  %1361 = vmatpush.msra.mxu0 0.0
  %1362 = vmatpush.msra.mxu0 0.0
  %1363 = vmatpush.msra.mxu0 0.0
  %1364 = vmatpush.msra.mxu0 0.0
  %1365 = vmatpush.msra.mxu0 %v208
  %1366 = vmatpush.msra.mxu0 %v207
  %1367 = vmatmul.f32.gmra.mxu0 %v1349
  %v1368 = vpop.f32.mrf.mxu0
  %v1369 = vadd.f32 0.0, %v1368
  %1370 = vdwg.mxu0
  %v1372 = vsel %vm335, %v56, 0
  %1374 = vmatpush.msra.mxu0 0.0
  %1375 = vmatpush.msra.mxu0 0.0
  %1376 = vmatpush.msra.mxu0 0.0
  %1377 = vmatpush.msra.mxu0 0.0
  %1378 = vmatpush.msra.mxu0 0.0
  %1379 = vmatpush.msra.mxu0 0.0
  %1380 = vmatpush.msra.mxu0 0.0
  %1381 = vmatpush.msra.mxu0 0.0
  %1382 = vmatpush.msra.mxu0 0.0
  %1383 = vmatpush.msra.mxu0 0.0
  %1384 = vmatpush.msra.mxu0 0.0
  %1385 = vmatpush.msra.mxu0 0.0
  %1386 = vmatpush.msra.mxu0 0.0
  %1387 = vmatpush.msra.mxu0 0.0
  %1388 = vmatpush.msra.mxu0 %v210
  %1389 = vmatpush.msra.mxu0 %v209
  %1390 = vmatmul.f32.gmra.mxu0 %v1372
  %v1391 = vpop.f32.mrf.mxu0
  %v1392 = vadd.f32 0.0, %v1391
  %1393 = vdwg.mxu0
  %v1395 = vsel %vm335, %v57, 0
  %1397 = vmatpush.msra.mxu0 0.0
  %1398 = vmatpush.msra.mxu0 0.0
  %1399 = vmatpush.msra.mxu0 0.0
  %1400 = vmatpush.msra.mxu0 0.0
  %1401 = vmatpush.msra.mxu0 0.0
  %1402 = vmatpush.msra.mxu0 0.0
  %1403 = vmatpush.msra.mxu0 0.0
  %1404 = vmatpush.msra.mxu0 0.0
  %1405 = vmatpush.msra.mxu0 0.0
  %1406 = vmatpush.msra.mxu0 0.0
  %1407 = vmatpush.msra.mxu0 0.0
  %1408 = vmatpush.msra.mxu0 0.0
  %1409 = vmatpush.msra.mxu0 0.0
  %1410 = vmatpush.msra.mxu0 0.0
  %1411 = vmatpush.msra.mxu0 %v212
  %1412 = vmatpush.msra.mxu0 %v211
  %1413 = vmatmul.f32.gmra.mxu0 %v1395
  %v1414 = vpop.f32.mrf.mxu0
  %v1415 = vadd.f32 0.0, %v1414
  %1416 = vdwg.mxu0
  %v1418 = vsel %vm335, %v58, 0
  %1420 = vmatpush.msra.mxu0 0.0
  %1421 = vmatpush.msra.mxu0 0.0
  %1422 = vmatpush.msra.mxu0 0.0
  %1423 = vmatpush.msra.mxu0 0.0
  %1424 = vmatpush.msra.mxu0 0.0
  %1425 = vmatpush.msra.mxu0 0.0
  %1426 = vmatpush.msra.mxu0 0.0
  %1427 = vmatpush.msra.mxu0 0.0
  %1428 = vmatpush.msra.mxu0 0.0
  %1429 = vmatpush.msra.mxu0 0.0
  %1430 = vmatpush.msra.mxu0 0.0
  %1431 = vmatpush.msra.mxu0 0.0
  %1432 = vmatpush.msra.mxu0 0.0
  %1433 = vmatpush.msra.mxu0 0.0
  %1434 = vmatpush.msra.mxu0 %v214
  %1435 = vmatpush.msra.mxu0 %v213
  %1436 = vmatmul.f32.gmra.mxu0 %v1418
  %v1437 = vpop.f32.mrf.mxu0
  %v1438 = vadd.f32 0.0, %v1437
  %1439 = vdwg.mxu0
  %v1441 = vsel %vm335, %v59, 0
  %1443 = vmatpush.msra.mxu0 0.0
  %1444 = vmatpush.msra.mxu0 0.0
  %1445 = vmatpush.msra.mxu0 0.0
  %1446 = vmatpush.msra.mxu0 0.0
  %1447 = vmatpush.msra.mxu0 0.0
  %1448 = vmatpush.msra.mxu0 0.0
  %1449 = vmatpush.msra.mxu0 0.0
  %1450 = vmatpush.msra.mxu0 0.0
  %1451 = vmatpush.msra.mxu0 0.0
  %1452 = vmatpush.msra.mxu0 0.0
  %1453 = vmatpush.msra.mxu0 0.0
  %1454 = vmatpush.msra.mxu0 0.0
  %1455 = vmatpush.msra.mxu0 0.0
  %1456 = vmatpush.msra.mxu0 0.0
  %1457 = vmatpush.msra.mxu0 %v216
  %1458 = vmatpush.msra.mxu0 %v215
  %1459 = vmatmul.f32.gmra.mxu0 %v1441
  %v1460 = vpop.f32.mrf.mxu0
  %v1461 = vadd.f32 0.0, %v1460
  %1462 = vdwg.mxu0
  %v1464 = vsel %vm335, %v60, 0
  %1466 = vmatpush.msra.mxu0 0.0
  %1467 = vmatpush.msra.mxu0 0.0
  %1468 = vmatpush.msra.mxu0 0.0
  %1469 = vmatpush.msra.mxu0 0.0
  %1470 = vmatpush.msra.mxu0 0.0
  %1471 = vmatpush.msra.mxu0 0.0
  %1472 = vmatpush.msra.mxu0 0.0
  %1473 = vmatpush.msra.mxu0 0.0
  %1474 = vmatpush.msra.mxu0 0.0
  %1475 = vmatpush.msra.mxu0 0.0
  %1476 = vmatpush.msra.mxu0 0.0
  %1477 = vmatpush.msra.mxu0 0.0
  %1478 = vmatpush.msra.mxu0 0.0
  %1479 = vmatpush.msra.mxu0 0.0
  %1480 = vmatpush.msra.mxu0 %v218
  %1481 = vmatpush.msra.mxu0 %v217
  %1482 = vmatmul.f32.gmra.mxu0 %v1464
  %v1483 = vpop.f32.mrf.mxu0
  %v1484 = vadd.f32 0.0, %v1483
  %1485 = vdwg.mxu0
  %v1487 = vsel %vm335, %v61, 0
  %1489 = vmatpush.msra.mxu0 0.0
  %1490 = vmatpush.msra.mxu0 0.0
  %1491 = vmatpush.msra.mxu0 0.0
  %1492 = vmatpush.msra.mxu0 0.0
  %1493 = vmatpush.msra.mxu0 0.0
  %1494 = vmatpush.msra.mxu0 0.0
  %1495 = vmatpush.msra.mxu0 0.0
  %1496 = vmatpush.msra.mxu0 0.0
  %1497 = vmatpush.msra.mxu0 0.0
  %1498 = vmatpush.msra.mxu0 0.0
  %1499 = vmatpush.msra.mxu0 0.0
  %1500 = vmatpush.msra.mxu0 0.0
  %1501 = vmatpush.msra.mxu0 0.0
  %1502 = vmatpush.msra.mxu0 0.0
  %1503 = vmatpush.msra.mxu0 %v220
  %1504 = vmatpush.msra.mxu0 %v219
  %1505 = vmatmul.f32.gmra.mxu0 %v1487
  %v1506 = vpop.f32.mrf.mxu0
  %v1507 = vadd.f32 0.0, %v1506
  %1508 = vdwg.mxu0
  %v1510 = vsel %vm335, %v62, 0
  %1512 = vmatpush.msra.mxu0 0.0
  %1513 = vmatpush.msra.mxu0 0.0
  %1514 = vmatpush.msra.mxu0 0.0
  %1515 = vmatpush.msra.mxu0 0.0
  %1516 = vmatpush.msra.mxu0 0.0
  %1517 = vmatpush.msra.mxu0 0.0
  %1518 = vmatpush.msra.mxu0 0.0
  %1519 = vmatpush.msra.mxu0 0.0
  %1520 = vmatpush.msra.mxu0 0.0
  %1521 = vmatpush.msra.mxu0 0.0
  %1522 = vmatpush.msra.mxu0 0.0
  %1523 = vmatpush.msra.mxu0 0.0
  %1524 = vmatpush.msra.mxu0 0.0
  %1525 = vmatpush.msra.mxu0 0.0
  %1526 = vmatpush.msra.mxu0 %v222
  %1527 = vmatpush.msra.mxu0 %v221
  %1528 = vmatmul.f32.gmra.mxu0 %v1510
  %v1529 = vpop.f32.mrf.mxu0
  %v1530 = vadd.f32 0.0, %v1529
  %1531 = vdwg.mxu0
  %v1533 = vsel %vm335, %v63, 0
  %1535 = vmatpush.msra.mxu0 0.0
  %1536 = vmatpush.msra.mxu0 0.0
  %1537 = vmatpush.msra.mxu0 0.0
  %1538 = vmatpush.msra.mxu0 0.0
  %1539 = vmatpush.msra.mxu0 0.0
  %1540 = vmatpush.msra.mxu0 0.0
  %1541 = vmatpush.msra.mxu0 0.0
  %1542 = vmatpush.msra.mxu0 0.0
  %1543 = vmatpush.msra.mxu0 0.0
  %1544 = vmatpush.msra.mxu0 0.0
  %1545 = vmatpush.msra.mxu0 0.0
  %1546 = vmatpush.msra.mxu0 0.0
  %1547 = vmatpush.msra.mxu0 0.0
  %1548 = vmatpush.msra.mxu0 0.0
  %1549 = vmatpush.msra.mxu0 %v224
  %1550 = vmatpush.msra.mxu0 %v223
  %1551 = vmatmul.f32.gmra.mxu0 %v1533
  %v1552 = vpop.f32.mrf.mxu0
  %v1553 = vadd.f32 0.0, %v1552
  %1554 = vdwg.mxu0
  %v1556 = vsel %vm335, %v64, 0
  %1558 = vmatpush.msra.mxu0 0.0
  %1559 = vmatpush.msra.mxu0 0.0
  %1560 = vmatpush.msra.mxu0 0.0
  %1561 = vmatpush.msra.mxu0 0.0
  %1562 = vmatpush.msra.mxu0 0.0
  %1563 = vmatpush.msra.mxu0 0.0
  %1564 = vmatpush.msra.mxu0 0.0
  %1565 = vmatpush.msra.mxu0 0.0
  %1566 = vmatpush.msra.mxu0 0.0
  %1567 = vmatpush.msra.mxu0 0.0
  %1568 = vmatpush.msra.mxu0 0.0
  %1569 = vmatpush.msra.mxu0 0.0
  %1570 = vmatpush.msra.mxu0 0.0
  %1571 = vmatpush.msra.mxu0 0.0
  %1572 = vmatpush.msra.mxu0 %v226
  %1573 = vmatpush.msra.mxu0 %v225
  %1574 = vmatmul.f32.gmra.mxu0 %v1556
  %v1575 = vpop.f32.mrf.mxu0
  %v1576 = vadd.f32 0.0, %v1575
  %1577 = vdwg.mxu0
  %v1579 = vsel %vm335, %v65, 0
  %1581 = vmatpush.msra.mxu0 0.0
  %1582 = vmatpush.msra.mxu0 0.0
  %1583 = vmatpush.msra.mxu0 0.0
  %1584 = vmatpush.msra.mxu0 0.0
  %1585 = vmatpush.msra.mxu0 0.0
  %1586 = vmatpush.msra.mxu0 0.0
  %1587 = vmatpush.msra.mxu0 0.0
  %1588 = vmatpush.msra.mxu0 0.0
  %1589 = vmatpush.msra.mxu0 0.0
  %1590 = vmatpush.msra.mxu0 0.0
  %1591 = vmatpush.msra.mxu0 0.0
  %1592 = vmatpush.msra.mxu0 0.0
  %1593 = vmatpush.msra.mxu0 0.0
  %1594 = vmatpush.msra.mxu0 0.0
  %1595 = vmatpush.msra.mxu0 %v228
  %1596 = vmatpush.msra.mxu0 %v227
  %1597 = vmatmul.f32.gmra.mxu0 %v1579
  %v1598 = vpop.f32.mrf.mxu0
  %v1599 = vadd.f32 0.0, %v1598
  %1600 = vdwg.mxu0
  %v1602 = vsel %vm335, %v66, 0
  %1604 = vmatpush.msra.mxu0 0.0
  %1605 = vmatpush.msra.mxu0 0.0
  %1606 = vmatpush.msra.mxu0 0.0
  %1607 = vmatpush.msra.mxu0 0.0
  %1608 = vmatpush.msra.mxu0 0.0
  %1609 = vmatpush.msra.mxu0 0.0
  %1610 = vmatpush.msra.mxu0 0.0
  %1611 = vmatpush.msra.mxu0 0.0
  %1612 = vmatpush.msra.mxu0 0.0
  %1613 = vmatpush.msra.mxu0 0.0
  %1614 = vmatpush.msra.mxu0 0.0
  %1615 = vmatpush.msra.mxu0 0.0
  %1616 = vmatpush.msra.mxu0 0.0
  %1617 = vmatpush.msra.mxu0 0.0
  %1618 = vmatpush.msra.mxu0 %v230
  %1619 = vmatpush.msra.mxu0 %v229
  %1620 = vmatmul.f32.gmra.mxu0 %v1602
  %v1621 = vpop.f32.mrf.mxu0
  %v1622 = vadd.f32 0.0, %v1621
  %1623 = vdwg.mxu0
  %v1625 = vsel %vm335, %v67, 0
  %1627 = vmatpush.msra.mxu0 0.0
  %1628 = vmatpush.msra.mxu0 0.0
  %1629 = vmatpush.msra.mxu0 0.0
  %1630 = vmatpush.msra.mxu0 0.0
  %1631 = vmatpush.msra.mxu0 0.0
  %1632 = vmatpush.msra.mxu0 0.0
  %1633 = vmatpush.msra.mxu0 0.0
  %1634 = vmatpush.msra.mxu0 0.0
  %1635 = vmatpush.msra.mxu0 0.0
  %1636 = vmatpush.msra.mxu0 0.0
  %1637 = vmatpush.msra.mxu0 0.0
  %1638 = vmatpush.msra.mxu0 0.0
  %1639 = vmatpush.msra.mxu0 0.0
  %1640 = vmatpush.msra.mxu0 0.0
  %1641 = vmatpush.msra.mxu0 %v232
  %1642 = vmatpush.msra.mxu0 %v231
  %1643 = vmatmul.f32.gmra.mxu0 %v1625
  %v1644 = vpop.f32.mrf.mxu0
  %v1645 = vadd.f32 0.0, %v1644
  %1646 = vdwg.mxu0
  %v1648 = vsel %vm335, %v68, 0
  %1650 = vmatpush.msra.mxu0 0.0
  %1651 = vmatpush.msra.mxu0 0.0
  %1652 = vmatpush.msra.mxu0 0.0
  %1653 = vmatpush.msra.mxu0 0.0
  %1654 = vmatpush.msra.mxu0 0.0
  %1655 = vmatpush.msra.mxu0 0.0
  %1656 = vmatpush.msra.mxu0 0.0
  %1657 = vmatpush.msra.mxu0 0.0
  %1658 = vmatpush.msra.mxu0 0.0
  %1659 = vmatpush.msra.mxu0 0.0
  %1660 = vmatpush.msra.mxu0 0.0
  %1661 = vmatpush.msra.mxu0 0.0
  %1662 = vmatpush.msra.mxu0 0.0
  %1663 = vmatpush.msra.mxu0 0.0
  %1664 = vmatpush.msra.mxu0 %v234
  %1665 = vmatpush.msra.mxu0 %v233
  %1666 = vmatmul.f32.gmra.mxu0 %v1648
  %v1667 = vpop.f32.mrf.mxu0
  %v1668 = vadd.f32 0.0, %v1667
  %1669 = vdwg.mxu0
  %v1671 = vsel %vm335, %v69, 0
  %1673 = vmatpush.msra.mxu0 0.0
  %1674 = vmatpush.msra.mxu0 0.0
  %1675 = vmatpush.msra.mxu0 0.0
  %1676 = vmatpush.msra.mxu0 0.0
  %1677 = vmatpush.msra.mxu0 0.0
  %1678 = vmatpush.msra.mxu0 0.0
  %1679 = vmatpush.msra.mxu0 0.0
  %1680 = vmatpush.msra.mxu0 0.0
  %1681 = vmatpush.msra.mxu0 0.0
  %1682 = vmatpush.msra.mxu0 0.0
  %1683 = vmatpush.msra.mxu0 0.0
  %1684 = vmatpush.msra.mxu0 0.0
  %1685 = vmatpush.msra.mxu0 0.0
  %1686 = vmatpush.msra.mxu0 0.0
  %1687 = vmatpush.msra.mxu0 %v236
  %1688 = vmatpush.msra.mxu0 %v235
  %1689 = vmatmul.f32.gmra.mxu0 %v1671
  %v1690 = vpop.f32.mrf.mxu0
  %v1691 = vadd.f32 0.0, %v1690
  %1692 = vdwg.mxu0
  %v1694 = vsel %vm335, %v70, 0
  %1696 = vmatpush.msra.mxu0 0.0
  %1697 = vmatpush.msra.mxu0 0.0
  %1698 = vmatpush.msra.mxu0 0.0
  %1699 = vmatpush.msra.mxu0 0.0
  %1700 = vmatpush.msra.mxu0 0.0
  %1701 = vmatpush.msra.mxu0 0.0
  %1702 = vmatpush.msra.mxu0 0.0
  %1703 = vmatpush.msra.mxu0 0.0
  %1704 = vmatpush.msra.mxu0 0.0
  %1705 = vmatpush.msra.mxu0 0.0
  %1706 = vmatpush.msra.mxu0 0.0
  %1707 = vmatpush.msra.mxu0 0.0
  %1708 = vmatpush.msra.mxu0 0.0
  %1709 = vmatpush.msra.mxu0 0.0
  %1710 = vmatpush.msra.mxu0 %v238
  %1711 = vmatpush.msra.mxu0 %v237
  %1712 = vmatmul.f32.gmra.mxu0 %v1694
  %v1713 = vpop.f32.mrf.mxu0
  %v1714 = vadd.f32 0.0, %v1713
  %1715 = vdwg.mxu0
  %v1717 = vsel %vm335, %v71, 0
  %1719 = vmatpush.msra.mxu0 0.0
  %1720 = vmatpush.msra.mxu0 0.0
  %1721 = vmatpush.msra.mxu0 0.0
  %1722 = vmatpush.msra.mxu0 0.0
  %1723 = vmatpush.msra.mxu0 0.0
  %1724 = vmatpush.msra.mxu0 0.0
  %1725 = vmatpush.msra.mxu0 0.0
  %1726 = vmatpush.msra.mxu0 0.0
  %1727 = vmatpush.msra.mxu0 0.0
  %1728 = vmatpush.msra.mxu0 0.0
  %1729 = vmatpush.msra.mxu0 0.0
  %1730 = vmatpush.msra.mxu0 0.0
  %1731 = vmatpush.msra.mxu0 0.0
  %1732 = vmatpush.msra.mxu0 0.0
  %1733 = vmatpush.msra.mxu0 %v240
  %1734 = vmatpush.msra.mxu0 %v239
  %1735 = vmatmul.f32.gmra.mxu0 %v1717
  %v1736 = vpop.f32.mrf.mxu0
  %v1737 = vadd.f32 0.0, %v1736
  %1738 = vdwg.mxu0
  %v1740 = vsel %vm335, %v72, 0
  %1742 = vmatpush.msra.mxu0 0.0
  %1743 = vmatpush.msra.mxu0 0.0
  %1744 = vmatpush.msra.mxu0 0.0
  %1745 = vmatpush.msra.mxu0 0.0
  %1746 = vmatpush.msra.mxu0 0.0
  %1747 = vmatpush.msra.mxu0 0.0
  %1748 = vmatpush.msra.mxu0 0.0
  %1749 = vmatpush.msra.mxu0 0.0
  %1750 = vmatpush.msra.mxu0 0.0
  %1751 = vmatpush.msra.mxu0 0.0
  %1752 = vmatpush.msra.mxu0 0.0
  %1753 = vmatpush.msra.mxu0 0.0
  %1754 = vmatpush.msra.mxu0 0.0
  %1755 = vmatpush.msra.mxu0 0.0
  %1756 = vmatpush.msra.mxu0 %v242
  %1757 = vmatpush.msra.mxu0 %v241
  %1758 = vmatmul.f32.gmra.mxu0 %v1740
  %v1759 = vpop.f32.mrf.mxu0
  %v1760 = vadd.f32 0.0, %v1759
  %1761 = vdwg.mxu0
  %v1763 = vsel %vm335, %v73, 0
  %1765 = vmatpush.msra.mxu0 0.0
  %1766 = vmatpush.msra.mxu0 0.0
  %1767 = vmatpush.msra.mxu0 0.0
  %1768 = vmatpush.msra.mxu0 0.0
  %1769 = vmatpush.msra.mxu0 0.0
  %1770 = vmatpush.msra.mxu0 0.0
  %1771 = vmatpush.msra.mxu0 0.0
  %1772 = vmatpush.msra.mxu0 0.0
  %1773 = vmatpush.msra.mxu0 0.0
  %1774 = vmatpush.msra.mxu0 0.0
  %1775 = vmatpush.msra.mxu0 0.0
  %1776 = vmatpush.msra.mxu0 0.0
  %1777 = vmatpush.msra.mxu0 0.0
  %1778 = vmatpush.msra.mxu0 0.0
  %1779 = vmatpush.msra.mxu0 %v244
  %1780 = vmatpush.msra.mxu0 %v243
  %1781 = vmatmul.f32.gmra.mxu0 %v1763
  %v1782 = vpop.f32.mrf.mxu0
  %v1783 = vadd.f32 0.0, %v1782
  %1784 = vdwg.mxu0
  %v1786 = vsel %vm335, %v74, 0
  %1788 = vmatpush.msra.mxu0 0.0
  %1789 = vmatpush.msra.mxu0 0.0
  %1790 = vmatpush.msra.mxu0 0.0
  %1791 = vmatpush.msra.mxu0 0.0
  %1792 = vmatpush.msra.mxu0 0.0
  %1793 = vmatpush.msra.mxu0 0.0
  %1794 = vmatpush.msra.mxu0 0.0
  %1795 = vmatpush.msra.mxu0 0.0
  %1796 = vmatpush.msra.mxu0 0.0
  %1797 = vmatpush.msra.mxu0 0.0
  %1798 = vmatpush.msra.mxu0 0.0
  %1799 = vmatpush.msra.mxu0 0.0
  %1800 = vmatpush.msra.mxu0 0.0
  %1801 = vmatpush.msra.mxu0 0.0
  %1802 = vmatpush.msra.mxu0 %v246
  %1803 = vmatpush.msra.mxu0 %v245
  %1804 = vmatmul.f32.gmra.mxu0 %v1786
  %v1805 = vpop.f32.mrf.mxu0
  %v1806 = vadd.f32 0.0, %v1805
  %1807 = vdwg.mxu0
  %v1809 = vsel %vm335, %v75, 0
  %1811 = vmatpush.msra.mxu0 0.0
  %1812 = vmatpush.msra.mxu0 0.0
  %1813 = vmatpush.msra.mxu0 0.0
  %1814 = vmatpush.msra.mxu0 0.0
  %1815 = vmatpush.msra.mxu0 0.0
  %1816 = vmatpush.msra.mxu0 0.0
  %1817 = vmatpush.msra.mxu0 0.0
  %1818 = vmatpush.msra.mxu0 0.0
  %1819 = vmatpush.msra.mxu0 0.0
  %1820 = vmatpush.msra.mxu0 0.0
  %1821 = vmatpush.msra.mxu0 0.0
  %1822 = vmatpush.msra.mxu0 0.0
  %1823 = vmatpush.msra.mxu0 0.0
  %1824 = vmatpush.msra.mxu0 0.0
  %1825 = vmatpush.msra.mxu0 %v248
  %1826 = vmatpush.msra.mxu0 %v247
  %1827 = vmatmul.f32.gmra.mxu0 %v1809
  %v1828 = vpop.f32.mrf.mxu0
  %v1829 = vadd.f32 0.0, %v1828
  %1830 = vdwg.mxu0
  %v1832 = vsel %vm335, %v76, 0
  %1834 = vmatpush.msra.mxu0 0.0
  %1835 = vmatpush.msra.mxu0 0.0
  %1836 = vmatpush.msra.mxu0 0.0
  %1837 = vmatpush.msra.mxu0 0.0
  %1838 = vmatpush.msra.mxu0 0.0
  %1839 = vmatpush.msra.mxu0 0.0
  %1840 = vmatpush.msra.mxu0 0.0
  %1841 = vmatpush.msra.mxu0 0.0
  %1842 = vmatpush.msra.mxu0 0.0
  %1843 = vmatpush.msra.mxu0 0.0
  %1844 = vmatpush.msra.mxu0 0.0
  %1845 = vmatpush.msra.mxu0 0.0
  %1846 = vmatpush.msra.mxu0 0.0
  %1847 = vmatpush.msra.mxu0 0.0
  %1848 = vmatpush.msra.mxu0 %v250
  %1849 = vmatpush.msra.mxu0 %v249
  %1850 = vmatmul.f32.gmra.mxu0 %v1832
  %v1851 = vpop.f32.mrf.mxu0
  %v1852 = vadd.f32 0.0, %v1851
  %1853 = vdwg.mxu0
  %v1855 = vsel %vm335, %v77, 0
  %1857 = vmatpush.msra.mxu0 0.0
  %1858 = vmatpush.msra.mxu0 0.0
  %1859 = vmatpush.msra.mxu0 0.0
  %1860 = vmatpush.msra.mxu0 0.0
  %1861 = vmatpush.msra.mxu0 0.0
  %1862 = vmatpush.msra.mxu0 0.0
  %1863 = vmatpush.msra.mxu0 0.0
  %1864 = vmatpush.msra.mxu0 0.0
  %1865 = vmatpush.msra.mxu0 0.0
  %1866 = vmatpush.msra.mxu0 0.0
  %1867 = vmatpush.msra.mxu0 0.0
  %1868 = vmatpush.msra.mxu0 0.0
  %1869 = vmatpush.msra.mxu0 0.0
  %1870 = vmatpush.msra.mxu0 0.0
  %1871 = vmatpush.msra.mxu0 %v252
  %1872 = vmatpush.msra.mxu0 %v251
  %1873 = vmatmul.f32.gmra.mxu0 %v1855
  %v1874 = vpop.f32.mrf.mxu0
  %v1875 = vadd.f32 0.0, %v1874
  %1876 = vdwg.mxu0
  %v1878 = vsel %vm335, %v78, 0
  %1880 = vmatpush.msra.mxu0 0.0
  %1881 = vmatpush.msra.mxu0 0.0
  %1882 = vmatpush.msra.mxu0 0.0
  %1883 = vmatpush.msra.mxu0 0.0
  %1884 = vmatpush.msra.mxu0 0.0
  %1885 = vmatpush.msra.mxu0 0.0
  %1886 = vmatpush.msra.mxu0 0.0
  %1887 = vmatpush.msra.mxu0 0.0
  %1888 = vmatpush.msra.mxu0 0.0
  %1889 = vmatpush.msra.mxu0 0.0
  %1890 = vmatpush.msra.mxu0 0.0
  %1891 = vmatpush.msra.mxu0 0.0
  %1892 = vmatpush.msra.mxu0 0.0
  %1893 = vmatpush.msra.mxu0 0.0
  %1894 = vmatpush.msra.mxu0 %v254
  %1895 = vmatpush.msra.mxu0 %v253
  %1896 = vmatmul.f32.gmra.mxu0 %v1878
  %v1897 = vpop.f32.mrf.mxu0
  %v1898 = vadd.f32 0.0, %v1897
  %1899 = vdwg.mxu0
  %v1901 = vsel %vm335, %v79, 0
  %1903 = vmatpush.msra.mxu0 0.0
  %1904 = vmatpush.msra.mxu0 0.0
  %1905 = vmatpush.msra.mxu0 0.0
  %1906 = vmatpush.msra.mxu0 0.0
  %1907 = vmatpush.msra.mxu0 0.0
  %1908 = vmatpush.msra.mxu0 0.0
  %1909 = vmatpush.msra.mxu0 0.0
  %1910 = vmatpush.msra.mxu0 0.0
  %1911 = vmatpush.msra.mxu0 0.0
  %1912 = vmatpush.msra.mxu0 0.0
  %1913 = vmatpush.msra.mxu0 0.0
  %1914 = vmatpush.msra.mxu0 0.0
  %1915 = vmatpush.msra.mxu0 0.0
  %1916 = vmatpush.msra.mxu0 0.0
  %1917 = vmatpush.msra.mxu0 %v256
  %1918 = vmatpush.msra.mxu0 %v255
  %1919 = vmatmul.f32.gmra.mxu0 %v1901
  %v1920 = vpop.f32.mrf.mxu0
  %v1921 = vadd.f32 0.0, %v1920
  %1922 = vdwg.mxu0
  %v1924 = vsel %vm335, %v80, 0
  %1926 = vmatpush.msra.mxu0 0.0
  %1927 = vmatpush.msra.mxu0 0.0
  %1928 = vmatpush.msra.mxu0 0.0
  %1929 = vmatpush.msra.mxu0 0.0
  %1930 = vmatpush.msra.mxu0 0.0
  %1931 = vmatpush.msra.mxu0 0.0
  %1932 = vmatpush.msra.mxu0 0.0
  %1933 = vmatpush.msra.mxu0 0.0
  %1934 = vmatpush.msra.mxu0 0.0
  %1935 = vmatpush.msra.mxu0 0.0
  %1936 = vmatpush.msra.mxu0 0.0
  %1937 = vmatpush.msra.mxu0 0.0
  %1938 = vmatpush.msra.mxu0 0.0
  %1939 = vmatpush.msra.mxu0 0.0
  %1940 = vmatpush.msra.mxu0 %v258
  %1941 = vmatpush.msra.mxu0 %v257
  %1942 = vmatmul.f32.gmra.mxu0 %v1924
  %v1943 = vpop.f32.mrf.mxu0
  %v1944 = vadd.f32 0.0, %v1943
  %1945 = vdwg.mxu0
  %v1947 = vsel %vm335, %v81, 0
  %1949 = vmatpush.msra.mxu0 0.0
  %1950 = vmatpush.msra.mxu0 0.0
  %1951 = vmatpush.msra.mxu0 0.0
  %1952 = vmatpush.msra.mxu0 0.0
  %1953 = vmatpush.msra.mxu0 0.0
  %1954 = vmatpush.msra.mxu0 0.0
  %1955 = vmatpush.msra.mxu0 0.0
  %1956 = vmatpush.msra.mxu0 0.0
  %1957 = vmatpush.msra.mxu0 0.0
  %1958 = vmatpush.msra.mxu0 0.0
  %1959 = vmatpush.msra.mxu0 0.0
  %1960 = vmatpush.msra.mxu0 0.0
  %1961 = vmatpush.msra.mxu0 0.0
  %1962 = vmatpush.msra.mxu0 0.0
  %1963 = vmatpush.msra.mxu0 %v260
  %1964 = vmatpush.msra.mxu0 %v259
  %1965 = vmatmul.f32.gmra.mxu0 %v1947
  %v1966 = vpop.f32.mrf.mxu0
  %v1967 = vadd.f32 0.0, %v1966
  %1968 = vdwg.mxu0
  %v1970 = vsel %vm335, %v82, 0
  %1972 = vmatpush.msra.mxu0 0.0
  %1973 = vmatpush.msra.mxu0 0.0
  %1974 = vmatpush.msra.mxu0 0.0
  %1975 = vmatpush.msra.mxu0 0.0
  %1976 = vmatpush.msra.mxu0 0.0
  %1977 = vmatpush.msra.mxu0 0.0
  %1978 = vmatpush.msra.mxu0 0.0
  %1979 = vmatpush.msra.mxu0 0.0
  %1980 = vmatpush.msra.mxu0 0.0
  %1981 = vmatpush.msra.mxu0 0.0
  %1982 = vmatpush.msra.mxu0 0.0
  %1983 = vmatpush.msra.mxu0 0.0
  %1984 = vmatpush.msra.mxu0 0.0
  %1985 = vmatpush.msra.mxu0 0.0
  %1986 = vmatpush.msra.mxu0 %v262
  %1987 = vmatpush.msra.mxu0 %v261
  %1988 = vmatmul.f32.gmra.mxu0 %v1970
  %v1989 = vpop.f32.mrf.mxu0
  %v1990 = vadd.f32 0.0, %v1989
  %1991 = vdwg.mxu0
  %v1993 = vsel %vm335, %v83, 0
  %1995 = vmatpush.msra.mxu0 0.0
  %1996 = vmatpush.msra.mxu0 0.0
  %1997 = vmatpush.msra.mxu0 0.0
  %1998 = vmatpush.msra.mxu0 0.0
  %1999 = vmatpush.msra.mxu0 0.0
  %2000 = vmatpush.msra.mxu0 0.0
  %2001 = vmatpush.msra.mxu0 0.0
  %2002 = vmatpush.msra.mxu0 0.0
  %2003 = vmatpush.msra.mxu0 0.0
  %2004 = vmatpush.msra.mxu0 0.0
  %2005 = vmatpush.msra.mxu0 0.0
  %2006 = vmatpush.msra.mxu0 0.0
  %2007 = vmatpush.msra.mxu0 0.0
  %2008 = vmatpush.msra.mxu0 0.0
  %2009 = vmatpush.msra.mxu0 %v264
  %2010 = vmatpush.msra.mxu0 %v263
  %2011 = vmatmul.f32.gmra.mxu0 %v1993
  %v2012 = vpop.f32.mrf.mxu0
  %v2013 = vadd.f32 0.0, %v2012
  %2014 = vdwg.mxu0
  %v2016 = vsel %vm335, %v84, 0
  %2018 = vmatpush.msra.mxu0 0.0
  %2019 = vmatpush.msra.mxu0 0.0
  %2020 = vmatpush.msra.mxu0 0.0
  %2021 = vmatpush.msra.mxu0 0.0
  %2022 = vmatpush.msra.mxu0 0.0
  %2023 = vmatpush.msra.mxu0 0.0
  %2024 = vmatpush.msra.mxu0 0.0
  %2025 = vmatpush.msra.mxu0 0.0
  %2026 = vmatpush.msra.mxu0 0.0
  %2027 = vmatpush.msra.mxu0 0.0
  %2028 = vmatpush.msra.mxu0 0.0
  %2029 = vmatpush.msra.mxu0 0.0
  %2030 = vmatpush.msra.mxu0 0.0
  %2031 = vmatpush.msra.mxu0 0.0
  %2032 = vmatpush.msra.mxu0 %v266
  %2033 = vmatpush.msra.mxu0 %v265
  %2034 = vmatmul.f32.gmra.mxu0 %v2016
  %v2035 = vpop.f32.mrf.mxu0
  %v2036 = vadd.f32 0.0, %v2035
  %2037 = vdwg.mxu0
  %v2039 = vsel %vm335, %v85, 0
  %2041 = vmatpush.msra.mxu0 0.0
  %2042 = vmatpush.msra.mxu0 0.0
  %2043 = vmatpush.msra.mxu0 0.0
  %2044 = vmatpush.msra.mxu0 0.0
  %2045 = vmatpush.msra.mxu0 0.0
  %2046 = vmatpush.msra.mxu0 0.0
  %2047 = vmatpush.msra.mxu0 0.0
  %2048 = vmatpush.msra.mxu0 0.0
  %2049 = vmatpush.msra.mxu0 0.0
  %2050 = vmatpush.msra.mxu0 0.0
  %2051 = vmatpush.msra.mxu0 0.0
  %2052 = vmatpush.msra.mxu0 0.0
  %2053 = vmatpush.msra.mxu0 0.0
  %2054 = vmatpush.msra.mxu0 0.0
  %2055 = vmatpush.msra.mxu0 %v268
  %2056 = vmatpush.msra.mxu0 %v267
  %2057 = vmatmul.f32.gmra.mxu0 %v2039
  %v2058 = vpop.f32.mrf.mxu0
  %v2059 = vadd.f32 0.0, %v2058
  %2060 = vdwg.mxu0
  %v2062 = vsel %vm335, %v86, 0
  %2064 = vmatpush.msra.mxu0 0.0
  %2065 = vmatpush.msra.mxu0 0.0
  %2066 = vmatpush.msra.mxu0 0.0
  %2067 = vmatpush.msra.mxu0 0.0
  %2068 = vmatpush.msra.mxu0 0.0
  %2069 = vmatpush.msra.mxu0 0.0
  %2070 = vmatpush.msra.mxu0 0.0
  %2071 = vmatpush.msra.mxu0 0.0
  %2072 = vmatpush.msra.mxu0 0.0
  %2073 = vmatpush.msra.mxu0 0.0
  %2074 = vmatpush.msra.mxu0 0.0
  %2075 = vmatpush.msra.mxu0 0.0
  %2076 = vmatpush.msra.mxu0 0.0
  %2077 = vmatpush.msra.mxu0 0.0
  %2078 = vmatpush.msra.mxu0 %v270
  %2079 = vmatpush.msra.mxu0 %v269
  %2080 = vmatmul.f32.gmra.mxu0 %v2062
  %v2081 = vpop.f32.mrf.mxu0
  %v2082 = vadd.f32 0.0, %v2081
  %2083 = vdwg.mxu0
  %v2085 = vsel %vm335, %v87, 0
  %2087 = vmatpush.msra.mxu0 0.0
  %2088 = vmatpush.msra.mxu0 0.0
  %2089 = vmatpush.msra.mxu0 0.0
  %2090 = vmatpush.msra.mxu0 0.0
  %2091 = vmatpush.msra.mxu0 0.0
  %2092 = vmatpush.msra.mxu0 0.0
  %2093 = vmatpush.msra.mxu0 0.0
  %2094 = vmatpush.msra.mxu0 0.0
  %2095 = vmatpush.msra.mxu0 0.0
  %2096 = vmatpush.msra.mxu0 0.0
  %2097 = vmatpush.msra.mxu0 0.0
  %2098 = vmatpush.msra.mxu0 0.0
  %2099 = vmatpush.msra.mxu0 0.0
  %2100 = vmatpush.msra.mxu0 0.0
  %2101 = vmatpush.msra.mxu0 %v272
  %2102 = vmatpush.msra.mxu0 %v271
  %2103 = vmatmul.f32.gmra.mxu0 %v2085
  %v2104 = vpop.f32.mrf.mxu0
  %v2105 = vadd.f32 0.0, %v2104
  %2106 = vdwg.mxu0
  %v2108 = vsel %vm335, %v88, 0
  %2110 = vmatpush.msra.mxu0 0.0
  %2111 = vmatpush.msra.mxu0 0.0
  %2112 = vmatpush.msra.mxu0 0.0
  %2113 = vmatpush.msra.mxu0 0.0
  %2114 = vmatpush.msra.mxu0 0.0
  %2115 = vmatpush.msra.mxu0 0.0
  %2116 = vmatpush.msra.mxu0 0.0
  %2117 = vmatpush.msra.mxu0 0.0
  %2118 = vmatpush.msra.mxu0 0.0
  %2119 = vmatpush.msra.mxu0 0.0
  %2120 = vmatpush.msra.mxu0 0.0
  %2121 = vmatpush.msra.mxu0 0.0
  %2122 = vmatpush.msra.mxu0 0.0
  %2123 = vmatpush.msra.mxu0 0.0
  %2124 = vmatpush.msra.mxu0 %v274
  %2125 = vmatpush.msra.mxu0 %v273
  %2126 = vmatmul.f32.gmra.mxu0 %v2108
  %v2127 = vpop.f32.mrf.mxu0
  %v2128 = vadd.f32 0.0, %v2127
  %2129 = vdwg.mxu0
  %v2131 = vsel %vm335, %v89, 0
  %2133 = vmatpush.msra.mxu0 0.0
  %2134 = vmatpush.msra.mxu0 0.0
  %2135 = vmatpush.msra.mxu0 0.0
  %2136 = vmatpush.msra.mxu0 0.0
  %2137 = vmatpush.msra.mxu0 0.0
  %2138 = vmatpush.msra.mxu0 0.0
  %2139 = vmatpush.msra.mxu0 0.0
  %2140 = vmatpush.msra.mxu0 0.0
  %2141 = vmatpush.msra.mxu0 0.0
  %2142 = vmatpush.msra.mxu0 0.0
  %2143 = vmatpush.msra.mxu0 0.0
  %2144 = vmatpush.msra.mxu0 0.0
  %2145 = vmatpush.msra.mxu0 0.0
  %2146 = vmatpush.msra.mxu0 0.0
  %2147 = vmatpush.msra.mxu0 %v276
  %2148 = vmatpush.msra.mxu0 %v275
  %2149 = vmatmul.f32.gmra.mxu0 %v2131
  %v2150 = vpop.f32.mrf.mxu0
  %v2151 = vadd.f32 0.0, %v2150
  %2152 = vdwg.mxu0
  %v2154 = vsel %vm335, %v90, 0
  %2156 = vmatpush.msra.mxu0 0.0
  %2157 = vmatpush.msra.mxu0 0.0
  %2158 = vmatpush.msra.mxu0 0.0
  %2159 = vmatpush.msra.mxu0 0.0
  %2160 = vmatpush.msra.mxu0 0.0
  %2161 = vmatpush.msra.mxu0 0.0
  %2162 = vmatpush.msra.mxu0 0.0
  %2163 = vmatpush.msra.mxu0 0.0
  %2164 = vmatpush.msra.mxu0 0.0
  %2165 = vmatpush.msra.mxu0 0.0
  %2166 = vmatpush.msra.mxu0 0.0
  %2167 = vmatpush.msra.mxu0 0.0
  %2168 = vmatpush.msra.mxu0 0.0
  %2169 = vmatpush.msra.mxu0 0.0
  %2170 = vmatpush.msra.mxu0 %v278
  %2171 = vmatpush.msra.mxu0 %v277
  %2172 = vmatmul.f32.gmra.mxu0 %v2154
  %v2173 = vpop.f32.mrf.mxu0
  %v2174 = vadd.f32 0.0, %v2173
  %2175 = vdwg.mxu0
  %v2177 = vsel %vm335, %v91, 0
  %2179 = vmatpush.msra.mxu0 0.0
  %2180 = vmatpush.msra.mxu0 0.0
  %2181 = vmatpush.msra.mxu0 0.0
  %2182 = vmatpush.msra.mxu0 0.0
  %2183 = vmatpush.msra.mxu0 0.0
  %2184 = vmatpush.msra.mxu0 0.0
  %2185 = vmatpush.msra.mxu0 0.0
  %2186 = vmatpush.msra.mxu0 0.0
  %2187 = vmatpush.msra.mxu0 0.0
  %2188 = vmatpush.msra.mxu0 0.0
  %2189 = vmatpush.msra.mxu0 0.0
  %2190 = vmatpush.msra.mxu0 0.0
  %2191 = vmatpush.msra.mxu0 0.0
  %2192 = vmatpush.msra.mxu0 0.0
  %2193 = vmatpush.msra.mxu0 %v280
  %2194 = vmatpush.msra.mxu0 %v279
  %2195 = vmatmul.f32.gmra.mxu0 %v2177
  %v2196 = vpop.f32.mrf.mxu0
  %v2197 = vadd.f32 0.0, %v2196
  %2198 = vdwg.mxu0
  %v2200 = vsel %vm335, %v92, 0
  %2202 = vmatpush.msra.mxu0 0.0
  %2203 = vmatpush.msra.mxu0 0.0
  %2204 = vmatpush.msra.mxu0 0.0
  %2205 = vmatpush.msra.mxu0 0.0
  %2206 = vmatpush.msra.mxu0 0.0
  %2207 = vmatpush.msra.mxu0 0.0
  %2208 = vmatpush.msra.mxu0 0.0
  %2209 = vmatpush.msra.mxu0 0.0
  %2210 = vmatpush.msra.mxu0 0.0
  %2211 = vmatpush.msra.mxu0 0.0
  %2212 = vmatpush.msra.mxu0 0.0
  %2213 = vmatpush.msra.mxu0 0.0
  %2214 = vmatpush.msra.mxu0 0.0
  %2215 = vmatpush.msra.mxu0 0.0
  %2216 = vmatpush.msra.mxu0 %v282
  %2217 = vmatpush.msra.mxu0 %v281
  %2218 = vmatmul.f32.gmra.mxu0 %v2200
  %v2219 = vpop.f32.mrf.mxu0
  %v2220 = vadd.f32 0.0, %v2219
  %2221 = vdwg.mxu0
  %v2223 = vsel %vm335, %v93, 0
  %2225 = vmatpush.msra.mxu0 0.0
  %2226 = vmatpush.msra.mxu0 0.0
  %2227 = vmatpush.msra.mxu0 0.0
  %2228 = vmatpush.msra.mxu0 0.0
  %2229 = vmatpush.msra.mxu0 0.0
  %2230 = vmatpush.msra.mxu0 0.0
  %2231 = vmatpush.msra.mxu0 0.0
  %2232 = vmatpush.msra.mxu0 0.0
  %2233 = vmatpush.msra.mxu0 0.0
  %2234 = vmatpush.msra.mxu0 0.0
  %2235 = vmatpush.msra.mxu0 0.0
  %2236 = vmatpush.msra.mxu0 0.0
  %2237 = vmatpush.msra.mxu0 0.0
  %2238 = vmatpush.msra.mxu0 0.0
  %2239 = vmatpush.msra.mxu0 %v284
  %2240 = vmatpush.msra.mxu0 %v283
  %2241 = vmatmul.f32.gmra.mxu0 %v2223
  %v2242 = vpop.f32.mrf.mxu0
  %v2243 = vadd.f32 0.0, %v2242
  %2244 = vdwg.mxu0
  %v2246 = vsel %vm335, %v94, 0
  %2248 = vmatpush.msra.mxu0 0.0
  %2249 = vmatpush.msra.mxu0 0.0
  %2250 = vmatpush.msra.mxu0 0.0
  %2251 = vmatpush.msra.mxu0 0.0
  %2252 = vmatpush.msra.mxu0 0.0
  %2253 = vmatpush.msra.mxu0 0.0
  %2254 = vmatpush.msra.mxu0 0.0
  %2255 = vmatpush.msra.mxu0 0.0
  %2256 = vmatpush.msra.mxu0 0.0
  %2257 = vmatpush.msra.mxu0 0.0
  %2258 = vmatpush.msra.mxu0 0.0
  %2259 = vmatpush.msra.mxu0 0.0
  %2260 = vmatpush.msra.mxu0 0.0
  %2261 = vmatpush.msra.mxu0 0.0
  %2262 = vmatpush.msra.mxu0 %v286
  %2263 = vmatpush.msra.mxu0 %v285
  %2264 = vmatmul.f32.gmra.mxu0 %v2246
  %v2265 = vpop.f32.mrf.mxu0
  %v2266 = vadd.f32 0.0, %v2265
  %2267 = vdwg.mxu0
  %v2269 = vsel %vm335, %v95, 0
  %2271 = vmatpush.msra.mxu0 0.0
  %2272 = vmatpush.msra.mxu0 0.0
  %2273 = vmatpush.msra.mxu0 0.0
  %2274 = vmatpush.msra.mxu0 0.0
  %2275 = vmatpush.msra.mxu0 0.0
  %2276 = vmatpush.msra.mxu0 0.0
  %2277 = vmatpush.msra.mxu0 0.0
  %2278 = vmatpush.msra.mxu0 0.0
  %2279 = vmatpush.msra.mxu0 0.0
  %2280 = vmatpush.msra.mxu0 0.0
  %2281 = vmatpush.msra.mxu0 0.0
  %2282 = vmatpush.msra.mxu0 0.0
  %2283 = vmatpush.msra.mxu0 0.0
  %2284 = vmatpush.msra.mxu0 0.0
  %2285 = vmatpush.msra.mxu0 %v288
  %2286 = vmatpush.msra.mxu0 %v287
  %2287 = vmatmul.f32.gmra.mxu0 %v2269
  %v2288 = vpop.f32.mrf.mxu0
  %v2289 = vadd.f32 0.0, %v2288
  %2290 = vdwg.mxu0
  %v2292 = vsel %vm335, %v96, 0
  %2294 = vmatpush.msra.mxu0 0.0
  %2295 = vmatpush.msra.mxu0 0.0
  %2296 = vmatpush.msra.mxu0 0.0
  %2297 = vmatpush.msra.mxu0 0.0
  %2298 = vmatpush.msra.mxu0 0.0
  %2299 = vmatpush.msra.mxu0 0.0
  %2300 = vmatpush.msra.mxu0 0.0
  %2301 = vmatpush.msra.mxu0 0.0
  %2302 = vmatpush.msra.mxu0 0.0
  %2303 = vmatpush.msra.mxu0 0.0
  %2304 = vmatpush.msra.mxu0 0.0
  %2305 = vmatpush.msra.mxu0 0.0
  %2306 = vmatpush.msra.mxu0 0.0
  %2307 = vmatpush.msra.mxu0 0.0
  %2308 = vmatpush.msra.mxu0 %v290
  %2309 = vmatpush.msra.mxu0 %v289
  %2310 = vmatmul.f32.gmra.mxu0 %v2292
  %v2311 = vpop.f32.mrf.mxu0
  %v2312 = vadd.f32 0.0, %v2311
  %2313 = vdwg.mxu0
  %v2315 = vsel %vm335, %v97, 0
  %2317 = vmatpush.msra.mxu0 0.0
  %2318 = vmatpush.msra.mxu0 0.0
  %2319 = vmatpush.msra.mxu0 0.0
  %2320 = vmatpush.msra.mxu0 0.0
  %2321 = vmatpush.msra.mxu0 0.0
  %2322 = vmatpush.msra.mxu0 0.0
  %2323 = vmatpush.msra.mxu0 0.0
  %2324 = vmatpush.msra.mxu0 0.0
  %2325 = vmatpush.msra.mxu0 0.0
  %2326 = vmatpush.msra.mxu0 0.0
  %2327 = vmatpush.msra.mxu0 0.0
  %2328 = vmatpush.msra.mxu0 0.0
  %2329 = vmatpush.msra.mxu0 0.0
  %2330 = vmatpush.msra.mxu0 0.0
  %2331 = vmatpush.msra.mxu0 %v292
  %2332 = vmatpush.msra.mxu0 %v291
  %2333 = vmatmul.f32.gmra.mxu0 %v2315
  %v2334 = vpop.f32.mrf.mxu0
  %v2335 = vadd.f32 0.0, %v2334
  %2336 = vdwg.mxu0
  %v2338 = vsel %vm335, %v98, 0
  %2340 = vmatpush.msra.mxu0 0.0
  %2341 = vmatpush.msra.mxu0 0.0
  %2342 = vmatpush.msra.mxu0 0.0
  %2343 = vmatpush.msra.mxu0 0.0
  %2344 = vmatpush.msra.mxu0 0.0
  %2345 = vmatpush.msra.mxu0 0.0
  %2346 = vmatpush.msra.mxu0 0.0
  %2347 = vmatpush.msra.mxu0 0.0
  %2348 = vmatpush.msra.mxu0 0.0
  %2349 = vmatpush.msra.mxu0 0.0
  %2350 = vmatpush.msra.mxu0 0.0
  %2351 = vmatpush.msra.mxu0 0.0
  %2352 = vmatpush.msra.mxu0 0.0
  %2353 = vmatpush.msra.mxu0 0.0
  %2354 = vmatpush.msra.mxu0 %v294
  %2355 = vmatpush.msra.mxu0 %v293
  %2356 = vmatmul.f32.gmra.mxu0 %v2338
  %v2357 = vpop.f32.mrf.mxu0
  %v2358 = vadd.f32 0.0, %v2357
  %2359 = vdwg.mxu0
  %v2361 = vsel %vm335, %v99, 0
  %2363 = vmatpush.msra.mxu0 0.0
  %2364 = vmatpush.msra.mxu0 0.0
  %2365 = vmatpush.msra.mxu0 0.0
  %2366 = vmatpush.msra.mxu0 0.0
  %2367 = vmatpush.msra.mxu0 0.0
  %2368 = vmatpush.msra.mxu0 0.0
  %2369 = vmatpush.msra.mxu0 0.0
  %2370 = vmatpush.msra.mxu0 0.0
  %2371 = vmatpush.msra.mxu0 0.0
  %2372 = vmatpush.msra.mxu0 0.0
  %2373 = vmatpush.msra.mxu0 0.0
  %2374 = vmatpush.msra.mxu0 0.0
  %2375 = vmatpush.msra.mxu0 0.0
  %2376 = vmatpush.msra.mxu0 0.0
  %2377 = vmatpush.msra.mxu0 %v296
  %2378 = vmatpush.msra.mxu0 %v295
  %2379 = vmatmul.f32.gmra.mxu0 %v2361
  %v2380 = vpop.f32.mrf.mxu0
  %v2381 = vadd.f32 0.0, %v2380
  %2382 = vdwg.mxu0
  %v2384 = vsel %vm335, %v100, 0
  %2386 = vmatpush.msra.mxu0 0.0
  %2387 = vmatpush.msra.mxu0 0.0
  %2388 = vmatpush.msra.mxu0 0.0
  %2389 = vmatpush.msra.mxu0 0.0
  %2390 = vmatpush.msra.mxu0 0.0
  %2391 = vmatpush.msra.mxu0 0.0
  %2392 = vmatpush.msra.mxu0 0.0
  %2393 = vmatpush.msra.mxu0 0.0
  %2394 = vmatpush.msra.mxu0 0.0
  %2395 = vmatpush.msra.mxu0 0.0
  %2396 = vmatpush.msra.mxu0 0.0
  %2397 = vmatpush.msra.mxu0 0.0
  %2398 = vmatpush.msra.mxu0 0.0
  %2399 = vmatpush.msra.mxu0 0.0
  %2400 = vmatpush.msra.mxu0 %v298
  %2401 = vmatpush.msra.mxu0 %v297
  %2402 = vmatmul.f32.gmra.mxu0 %v2384
  %v2403 = vpop.f32.mrf.mxu0
  %v2404 = vadd.f32 0.0, %v2403
  %2405 = vdwg.mxu0
  %v2407 = vsel %vm335, %v101, 0
  %2409 = vmatpush.msra.mxu0 0.0
  %2410 = vmatpush.msra.mxu0 0.0
  %2411 = vmatpush.msra.mxu0 0.0
  %2412 = vmatpush.msra.mxu0 0.0
  %2413 = vmatpush.msra.mxu0 0.0
  %2414 = vmatpush.msra.mxu0 0.0
  %2415 = vmatpush.msra.mxu0 0.0
  %2416 = vmatpush.msra.mxu0 0.0
  %2417 = vmatpush.msra.mxu0 0.0
  %2418 = vmatpush.msra.mxu0 0.0
  %2419 = vmatpush.msra.mxu0 0.0
  %2420 = vmatpush.msra.mxu0 0.0
  %2421 = vmatpush.msra.mxu0 0.0
  %2422 = vmatpush.msra.mxu0 0.0
  %2423 = vmatpush.msra.mxu0 %v300
  %2424 = vmatpush.msra.mxu0 %v299
  %2425 = vmatmul.f32.gmra.mxu0 %v2407
  %v2426 = vpop.f32.mrf.mxu0
  %v2427 = vadd.f32 0.0, %v2426
  %2428 = vdwg.mxu0
  %v2430 = vsel %vm335, %v102, 0
  %2432 = vmatpush.msra.mxu0 0.0
  %2433 = vmatpush.msra.mxu0 0.0
  %2434 = vmatpush.msra.mxu0 0.0
  %2435 = vmatpush.msra.mxu0 0.0
  %2436 = vmatpush.msra.mxu0 0.0
  %2437 = vmatpush.msra.mxu0 0.0
  %2438 = vmatpush.msra.mxu0 0.0
  %2439 = vmatpush.msra.mxu0 0.0
  %2440 = vmatpush.msra.mxu0 0.0
  %2441 = vmatpush.msra.mxu0 0.0
  %2442 = vmatpush.msra.mxu0 0.0
  %2443 = vmatpush.msra.mxu0 0.0
  %2444 = vmatpush.msra.mxu0 0.0
  %2445 = vmatpush.msra.mxu0 0.0
  %2446 = vmatpush.msra.mxu0 %v302
  %2447 = vmatpush.msra.mxu0 %v301
  %2448 = vmatmul.f32.gmra.mxu0 %v2430
  %v2449 = vpop.f32.mrf.mxu0
  %v2450 = vadd.f32 0.0, %v2449
  %2451 = vdwg.mxu0
  %v2453 = vsel %vm335, %v103, 0
  %2455 = vmatpush.msra.mxu0 0.0
  %2456 = vmatpush.msra.mxu0 0.0
  %2457 = vmatpush.msra.mxu0 0.0
  %2458 = vmatpush.msra.mxu0 0.0
  %2459 = vmatpush.msra.mxu0 0.0
  %2460 = vmatpush.msra.mxu0 0.0
  %2461 = vmatpush.msra.mxu0 0.0
  %2462 = vmatpush.msra.mxu0 0.0
  %2463 = vmatpush.msra.mxu0 0.0
  %2464 = vmatpush.msra.mxu0 0.0
  %2465 = vmatpush.msra.mxu0 0.0
  %2466 = vmatpush.msra.mxu0 0.0
  %2467 = vmatpush.msra.mxu0 0.0
  %2468 = vmatpush.msra.mxu0 0.0
  %2469 = vmatpush.msra.mxu0 %v304
  %2470 = vmatpush.msra.mxu0 %v303
  %2471 = vmatmul.f32.gmra.mxu0 %v2453
  %v2472 = vpop.f32.mrf.mxu0
  %v2473 = vadd.f32 0.0, %v2472
  %2474 = vdwg.mxu0
  %v2476 = vsel %vm335, %v104, 0
  %2478 = vmatpush.msra.mxu0 0.0
  %2479 = vmatpush.msra.mxu0 0.0
  %2480 = vmatpush.msra.mxu0 0.0
  %2481 = vmatpush.msra.mxu0 0.0
  %2482 = vmatpush.msra.mxu0 0.0
  %2483 = vmatpush.msra.mxu0 0.0
  %2484 = vmatpush.msra.mxu0 0.0
  %2485 = vmatpush.msra.mxu0 0.0
  %2486 = vmatpush.msra.mxu0 0.0
  %2487 = vmatpush.msra.mxu0 0.0
  %2488 = vmatpush.msra.mxu0 0.0
  %2489 = vmatpush.msra.mxu0 0.0
  %2490 = vmatpush.msra.mxu0 0.0
  %2491 = vmatpush.msra.mxu0 0.0
  %2492 = vmatpush.msra.mxu0 %v306
  %2493 = vmatpush.msra.mxu0 %v305
  %2494 = vmatmul.f32.gmra.mxu0 %v2476
  %v2495 = vpop.f32.mrf.mxu0
  %v2496 = vadd.f32 0.0, %v2495
  %2497 = vdwg.mxu0
  %v2499 = vsel %vm335, %v105, 0
  %2501 = vmatpush.msra.mxu0 0.0
  %2502 = vmatpush.msra.mxu0 0.0
  %2503 = vmatpush.msra.mxu0 0.0
  %2504 = vmatpush.msra.mxu0 0.0
  %2505 = vmatpush.msra.mxu0 0.0
  %2506 = vmatpush.msra.mxu0 0.0
  %2507 = vmatpush.msra.mxu0 0.0
  %2508 = vmatpush.msra.mxu0 0.0
  %2509 = vmatpush.msra.mxu0 0.0
  %2510 = vmatpush.msra.mxu0 0.0
  %2511 = vmatpush.msra.mxu0 0.0
  %2512 = vmatpush.msra.mxu0 0.0
  %2513 = vmatpush.msra.mxu0 0.0
  %2514 = vmatpush.msra.mxu0 0.0
  %2515 = vmatpush.msra.mxu0 %v308
  %2516 = vmatpush.msra.mxu0 %v307
  %2517 = vmatmul.f32.gmra.mxu0 %v2499
  %v2518 = vpop.f32.mrf.mxu0
  %v2519 = vadd.f32 0.0, %v2518
  %2520 = vdwg.mxu0
  %v2522 = vsel %vm335, %v106, 0
  %2524 = vmatpush.msra.mxu0 0.0
  %2525 = vmatpush.msra.mxu0 0.0
  %2526 = vmatpush.msra.mxu0 0.0
  %2527 = vmatpush.msra.mxu0 0.0
  %2528 = vmatpush.msra.mxu0 0.0
  %2529 = vmatpush.msra.mxu0 0.0
  %2530 = vmatpush.msra.mxu0 0.0
  %2531 = vmatpush.msra.mxu0 0.0
  %2532 = vmatpush.msra.mxu0 0.0
  %2533 = vmatpush.msra.mxu0 0.0
  %2534 = vmatpush.msra.mxu0 0.0
  %2535 = vmatpush.msra.mxu0 0.0
  %2536 = vmatpush.msra.mxu0 0.0
  %2537 = vmatpush.msra.mxu0 0.0
  %2538 = vmatpush.msra.mxu0 %v310
  %2539 = vmatpush.msra.mxu0 %v309
  %2540 = vmatmul.f32.gmra.mxu0 %v2522
  %v2541 = vpop.f32.mrf.mxu0
  %v2542 = vadd.f32 0.0, %v2541
  %2543 = vdwg.mxu0
  %v2545 = vsel %vm335, %v107, 0
  %2547 = vmatpush.msra.mxu0 0.0
  %2548 = vmatpush.msra.mxu0 0.0
  %2549 = vmatpush.msra.mxu0 0.0
  %2550 = vmatpush.msra.mxu0 0.0
  %2551 = vmatpush.msra.mxu0 0.0
  %2552 = vmatpush.msra.mxu0 0.0
  %2553 = vmatpush.msra.mxu0 0.0
  %2554 = vmatpush.msra.mxu0 0.0
  %2555 = vmatpush.msra.mxu0 0.0
  %2556 = vmatpush.msra.mxu0 0.0
  %2557 = vmatpush.msra.mxu0 0.0
  %2558 = vmatpush.msra.mxu0 0.0
  %2559 = vmatpush.msra.mxu0 0.0
  %2560 = vmatpush.msra.mxu0 0.0
  %2561 = vmatpush.msra.mxu0 %v312
  %2562 = vmatpush.msra.mxu0 %v311
  %2563 = vmatmul.f32.gmra.mxu0 %v2545
  %v2564 = vpop.f32.mrf.mxu0
  %v2565 = vadd.f32 0.0, %v2564
  %2566 = vdwg.mxu0
  %v2568 = vsel %vm335, %v108, 0
  %2570 = vmatpush.msra.mxu0 0.0
  %2571 = vmatpush.msra.mxu0 0.0
  %2572 = vmatpush.msra.mxu0 0.0
  %2573 = vmatpush.msra.mxu0 0.0
  %2574 = vmatpush.msra.mxu0 0.0
  %2575 = vmatpush.msra.mxu0 0.0
  %2576 = vmatpush.msra.mxu0 0.0
  %2577 = vmatpush.msra.mxu0 0.0
  %2578 = vmatpush.msra.mxu0 0.0
  %2579 = vmatpush.msra.mxu0 0.0
  %2580 = vmatpush.msra.mxu0 0.0
  %2581 = vmatpush.msra.mxu0 0.0
  %2582 = vmatpush.msra.mxu0 0.0
  %2583 = vmatpush.msra.mxu0 0.0
  %2584 = vmatpush.msra.mxu0 %v314
  %2585 = vmatpush.msra.mxu0 %v313
  %2586 = vmatmul.f32.gmra.mxu0 %v2568
  %v2587 = vpop.f32.mrf.mxu0
  %v2588 = vadd.f32 0.0, %v2587
  %2589 = vdwg.mxu0
  %v2591 = vsel %vm335, %v109, 0
  %2593 = vmatpush.msra.mxu0 0.0
  %2594 = vmatpush.msra.mxu0 0.0
  %2595 = vmatpush.msra.mxu0 0.0
  %2596 = vmatpush.msra.mxu0 0.0
  %2597 = vmatpush.msra.mxu0 0.0
  %2598 = vmatpush.msra.mxu0 0.0
  %2599 = vmatpush.msra.mxu0 0.0
  %2600 = vmatpush.msra.mxu0 0.0
  %2601 = vmatpush.msra.mxu0 0.0
  %2602 = vmatpush.msra.mxu0 0.0
  %2603 = vmatpush.msra.mxu0 0.0
  %2604 = vmatpush.msra.mxu0 0.0
  %2605 = vmatpush.msra.mxu0 0.0
  %2606 = vmatpush.msra.mxu0 0.0
  %2607 = vmatpush.msra.mxu0 %v316
  %2608 = vmatpush.msra.mxu0 %v315
  %2609 = vmatmul.f32.gmra.mxu0 %v2591
  %v2610 = vpop.f32.mrf.mxu0
  %v2611 = vadd.f32 0.0, %v2610
  %2612 = vdwg.mxu0
  %v2614 = vsel %vm335, %v110, 0
  %2616 = vmatpush.msra.mxu0 0.0
  %2617 = vmatpush.msra.mxu0 0.0
  %2618 = vmatpush.msra.mxu0 0.0
  %2619 = vmatpush.msra.mxu0 0.0
  %2620 = vmatpush.msra.mxu0 0.0
  %2621 = vmatpush.msra.mxu0 0.0
  %2622 = vmatpush.msra.mxu0 0.0
  %2623 = vmatpush.msra.mxu0 0.0
  %2624 = vmatpush.msra.mxu0 0.0
  %2625 = vmatpush.msra.mxu0 0.0
  %2626 = vmatpush.msra.mxu0 0.0
  %2627 = vmatpush.msra.mxu0 0.0
  %2628 = vmatpush.msra.mxu0 0.0
  %2629 = vmatpush.msra.mxu0 0.0
  %2630 = vmatpush.msra.mxu0 %v318
  %2631 = vmatpush.msra.mxu0 %v317
  %2632 = vmatmul.f32.gmra.mxu0 %v2614
  %v2633 = vpop.f32.mrf.mxu0
  %v2634 = vadd.f32 0.0, %v2633
  %2635 = vdwg.mxu0
  %v2637 = vsel %vm335, %v111, 0
  %2639 = vmatpush.msra.mxu0 0.0
  %2640 = vmatpush.msra.mxu0 0.0
  %2641 = vmatpush.msra.mxu0 0.0
  %2642 = vmatpush.msra.mxu0 0.0
  %2643 = vmatpush.msra.mxu0 0.0
  %2644 = vmatpush.msra.mxu0 0.0
  %2645 = vmatpush.msra.mxu0 0.0
  %2646 = vmatpush.msra.mxu0 0.0
  %2647 = vmatpush.msra.mxu0 0.0
  %2648 = vmatpush.msra.mxu0 0.0
  %2649 = vmatpush.msra.mxu0 0.0
  %2650 = vmatpush.msra.mxu0 0.0
  %2651 = vmatpush.msra.mxu0 0.0
  %2652 = vmatpush.msra.mxu0 0.0
  %2653 = vmatpush.msra.mxu0 %v320
  %2654 = vmatpush.msra.mxu0 %v319
  %2655 = vmatmul.f32.gmra.mxu0 %v2637
  %v2656 = vpop.f32.mrf.mxu0
  %v2657 = vadd.f32 0.0, %v2656
  %2658 = vdwg.mxu0
  %v2660 = vsel %vm335, %v112, 0
  %2662 = vmatpush.msra.mxu0 0.0
  %2663 = vmatpush.msra.mxu0 0.0
  %2664 = vmatpush.msra.mxu0 0.0
  %2665 = vmatpush.msra.mxu0 0.0
  %2666 = vmatpush.msra.mxu0 0.0
  %2667 = vmatpush.msra.mxu0 0.0
  %2668 = vmatpush.msra.mxu0 0.0
  %2669 = vmatpush.msra.mxu0 0.0
  %2670 = vmatpush.msra.mxu0 0.0
  %2671 = vmatpush.msra.mxu0 0.0
  %2672 = vmatpush.msra.mxu0 0.0
  %2673 = vmatpush.msra.mxu0 0.0
  %2674 = vmatpush.msra.mxu0 0.0
  %2675 = vmatpush.msra.mxu0 0.0
  %2676 = vmatpush.msra.mxu0 %v322
  %2677 = vmatpush.msra.mxu0 %v321
  %2678 = vmatmul.f32.gmra.mxu0 %v2660
  %v2679 = vpop.f32.mrf.mxu0
  %v2680 = vadd.f32 0.0, %v2679
  %2681 = vdwg.mxu0
  %v2683 = vsel %vm335, %v113, 0
  %2685 = vmatpush.msra.mxu0 0.0
  %2686 = vmatpush.msra.mxu0 0.0
  %2687 = vmatpush.msra.mxu0 0.0
  %2688 = vmatpush.msra.mxu0 0.0
  %2689 = vmatpush.msra.mxu0 0.0
  %2690 = vmatpush.msra.mxu0 0.0
  %2691 = vmatpush.msra.mxu0 0.0
  %2692 = vmatpush.msra.mxu0 0.0
  %2693 = vmatpush.msra.mxu0 0.0
  %2694 = vmatpush.msra.mxu0 0.0
  %2695 = vmatpush.msra.mxu0 0.0
  %2696 = vmatpush.msra.mxu0 0.0
  %2697 = vmatpush.msra.mxu0 0.0
  %2698 = vmatpush.msra.mxu0 0.0
  %2699 = vmatpush.msra.mxu0 %v324
  %2700 = vmatpush.msra.mxu0 %v323
  %2701 = vmatmul.f32.gmra.mxu0 %v2683
  %v2702 = vpop.f32.mrf.mxu0
  %v2703 = vadd.f32 0.0, %v2702
  %2704 = vdwg.mxu0
  %v2706 = vsel %vm335, %v114, 0
  %2708 = vmatpush.msra.mxu0 0.0
  %2709 = vmatpush.msra.mxu0 0.0
  %2710 = vmatpush.msra.mxu0 0.0
  %2711 = vmatpush.msra.mxu0 0.0
  %2712 = vmatpush.msra.mxu0 0.0
  %2713 = vmatpush.msra.mxu0 0.0
  %2714 = vmatpush.msra.mxu0 0.0
  %2715 = vmatpush.msra.mxu0 0.0
  %2716 = vmatpush.msra.mxu0 0.0
  %2717 = vmatpush.msra.mxu0 0.0
  %2718 = vmatpush.msra.mxu0 0.0
  %2719 = vmatpush.msra.mxu0 0.0
  %2720 = vmatpush.msra.mxu0 0.0
  %2721 = vmatpush.msra.mxu0 0.0
  %2722 = vmatpush.msra.mxu0 %v326
  %2723 = vmatpush.msra.mxu0 %v325
  %2724 = vmatmul.f32.gmra.mxu0 %v2706
  %v2725 = vpop.f32.mrf.mxu0
  %v2726 = vadd.f32 0.0, %v2725
  %2727 = vdwg.mxu0
  %v2729 = vsel %vm335, %v115, 0
  %2731 = vmatpush.msra.mxu0 0.0
  %2732 = vmatpush.msra.mxu0 0.0
  %2733 = vmatpush.msra.mxu0 0.0
  %2734 = vmatpush.msra.mxu0 0.0
  %2735 = vmatpush.msra.mxu0 0.0
  %2736 = vmatpush.msra.mxu0 0.0
  %2737 = vmatpush.msra.mxu0 0.0
  %2738 = vmatpush.msra.mxu0 0.0
  %2739 = vmatpush.msra.mxu0 0.0
  %2740 = vmatpush.msra.mxu0 0.0
  %2741 = vmatpush.msra.mxu0 0.0
  %2742 = vmatpush.msra.mxu0 0.0
  %2743 = vmatpush.msra.mxu0 0.0
  %2744 = vmatpush.msra.mxu0 0.0
  %2745 = vmatpush.msra.mxu0 %v328
  %2746 = vmatpush.msra.mxu0 %v327
  %2747 = vmatmul.f32.gmra.mxu0 %v2729
  %v2748 = vpop.f32.mrf.mxu0
  %v2749 = vadd.f32 0.0, %v2748
  %2750 = vdwg.mxu0
  %v2752 = vsel %vm335, %v116, 0
  %2754 = vmatpush.msra.mxu0 0.0
  %2755 = vmatpush.msra.mxu0 0.0
  %2756 = vmatpush.msra.mxu0 0.0
  %2757 = vmatpush.msra.mxu0 0.0
  %2758 = vmatpush.msra.mxu0 0.0
  %2759 = vmatpush.msra.mxu0 0.0
  %2760 = vmatpush.msra.mxu0 0.0
  %2761 = vmatpush.msra.mxu0 0.0
  %2762 = vmatpush.msra.mxu0 0.0
  %2763 = vmatpush.msra.mxu0 0.0
  %2764 = vmatpush.msra.mxu0 0.0
  %2765 = vmatpush.msra.mxu0 0.0
  %2766 = vmatpush.msra.mxu0 0.0
  %2767 = vmatpush.msra.mxu0 0.0
  %2768 = vmatpush.msra.mxu0 %v330
  %2769 = vmatpush.msra.mxu0 %v329
  %2770 = vmatmul.f32.gmra.mxu0 %v2752
  %v2771 = vpop.f32.mrf.mxu0
  %v2772 = vadd.f32 0.0, %v2771
  %2773 = vdwg.mxu0
  %v2775 = vsel %vm335, %v117, 0
  %2777 = vmatpush.msra.mxu0 0.0
  %2778 = vmatpush.msra.mxu0 0.0
  %2779 = vmatpush.msra.mxu0 0.0
  %2780 = vmatpush.msra.mxu0 0.0
  %2781 = vmatpush.msra.mxu0 0.0
  %2782 = vmatpush.msra.mxu0 0.0
  %2783 = vmatpush.msra.mxu0 0.0
  %2784 = vmatpush.msra.mxu0 0.0
  %2785 = vmatpush.msra.mxu0 0.0
  %2786 = vmatpush.msra.mxu0 0.0
  %2787 = vmatpush.msra.mxu0 0.0
  %2788 = vmatpush.msra.mxu0 0.0
  %2789 = vmatpush.msra.mxu0 0.0
  %2790 = vmatpush.msra.mxu0 0.0
  %2791 = vmatpush.msra.mxu0 %v332
  %2792 = vmatpush.msra.mxu0 %v331
  %2793 = vmatmul.f32.gmra.mxu0 %v2775
  %v2794 = vpop.f32.mrf.mxu0
  %v2795 = vadd.f32 0.0, %v2794
  %2796 = vdwg.mxu0
  %v2798 = vsel %vm335, %v118, 0
  %2800 = vmatpush.msra.mxu0 0.0
  %2801 = vmatpush.msra.mxu0 0.0
  %2802 = vmatpush.msra.mxu0 0.0
  %2803 = vmatpush.msra.mxu0 0.0
  %2804 = vmatpush.msra.mxu0 0.0
  %2805 = vmatpush.msra.mxu0 0.0
  %2806 = vmatpush.msra.mxu0 0.0
  %2807 = vmatpush.msra.mxu0 0.0
  %2808 = vmatpush.msra.mxu0 0.0
  %2809 = vmatpush.msra.mxu0 0.0
  %2810 = vmatpush.msra.mxu0 0.0
  %2811 = vmatpush.msra.mxu0 0.0
  %2812 = vmatpush.msra.mxu0 0.0
  %2813 = vmatpush.msra.mxu0 0.0
  %2814 = vmatpush.msra.mxu0 %v334
  %2815 = vmatpush.msra.mxu0 %v333
  %2816 = vmatmul.f32.gmra.mxu0 %v2798
  %v2817 = vpop.f32.mrf.mxu0
  %v2818 = vadd.f32 0.0, %v2817
  %2819 = vdwg.mxu0
  %vm2820 = vcmask 123904
  %2821 = vst.msk [vmem:[%s2] sm:$0x3] %vm2820, %v357
  %2822 = vst.msk [vmem:[%s2 + $0x2] sm:$0x3] %vm2820, %v380
  %2823 = vst.msk [vmem:[%s2 + $0x4] sm:$0x3] %vm2820, %v403
  %2824 = vst.msk [vmem:[%s2 + $0x6] sm:$0x3] %vm2820, %v426
  %2825 = vst.msk [vmem:[%s2 + $0x8] sm:$0x3] %vm2820, %v449
  %2826 = vst.msk [vmem:[%s2 + $0xa] sm:$0x3] %vm2820, %v472
  %2827 = vst.msk [vmem:[%s2 + $0xc] sm:$0x3] %vm2820, %v495
  %2828 = vst.msk [vmem:[%s2 + $0xe] sm:$0x3] %vm2820, %v518
  %2829 = vst.msk [vmem:[%s2 + $0x10] sm:$0x3] %vm2820, %v541
  %2830 = vst.msk [vmem:[%s2 + $0x12] sm:$0x3] %vm2820, %v564
  %2831 = vst.msk [vmem:[%s2 + $0x14] sm:$0x3] %vm2820, %v587
  %2832 = vst.msk [vmem:[%s2 + $0x16] sm:$0x3] %vm2820, %v610
  %2833 = vst.msk [vmem:[%s2 + $0x18] sm:$0x3] %vm2820, %v633
  %2834 = vst.msk [vmem:[%s2 + $0x1a] sm:$0x3] %vm2820, %v656
  %2835 = vst.msk [vmem:[%s2 + $0x1c] sm:$0x3] %vm2820, %v679
  %2836 = vst.msk [vmem:[%s2 + $0x1e] sm:$0x3] %vm2820, %v702
  %2837 = vst.msk [vmem:[%s2 + $0x20] sm:$0x3] %vm2820, %v725
  %2838 = vst.msk [vmem:[%s2 + $0x22] sm:$0x3] %vm2820, %v748
  %2839 = vst.msk [vmem:[%s2 + $0x24] sm:$0x3] %vm2820, %v771
  %2840 = vst.msk [vmem:[%s2 + $0x26] sm:$0x3] %vm2820, %v794
  %2841 = vst.msk [vmem:[%s2 + $0x28] sm:$0x3] %vm2820, %v817
  %2842 = vst.msk [vmem:[%s2 + $0x2a] sm:$0x3] %vm2820, %v840
  %2843 = vst.msk [vmem:[%s2 + $0x2c] sm:$0x3] %vm2820, %v863
  %2844 = vst.msk [vmem:[%s2 + $0x2e] sm:$0x3] %vm2820, %v886
  %2845 = vst.msk [vmem:[%s2 + $0x30] sm:$0x3] %vm2820, %v909
  %2846 = vst.msk [vmem:[%s2 + $0x32] sm:$0x3] %vm2820, %v932
  %2847 = vst.msk [vmem:[%s2 + $0x34] sm:$0x3] %vm2820, %v955
  %2848 = vst.msk [vmem:[%s2 + $0x36] sm:$0x3] %vm2820, %v978
  %2849 = vst.msk [vmem:[%s2 + $0x38] sm:$0x3] %vm2820, %v1001
  %2850 = vst.msk [vmem:[%s2 + $0x3a] sm:$0x3] %vm2820, %v1024
  %2851 = vst.msk [vmem:[%s2 + $0x3c] sm:$0x3] %vm2820, %v1047
  %2852 = vst.msk [vmem:[%s2 + $0x3e] sm:$0x3] %vm2820, %v1070
  %2853 = vst.msk [vmem:[%s2 + $0x40] sm:$0x3] %vm2820, %v1093
  %2854 = vst.msk [vmem:[%s2 + $0x42] sm:$0x3] %vm2820, %v1116
  %2855 = vst.msk [vmem:[%s2 + $0x44] sm:$0x3] %vm2820, %v1139
  %2856 = vst.msk [vmem:[%s2 + $0x46] sm:$0x3] %vm2820, %v1162
  %2857 = vst.msk [vmem:[%s2 + $0x48] sm:$0x3] %vm2820, %v1185
  %2858 = vst.msk [vmem:[%s2 + $0x4a] sm:$0x3] %vm2820, %v1208
  %2859 = vst.msk [vmem:[%s2 + $0x4c] sm:$0x3] %vm2820, %v1231
  %2860 = vst.msk [vmem:[%s2 + $0x4e] sm:$0x3] %vm2820, %v1254
  %2861 = vst.msk [vmem:[%s2 + $0x50] sm:$0x3] %vm2820, %v1277
  %2862 = vst.msk [vmem:[%s2 + $0x52] sm:$0x3] %vm2820, %v1300
  %2863 = vst.msk [vmem:[%s2 + $0x54] sm:$0x3] %vm2820, %v1323
  %2864 = vst.msk [vmem:[%s2 + $0x56] sm:$0x3] %vm2820, %v1346
  %2865 = vst.msk [vmem:[%s2 + $0x58] sm:$0x3] %vm2820, %v1369
  %2866 = vst.msk [vmem:[%s2 + $0x5a] sm:$0x3] %vm2820, %v1392
  %2867 = vst.msk [vmem:[%s2 + $0x5c] sm:$0x3] %vm2820, %v1415
  %2868 = vst.msk [vmem:[%s2 + $0x5e] sm:$0x3] %vm2820, %v1438
  %2869 = vst.msk [vmem:[%s2 + $0x60] sm:$0x3] %vm2820, %v1461
  %2870 = vst.msk [vmem:[%s2 + $0x62] sm:$0x3] %vm2820, %v1484
  %2871 = vst.msk [vmem:[%s2 + $0x64] sm:$0x3] %vm2820, %v1507
  %2872 = vst.msk [vmem:[%s2 + $0x66] sm:$0x3] %vm2820, %v1530
  %2873 = vst.msk [vmem:[%s2 + $0x68] sm:$0x3] %vm2820, %v1553
  %2874 = vst.msk [vmem:[%s2 + $0x6a] sm:$0x3] %vm2820, %v1576
  %2875 = vst.msk [vmem:[%s2 + $0x6c] sm:$0x3] %vm2820, %v1599
  %2876 = vst.msk [vmem:[%s2 + $0x6e] sm:$0x3] %vm2820, %v1622
  %2877 = vst.msk [vmem:[%s2 + $0x70] sm:$0x3] %vm2820, %v1645
  %2878 = vst.msk [vmem:[%s2 + $0x72] sm:$0x3] %vm2820, %v1668
  %2879 = vst.msk [vmem:[%s2 + $0x74] sm:$0x3] %vm2820, %v1691
  %2880 = vst.msk [vmem:[%s2 + $0x76] sm:$0x3] %vm2820, %v1714
  %2881 = vst.msk [vmem:[%s2 + $0x78] sm:$0x3] %vm2820, %v1737
  %2882 = vst.msk [vmem:[%s2 + $0x7a] sm:$0x3] %vm2820, %v1760
  %2883 = vst.msk [vmem:[%s2 + $0x7c] sm:$0x3] %vm2820, %v1783
  %2884 = vst.msk [vmem:[%s2 + $0x7e] sm:$0x3] %vm2820, %v1806
  %2885 = vst.msk [vmem:[%s2 + $0x80] sm:$0x3] %vm2820, %v1829
  %2886 = vst.msk [vmem:[%s2 + $0x82] sm:$0x3] %vm2820, %v1852
  %2887 = vst.msk [vmem:[%s2 + $0x84] sm:$0x3] %vm2820, %v1875
  %2888 = vst.msk [vmem:[%s2 + $0x86] sm:$0x3] %vm2820, %v1898
  %2889 = vst.msk [vmem:[%s2 + $0x88] sm:$0x3] %vm2820, %v1921
  %2890 = vst.msk [vmem:[%s2 + $0x8a] sm:$0x3] %vm2820, %v1944
  %2891 = vst.msk [vmem:[%s2 + $0x8c] sm:$0x3] %vm2820, %v1967
  %2892 = vst.msk [vmem:[%s2 + $0x8e] sm:$0x3] %vm2820, %v1990
  %2893 = vst.msk [vmem:[%s2 + $0x90] sm:$0x3] %vm2820, %v2013
  %2894 = vst.msk [vmem:[%s2 + $0x92] sm:$0x3] %vm2820, %v2036
  %2895 = vst.msk [vmem:[%s2 + $0x94] sm:$0x3] %vm2820, %v2059
  %2896 = vst.msk [vmem:[%s2 + $0x96] sm:$0x3] %vm2820, %v2082
  %2897 = vst.msk [vmem:[%s2 + $0x98] sm:$0x3] %vm2820, %v2105
  %2898 = vst.msk [vmem:[%s2 + $0x9a] sm:$0x3] %vm2820, %v2128
  %2899 = vst.msk [vmem:[%s2 + $0x9c] sm:$0x3] %vm2820, %v2151
  %2900 = vst.msk [vmem:[%s2 + $0x9e] sm:$0x3] %vm2820, %v2174
  %2901 = vst.msk [vmem:[%s2 + $0xa0] sm:$0x3] %vm2820, %v2197
  %2902 = vst.msk [vmem:[%s2 + $0xa2] sm:$0x3] %vm2820, %v2220
  %2903 = vst.msk [vmem:[%s2 + $0xa4] sm:$0x3] %vm2820, %v2243
  %2904 = vst.msk [vmem:[%s2 + $0xa6] sm:$0x3] %vm2820, %v2266
  %2905 = vst.msk [vmem:[%s2 + $0xa8] sm:$0x3] %vm2820, %v2289
  %2906 = vst.msk [vmem:[%s2 + $0xaa] sm:$0x3] %vm2820, %v2312
  %2907 = vst.msk [vmem:[%s2 + $0xac] sm:$0x3] %vm2820, %v2335
  %2908 = vst.msk [vmem:[%s2 + $0xae] sm:$0x3] %vm2820, %v2358
  %2909 = vst.msk [vmem:[%s2 + $0xb0] sm:$0x3] %vm2820, %v2381
  %2910 = vst.msk [vmem:[%s2 + $0xb2] sm:$0x3] %vm2820, %v2404
  %2911 = vst.msk [vmem:[%s2 + $0xb4] sm:$0x3] %vm2820, %v2427
  %2912 = vst.msk [vmem:[%s2 + $0xb6] sm:$0x3] %vm2820, %v2450
  %2913 = vst.msk [vmem:[%s2 + $0xb8] sm:$0x3] %vm2820, %v2473
  %2914 = vst.msk [vmem:[%s2 + $0xba] sm:$0x3] %vm2820, %v2496
  %2915 = vst.msk [vmem:[%s2 + $0xbc] sm:$0x3] %vm2820, %v2519
  %2916 = vst.msk [vmem:[%s2 + $0xbe] sm:$0x3] %vm2820, %v2542
  %2917 = vst.msk [vmem:[%s2 + $0xc0] sm:$0x3] %vm2820, %v2565
  %2918 = vst.msk [vmem:[%s2 + $0xc2] sm:$0x3] %vm2820, %v2588
  %2919 = vst.msk [vmem:[%s2 + $0xc4] sm:$0x3] %vm2820, %v2611
  %2920 = vst.msk [vmem:[%s2 + $0xc6] sm:$0x3] %vm2820, %v2634
  %2921 = vst.msk [vmem:[%s2 + $0xc8] sm:$0x3] %vm2820, %v2657
  %2922 = vst.msk [vmem:[%s2 + $0xca] sm:$0x3] %vm2820, %v2680
  %2923 = vst.msk [vmem:[%s2 + $0xcc] sm:$0x3] %vm2820, %v2703
  %2924 = vst.msk [vmem:[%s2 + $0xce] sm:$0x3] %vm2820, %v2726
  %2925 = vst.msk [vmem:[%s2 + $0xd0] sm:$0x3] %vm2820, %v2749
  %2926 = vst.msk [vmem:[%s2 + $0xd2] sm:$0x3] %vm2820, %v2772
  %2927 = vst.msk [vmem:[%s2 + $0xd4] sm:$0x3] %vm2820, %v2795
  %2928 = vst.msk [vmem:[%s2 + $0xd6] sm:$0x3] %vm2820, %v2818
  // Predicated region
  $region10: #{simple_block3d_forward.42} parent=0 // pred_check
    _
  $region11: #{simple_block3d_forward.42} parent=0 // pred_check_branch
    %2930 = sbr.rel (0) target = $region13
  $region12: #{simple_block3d_forward.42} parent=0 // pred_region
    _
  $region13: #{simple_block3d_forward.42} parent=0 // pred_fallthru
    _
  // Predicated region
  $region14: #{simple_block3d_forward.42} parent=0 // pred_check
    _
  $region15: #{simple_block3d_forward.42} parent=0 // pred_check_branch
    %2932 = sbr.rel (0) target = $region17
  $region16: #{simple_block3d_forward.42} parent=0 // pred_region
    _
  $region17: #{simple_block3d_forward.42} parent=0 // pred_fallthru
    _

// kernel: reverse.12
$region0: #{reverse.12}
  #allocation0 [shape = 's32[1]{0}', space=sflag, size = 0x4, scoped, tag = 'scoped memory for reverse.12']
  %s0 = inlined_call_operand.vmem [shape: f32[8,2,8,8,3], index: 0, kind: input, shape index: {}]
  %s1 = inlined_call_operand.vmem [shape: f32[8,2,8,8,3], index: 1, kind: output, shape index: {}]
  %s2 = scalar_lea.vmem %s0, 16
  %v3 = vld [vmem:[%s2] sm:$0xff]
  %4 = vst [vmem:[%s1] sm:$0xff] %v3
  %s5 = scalar_lea.vmem %s0, 64
  %v6 = vld [vmem:[%s5] sm:$0xff]
  %s7 = scalar_lea.vmem %s1, 48
  %8 = vst [vmem:[%s7] sm:$0xff] %v6
  %s9 = scalar_lea.vmem %s0, 112
  %v10 = vld [vmem:[%s9] sm:$0xff]
  %s11 = scalar_lea.vmem %s1, 96
  %12 = vst [vmem:[%s11] sm:$0xff] %v10
  %s13 = scalar_lea.vmem %s0, 160
  %v14 = vld [vmem:[%s13] sm:$0xff]
  %s15 = scalar_lea.vmem %s1, 144
  %16 = vst [vmem:[%s15] sm:$0xff] %v14
  %s17 = scalar_lea.vmem %s0, 208
  %v18 = vld [vmem:[%s17] sm:$0xff]
  %s19 = scalar_lea.vmem %s1, 192
  %20 = vst [vmem:[%s19] sm:$0xff] %v18
  %s21 = scalar_lea.vmem %s0, 256
  %v22 = vld [vmem:[%s21] sm:$0xff]
  %s23 = scalar_lea.vmem %s1, 240
  %24 = vst [vmem:[%s23] sm:$0xff] %v22
  %s25 = scalar_lea.vmem %s0, 304
  %v26 = vld [vmem:[%s25] sm:$0xff]
  %s27 = scalar_lea.vmem %s1, 288
  %28 = vst [vmem:[%s27] sm:$0xff] %v26
  %s29 = scalar_lea.vmem %s0, 352
  %v30 = vld [vmem:[%s29] sm:$0xff]
  %s31 = scalar_lea.vmem %s1, 336
  %32 = vst [vmem:[%s31] sm:$0xff] %v30
  %s33 = scalar_lea.vmem %s0, 40
  %v34 = vld [vmem:[%s33] sm:$0xff]
  %s35 = scalar_lea.vmem %s1, 24
  %36 = vst [vmem:[%s35] sm:$0xff] %v34
  %s37 = scalar_lea.vmem %s0, 88
  %v38 = vld [vmem:[%s37] sm:$0xff]
  %s39 = scalar_lea.vmem %s1, 72
  %40 = vst [vmem:[%s39] sm:$0xff] %v38
  %s41 = scalar_lea.vmem %s0, 136
  %v42 = vld [vmem:[%s41] sm:$0xff]
  %s43 = scalar_lea.vmem %s1, 120
  %44 = vst [vmem:[%s43] sm:$0xff] %v42
  %s45 = scalar_lea.vmem %s0, 184
  %v46 = vld [vmem:[%s45] sm:$0xff]
  %s47 = scalar_lea.vmem %s1, 168
  %48 = vst [vmem:[%s47] sm:$0xff] %v46
  %s49 = scalar_lea.vmem %s0, 232
  %v50 = vld [vmem:[%s49] sm:$0xff]
  %s51 = scalar_lea.vmem %s1, 216
  %52 = vst [vmem:[%s51] sm:$0xff] %v50
  %s53 = scalar_lea.vmem %s0, 280
  %v54 = vld [vmem:[%s53] sm:$0xff]
  %s55 = scalar_lea.vmem %s1, 264
  %56 = vst [vmem:[%s55] sm:$0xff] %v54
  %s57 = scalar_lea.vmem %s0, 328
  %v58 = vld [vmem:[%s57] sm:$0xff]
  %s59 = scalar_lea.vmem %s1, 312
  %60 = vst [vmem:[%s59] sm:$0xff] %v58
  %s61 = scalar_lea.vmem %s0, 376
  %v62 = vld [vmem:[%s61] sm:$0xff]
  %s63 = scalar_lea.vmem %s1, 360
  %64 = vst [vmem:[%s63] sm:$0xff] %v62
  %s65 = scalar_lea.vmem %s0, 8
  %v66 = vld [vmem:[%s65] sm:$0xff]
  %s67 = scalar_lea.vmem %s1, 8
  %68 = vst [vmem:[%s67] sm:$0xff] %v66
  %s69 = scalar_lea.vmem %s0, 56
  %v70 = vld [vmem:[%s69] sm:$0xff]
  %s71 = scalar_lea.vmem %s1, 56
  %72 = vst [vmem:[%s71] sm:$0xff] %v70
  %s73 = scalar_lea.vmem %s0, 104
  %v74 = vld [vmem:[%s73] sm:$0xff]
  %s75 = scalar_lea.vmem %s1, 104
  %76 = vst [vmem:[%s75] sm:$0xff] %v74
  %s77 = scalar_lea.vmem %s0, 152
  %v78 = vld [vmem:[%s77] sm:$0xff]
  %s79 = scalar_lea.vmem %s1, 152
  %80 = vst [vmem:[%s79] sm:$0xff] %v78
  %s81 = scalar_lea.vmem %s0, 200
  %v82 = vld [vmem:[%s81] sm:$0xff]
  %s83 = scalar_lea.vmem %s1, 200
  %84 = vst [vmem:[%s83] sm:$0xff] %v82
  %s85 = scalar_lea.vmem %s0, 248
  %v86 = vld [vmem:[%s85] sm:$0xff]
  %s87 = scalar_lea.vmem %s1, 248
  %88 = vst [vmem:[%s87] sm:$0xff] %v86
  %s89 = scalar_lea.vmem %s0, 296
  %v90 = vld [vmem:[%s89] sm:$0xff]
  %s91 = scalar_lea.vmem %s1, 296
  %92 = vst [vmem:[%s91] sm:$0xff] %v90
  %s93 = scalar_lea.vmem %s0, 344
  %v94 = vld [vmem:[%s93] sm:$0xff]
  %s95 = scalar_lea.vmem %s1, 344
  %96 = vst [vmem:[%s95] sm:$0xff] %v94
  %s97 = scalar_lea.vmem %s0, 32
  %v98 = vld [vmem:[%s97] sm:$0xff]
  %s99 = scalar_lea.vmem %s1, 32
  %100 = vst [vmem:[%s99] sm:$0xff] %v98
  %s101 = scalar_lea.vmem %s0, 80
  %v102 = vld [vmem:[%s101] sm:$0xff]
  %s103 = scalar_lea.vmem %s1, 80
  %104 = vst [vmem:[%s103] sm:$0xff] %v102
  %s105 = scalar_lea.vmem %s0, 128
  %v106 = vld [vmem:[%s105] sm:$0xff]
  %s107 = scalar_lea.vmem %s1, 128
  %108 = vst [vmem:[%s107] sm:$0xff] %v106
  %s109 = scalar_lea.vmem %s0, 176
  %v110 = vld [vmem:[%s109] sm:$0xff]
  %s111 = scalar_lea.vmem %s1, 176
  %112 = vst [vmem:[%s111] sm:$0xff] %v110
  %s113 = scalar_lea.vmem %s0, 224
  %v114 = vld [vmem:[%s113] sm:$0xff]
  %s115 = scalar_lea.vmem %s1, 224
  %116 = vst [vmem:[%s115] sm:$0xff] %v114
  %s117 = scalar_lea.vmem %s0, 272
  %v118 = vld [vmem:[%s117] sm:$0xff]
  %s119 = scalar_lea.vmem %s1, 272
  %120 = vst [vmem:[%s119] sm:$0xff] %v118
  %s121 = scalar_lea.vmem %s0, 320
  %v122 = vld [vmem:[%s121] sm:$0xff]
  %s123 = scalar_lea.vmem %s1, 320
  %124 = vst [vmem:[%s123] sm:$0xff] %v122
  %s125 = scalar_lea.vmem %s0, 368
  %v126 = vld [vmem:[%s125] sm:$0xff]
  %s127 = scalar_lea.vmem %s1, 368
  %128 = vst [vmem:[%s127] sm:$0xff] %v126
  %v129 = vld [vmem:[%s0] sm:$0xff]
  %s130 = scalar_lea.vmem %s1, 16
  %131 = vst [vmem:[%s130] sm:$0xff] %v129
  %s132 = scalar_lea.vmem %s0, 48
  %v133 = vld [vmem:[%s132] sm:$0xff]
  %s134 = scalar_lea.vmem %s1, 64
  %135 = vst [vmem:[%s134] sm:$0xff] %v133
  %s136 = scalar_lea.vmem %s0, 96
  %v137 = vld [vmem:[%s136] sm:$0xff]
  %s138 = scalar_lea.vmem %s1, 112
  %139 = vst [vmem:[%s138] sm:$0xff] %v137
  %s140 = scalar_lea.vmem %s0, 144
  %v141 = vld [vmem:[%s140] sm:$0xff]
  %s142 = scalar_lea.vmem %s1, 160
  %143 = vst [vmem:[%s142] sm:$0xff] %v141
  %s144 = scalar_lea.vmem %s0, 192
  %v145 = vld [vmem:[%s144] sm:$0xff]
  %s146 = scalar_lea.vmem %s1, 208
  %147 = vst [vmem:[%s146] sm:$0xff] %v145
  %s148 = scalar_lea.vmem %s0, 240
  %v149 = vld [vmem:[%s148] sm:$0xff]
  %s150 = scalar_lea.vmem %s1, 256
  %151 = vst [vmem:[%s150] sm:$0xff] %v149
  %s152 = scalar_lea.vmem %s0, 288
  %v153 = vld [vmem:[%s152] sm:$0xff]
  %s154 = scalar_lea.vmem %s1, 304
  %155 = vst [vmem:[%s154] sm:$0xff] %v153
  %s156 = scalar_lea.vmem %s0, 336
  %v157 = vld [vmem:[%s156] sm:$0xff]
  %s158 = scalar_lea.vmem %s1, 352
  %159 = vst [vmem:[%s158] sm:$0xff] %v157
  %s160 = scalar_lea.vmem %s0, 24
  %v161 = vld [vmem:[%s160] sm:$0xff]
  %s162 = scalar_lea.vmem %s1, 40
  %163 = vst [vmem:[%s162] sm:$0xff] %v161
  %s164 = scalar_lea.vmem %s0, 72
  %v165 = vld [vmem:[%s164] sm:$0xff]
  %s166 = scalar_lea.vmem %s1, 88
  %167 = vst [vmem:[%s166] sm:$0xff] %v165
  %s168 = scalar_lea.vmem %s0, 120
  %v169 = vld [vmem:[%s168] sm:$0xff]
  %s170 = scalar_lea.vmem %s1, 136
  %171 = vst [vmem:[%s170] sm:$0xff] %v169
  %s172 = scalar_lea.vmem %s0, 168
  %v173 = vld [vmem:[%s172] sm:$0xff]
  %s174 = scalar_lea.vmem %s1, 184
  %175 = vst [vmem:[%s174] sm:$0xff] %v173
  %s176 = scalar_lea.vmem %s0, 216
  %v177 = vld [vmem:[%s176] sm:$0xff]
  %s178 = scalar_lea.vmem %s1, 232
  %179 = vst [vmem:[%s178] sm:$0xff] %v177
  %s180 = scalar_lea.vmem %s0, 264
  %v181 = vld [vmem:[%s180] sm:$0xff]
  %s182 = scalar_lea.vmem %s1, 280
  %183 = vst [vmem:[%s182] sm:$0xff] %v181
  %s184 = scalar_lea.vmem %s0, 312
  %v185 = vld [vmem:[%s184] sm:$0xff]
  %s186 = scalar_lea.vmem %s1, 328
  %187 = vst [vmem:[%s186] sm:$0xff] %v185
  %s188 = scalar_lea.vmem %s0, 360
  %v189 = vld [vmem:[%s188] sm:$0xff]
  %s190 = scalar_lea.vmem %s1, 376
  %191 = vst [vmem:[%s190] sm:$0xff] %v189

// kernel: simple_block3d_forward.43
$region0: #{simple_block3d_forward.43}
  #allocation0 [shape = 'u32[]', space=smem, size = 0x4, offset = 0x4, fixed_abs, tag = 'smem constant byte address 0x4 - core index']
  #allocation1 [shape = 'u32[72,128]{1,0:T(1,128)}', space=vmem, size = 0x9000, scoped, tag = 'internal scratch']
  %s0 = inlined_call_operand.vmem [shape: f32[8,1024], index: 0, kind: input, shape index: {}]
  %s1 = inlined_call_operand.vmem [shape: f32[8,8], index: 1, kind: input, shape index: {}]
  %s2 = inlined_call_operand.vmem [shape: f32[8,1], index: 2, kind: input, shape index: {}]
  %s3 = inlined_call_operand.vmem [shape: f32[8,1024], index: 3, kind: input, shape index: {}]
  %s4 = inlined_call_operand.vmem [shape: f32[8,1024], index: 4, kind: output, shape index: {}]
  %s5 = sld [smem:[#allocation0]]
  $region49: #{simple_block3d_forward.43} parent=0
    _
  %s7 = ssub.s32 1, %s5
  %s8 = scalar_select 0, %s7, %s5
  loop: start=0, step=1, limit=4
  $region2: #{simple_block3d_forward.43} parent=0 // loop_pre_header
    _
  $region3: #{simple_block3d_forward.43} parent=0 // loop_header
    %s10 = sphi 0, %s14
    %p11 = scmp.ge.s32.totalorder %s10, 4
    %s20 = sphi 0, %s22
    %s23 = sphi 0, %s20
    %s24 = sphi 0, %s23
    %s40 = sphi 0, %s24
    %s44 = sphi 0, %s44
    %s46 = sphi 0, %s44
    %s47 = sphi 0, %s46
    %s61 = sphi 0, %s47
    %s65 = sphi 0, %s65
    %s67 = sphi 0, %s65
    %s68 = sphi 0, %s67
    %s82 = sphi 0, %s68
    %s88 = sphi 0, %s90
    %s91 = sphi 0, %s88
    %s92 = sphi 0, %s91
    %s108 = sphi 0, %s92
    %s114 = sphi 0, %s116
    %s117 = sphi 0, %s114
    %s118 = sphi 0, %s117
    %s134 = sphi 0, %s118
  $region4: #{simple_block3d_forward.43} parent=0 // loop_header_branch
    %13 = sbr.rel (%p11) target = $region8
  $region5: #{simple_block3d_forward.43} parent=0 // loop_body
    %s15 = ssub.s32 %s10, 1
    %s16 = ssub.s32 %s10, 2
    %s17 = sadd.s32 %s10, 1
    %s18 = ssub.s32 %s10, %s17
    %p19 = scmp.eq.s32.totalorder %s18, 0
    %s21 = sadd.s32 %s20, 1
    %s22 = scalar_select %p19, %s20, %s21
    %p25 = pneg %p19
    %p26 = scmp.eq.s32.totalorder %s10, 1
    %p27 = por %p25, %p26
    %p28 = scmp.ne.s32.totalorder %s20, %s23
    %p29 = scmp.eq.s32.totalorder %s10, 0
    %p30 = por %p28, %p29
    %p31 = scmp.ne.s32.totalorder %s20, %s23
    %p32 = scmp.eq.s32.totalorder %s15, 1
    %p33 = por %p31, %p32
    %p34 = scmp.ne.s32.totalorder %s23, %s24
    %p35 = scmp.eq.s32.totalorder %s15, 0
    %p36 = por %p34, %p35
    %p37 = scmp.ne.s32.totalorder %s23, %s24
    %p38 = scmp.eq.s32.totalorder %s16, 1
    %p39 = por %p37, %p38
    %p41 = scmp.ne.s32.totalorder %s24, %s40
    %p42 = scmp.eq.s32.totalorder %s16, 0
    %p43 = por %p41, %p42
    %s45 = sadd.s32 %s44, 1
    %p48 = scmp.eq.s32.totalorder %s10, 1
    %p49 = scmp.ne.s32.totalorder %s44, %s46
    %p50 = scmp.eq.s32.totalorder %s10, 0
    %p51 = por %p49, %p50
    %p52 = scmp.ne.s32.totalorder %s44, %s46
    %p53 = scmp.eq.s32.totalorder %s15, 1
    %p54 = por %p52, %p53
    %p55 = scmp.ne.s32.totalorder %s46, %s47
    %p56 = scmp.eq.s32.totalorder %s15, 0
    %p57 = por %p55, %p56
    %p58 = scmp.ne.s32.totalorder %s46, %s47
    %p59 = scmp.eq.s32.totalorder %s16, 1
    %p60 = por %p58, %p59
    %p62 = scmp.ne.s32.totalorder %s47, %s61
    %p63 = scmp.eq.s32.totalorder %s16, 0
    %p64 = por %p62, %p63
    %s66 = sadd.s32 %s65, 1
    %p69 = scmp.eq.s32.totalorder %s10, 1
    %p70 = scmp.ne.s32.totalorder %s65, %s67
    %p71 = scmp.eq.s32.totalorder %s10, 0
    %p72 = por %p70, %p71
    %p73 = scmp.ne.s32.totalorder %s65, %s67
    %p74 = scmp.eq.s32.totalorder %s15, 1
    %p75 = por %p73, %p74
    %p76 = scmp.ne.s32.totalorder %s67, %s68
    %p77 = scmp.eq.s32.totalorder %s15, 0
    %p78 = por %p76, %p77
    %p79 = scmp.ne.s32.totalorder %s67, %s68
    %p80 = scmp.eq.s32.totalorder %s16, 1
    %p81 = por %p79, %p80
    %p83 = scmp.ne.s32.totalorder %s68, %s82
    %p84 = scmp.eq.s32.totalorder %s16, 0
    %p85 = por %p83, %p84
    %s86 = ssub.s32 %s10, %s17
    %p87 = scmp.eq.s32.totalorder %s86, 0
    %s89 = sadd.s32 %s88, 1
    %s90 = scalar_select %p87, %s88, %s89
    %p93 = pneg %p87
    %p94 = scmp.eq.s32.totalorder %s10, 1
    %p95 = por %p93, %p94
    %p96 = scmp.ne.s32.totalorder %s88, %s91
    %p97 = scmp.eq.s32.totalorder %s10, 0
    %p98 = por %p96, %p97
    %p99 = scmp.ne.s32.totalorder %s88, %s91
    %p100 = scmp.eq.s32.totalorder %s15, 1
    %p101 = por %p99, %p100
    %p102 = scmp.ne.s32.totalorder %s91, %s92
    %p103 = scmp.eq.s32.totalorder %s15, 0
    %p104 = por %p102, %p103
    %p105 = scmp.ne.s32.totalorder %s91, %s92
    %p106 = scmp.eq.s32.totalorder %s16, 1
    %p107 = por %p105, %p106
    %p109 = scmp.ne.s32.totalorder %s92, %s108
    %p110 = scmp.eq.s32.totalorder %s16, 0
    %p111 = por %p109, %p110
    %s112 = ssub.s32 %s10, %s17
    %p113 = scmp.eq.s32.totalorder %s112, 0
    %s115 = sadd.s32 %s114, 1
    %s116 = scalar_select %p113, %s114, %s115
    %p119 = pneg %p113
    %p120 = scmp.eq.s32.totalorder %s10, 1
    %p121 = por %p119, %p120
    %p122 = scmp.ne.s32.totalorder %s114, %s117
    %p123 = scmp.eq.s32.totalorder %s10, 0
    %p124 = por %p122, %p123
    %p125 = scmp.ne.s32.totalorder %s114, %s117
    %p126 = scmp.eq.s32.totalorder %s15, 1
    %p127 = por %p125, %p126
    %p128 = scmp.ne.s32.totalorder %s117, %s118
    %p129 = scmp.eq.s32.totalorder %s15, 0
    %p130 = por %p128, %p129
    %p131 = scmp.ne.s32.totalorder %s117, %s118
    %p132 = scmp.eq.s32.totalorder %s16, 1
    %p133 = por %p131, %p132
    %p135 = scmp.ne.s32.totalorder %s118, %s134
    %p136 = scmp.eq.s32.totalorder %s16, 0
    %p137 = por %p135, %p136
    %p138 = scmp.le.s32.totalorder 1, %s10
    %p139 = scmp.lt.s32.totalorder %s10, 3
    %p140 = pnand %p138, %p139
    %p141 = pneg %p140
    // Predicated region
    $region9: #{simple_block3d_forward.43} parent=5 // pred_check
      _
    $region10: #{simple_block3d_forward.43} parent=5 // pred_check_branch
      %143 = sbr.rel (%p140) target = $region12
    $region11: #{simple_block3d_forward.43} parent=5 // pred_region
      %s144 = ssub.s32 %s10, 1
      // Predicated region
      $region13: #{simple_block3d_forward.43} parent=11 // pred_check
        %p145 = pneg %p57
      $region14: #{simple_block3d_forward.43} parent=11 // pred_check_branch
        %147 = sbr.rel (%p145) target = $region16
      $region15: #{simple_block3d_forward.43} parent=11 // pred_region
        _
      $region16: #{simple_block3d_forward.43} parent=11 // pred_fallthru
        _
      // Predicated region
      $region17: #{simple_block3d_forward.43} parent=11 // pred_check
        %p148 = pneg %p78
      $region18: #{simple_block3d_forward.43} parent=11 // pred_check_branch
        %150 = sbr.rel (%p148) target = $region20
      $region19: #{simple_block3d_forward.43} parent=11 // pred_region
        _
      $region20: #{simple_block3d_forward.43} parent=11 // pred_fallthru
        _
    $region12: #{simple_block3d_forward.43} parent=5 // pred_fallthru
      _
    %p151 = scmp.lt.s32.totalorder %s10, 2
    // Predicated region
    $region21: #{simple_block3d_forward.43} parent=5 // pred_check
      %p152 = pneg %p151
    $region22: #{simple_block3d_forward.43} parent=5 // pred_check_branch
      %154 = sbr.rel (%p152) target = $region24
    $region23: #{simple_block3d_forward.43} parent=5 // pred_region
      // Predicated region
      $region25: #{simple_block3d_forward.43} parent=23 // pred_check
        %p155 = pneg %p30
      $region26: #{simple_block3d_forward.43} parent=23 // pred_check_branch
        %157 = sbr.rel (%p155) target = $region28
      $region27: #{simple_block3d_forward.43} parent=23 // pred_region
        %s158 = smul.u32 4, %s10
        %p159 = scmp.lt.s32.totalorder %s158, 7
        %s160 = scalar_select %p159, %s158, 7
        %s161 = smul.addr %s160, 8
        %s162 = scalar_lea.vmem %s0, %s161
        %s163 = smul.u32 4, %s10
      $region28: #{simple_block3d_forward.43} parent=23 // pred_fallthru
        _
      // Predicated region
      $region29: #{simple_block3d_forward.43} parent=23 // pred_check
        %p164 = pneg %p98
      $region30: #{simple_block3d_forward.43} parent=23 // pred_check_branch
        %166 = sbr.rel (%p164) target = $region32
      $region31: #{simple_block3d_forward.43} parent=23 // pred_region
        %s167 = smul.u32 4, %s10
        %p168 = scmp.lt.s32.totalorder %s167, 7
        %s169 = scalar_select %p168, %s167, 7
        %s170 = smul.addr %s169, 8
        %s171 = scalar_lea.vmem %s3, %s170
        %s172 = smul.u32 4, %s10
      $region32: #{simple_block3d_forward.43} parent=23 // pred_fallthru
        _
    $region24: #{simple_block3d_forward.43} parent=5 // pred_fallthru
      _
    %p173 = scmp.le.s32.totalorder 1, %s10
    %p174 = scmp.lt.s32.totalorder %s10, 3
    %p175 = pnand %p173, %p174
    %p176 = pneg %p175
    // Predicated region
    $region33: #{simple_block3d_forward.43} parent=5 // pred_check
      _
    $region34: #{simple_block3d_forward.43} parent=5 // pred_check_branch
      %178 = sbr.rel (%p175) target = $region36
    $region35: #{simple_block3d_forward.43} parent=5 // pred_region
      %s179 = ssub.s32 %s10, 1
      %s180 = smul.u32 4, %s15
      %p181 = scmp.lt.s32.totalorder %s180, 7
      %s182 = scalar_select %p181, %s180, 7
      %s183 = smul.addr %s182, 8
      %s184 = scalar_lea.vmem %s0, %s183
      %p185 = pneg %p36
      %p186 = pneg %p33
      %p187 = pneg %p57
      %p188 = pneg %p54
      %p189 = pneg %p78
      %p190 = pneg %p75
      %s191 = smul.u32 4, %s15
      %p192 = scmp.lt.s32.totalorder %s191, 7
      %s193 = scalar_select %p192, %s191, 7
      %s194 = smul.addr %s193, 8
      %s195 = scalar_lea.vmem %s3, %s194
      %p196 = pneg %p104
      %p197 = pneg %p101
      %p198 = pneg %p130
      %p199 = pneg %p127
      %s200 = smul.u32 4, %s15
      %p201 = scmp.lt.s32.totalorder %s200, 7
      %s202 = scalar_select %p201, %s200, 7
      %s203 = smul.addr %s202, 8
      %s204 = scalar_lea.vmem %s4, %s203
      %s205 = smul.u32 4, %s15
      %p206 = scmp.lt.s32.totalorder %s205, 7
      %s207 = scalar_select %p206, %s205, 7
      %s208 = smul.addr %s207, 8
      %s209 = scalar_lea.vmem %s0, %s208
      %s210 = smul.u32 4, %s15
      %s211 = smul.u32 4, %s15
      %p212 = scmp.lt.s32.totalorder %s211, 7
      %s213 = scalar_select %p212, %s211, 7
      %s214 = smul.addr %s213, 8
      %s215 = scalar_lea.vmem %s3, %s214
      %s216 = smul.u32 4, %s15
      %s217 = smul.u32 4, %s15
      %p218 = scmp.lt.s32.totalorder %s217, 7
      %s219 = scalar_select %p218, %s217, 7
      %s220 = smul.addr %s219, 8
      %s221 = scalar_lea.vmem %s4, %s220
      %s222 = smul.u32 4, %s15
      %v224 = vld [vmem:[%s1] sm:$0xff]
      %v225 = vpack.c.bf16 %v224, %v224
      %v226 = vld [vmem:[%s209] sm:$0xff]
      %v227 = vld [vmem:[%s209 + $0x8] sm:$0xff]
      %v228 = vld [vmem:[%s209 + $0x10] sm:$0xff]
      %v229 = vld [vmem:[%s209 + $0x18] sm:$0xff]
      %v230 = vpack.c.bf16 %v226, %v226
      %v231 = vpack.c.bf16 %v227, %v227
      %v232 = vpack.c.bf16 %v228, %v228
      %v233 = vpack.c.bf16 %v229, %v229
      %v234 = vld [vmem:[%s2] sm:$0xff]
      %236 = vset.pattern.permute.xlu0 0
      %237 = vperm.xlu0 %236, %v234
      %v238 = vpop.permute.xlu0 %237
      %vm240 = vcmask 64512
      %v242 = vsel %vm240, %v225, 0
      %vm244 = vcmask 1043456
      %v246 = vsel %vm244, %v230, 0
      %v249 = vsel %vm244, %v231, 0
      %v252 = vsel %vm244, %v232, 0
      %v255 = vsel %vm244, %v233, 0
      %257 = vmatpush.bf16.msra.mxu0 0
      %258 = vmatpush.bf16.msra.mxu0 0
      %259 = vmatpush.bf16.msra.mxu0 0
      %260 = vmatpush.bf16.msra.mxu0 0
      %261 = vmatpush.bf16.msra.mxu0 0
      %262 = vmatpush.bf16.msra.mxu0 0
      %263 = vmatpush.bf16.msra.mxu0 0
      %264 = vmatpush.bf16.msra.mxu0 %v246
      %265 = vmatmul.bf16.gmra.mxu0 %v242
      %v266 = vpop.f32.mrf.mxu0
      %v267 = vadd.f32 %v238, %v266
      %v268 = vpop.f32.mrf.mxu0
      %269 = vdwg.mxu0
      %270 = vmatpush.bf16.msra.mxu0 0
      %271 = vmatpush.bf16.msra.mxu0 0
      %272 = vmatpush.bf16.msra.mxu0 0
      %273 = vmatpush.bf16.msra.mxu0 0
      %274 = vmatpush.bf16.msra.mxu0 0
      %275 = vmatpush.bf16.msra.mxu0 0
      %276 = vmatpush.bf16.msra.mxu0 0
      %277 = vmatpush.bf16.msra.mxu0 %v249
      %278 = vmatmul.bf16.gmra.mxu0 %v242
      %v279 = vpop.f32.mrf.mxu0
      %v280 = vadd.f32 %v238, %v279
      %v281 = vpop.f32.mrf.mxu0
      %282 = vdwg.mxu0
      %283 = vmatpush.bf16.msra.mxu0 0
      %284 = vmatpush.bf16.msra.mxu0 0
      %285 = vmatpush.bf16.msra.mxu0 0
      %286 = vmatpush.bf16.msra.mxu0 0
      %287 = vmatpush.bf16.msra.mxu0 0
      %288 = vmatpush.bf16.msra.mxu0 0
      %289 = vmatpush.bf16.msra.mxu0 0
      %290 = vmatpush.bf16.msra.mxu0 %v252
      %291 = vmatmul.bf16.gmra.mxu0 %v242
      %v292 = vpop.f32.mrf.mxu0
      %v293 = vadd.f32 %v238, %v292
      %v294 = vpop.f32.mrf.mxu0
      %295 = vdwg.mxu0
      %296 = vmatpush.bf16.msra.mxu0 0
      %297 = vmatpush.bf16.msra.mxu0 0
      %298 = vmatpush.bf16.msra.mxu0 0
      %299 = vmatpush.bf16.msra.mxu0 0
      %300 = vmatpush.bf16.msra.mxu0 0
      %301 = vmatpush.bf16.msra.mxu0 0
      %302 = vmatpush.bf16.msra.mxu0 0
      %303 = vmatpush.bf16.msra.mxu0 %v255
      %304 = vmatmul.bf16.gmra.mxu0 %v242
      %v305 = vpop.f32.mrf.mxu0
      %v306 = vadd.f32 %v238, %v305
      %v307 = vpop.f32.mrf.mxu0
      %308 = vdwg.mxu0
      %v309 = vld [vmem:[%s215] sm:$0xff]
      %v310 = vld [vmem:[%s215 + $0x8] sm:$0xff]
      %v311 = vld [vmem:[%s215 + $0x10] sm:$0xff]
      %v312 = vld [vmem:[%s215 + $0x18] sm:$0xff]
      %v313 = vadd.f32 %v267, %v309
      %v314 = vadd.f32 %v280, %v310
      %v315 = vadd.f32 %v293, %v311
      %v316 = vadd.f32 %v306, %v312
      %v317 = vmax.f32 %v313, 0.0
      %v318 = vmax.f32 %v314, 0.0
      %v319 = vmax.f32 %v315, 0.0
      %v320 = vmax.f32 %v316, 0.0
      %321 = vst [vmem:[%s221] sm:$0xff] %v317
      %322 = vst [vmem:[%s221 + $0x8] sm:$0xff] %v318
      %323 = vst [vmem:[%s221 + $0x10] sm:$0xff] %v319
      %324 = vst [vmem:[%s221 + $0x18] sm:$0xff] %v320
      %s325 = smul.u32 4, %s15
      %p326 = scmp.lt.s32.totalorder %s325, 7
      %s327 = scalar_select %p326, %s325, 7
      %s328 = smul.addr %s327, 8
      %s329 = scalar_lea.vmem %s4, %s328
      // Predicated region
      $region37: #{simple_block3d_forward.43} parent=35 // pred_check
        %p330 = pneg %p127
      $region38: #{simple_block3d_forward.43} parent=35 // pred_check_branch
        %332 = sbr.rel (%p330) target = $region40
      $region39: #{simple_block3d_forward.43} parent=35 // pred_region
        %s333 = smul.u32 4, %s15
      $region40: #{simple_block3d_forward.43} parent=35 // pred_fallthru
        _
    $region36: #{simple_block3d_forward.43} parent=5 // pred_fallthru
      _
    %p334 = scmp.le.s32.totalorder 2, %s10
    // Predicated region
    $region41: #{simple_block3d_forward.43} parent=5 // pred_check
      %p335 = pneg %p334
    $region42: #{simple_block3d_forward.43} parent=5 // pred_check_branch
      %337 = sbr.rel (%p335) target = $region44
    $region43: #{simple_block3d_forward.43} parent=5 // pred_region
      %s338 = ssub.s32 %s10, 2
      // Predicated region
      $region45: #{simple_block3d_forward.43} parent=43 // pred_check
        %p339 = pneg %p133
      $region46: #{simple_block3d_forward.43} parent=43 // pred_check_branch
        %341 = sbr.rel (%p339) target = $region48
      $region47: #{simple_block3d_forward.43} parent=43 // pred_region
        %s342 = smul.u32 4, %s16
        %p343 = scmp.lt.s32.totalorder %s342, 7
        %s344 = scalar_select %p343, %s342, 7
        %s345 = smul.addr %s344, 8
        %s346 = scalar_lea.vmem %s4, %s345
      $region48: #{simple_block3d_forward.43} parent=43 // pred_fallthru
        _
    $region44: #{simple_block3d_forward.43} parent=5 // pred_fallthru
      _
  $region6: #{simple_block3d_forward.43} parent=0 // loop_footer
    %s14 = sadd.s32 1, %s10
  $region7: #{simple_block3d_forward.43} parent=0 // loop_footer_branch
    %9 = sbr.rel target = $region3
  $region8: #{simple_block3d_forward.43} parent=0 // loop_exit
    _

// kernel: simple_block3d_forward.49
$region0: #{simple_block3d_forward.49}
  #allocation0 [shape = 'u32[]', space=smem, size = 0x4, offset = 0x4, fixed_abs, tag = 'smem constant byte address 0x4 - core index']
  #allocation1 [shape = 'u32[72,128]{1,0:T(1,128)}', space=vmem, size = 0x9000, scoped, tag = 'internal scratch']
  %s0 = inlined_call_operand.vmem [shape: bf16[216,128], index: 0, kind: input, shape index: {}]
  %s1 = inlined_call_operand.vmem [shape: f32[8,216], index: 1, kind: input, shape index: {}]
  %s2 = inlined_call_operand.vmem [shape: f32[8,1], index: 2, kind: input, shape index: {}]
  %s3 = inlined_call_operand.vmem [shape: f32[8,128], index: 3, kind: output, shape index: {}]
  %s4 = sld [smem:[#allocation0]]
  $region22: #{simple_block3d_forward.49} parent=0
    _
  %s6 = ssub.s32 1, %s4
  %s7 = scalar_select 0, %s6, %s4
  // Predicated region
  $region2: #{simple_block3d_forward.49} parent=0 // pred_check
    _
  $region3: #{simple_block3d_forward.49} parent=0 // pred_check_branch
    %9 = sbr.rel (0) target = $region5
  $region4: #{simple_block3d_forward.49} parent=0 // pred_region
    _
  $region5: #{simple_block3d_forward.49} parent=0 // pred_fallthru
    _
  // Predicated region
  $region6: #{simple_block3d_forward.49} parent=0 // pred_check
    _
  $region7: #{simple_block3d_forward.49} parent=0 // pred_check_branch
    %11 = sbr.rel (0) target = $region9
  $region8: #{simple_block3d_forward.49} parent=0 // pred_region
    _
  $region9: #{simple_block3d_forward.49} parent=0 // pred_fallthru
    _
  // Predicated region
  $region10: #{simple_block3d_forward.49} parent=0 // pred_check
    _
  $region11: #{simple_block3d_forward.49} parent=0 // pred_check_branch
    %13 = sbr.rel (0) target = $region13
  $region12: #{simple_block3d_forward.49} parent=0 // pred_region
    _
  $region13: #{simple_block3d_forward.49} parent=0 // pred_fallthru
    _
  %v15 = vld [vmem:[%s1] sm:$0xff]
  %v16 = vld [vmem:[%s1 + $0x8] sm:$0xff]
  %v17 = vpack.c.bf16 %v15, %v15
  %v18 = vpack.c.bf16 %v16, %v16
  %v19 = vld [vmem:[%s0] sm:$0xf]
  %v20 = vld [vmem:[%s0 + $0x4] sm:$0xf]
  %v21 = vld [vmem:[%s0 + $0x8] sm:$0xf]
  %v22 = vld [vmem:[%s0 + $0xc] sm:$0xf]
  %v23 = vld [vmem:[%s0 + $0x10] sm:$0xf]
  %v24 = vld [vmem:[%s0 + $0x14] sm:$0xf]
  %v25 = vld [vmem:[%s0 + $0x18] sm:$0xf]
  %v26 = vld [vmem:[%s0 + $0x1c] sm:$0xf]
  %v27 = vld [vmem:[%s0 + $0x20] sm:$0xf]
  %v28 = vld [vmem:[%s0 + $0x24] sm:$0xf]
  %v29 = vld [vmem:[%s0 + $0x28] sm:$0xf]
  %v30 = vld [vmem:[%s0 + $0x2c] sm:$0xf]
  %v31 = vld [vmem:[%s0 + $0x30] sm:$0xf]
  %v32 = vld [vmem:[%s0 + $0x34] sm:$0xf]
  %v33 = vld [vmem:[%s0 + $0x38] sm:$0xf]
  %v34 = vld [vmem:[%s0 + $0x3c] sm:$0xf]
  %v35 = vld [vmem:[%s0 + $0x40] sm:$0xf]
  %v36 = vld [vmem:[%s0 + $0x44] sm:$0xf]
  %v37 = vld [vmem:[%s0 + $0x48] sm:$0xf]
  %v38 = vld [vmem:[%s0 + $0x4c] sm:$0xf]
  %v39 = vld [vmem:[%s0 + $0x50] sm:$0xf]
  %v40 = vld [vmem:[%s0 + $0x54] sm:$0xf]
  %v41 = vld [vmem:[%s0 + $0x58] sm:$0xf]
  %v42 = vld [vmem:[%s0 + $0x5c] sm:$0xf]
  %v43 = vld [vmem:[%s0 + $0x60] sm:$0xf]
  %v44 = vld [vmem:[%s0 + $0x64] sm:$0xf]
  %v45 = vld [vmem:[%s0 + $0x68] sm:$0xf]
  %v46 = vld [vmem:[%s2] sm:$0xff]
  %48 = vset.pattern.permute.xlu0 0
  %49 = vperm.xlu0 %48, %v46
  %v50 = vpop.permute.xlu0 %49
  %v79 = vunpack.c.l.b16 %v19
  %v80 = vunpack.c.l.b16 %v20
  %v81 = vunpack.c.l.b16 %v21
  %v82 = vunpack.c.l.b16 %v22
  %v83 = vunpack.c.l.b16 %v23
  %v84 = vunpack.c.l.b16 %v24
  %v85 = vunpack.c.l.b16 %v25
  %v86 = vunpack.c.l.b16 %v26
  %v87 = vunpack.c.l.b16 %v27
  %v88 = vunpack.c.l.b16 %v28
  %v89 = vunpack.c.l.b16 %v29
  %v90 = vunpack.c.l.b16 %v30
  %v91 = vunpack.c.l.b16 %v31
  %v92 = vunpack.c.l.b16 %v32
  %v93 = vunpack.c.l.b16 %v33
  %v94 = vunpack.c.l.b16 %v34
  %v95 = vunpack.c.l.b16 %v35
  %v96 = vunpack.c.l.b16 %v36
  %v97 = vunpack.c.l.b16 %v37
  %v98 = vunpack.c.l.b16 %v38
  %v99 = vunpack.c.l.b16 %v39
  %v100 = vunpack.c.l.b16 %v40
  %v101 = vunpack.c.l.b16 %v41
  %v102 = vunpack.c.l.b16 %v42
  %v103 = vunpack.c.l.b16 %v43
  %v104 = vunpack.c.l.b16 %v44
  %v105 = vunpack.c.l.b16 %v45
  %v106 = vpack.c.b16 %v80, %v79
  %v107 = vpack.c.b16 %v82, %v81
  %v108 = vpack.c.b16 %v84, %v83
  %v109 = vpack.c.b16 %v86, %v85
  %v110 = vpack.c.b16 %v88, %v87
  %v111 = vpack.c.b16 %v90, %v89
  %v112 = vpack.c.b16 %v92, %v91
  %v113 = vpack.c.b16 %v94, %v93
  %v114 = vpack.c.b16 %v96, %v95
  %v115 = vpack.c.b16 %v98, %v97
  %v116 = vpack.c.b16 %v100, %v99
  %v117 = vpack.c.b16 %v102, %v101
  %v118 = vpack.c.b16 %v104, %v103
  %v119 = vpack.c.b16 %v105, %v105
  %vm133 = vcmask 719872
  %v135 = vsel %vm133, %v18, 0
  %vm137 = vcmask 1043456
  %v139 = vsel %vm137, %v119, 0
  %141 = vmatpush.bf16.msra.mxu0 %v113
  %142 = vmatpush.bf16.msra.mxu0 %v112
  %143 = vmatpush.bf16.msra.mxu0 %v111
  %144 = vmatpush.bf16.msra.mxu0 %v110
  %145 = vmatpush.bf16.msra.mxu0 %v109
  %146 = vmatpush.bf16.msra.mxu0 %v108
  %147 = vmatpush.bf16.msra.mxu0 %v107
  %148 = vmatpush.bf16.msra.mxu0 %v106
  %149 = vmatmul.bf16.gmra.mxu0 %v17
  %v150 = vpop.f32.mrf.mxu0
  %v151 = vadd.f32 %v50, %v150
  %v152 = vpop.f32.mrf.mxu0
  %153 = vdwg.mxu0
  %154 = vmatpush.bf16.msra.mxu0 0
  %155 = vmatpush.bf16.msra.mxu0 0
  %156 = vmatpush.bf16.msra.mxu0 %v139
  %157 = vmatpush.bf16.msra.mxu0 %v118
  %158 = vmatpush.bf16.msra.mxu0 %v117
  %159 = vmatpush.bf16.msra.mxu0 %v116
  %160 = vmatpush.bf16.msra.mxu0 %v115
  %161 = vmatpush.bf16.msra.mxu0 %v114
  %162 = vmatmul.bf16.gmra.mxu0 %v135
  %v163 = vpop.f32.mrf.mxu0
  %v164 = vadd.f32 %v151, %v163
  %v165 = vpop.f32.mrf.mxu0
  %166 = vdwg.mxu0
  %167 = vst [vmem:[%s3] sm:$0xff] %v164
  // Predicated region
  $region14: #{simple_block3d_forward.49} parent=0 // pred_check
    _
  $region15: #{simple_block3d_forward.49} parent=0 // pred_check_branch
    %169 = sbr.rel (0) target = $region17
  $region16: #{simple_block3d_forward.49} parent=0 // pred_region
    _
  $region17: #{simple_block3d_forward.49} parent=0 // pred_fallthru
    _
  // Predicated region
  $region18: #{simple_block3d_forward.49} parent=0 // pred_check
    _
  $region19: #{simple_block3d_forward.49} parent=0 // pred_check_branch
    %171 = sbr.rel (0) target = $region21
  $region20: #{simple_block3d_forward.49} parent=0 // pred_region
    _
  $region21: #{simple_block3d_forward.49} parent=0 // pred_fallthru
    _

// kernel: simple_block3d_forward.54
$region0: #{simple_block3d_forward.54}
  #allocation0 [shape = 'u32[]', space=smem, size = 0x4, offset = 0x4, fixed_abs, tag = 'smem constant byte address 0x4 - core index']
  #allocation1 [shape = 'u32[72,128]{1,0:T(1,128)}', space=vmem, size = 0x9000, scoped, tag = 'internal scratch']
  %s0 = inlined_call_operand.vmem [shape: bf16[8,64,128], index: 0, kind: input, shape index: {}]
  %s1 = inlined_call_operand.vmem [shape: f32[8,8,64], index: 1, kind: input, shape index: {}]
  %s2 = inlined_call_operand.vmem [shape: f32[8,1], index: 2, kind: input, shape index: {}]
  %s3 = inlined_call_operand.vmem [shape: f32[8,8,128], index: 3, kind: output, shape index: {}]
  %s4 = sld [smem:[#allocation0]]
  $region22: #{simple_block3d_forward.54} parent=0
    _
  %s6 = ssub.s32 1, %s4
  %s7 = scalar_select 0, %s6, %s4
  // Predicated region
  $region2: #{simple_block3d_forward.54} parent=0 // pred_check
    _
  $region3: #{simple_block3d_forward.54} parent=0 // pred_check_branch
    %9 = sbr.rel (0) target = $region5
  $region4: #{simple_block3d_forward.54} parent=0 // pred_region
    _
  $region5: #{simple_block3d_forward.54} parent=0 // pred_fallthru
    _
  // Predicated region
  $region6: #{simple_block3d_forward.54} parent=0 // pred_check
    _
  $region7: #{simple_block3d_forward.54} parent=0 // pred_check_branch
    %11 = sbr.rel (0) target = $region9
  $region8: #{simple_block3d_forward.54} parent=0 // pred_region
    _
  $region9: #{simple_block3d_forward.54} parent=0 // pred_fallthru
    _
  // Predicated region
  $region10: #{simple_block3d_forward.54} parent=0 // pred_check
    _
  $region11: #{simple_block3d_forward.54} parent=0 // pred_check_branch
    %13 = sbr.rel (0) target = $region13
  $region12: #{simple_block3d_forward.54} parent=0 // pred_region
    _
  $region13: #{simple_block3d_forward.54} parent=0 // pred_fallthru
    _
  %v15 = vld [vmem:[%s1] sm:$0xff]
  %v16 = vld [vmem:[%s1 + $0x8] sm:$0xff]
  %v17 = vld [vmem:[%s1 + $0x10] sm:$0xff]
  %v18 = vld [vmem:[%s1 + $0x18] sm:$0xff]
  %v19 = vld [vmem:[%s1 + $0x20] sm:$0xff]
  %v20 = vld [vmem:[%s1 + $0x28] sm:$0xff]
  %v21 = vld [vmem:[%s1 + $0x30] sm:$0xff]
  %v22 = vld [vmem:[%s1 + $0x38] sm:$0xff]
  %v23 = vpack.c.bf16 %v15, %v15
  %v24 = vpack.c.bf16 %v16, %v16
  %v25 = vpack.c.bf16 %v17, %v17
  %v26 = vpack.c.bf16 %v18, %v18
  %v27 = vpack.c.bf16 %v19, %v19
  %v28 = vpack.c.bf16 %v20, %v20
  %v29 = vpack.c.bf16 %v21, %v21
  %v30 = vpack.c.bf16 %v22, %v22
  %v31 = vld [vmem:[%s0] sm:$0xf]
  %v32 = vld [vmem:[%s0 + $0x4] sm:$0xf]
  %v33 = vld [vmem:[%s0 + $0x8] sm:$0xf]
  %v34 = vld [vmem:[%s0 + $0xc] sm:$0xf]
  %v35 = vld [vmem:[%s0 + $0x10] sm:$0xf]
  %v36 = vld [vmem:[%s0 + $0x14] sm:$0xf]
  %v37 = vld [vmem:[%s0 + $0x18] sm:$0xf]
  %v38 = vld [vmem:[%s0 + $0x1c] sm:$0xf]
  %v39 = vld [vmem:[%s0 + $0x20] sm:$0xf]
  %v40 = vld [vmem:[%s0 + $0x24] sm:$0xf]
  %v41 = vld [vmem:[%s0 + $0x28] sm:$0xf]
  %v42 = vld [vmem:[%s0 + $0x2c] sm:$0xf]
  %v43 = vld [vmem:[%s0 + $0x30] sm:$0xf]
  %v44 = vld [vmem:[%s0 + $0x34] sm:$0xf]
  %v45 = vld [vmem:[%s0 + $0x38] sm:$0xf]
  %v46 = vld [vmem:[%s0 + $0x3c] sm:$0xf]
  %v47 = vld [vmem:[%s0 + $0x40] sm:$0xf]
  %v48 = vld [vmem:[%s0 + $0x44] sm:$0xf]
  %v49 = vld [vmem:[%s0 + $0x48] sm:$0xf]
  %v50 = vld [vmem:[%s0 + $0x4c] sm:$0xf]
  %v51 = vld [vmem:[%s0 + $0x50] sm:$0xf]
  %v52 = vld [vmem:[%s0 + $0x54] sm:$0xf]
  %v53 = vld [vmem:[%s0 + $0x58] sm:$0xf]
  %v54 = vld [vmem:[%s0 + $0x5c] sm:$0xf]
  %v55 = vld [vmem:[%s0 + $0x60] sm:$0xf]
  %v56 = vld [vmem:[%s0 + $0x64] sm:$0xf]
  %v57 = vld [vmem:[%s0 + $0x68] sm:$0xf]
  %v58 = vld [vmem:[%s0 + $0x6c] sm:$0xf]
  %v59 = vld [vmem:[%s0 + $0x70] sm:$0xf]
  %v60 = vld [vmem:[%s0 + $0x74] sm:$0xf]
  %v61 = vld [vmem:[%s0 + $0x78] sm:$0xf]
  %v62 = vld [vmem:[%s0 + $0x7c] sm:$0xf]
  %v63 = vld [vmem:[%s0 + $0x80] sm:$0xf]
  %v64 = vld [vmem:[%s0 + $0x84] sm:$0xf]
  %v65 = vld [vmem:[%s0 + $0x88] sm:$0xf]
  %v66 = vld [vmem:[%s0 + $0x8c] sm:$0xf]
  %v67 = vld [vmem:[%s0 + $0x90] sm:$0xf]
  %v68 = vld [vmem:[%s0 + $0x94] sm:$0xf]
  %v69 = vld [vmem:[%s0 + $0x98] sm:$0xf]
  %v70 = vld [vmem:[%s0 + $0x9c] sm:$0xf]
  %v71 = vld [vmem:[%s0 + $0xa0] sm:$0xf]
  %v72 = vld [vmem:[%s0 + $0xa4] sm:$0xf]
  %v73 = vld [vmem:[%s0 + $0xa8] sm:$0xf]
  %v74 = vld [vmem:[%s0 + $0xac] sm:$0xf]
  %v75 = vld [vmem:[%s0 + $0xb0] sm:$0xf]
  %v76 = vld [vmem:[%s0 + $0xb4] sm:$0xf]
  %v77 = vld [vmem:[%s0 + $0xb8] sm:$0xf]
  %v78 = vld [vmem:[%s0 + $0xbc] sm:$0xf]
  %v79 = vld [vmem:[%s0 + $0xc0] sm:$0xf]
  %v80 = vld [vmem:[%s0 + $0xc4] sm:$0xf]
  %v81 = vld [vmem:[%s0 + $0xc8] sm:$0xf]
  %v82 = vld [vmem:[%s0 + $0xcc] sm:$0xf]
  %v83 = vld [vmem:[%s0 + $0xd0] sm:$0xf]
  %v84 = vld [vmem:[%s0 + $0xd4] sm:$0xf]
  %v85 = vld [vmem:[%s0 + $0xd8] sm:$0xf]
  %v86 = vld [vmem:[%s0 + $0xdc] sm:$0xf]
  %v87 = vld [vmem:[%s0 + $0xe0] sm:$0xf]
  %v88 = vld [vmem:[%s0 + $0xe4] sm:$0xf]
  %v89 = vld [vmem:[%s0 + $0xe8] sm:$0xf]
  %v90 = vld [vmem:[%s0 + $0xec] sm:$0xf]
  %v91 = vld [vmem:[%s0 + $0xf0] sm:$0xf]
  %v92 = vld [vmem:[%s0 + $0xf4] sm:$0xf]
  %v93 = vld [vmem:[%s0 + $0xf8] sm:$0xf]
  %v94 = vld [vmem:[%s0 + $0xfc] sm:$0xf]
  %v95 = vld [vmem:[%s2] sm:$0xff]
  %97 = vset.pattern.permute.xlu0 0
  %98 = vperm.xlu0 %97, %v95
  %v99 = vpop.permute.xlu0 %98
  %v109 = vunpack.c.l.b16 %v31
  %v110 = vunpack.c.l.b16 %v32
  %v111 = vunpack.c.l.b16 %v33
  %v112 = vunpack.c.l.b16 %v34
  %v113 = vunpack.c.l.b16 %v35
  %v114 = vunpack.c.l.b16 %v36
  %v115 = vunpack.c.l.b16 %v37
  %v116 = vunpack.c.l.b16 %v38
  %v117 = vpack.c.b16 %v110, %v109
  %v118 = vpack.c.b16 %v112, %v111
  %v119 = vpack.c.b16 %v114, %v113
  %v120 = vpack.c.b16 %v116, %v115
  %vm125 = vcmask 523264
  %v127 = vsel %vm125, %v23, 0
  %129 = vmatpush.bf16.msra.mxu0 0
  %130 = vmatpush.bf16.msra.mxu0 0
  %131 = vmatpush.bf16.msra.mxu0 0
  %132 = vmatpush.bf16.msra.mxu0 0
  %133 = vmatpush.bf16.msra.mxu0 %v120
  %134 = vmatpush.bf16.msra.mxu0 %v119
  %135 = vmatpush.bf16.msra.mxu0 %v118
  %136 = vmatpush.bf16.msra.mxu0 %v117
  %137 = vmatmul.bf16.gmra.mxu0 %v127
  %v138 = vpop.f32.mrf.mxu0
  %v139 = vadd.f32 %v99, %v138
  %v140 = vpop.f32.mrf.mxu0
  %141 = vdwg.mxu0
  %v150 = vunpack.c.l.b16 %v39
  %v151 = vunpack.c.l.b16 %v40
  %v152 = vunpack.c.l.b16 %v41
  %v153 = vunpack.c.l.b16 %v42
  %v154 = vunpack.c.l.b16 %v43
  %v155 = vunpack.c.l.b16 %v44
  %v156 = vunpack.c.l.b16 %v45
  %v157 = vunpack.c.l.b16 %v46
  %v158 = vpack.c.b16 %v151, %v150
  %v159 = vpack.c.b16 %v153, %v152
  %v160 = vpack.c.b16 %v155, %v154
  %v161 = vpack.c.b16 %v157, %v156
  %v167 = vsel %vm125, %v24, 0
  %169 = vmatpush.bf16.msra.mxu0 0
  %170 = vmatpush.bf16.msra.mxu0 0
  %171 = vmatpush.bf16.msra.mxu0 0
  %172 = vmatpush.bf16.msra.mxu0 0
  %173 = vmatpush.bf16.msra.mxu0 %v161
  %174 = vmatpush.bf16.msra.mxu0 %v160
  %175 = vmatpush.bf16.msra.mxu0 %v159
  %176 = vmatpush.bf16.msra.mxu0 %v158
  %177 = vmatmul.bf16.gmra.mxu0 %v167
  %v178 = vpop.f32.mrf.mxu0
  %v179 = vadd.f32 %v99, %v178
  %v180 = vpop.f32.mrf.mxu0
  %181 = vdwg.mxu0
  %v190 = vunpack.c.l.b16 %v47
  %v191 = vunpack.c.l.b16 %v48
  %v192 = vunpack.c.l.b16 %v49
  %v193 = vunpack.c.l.b16 %v50
  %v194 = vunpack.c.l.b16 %v51
  %v195 = vunpack.c.l.b16 %v52
  %v196 = vunpack.c.l.b16 %v53
  %v197 = vunpack.c.l.b16 %v54
  %v198 = vpack.c.b16 %v191, %v190
  %v199 = vpack.c.b16 %v193, %v192
  %v200 = vpack.c.b16 %v195, %v194
  %v201 = vpack.c.b16 %v197, %v196
  %v207 = vsel %vm125, %v25, 0
  %209 = vmatpush.bf16.msra.mxu0 0
  %210 = vmatpush.bf16.msra.mxu0 0
  %211 = vmatpush.bf16.msra.mxu0 0
  %212 = vmatpush.bf16.msra.mxu0 0
  %213 = vmatpush.bf16.msra.mxu0 %v201
  %214 = vmatpush.bf16.msra.mxu0 %v200
  %215 = vmatpush.bf16.msra.mxu0 %v199
  %216 = vmatpush.bf16.msra.mxu0 %v198
  %217 = vmatmul.bf16.gmra.mxu0 %v207
  %v218 = vpop.f32.mrf.mxu0
  %v219 = vadd.f32 %v99, %v218
  %v220 = vpop.f32.mrf.mxu0
  %221 = vdwg.mxu0
  %v230 = vunpack.c.l.b16 %v55
  %v231 = vunpack.c.l.b16 %v56
  %v232 = vunpack.c.l.b16 %v57
  %v233 = vunpack.c.l.b16 %v58
  %v234 = vunpack.c.l.b16 %v59
  %v235 = vunpack.c.l.b16 %v60
  %v236 = vunpack.c.l.b16 %v61
  %v237 = vunpack.c.l.b16 %v62
  %v238 = vpack.c.b16 %v231, %v230
  %v239 = vpack.c.b16 %v233, %v232
  %v240 = vpack.c.b16 %v235, %v234
  %v241 = vpack.c.b16 %v237, %v236
  %v247 = vsel %vm125, %v26, 0
  %249 = vmatpush.bf16.msra.mxu0 0
  %250 = vmatpush.bf16.msra.mxu0 0
  %251 = vmatpush.bf16.msra.mxu0 0
  %252 = vmatpush.bf16.msra.mxu0 0
  %253 = vmatpush.bf16.msra.mxu0 %v241
  %254 = vmatpush.bf16.msra.mxu0 %v240
  %255 = vmatpush.bf16.msra.mxu0 %v239
  %256 = vmatpush.bf16.msra.mxu0 %v238
  %257 = vmatmul.bf16.gmra.mxu0 %v247
  %v258 = vpop.f32.mrf.mxu0
  %v259 = vadd.f32 %v99, %v258
  %v260 = vpop.f32.mrf.mxu0
  %261 = vdwg.mxu0
  %v270 = vunpack.c.l.b16 %v63
  %v271 = vunpack.c.l.b16 %v64
  %v272 = vunpack.c.l.b16 %v65
  %v273 = vunpack.c.l.b16 %v66
  %v274 = vunpack.c.l.b16 %v67
  %v275 = vunpack.c.l.b16 %v68
  %v276 = vunpack.c.l.b16 %v69
  %v277 = vunpack.c.l.b16 %v70
  %v278 = vpack.c.b16 %v271, %v270
  %v279 = vpack.c.b16 %v273, %v272
  %v280 = vpack.c.b16 %v275, %v274
  %v281 = vpack.c.b16 %v277, %v276
  %v287 = vsel %vm125, %v27, 0
  %289 = vmatpush.bf16.msra.mxu0 0
  %290 = vmatpush.bf16.msra.mxu0 0
  %291 = vmatpush.bf16.msra.mxu0 0
  %292 = vmatpush.bf16.msra.mxu0 0
  %293 = vmatpush.bf16.msra.mxu0 %v281
  %294 = vmatpush.bf16.msra.mxu0 %v280
  %295 = vmatpush.bf16.msra.mxu0 %v279
  %296 = vmatpush.bf16.msra.mxu0 %v278
  %297 = vmatmul.bf16.gmra.mxu0 %v287
  %v298 = vpop.f32.mrf.mxu0
  %v299 = vadd.f32 %v99, %v298
  %v300 = vpop.f32.mrf.mxu0
  %301 = vdwg.mxu0
  %v310 = vunpack.c.l.b16 %v71
  %v311 = vunpack.c.l.b16 %v72
  %v312 = vunpack.c.l.b16 %v73
  %v313 = vunpack.c.l.b16 %v74
  %v314 = vunpack.c.l.b16 %v75
  %v315 = vunpack.c.l.b16 %v76
  %v316 = vunpack.c.l.b16 %v77
  %v317 = vunpack.c.l.b16 %v78
  %v318 = vpack.c.b16 %v311, %v310
  %v319 = vpack.c.b16 %v313, %v312
  %v320 = vpack.c.b16 %v315, %v314
  %v321 = vpack.c.b16 %v317, %v316
  %v327 = vsel %vm125, %v28, 0
  %329 = vmatpush.bf16.msra.mxu0 0
  %330 = vmatpush.bf16.msra.mxu0 0
  %331 = vmatpush.bf16.msra.mxu0 0
  %332 = vmatpush.bf16.msra.mxu0 0
  %333 = vmatpush.bf16.msra.mxu0 %v321
  %334 = vmatpush.bf16.msra.mxu0 %v320
  %335 = vmatpush.bf16.msra.mxu0 %v319
  %336 = vmatpush.bf16.msra.mxu0 %v318
  %337 = vmatmul.bf16.gmra.mxu0 %v327
  %v338 = vpop.f32.mrf.mxu0
  %v339 = vadd.f32 %v99, %v338
  %v340 = vpop.f32.mrf.mxu0
  %341 = vdwg.mxu0
  %v350 = vunpack.c.l.b16 %v79
  %v351 = vunpack.c.l.b16 %v80
  %v352 = vunpack.c.l.b16 %v81
  %v353 = vunpack.c.l.b16 %v82
  %v354 = vunpack.c.l.b16 %v83
  %v355 = vunpack.c.l.b16 %v84
  %v356 = vunpack.c.l.b16 %v85
  %v357 = vunpack.c.l.b16 %v86
  %v358 = vpack.c.b16 %v351, %v350
  %v359 = vpack.c.b16 %v353, %v352
  %v360 = vpack.c.b16 %v355, %v354
  %v361 = vpack.c.b16 %v357, %v356
  %v367 = vsel %vm125, %v29, 0
  %369 = vmatpush.bf16.msra.mxu0 0
  %370 = vmatpush.bf16.msra.mxu0 0
  %371 = vmatpush.bf16.msra.mxu0 0
  %372 = vmatpush.bf16.msra.mxu0 0
  %373 = vmatpush.bf16.msra.mxu0 %v361
  %374 = vmatpush.bf16.msra.mxu0 %v360
  %375 = vmatpush.bf16.msra.mxu0 %v359
  %376 = vmatpush.bf16.msra.mxu0 %v358
  %377 = vmatmul.bf16.gmra.mxu0 %v367
  %v378 = vpop.f32.mrf.mxu0
  %v379 = vadd.f32 %v99, %v378
  %v380 = vpop.f32.mrf.mxu0
  %381 = vdwg.mxu0
  %v390 = vunpack.c.l.b16 %v87
  %v391 = vunpack.c.l.b16 %v88
  %v392 = vunpack.c.l.b16 %v89
  %v393 = vunpack.c.l.b16 %v90
  %v394 = vunpack.c.l.b16 %v91
  %v395 = vunpack.c.l.b16 %v92
  %v396 = vunpack.c.l.b16 %v93
  %v397 = vunpack.c.l.b16 %v94
  %v398 = vpack.c.b16 %v391, %v390
  %v399 = vpack.c.b16 %v393, %v392
  %v400 = vpack.c.b16 %v395, %v394
  %v401 = vpack.c.b16 %v397, %v396
  %v407 = vsel %vm125, %v30, 0
  %409 = vmatpush.bf16.msra.mxu0 0
  %410 = vmatpush.bf16.msra.mxu0 0
  %411 = vmatpush.bf16.msra.mxu0 0
  %412 = vmatpush.bf16.msra.mxu0 0
  %413 = vmatpush.bf16.msra.mxu0 %v401
  %414 = vmatpush.bf16.msra.mxu0 %v400
  %415 = vmatpush.bf16.msra.mxu0 %v399
  %416 = vmatpush.bf16.msra.mxu0 %v398
  %417 = vmatmul.bf16.gmra.mxu0 %v407
  %v418 = vpop.f32.mrf.mxu0
  %v419 = vadd.f32 %v99, %v418
  %v420 = vpop.f32.mrf.mxu0
  %421 = vdwg.mxu0
  %vm422 = vcmp.gt.f32.partialorder %v139, 0.0
  %vm423 = vcmp.gt.f32.partialorder %v179, 0.0
  %vm424 = vcmp.gt.f32.partialorder %v219, 0.0
  %vm425 = vcmp.gt.f32.partialorder %v259, 0.0
  %vm426 = vcmp.gt.f32.partialorder %v299, 0.0
  %vm427 = vcmp.gt.f32.partialorder %v339, 0.0
  %vm428 = vcmp.gt.f32.partialorder %v379, 0.0
  %vm429 = vcmp.gt.f32.partialorder %v419, 0.0
  %v430 = vmul.f32 %v139, 0.1
  %v431 = vmul.f32 %v179, 0.1
  %v432 = vmul.f32 %v219, 0.1
  %v433 = vmul.f32 %v259, 0.1
  %v434 = vmul.f32 %v299, 0.1
  %v435 = vmul.f32 %v339, 0.1
  %v436 = vmul.f32 %v379, 0.1
  %v437 = vmul.f32 %v419, 0.1
  %v438 = vsel %vm422, %v139, %v430
  %v439 = vsel %vm423, %v179, %v431
  %v440 = vsel %vm424, %v219, %v432
  %v441 = vsel %vm425, %v259, %v433
  %v442 = vsel %vm426, %v299, %v434
  %v443 = vsel %vm427, %v339, %v435
  %v444 = vsel %vm428, %v379, %v436
  %v445 = vsel %vm429, %v419, %v437
  %446 = vst [vmem:[%s3] sm:$0xff] %v438
  %447 = vst [vmem:[%s3 + $0x8] sm:$0xff] %v439
  %448 = vst [vmem:[%s3 + $0x10] sm:$0xff] %v440
  %449 = vst [vmem:[%s3 + $0x18] sm:$0xff] %v441
  %450 = vst [vmem:[%s3 + $0x20] sm:$0xff] %v442
  %451 = vst [vmem:[%s3 + $0x28] sm:$0xff] %v443
  %452 = vst [vmem:[%s3 + $0x30] sm:$0xff] %v444
  %453 = vst [vmem:[%s3 + $0x38] sm:$0xff] %v445
  // Predicated region
  $region14: #{simple_block3d_forward.54} parent=0 // pred_check
    _
  $region15: #{simple_block3d_forward.54} parent=0 // pred_check_branch
    %455 = sbr.rel (0) target = $region17
  $region16: #{simple_block3d_forward.54} parent=0 // pred_region
    _
  $region17: #{simple_block3d_forward.54} parent=0 // pred_fallthru
    _
  // Predicated region
  $region18: #{simple_block3d_forward.54} parent=0 // pred_check
    _
  $region19: #{simple_block3d_forward.54} parent=0 // pred_check_branch
    %457 = sbr.rel (0) target = $region21
  $region20: #{simple_block3d_forward.54} parent=0 // pred_region
    _
  $region21: #{simple_block3d_forward.54} parent=0 // pred_fallthru
    _

// kernel: simple_block3d_forward.55
$region0: #{simple_block3d_forward.55}
  #allocation0 [shape = 'u32[]', space=smem, size = 0x4, offset = 0x4, fixed_abs, tag = 'smem constant byte address 0x4 - core index']
  #allocation1 [shape = 'u32[72,128]{1,0:T(1,128)}', space=vmem, size = 0x9000, scoped, tag = 'internal scratch']
  %s0 = inlined_call_operand.vmem [shape: bf16[8,128,128], index: 0, kind: input, shape index: {}]
  %s1 = inlined_call_operand.vmem [shape: f32[8,8,128], index: 1, kind: input, shape index: {}]
  %s2 = inlined_call_operand.vmem [shape: f32[8,1], index: 2, kind: input, shape index: {}]
  %s3 = inlined_call_operand.vmem [shape: f32[8,8,128], index: 3, kind: output, shape index: {}]
  %s4 = sld [smem:[#allocation0]]
  $region22: #{simple_block3d_forward.55} parent=0
    _
  %s6 = ssub.s32 1, %s4
  %s7 = scalar_select 0, %s6, %s4
  // Predicated region
  $region2: #{simple_block3d_forward.55} parent=0 // pred_check
    _
  $region3: #{simple_block3d_forward.55} parent=0 // pred_check_branch
    %9 = sbr.rel (0) target = $region5
  $region4: #{simple_block3d_forward.55} parent=0 // pred_region
    _
  $region5: #{simple_block3d_forward.55} parent=0 // pred_fallthru
    _
  // Predicated region
  $region6: #{simple_block3d_forward.55} parent=0 // pred_check
    _
  $region7: #{simple_block3d_forward.55} parent=0 // pred_check_branch
    %11 = sbr.rel (0) target = $region9
  $region8: #{simple_block3d_forward.55} parent=0 // pred_region
    _
  $region9: #{simple_block3d_forward.55} parent=0 // pred_fallthru
    _
  // Predicated region
  $region10: #{simple_block3d_forward.55} parent=0 // pred_check
    _
  $region11: #{simple_block3d_forward.55} parent=0 // pred_check_branch
    %13 = sbr.rel (0) target = $region13
  $region12: #{simple_block3d_forward.55} parent=0 // pred_region
    _
  $region13: #{simple_block3d_forward.55} parent=0 // pred_fallthru
    _
  %v14 = vld [vmem:[%s1] sm:$0xff]
  %v15 = vld [vmem:[%s1 + $0x8] sm:$0xff]
  %v16 = vld [vmem:[%s1 + $0x10] sm:$0xff]
  %v17 = vld [vmem:[%s1 + $0x18] sm:$0xff]
  %v18 = vld [vmem:[%s1 + $0x20] sm:$0xff]
  %v19 = vld [vmem:[%s1 + $0x28] sm:$0xff]
  %v20 = vld [vmem:[%s1 + $0x30] sm:$0xff]
  %v21 = vld [vmem:[%s1 + $0x38] sm:$0xff]
  %v22 = vpack.c.bf16 %v14, %v14
  %v23 = vpack.c.bf16 %v15, %v15
  %v24 = vpack.c.bf16 %v16, %v16
  %v25 = vpack.c.bf16 %v17, %v17
  %v26 = vpack.c.bf16 %v18, %v18
  %v27 = vpack.c.bf16 %v19, %v19
  %v28 = vpack.c.bf16 %v20, %v20
  %v29 = vpack.c.bf16 %v21, %v21
  %v30 = vld [vmem:[%s0] sm:$0xf]
  %v31 = vld [vmem:[%s0 + $0x4] sm:$0xf]
  %v32 = vld [vmem:[%s0 + $0x8] sm:$0xf]
  %v33 = vld [vmem:[%s0 + $0xc] sm:$0xf]
  %v34 = vld [vmem:[%s0 + $0x10] sm:$0xf]
  %v35 = vld [vmem:[%s0 + $0x14] sm:$0xf]
  %v36 = vld [vmem:[%s0 + $0x18] sm:$0xf]
  %v37 = vld [vmem:[%s0 + $0x1c] sm:$0xf]
  %v38 = vld [vmem:[%s0 + $0x20] sm:$0xf]
  %v39 = vld [vmem:[%s0 + $0x24] sm:$0xf]
  %v40 = vld [vmem:[%s0 + $0x28] sm:$0xf]
  %v41 = vld [vmem:[%s0 + $0x2c] sm:$0xf]
  %v42 = vld [vmem:[%s0 + $0x30] sm:$0xf]
  %v43 = vld [vmem:[%s0 + $0x34] sm:$0xf]
  %v44 = vld [vmem:[%s0 + $0x38] sm:$0xf]
  %v45 = vld [vmem:[%s0 + $0x3c] sm:$0xf]
  %v46 = vld [vmem:[%s0 + $0x40] sm:$0xf]
  %v47 = vld [vmem:[%s0 + $0x44] sm:$0xf]
  %v48 = vld [vmem:[%s0 + $0x48] sm:$0xf]
  %v49 = vld [vmem:[%s0 + $0x4c] sm:$0xf]
  %v50 = vld [vmem:[%s0 + $0x50] sm:$0xf]
  %v51 = vld [vmem:[%s0 + $0x54] sm:$0xf]
  %v52 = vld [vmem:[%s0 + $0x58] sm:$0xf]
  %v53 = vld [vmem:[%s0 + $0x5c] sm:$0xf]
  %v54 = vld [vmem:[%s0 + $0x60] sm:$0xf]
  %v55 = vld [vmem:[%s0 + $0x64] sm:$0xf]
  %v56 = vld [vmem:[%s0 + $0x68] sm:$0xf]
  %v57 = vld [vmem:[%s0 + $0x6c] sm:$0xf]
  %v58 = vld [vmem:[%s0 + $0x70] sm:$0xf]
  %v59 = vld [vmem:[%s0 + $0x74] sm:$0xf]
  %v60 = vld [vmem:[%s0 + $0x78] sm:$0xf]
  %v61 = vld [vmem:[%s0 + $0x7c] sm:$0xf]
  %v62 = vld [vmem:[%s0 + $0x80] sm:$0xf]
  %v63 = vld [vmem:[%s0 + $0x84] sm:$0xf]
  %v64 = vld [vmem:[%s0 + $0x88] sm:$0xf]
  %v65 = vld [vmem:[%s0 + $0x8c] sm:$0xf]
  %v66 = vld [vmem:[%s0 + $0x90] sm:$0xf]
  %v67 = vld [vmem:[%s0 + $0x94] sm:$0xf]
  %v68 = vld [vmem:[%s0 + $0x98] sm:$0xf]
  %v69 = vld [vmem:[%s0 + $0x9c] sm:$0xf]
  %v70 = vld [vmem:[%s0 + $0xa0] sm:$0xf]
  %v71 = vld [vmem:[%s0 + $0xa4] sm:$0xf]
  %v72 = vld [vmem:[%s0 + $0xa8] sm:$0xf]
  %v73 = vld [vmem:[%s0 + $0xac] sm:$0xf]
  %v74 = vld [vmem:[%s0 + $0xb0] sm:$0xf]
  %v75 = vld [vmem:[%s0 + $0xb4] sm:$0xf]
  %v76 = vld [vmem:[%s0 + $0xb8] sm:$0xf]
  %v77 = vld [vmem:[%s0 + $0xbc] sm:$0xf]
  %v78 = vld [vmem:[%s0 + $0xc0] sm:$0xf]
  %v79 = vld [vmem:[%s0 + $0xc4] sm:$0xf]
  %v80 = vld [vmem:[%s0 + $0xc8] sm:$0xf]
  %v81 = vld [vmem:[%s0 + $0xcc] sm:$0xf]
  %v82 = vld [vmem:[%s0 + $0xd0] sm:$0xf]
  %v83 = vld [vmem:[%s0 + $0xd4] sm:$0xf]
  %v84 = vld [vmem:[%s0 + $0xd8] sm:$0xf]
  %v85 = vld [vmem:[%s0 + $0xdc] sm:$0xf]
  %v86 = vld [vmem:[%s0 + $0xe0] sm:$0xf]
  %v87 = vld [vmem:[%s0 + $0xe4] sm:$0xf]
  %v88 = vld [vmem:[%s0 + $0xe8] sm:$0xf]
  %v89 = vld [vmem:[%s0 + $0xec] sm:$0xf]
  %v90 = vld [vmem:[%s0 + $0xf0] sm:$0xf]
  %v91 = vld [vmem:[%s0 + $0xf4] sm:$0xf]
  %v92 = vld [vmem:[%s0 + $0xf8] sm:$0xf]
  %v93 = vld [vmem:[%s0 + $0xfc] sm:$0xf]
  %v94 = vld [vmem:[%s0 + $0x100] sm:$0xf]
  %v95 = vld [vmem:[%s0 + $0x104] sm:$0xf]
  %v96 = vld [vmem:[%s0 + $0x108] sm:$0xf]
  %v97 = vld [vmem:[%s0 + $0x10c] sm:$0xf]
  %v98 = vld [vmem:[%s0 + $0x110] sm:$0xf]
  %v99 = vld [vmem:[%s0 + $0x114] sm:$0xf]
  %v100 = vld [vmem:[%s0 + $0x118] sm:$0xf]
  %v101 = vld [vmem:[%s0 + $0x11c] sm:$0xf]
  %v102 = vld [vmem:[%s0 + $0x120] sm:$0xf]
  %v103 = vld [vmem:[%s0 + $0x124] sm:$0xf]
  %v104 = vld [vmem:[%s0 + $0x128] sm:$0xf]
  %v105 = vld [vmem:[%s0 + $0x12c] sm:$0xf]
  %v106 = vld [vmem:[%s0 + $0x130] sm:$0xf]
  %v107 = vld [vmem:[%s0 + $0x134] sm:$0xf]
  %v108 = vld [vmem:[%s0 + $0x138] sm:$0xf]
  %v109 = vld [vmem:[%s0 + $0x13c] sm:$0xf]
  %v110 = vld [vmem:[%s0 + $0x140] sm:$0xf]
  %v111 = vld [vmem:[%s0 + $0x144] sm:$0xf]
  %v112 = vld [vmem:[%s0 + $0x148] sm:$0xf]
  %v113 = vld [vmem:[%s0 + $0x14c] sm:$0xf]
  %v114 = vld [vmem:[%s0 + $0x150] sm:$0xf]
  %v115 = vld [vmem:[%s0 + $0x154] sm:$0xf]
  %v116 = vld [vmem:[%s0 + $0x158] sm:$0xf]
  %v117 = vld [vmem:[%s0 + $0x15c] sm:$0xf]
  %v118 = vld [vmem:[%s0 + $0x160] sm:$0xf]
  %v119 = vld [vmem:[%s0 + $0x164] sm:$0xf]
  %v120 = vld [vmem:[%s0 + $0x168] sm:$0xf]
  %v121 = vld [vmem:[%s0 + $0x16c] sm:$0xf]
  %v122 = vld [vmem:[%s0 + $0x170] sm:$0xf]
  %v123 = vld [vmem:[%s0 + $0x174] sm:$0xf]
  %v124 = vld [vmem:[%s0 + $0x178] sm:$0xf]
  %v125 = vld [vmem:[%s0 + $0x17c] sm:$0xf]
  %v126 = vld [vmem:[%s0 + $0x180] sm:$0xf]
  %v127 = vld [vmem:[%s0 + $0x184] sm:$0xf]
  %v128 = vld [vmem:[%s0 + $0x188] sm:$0xf]
  %v129 = vld [vmem:[%s0 + $0x18c] sm:$0xf]
  %v130 = vld [vmem:[%s0 + $0x190] sm:$0xf]
  %v131 = vld [vmem:[%s0 + $0x194] sm:$0xf]
  %v132 = vld [vmem:[%s0 + $0x198] sm:$0xf]
  %v133 = vld [vmem:[%s0 + $0x19c] sm:$0xf]
  %v134 = vld [vmem:[%s0 + $0x1a0] sm:$0xf]
  %v135 = vld [vmem:[%s0 + $0x1a4] sm:$0xf]
  %v136 = vld [vmem:[%s0 + $0x1a8] sm:$0xf]
  %v137 = vld [vmem:[%s0 + $0x1ac] sm:$0xf]
  %v138 = vld [vmem:[%s0 + $0x1b0] sm:$0xf]
  %v139 = vld [vmem:[%s0 + $0x1b4] sm:$0xf]
  %v140 = vld [vmem:[%s0 + $0x1b8] sm:$0xf]
  %v141 = vld [vmem:[%s0 + $0x1bc] sm:$0xf]
  %v142 = vld [vmem:[%s0 + $0x1c0] sm:$0xf]
  %v143 = vld [vmem:[%s0 + $0x1c4] sm:$0xf]
  %v144 = vld [vmem:[%s0 + $0x1c8] sm:$0xf]
  %v145 = vld [vmem:[%s0 + $0x1cc] sm:$0xf]
  %v146 = vld [vmem:[%s0 + $0x1d0] sm:$0xf]
  %v147 = vld [vmem:[%s0 + $0x1d4] sm:$0xf]
  %v148 = vld [vmem:[%s0 + $0x1d8] sm:$0xf]
  %v149 = vld [vmem:[%s0 + $0x1dc] sm:$0xf]
  %v150 = vld [vmem:[%s0 + $0x1e0] sm:$0xf]
  %v151 = vld [vmem:[%s0 + $0x1e4] sm:$0xf]
  %v152 = vld [vmem:[%s0 + $0x1e8] sm:$0xf]
  %v153 = vld [vmem:[%s0 + $0x1ec] sm:$0xf]
  %v154 = vld [vmem:[%s0 + $0x1f0] sm:$0xf]
  %v155 = vld [vmem:[%s0 + $0x1f4] sm:$0xf]
  %v156 = vld [vmem:[%s0 + $0x1f8] sm:$0xf]
  %v157 = vld [vmem:[%s0 + $0x1fc] sm:$0xf]
  %v158 = vld [vmem:[%s2] sm:$0xff]
  %160 = vset.pattern.permute.xlu0 0
  %161 = vperm.xlu0 %160, %v158
  %v162 = vpop.permute.xlu0 %161
  %v180 = vunpack.c.l.b16 %v30
  %v181 = vunpack.c.l.b16 %v31
  %v182 = vunpack.c.l.b16 %v32
  %v183 = vunpack.c.l.b16 %v33
  %v184 = vunpack.c.l.b16 %v34
  %v185 = vunpack.c.l.b16 %v35
  %v186 = vunpack.c.l.b16 %v36
  %v187 = vunpack.c.l.b16 %v37
  %v188 = vunpack.c.l.b16 %v38
  %v189 = vunpack.c.l.b16 %v39
  %v190 = vunpack.c.l.b16 %v40
  %v191 = vunpack.c.l.b16 %v41
  %v192 = vunpack.c.l.b16 %v42
  %v193 = vunpack.c.l.b16 %v43
  %v194 = vunpack.c.l.b16 %v44
  %v195 = vunpack.c.l.b16 %v45
  %v196 = vpack.c.b16 %v181, %v180
  %v197 = vpack.c.b16 %v183, %v182
  %v198 = vpack.c.b16 %v185, %v184
  %v199 = vpack.c.b16 %v187, %v186
  %v200 = vpack.c.b16 %v189, %v188
  %v201 = vpack.c.b16 %v191, %v190
  %v202 = vpack.c.b16 %v193, %v192
  %v203 = vpack.c.b16 %v195, %v194
  %212 = vmatpush.bf16.msra.mxu0 %v203
  %213 = vmatpush.bf16.msra.mxu0 %v202
  %214 = vmatpush.bf16.msra.mxu0 %v201
  %215 = vmatpush.bf16.msra.mxu0 %v200
  %216 = vmatpush.bf16.msra.mxu0 %v199
  %217 = vmatpush.bf16.msra.mxu0 %v198
  %218 = vmatpush.bf16.msra.mxu0 %v197
  %219 = vmatpush.bf16.msra.mxu0 %v196
  %220 = vmatmul.bf16.gmra.mxu0 %v22
  %v221 = vpop.f32.mrf.mxu0
  %v222 = vadd.f32 %v162, %v221
  %v223 = vpop.f32.mrf.mxu0
  %224 = vdwg.mxu0
  %v241 = vunpack.c.l.b16 %v46
  %v242 = vunpack.c.l.b16 %v47
  %v243 = vunpack.c.l.b16 %v48
  %v244 = vunpack.c.l.b16 %v49
  %v245 = vunpack.c.l.b16 %v50
  %v246 = vunpack.c.l.b16 %v51
  %v247 = vunpack.c.l.b16 %v52
  %v248 = vunpack.c.l.b16 %v53
  %v249 = vunpack.c.l.b16 %v54
  %v250 = vunpack.c.l.b16 %v55
  %v251 = vunpack.c.l.b16 %v56
  %v252 = vunpack.c.l.b16 %v57
  %v253 = vunpack.c.l.b16 %v58
  %v254 = vunpack.c.l.b16 %v59
  %v255 = vunpack.c.l.b16 %v60
  %v256 = vunpack.c.l.b16 %v61
  %v257 = vpack.c.b16 %v242, %v241
  %v258 = vpack.c.b16 %v244, %v243
  %v259 = vpack.c.b16 %v246, %v245
  %v260 = vpack.c.b16 %v248, %v247
  %v261 = vpack.c.b16 %v250, %v249
  %v262 = vpack.c.b16 %v252, %v251
  %v263 = vpack.c.b16 %v254, %v253
  %v264 = vpack.c.b16 %v256, %v255
  %273 = vmatpush.bf16.msra.mxu0 %v264
  %274 = vmatpush.bf16.msra.mxu0 %v263
  %275 = vmatpush.bf16.msra.mxu0 %v262
  %276 = vmatpush.bf16.msra.mxu0 %v261
  %277 = vmatpush.bf16.msra.mxu0 %v260
  %278 = vmatpush.bf16.msra.mxu0 %v259
  %279 = vmatpush.bf16.msra.mxu0 %v258
  %280 = vmatpush.bf16.msra.mxu0 %v257
  %281 = vmatmul.bf16.gmra.mxu0 %v23
  %v282 = vpop.f32.mrf.mxu0
  %v283 = vadd.f32 %v162, %v282
  %v284 = vpop.f32.mrf.mxu0
  %285 = vdwg.mxu0
  %v302 = vunpack.c.l.b16 %v62
  %v303 = vunpack.c.l.b16 %v63
  %v304 = vunpack.c.l.b16 %v64
  %v305 = vunpack.c.l.b16 %v65
  %v306 = vunpack.c.l.b16 %v66
  %v307 = vunpack.c.l.b16 %v67
  %v308 = vunpack.c.l.b16 %v68
  %v309 = vunpack.c.l.b16 %v69
  %v310 = vunpack.c.l.b16 %v70
  %v311 = vunpack.c.l.b16 %v71
  %v312 = vunpack.c.l.b16 %v72
  %v313 = vunpack.c.l.b16 %v73
  %v314 = vunpack.c.l.b16 %v74
  %v315 = vunpack.c.l.b16 %v75
  %v316 = vunpack.c.l.b16 %v76
  %v317 = vunpack.c.l.b16 %v77
  %v318 = vpack.c.b16 %v303, %v302
  %v319 = vpack.c.b16 %v305, %v304
  %v320 = vpack.c.b16 %v307, %v306
  %v321 = vpack.c.b16 %v309, %v308
  %v322 = vpack.c.b16 %v311, %v310
  %v323 = vpack.c.b16 %v313, %v312
  %v324 = vpack.c.b16 %v315, %v314
  %v325 = vpack.c.b16 %v317, %v316
  %334 = vmatpush.bf16.msra.mxu0 %v325
  %335 = vmatpush.bf16.msra.mxu0 %v324
  %336 = vmatpush.bf16.msra.mxu0 %v323
  %337 = vmatpush.bf16.msra.mxu0 %v322
  %338 = vmatpush.bf16.msra.mxu0 %v321
  %339 = vmatpush.bf16.msra.mxu0 %v320
  %340 = vmatpush.bf16.msra.mxu0 %v319
  %341 = vmatpush.bf16.msra.mxu0 %v318
  %342 = vmatmul.bf16.gmra.mxu0 %v24
  %v343 = vpop.f32.mrf.mxu0
  %v344 = vadd.f32 %v162, %v343
  %v345 = vpop.f32.mrf.mxu0
  %346 = vdwg.mxu0
  %v363 = vunpack.c.l.b16 %v78
  %v364 = vunpack.c.l.b16 %v79
  %v365 = vunpack.c.l.b16 %v80
  %v366 = vunpack.c.l.b16 %v81
  %v367 = vunpack.c.l.b16 %v82
  %v368 = vunpack.c.l.b16 %v83
  %v369 = vunpack.c.l.b16 %v84
  %v370 = vunpack.c.l.b16 %v85
  %v371 = vunpack.c.l.b16 %v86
  %v372 = vunpack.c.l.b16 %v87
  %v373 = vunpack.c.l.b16 %v88
  %v374 = vunpack.c.l.b16 %v89
  %v375 = vunpack.c.l.b16 %v90
  %v376 = vunpack.c.l.b16 %v91
  %v377 = vunpack.c.l.b16 %v92
  %v378 = vunpack.c.l.b16 %v93
  %v379 = vpack.c.b16 %v364, %v363
  %v380 = vpack.c.b16 %v366, %v365
  %v381 = vpack.c.b16 %v368, %v367
  %v382 = vpack.c.b16 %v370, %v369
  %v383 = vpack.c.b16 %v372, %v371
  %v384 = vpack.c.b16 %v374, %v373
  %v385 = vpack.c.b16 %v376, %v375
  %v386 = vpack.c.b16 %v378, %v377
  %395 = vmatpush.bf16.msra.mxu0 %v386
  %396 = vmatpush.bf16.msra.mxu0 %v385
  %397 = vmatpush.bf16.msra.mxu0 %v384
  %398 = vmatpush.bf16.msra.mxu0 %v383
  %399 = vmatpush.bf16.msra.mxu0 %v382
  %400 = vmatpush.bf16.msra.mxu0 %v381
  %401 = vmatpush.bf16.msra.mxu0 %v380
  %402 = vmatpush.bf16.msra.mxu0 %v379
  %403 = vmatmul.bf16.gmra.mxu0 %v25
  %v404 = vpop.f32.mrf.mxu0
  %v405 = vadd.f32 %v162, %v404
  %v406 = vpop.f32.mrf.mxu0
  %407 = vdwg.mxu0
  %v424 = vunpack.c.l.b16 %v94
  %v425 = vunpack.c.l.b16 %v95
  %v426 = vunpack.c.l.b16 %v96
  %v427 = vunpack.c.l.b16 %v97
  %v428 = vunpack.c.l.b16 %v98
  %v429 = vunpack.c.l.b16 %v99
  %v430 = vunpack.c.l.b16 %v100
  %v431 = vunpack.c.l.b16 %v101
  %v432 = vunpack.c.l.b16 %v102
  %v433 = vunpack.c.l.b16 %v103
  %v434 = vunpack.c.l.b16 %v104
  %v435 = vunpack.c.l.b16 %v105
  %v436 = vunpack.c.l.b16 %v106
  %v437 = vunpack.c.l.b16 %v107
  %v438 = vunpack.c.l.b16 %v108
  %v439 = vunpack.c.l.b16 %v109
  %v440 = vpack.c.b16 %v425, %v424
  %v441 = vpack.c.b16 %v427, %v426
  %v442 = vpack.c.b16 %v429, %v428
  %v443 = vpack.c.b16 %v431, %v430
  %v444 = vpack.c.b16 %v433, %v432
  %v445 = vpack.c.b16 %v435, %v434
  %v446 = vpack.c.b16 %v437, %v436
  %v447 = vpack.c.b16 %v439, %v438
  %456 = vmatpush.bf16.msra.mxu0 %v447
  %457 = vmatpush.bf16.msra.mxu0 %v446
  %458 = vmatpush.bf16.msra.mxu0 %v445
  %459 = vmatpush.bf16.msra.mxu0 %v444
  %460 = vmatpush.bf16.msra.mxu0 %v443
  %461 = vmatpush.bf16.msra.mxu0 %v442
  %462 = vmatpush.bf16.msra.mxu0 %v441
  %463 = vmatpush.bf16.msra.mxu0 %v440
  %464 = vmatmul.bf16.gmra.mxu0 %v26
  %v465 = vpop.f32.mrf.mxu0
  %v466 = vadd.f32 %v162, %v465
  %v467 = vpop.f32.mrf.mxu0
  %468 = vdwg.mxu0
  %v485 = vunpack.c.l.b16 %v110
  %v486 = vunpack.c.l.b16 %v111
  %v487 = vunpack.c.l.b16 %v112
  %v488 = vunpack.c.l.b16 %v113
  %v489 = vunpack.c.l.b16 %v114
  %v490 = vunpack.c.l.b16 %v115
  %v491 = vunpack.c.l.b16 %v116
  %v492 = vunpack.c.l.b16 %v117
  %v493 = vunpack.c.l.b16 %v118
  %v494 = vunpack.c.l.b16 %v119
  %v495 = vunpack.c.l.b16 %v120
  %v496 = vunpack.c.l.b16 %v121
  %v497 = vunpack.c.l.b16 %v122
  %v498 = vunpack.c.l.b16 %v123
  %v499 = vunpack.c.l.b16 %v124
  %v500 = vunpack.c.l.b16 %v125
  %v501 = vpack.c.b16 %v486, %v485
  %v502 = vpack.c.b16 %v488, %v487
  %v503 = vpack.c.b16 %v490, %v489
  %v504 = vpack.c.b16 %v492, %v491
  %v505 = vpack.c.b16 %v494, %v493
  %v506 = vpack.c.b16 %v496, %v495
  %v507 = vpack.c.b16 %v498, %v497
  %v508 = vpack.c.b16 %v500, %v499
  %517 = vmatpush.bf16.msra.mxu0 %v508
  %518 = vmatpush.bf16.msra.mxu0 %v507
  %519 = vmatpush.bf16.msra.mxu0 %v506
  %520 = vmatpush.bf16.msra.mxu0 %v505
  %521 = vmatpush.bf16.msra.mxu0 %v504
  %522 = vmatpush.bf16.msra.mxu0 %v503
  %523 = vmatpush.bf16.msra.mxu0 %v502
  %524 = vmatpush.bf16.msra.mxu0 %v501
  %525 = vmatmul.bf16.gmra.mxu0 %v27
  %v526 = vpop.f32.mrf.mxu0
  %v527 = vadd.f32 %v162, %v526
  %v528 = vpop.f32.mrf.mxu0
  %529 = vdwg.mxu0
  %v546 = vunpack.c.l.b16 %v126
  %v547 = vunpack.c.l.b16 %v127
  %v548 = vunpack.c.l.b16 %v128
  %v549 = vunpack.c.l.b16 %v129
  %v550 = vunpack.c.l.b16 %v130
  %v551 = vunpack.c.l.b16 %v131
  %v552 = vunpack.c.l.b16 %v132
  %v553 = vunpack.c.l.b16 %v133
  %v554 = vunpack.c.l.b16 %v134
  %v555 = vunpack.c.l.b16 %v135
  %v556 = vunpack.c.l.b16 %v136
  %v557 = vunpack.c.l.b16 %v137
  %v558 = vunpack.c.l.b16 %v138
  %v559 = vunpack.c.l.b16 %v139
  %v560 = vunpack.c.l.b16 %v140
  %v561 = vunpack.c.l.b16 %v141
  %v562 = vpack.c.b16 %v547, %v546
  %v563 = vpack.c.b16 %v549, %v548
  %v564 = vpack.c.b16 %v551, %v550
  %v565 = vpack.c.b16 %v553, %v552
  %v566 = vpack.c.b16 %v555, %v554
  %v567 = vpack.c.b16 %v557, %v556
  %v568 = vpack.c.b16 %v559, %v558
  %v569 = vpack.c.b16 %v561, %v560
  %578 = vmatpush.bf16.msra.mxu0 %v569
  %579 = vmatpush.bf16.msra.mxu0 %v568
  %580 = vmatpush.bf16.msra.mxu0 %v567
  %581 = vmatpush.bf16.msra.mxu0 %v566
  %582 = vmatpush.bf16.msra.mxu0 %v565
  %583 = vmatpush.bf16.msra.mxu0 %v564
  %584 = vmatpush.bf16.msra.mxu0 %v563
  %585 = vmatpush.bf16.msra.mxu0 %v562
  %586 = vmatmul.bf16.gmra.mxu0 %v28
  %v587 = vpop.f32.mrf.mxu0
  %v588 = vadd.f32 %v162, %v587
  %v589 = vpop.f32.mrf.mxu0
  %590 = vdwg.mxu0
  %v607 = vunpack.c.l.b16 %v142
  %v608 = vunpack.c.l.b16 %v143
  %v609 = vunpack.c.l.b16 %v144
  %v610 = vunpack.c.l.b16 %v145
  %v611 = vunpack.c.l.b16 %v146
  %v612 = vunpack.c.l.b16 %v147
  %v613 = vunpack.c.l.b16 %v148
  %v614 = vunpack.c.l.b16 %v149
  %v615 = vunpack.c.l.b16 %v150
  %v616 = vunpack.c.l.b16 %v151
  %v617 = vunpack.c.l.b16 %v152
  %v618 = vunpack.c.l.b16 %v153
  %v619 = vunpack.c.l.b16 %v154
  %v620 = vunpack.c.l.b16 %v155
  %v621 = vunpack.c.l.b16 %v156
  %v622 = vunpack.c.l.b16 %v157
  %v623 = vpack.c.b16 %v608, %v607
  %v624 = vpack.c.b16 %v610, %v609
  %v625 = vpack.c.b16 %v612, %v611
  %v626 = vpack.c.b16 %v614, %v613
  %v627 = vpack.c.b16 %v616, %v615
  %v628 = vpack.c.b16 %v618, %v617
  %v629 = vpack.c.b16 %v620, %v619
  %v630 = vpack.c.b16 %v622, %v621
  %639 = vmatpush.bf16.msra.mxu0 %v630
  %640 = vmatpush.bf16.msra.mxu0 %v629
  %641 = vmatpush.bf16.msra.mxu0 %v628
  %642 = vmatpush.bf16.msra.mxu0 %v627
  %643 = vmatpush.bf16.msra.mxu0 %v626
  %644 = vmatpush.bf16.msra.mxu0 %v625
  %645 = vmatpush.bf16.msra.mxu0 %v624
  %646 = vmatpush.bf16.msra.mxu0 %v623
  %647 = vmatmul.bf16.gmra.mxu0 %v29
  %v648 = vpop.f32.mrf.mxu0
  %v649 = vadd.f32 %v162, %v648
  %v650 = vpop.f32.mrf.mxu0
  %651 = vdwg.mxu0
  %vm652 = vcmp.gt.f32.partialorder %v222, 0.0
  %vm653 = vcmp.gt.f32.partialorder %v283, 0.0
  %vm654 = vcmp.gt.f32.partialorder %v344, 0.0
  %vm655 = vcmp.gt.f32.partialorder %v405, 0.0
  %vm656 = vcmp.gt.f32.partialorder %v466, 0.0
  %vm657 = vcmp.gt.f32.partialorder %v527, 0.0
  %vm658 = vcmp.gt.f32.partialorder %v588, 0.0
  %vm659 = vcmp.gt.f32.partialorder %v649, 0.0
  %v660 = vmul.f32 %v222, 0.1
  %v661 = vmul.f32 %v283, 0.1
  %v662 = vmul.f32 %v344, 0.1
  %v663 = vmul.f32 %v405, 0.1
  %v664 = vmul.f32 %v466, 0.1
  %v665 = vmul.f32 %v527, 0.1
  %v666 = vmul.f32 %v588, 0.1
  %v667 = vmul.f32 %v649, 0.1
  %v668 = vsel %vm652, %v222, %v660
  %v669 = vsel %vm653, %v283, %v661
  %v670 = vsel %vm654, %v344, %v662
  %v671 = vsel %vm655, %v405, %v663
  %v672 = vsel %vm656, %v466, %v664
  %v673 = vsel %vm657, %v527, %v665
  %v674 = vsel %vm658, %v588, %v666
  %v675 = vsel %vm659, %v649, %v667
  %676 = vst [vmem:[%s3] sm:$0xff] %v668
  %677 = vst [vmem:[%s3 + $0x8] sm:$0xff] %v669
  %678 = vst [vmem:[%s3 + $0x10] sm:$0xff] %v670
  %679 = vst [vmem:[%s3 + $0x18] sm:$0xff] %v671
  %680 = vst [vmem:[%s3 + $0x20] sm:$0xff] %v672
  %681 = vst [vmem:[%s3 + $0x28] sm:$0xff] %v673
  %682 = vst [vmem:[%s3 + $0x30] sm:$0xff] %v674
  %683 = vst [vmem:[%s3 + $0x38] sm:$0xff] %v675
  // Predicated region
  $region14: #{simple_block3d_forward.55} parent=0 // pred_check
    _
  $region15: #{simple_block3d_forward.55} parent=0 // pred_check_branch
    %685 = sbr.rel (0) target = $region17
  $region16: #{simple_block3d_forward.55} parent=0 // pred_region
    _
  $region17: #{simple_block3d_forward.55} parent=0 // pred_fallthru
    _
  // Predicated region
  $region18: #{simple_block3d_forward.55} parent=0 // pred_check
    _
  $region19: #{simple_block3d_forward.55} parent=0 // pred_check_branch
    %687 = sbr.rel (0) target = $region21
  $region20: #{simple_block3d_forward.55} parent=0 // pred_region
    _
  $region21: #{simple_block3d_forward.55} parent=0 // pred_fallthru
    _

// kernel: simple_block3d_forward.58
$region0: #{simple_block3d_forward.58}
  #allocation0 [shape = 'u32[]', space=smem, size = 0x4, offset = 0x4, fixed_abs, tag = 'smem constant byte address 0x4 - core index']
  #allocation1 [shape = 'u32[72,128]{1,0:T(1,128)}', space=vmem, size = 0x9000, scoped, tag = 'internal scratch']
  %s0 = inlined_call_operand.vmem [shape: f32[8,1024], index: 0, kind: input, shape index: {}]
  %s1 = inlined_call_operand.vmem [shape: f32[8,8], index: 1, kind: input, shape index: {}]
  %s2 = inlined_call_operand.vmem [shape: f32[8,1], index: 2, kind: input, shape index: {}]
  %s3 = inlined_call_operand.vmem [shape: f32[8,1024], index: 3, kind: input, shape index: {}]
  %s4 = inlined_call_operand.vmem [shape: f32[8,1024], index: 4, kind: input, shape index: {}]
  %s5 = inlined_call_operand.vmem [shape: f32[8,1024], index: 5, kind: output, shape index: {}]
  %s6 = sld [smem:[#allocation0]]
  $region53: #{simple_block3d_forward.58} parent=0
    _
  %s8 = ssub.s32 1, %s6
  %s9 = scalar_select 0, %s8, %s6
  loop: start=0, step=1, limit=4
  $region2: #{simple_block3d_forward.58} parent=0 // loop_pre_header
    _
  $region3: #{simple_block3d_forward.58} parent=0 // loop_header
    %s11 = sphi 0, %s15
    %p12 = scmp.ge.s32.totalorder %s11, 4
    %s21 = sphi 0, %s23
    %s24 = sphi 0, %s21
    %s25 = sphi 0, %s24
    %s41 = sphi 0, %s25
    %s45 = sphi 0, %s45
    %s47 = sphi 0, %s45
    %s48 = sphi 0, %s47
    %s62 = sphi 0, %s48
    %s66 = sphi 0, %s66
    %s68 = sphi 0, %s66
    %s69 = sphi 0, %s68
    %s83 = sphi 0, %s69
    %s89 = sphi 0, %s91
    %s92 = sphi 0, %s89
    %s93 = sphi 0, %s92
    %s109 = sphi 0, %s93
    %s115 = sphi 0, %s117
    %s118 = sphi 0, %s115
    %s119 = sphi 0, %s118
    %s135 = sphi 0, %s119
    %s141 = sphi 0, %s143
    %s144 = sphi 0, %s141
    %s145 = sphi 0, %s144
    %s161 = sphi 0, %s145
  $region4: #{simple_block3d_forward.58} parent=0 // loop_header_branch
    %14 = sbr.rel (%p12) target = $region8
  $region5: #{simple_block3d_forward.58} parent=0 // loop_body
    %s16 = ssub.s32 %s11, 1
    %s17 = ssub.s32 %s11, 2
    %s18 = sadd.s32 %s11, 1
    %s19 = ssub.s32 %s11, %s18
    %p20 = scmp.eq.s32.totalorder %s19, 0
    %s22 = sadd.s32 %s21, 1
    %s23 = scalar_select %p20, %s21, %s22
    %p26 = pneg %p20
    %p27 = scmp.eq.s32.totalorder %s11, 1
    %p28 = por %p26, %p27
    %p29 = scmp.ne.s32.totalorder %s21, %s24
    %p30 = scmp.eq.s32.totalorder %s11, 0
    %p31 = por %p29, %p30
    %p32 = scmp.ne.s32.totalorder %s21, %s24
    %p33 = scmp.eq.s32.totalorder %s16, 1
    %p34 = por %p32, %p33
    %p35 = scmp.ne.s32.totalorder %s24, %s25
    %p36 = scmp.eq.s32.totalorder %s16, 0
    %p37 = por %p35, %p36
    %p38 = scmp.ne.s32.totalorder %s24, %s25
    %p39 = scmp.eq.s32.totalorder %s17, 1
    %p40 = por %p38, %p39
    %p42 = scmp.ne.s32.totalorder %s25, %s41
    %p43 = scmp.eq.s32.totalorder %s17, 0
    %p44 = por %p42, %p43
    %s46 = sadd.s32 %s45, 1
    %p49 = scmp.eq.s32.totalorder %s11, 1
    %p50 = scmp.ne.s32.totalorder %s45, %s47
    %p51 = scmp.eq.s32.totalorder %s11, 0
    %p52 = por %p50, %p51
    %p53 = scmp.ne.s32.totalorder %s45, %s47
    %p54 = scmp.eq.s32.totalorder %s16, 1
    %p55 = por %p53, %p54
    %p56 = scmp.ne.s32.totalorder %s47, %s48
    %p57 = scmp.eq.s32.totalorder %s16, 0
    %p58 = por %p56, %p57
    %p59 = scmp.ne.s32.totalorder %s47, %s48
    %p60 = scmp.eq.s32.totalorder %s17, 1
    %p61 = por %p59, %p60
    %p63 = scmp.ne.s32.totalorder %s48, %s62
    %p64 = scmp.eq.s32.totalorder %s17, 0
    %p65 = por %p63, %p64
    %s67 = sadd.s32 %s66, 1
    %p70 = scmp.eq.s32.totalorder %s11, 1
    %p71 = scmp.ne.s32.totalorder %s66, %s68
    %p72 = scmp.eq.s32.totalorder %s11, 0
    %p73 = por %p71, %p72
    %p74 = scmp.ne.s32.totalorder %s66, %s68
    %p75 = scmp.eq.s32.totalorder %s16, 1
    %p76 = por %p74, %p75
    %p77 = scmp.ne.s32.totalorder %s68, %s69
    %p78 = scmp.eq.s32.totalorder %s16, 0
    %p79 = por %p77, %p78
    %p80 = scmp.ne.s32.totalorder %s68, %s69
    %p81 = scmp.eq.s32.totalorder %s17, 1
    %p82 = por %p80, %p81
    %p84 = scmp.ne.s32.totalorder %s69, %s83
    %p85 = scmp.eq.s32.totalorder %s17, 0
    %p86 = por %p84, %p85
    %s87 = ssub.s32 %s11, %s18
    %p88 = scmp.eq.s32.totalorder %s87, 0
    %s90 = sadd.s32 %s89, 1
    %s91 = scalar_select %p88, %s89, %s90
    %p94 = pneg %p88
    %p95 = scmp.eq.s32.totalorder %s11, 1
    %p96 = por %p94, %p95
    %p97 = scmp.ne.s32.totalorder %s89, %s92
    %p98 = scmp.eq.s32.totalorder %s11, 0
    %p99 = por %p97, %p98
    %p100 = scmp.ne.s32.totalorder %s89, %s92
    %p101 = scmp.eq.s32.totalorder %s16, 1
    %p102 = por %p100, %p101
    %p103 = scmp.ne.s32.totalorder %s92, %s93
    %p104 = scmp.eq.s32.totalorder %s16, 0
    %p105 = por %p103, %p104
    %p106 = scmp.ne.s32.totalorder %s92, %s93
    %p107 = scmp.eq.s32.totalorder %s17, 1
    %p108 = por %p106, %p107
    %p110 = scmp.ne.s32.totalorder %s93, %s109
    %p111 = scmp.eq.s32.totalorder %s17, 0
    %p112 = por %p110, %p111
    %s113 = ssub.s32 %s11, %s18
    %p114 = scmp.eq.s32.totalorder %s113, 0
    %s116 = sadd.s32 %s115, 1
    %s117 = scalar_select %p114, %s115, %s116
    %p120 = pneg %p114
    %p121 = scmp.eq.s32.totalorder %s11, 1
    %p122 = por %p120, %p121
    %p123 = scmp.ne.s32.totalorder %s115, %s118
    %p124 = scmp.eq.s32.totalorder %s11, 0
    %p125 = por %p123, %p124
    %p126 = scmp.ne.s32.totalorder %s115, %s118
    %p127 = scmp.eq.s32.totalorder %s16, 1
    %p128 = por %p126, %p127
    %p129 = scmp.ne.s32.totalorder %s118, %s119
    %p130 = scmp.eq.s32.totalorder %s16, 0
    %p131 = por %p129, %p130
    %p132 = scmp.ne.s32.totalorder %s118, %s119
    %p133 = scmp.eq.s32.totalorder %s17, 1
    %p134 = por %p132, %p133
    %p136 = scmp.ne.s32.totalorder %s119, %s135
    %p137 = scmp.eq.s32.totalorder %s17, 0
    %p138 = por %p136, %p137
    %s139 = ssub.s32 %s11, %s18
    %p140 = scmp.eq.s32.totalorder %s139, 0
    %s142 = sadd.s32 %s141, 1
    %s143 = scalar_select %p140, %s141, %s142
    %p146 = pneg %p140
    %p147 = scmp.eq.s32.totalorder %s11, 1
    %p148 = por %p146, %p147
    %p149 = scmp.ne.s32.totalorder %s141, %s144
    %p150 = scmp.eq.s32.totalorder %s11, 0
    %p151 = por %p149, %p150
    %p152 = scmp.ne.s32.totalorder %s141, %s144
    %p153 = scmp.eq.s32.totalorder %s16, 1
    %p154 = por %p152, %p153
    %p155 = scmp.ne.s32.totalorder %s144, %s145
    %p156 = scmp.eq.s32.totalorder %s16, 0
    %p157 = por %p155, %p156
    %p158 = scmp.ne.s32.totalorder %s144, %s145
    %p159 = scmp.eq.s32.totalorder %s17, 1
    %p160 = por %p158, %p159
    %p162 = scmp.ne.s32.totalorder %s145, %s161
    %p163 = scmp.eq.s32.totalorder %s17, 0
    %p164 = por %p162, %p163
    %p165 = scmp.le.s32.totalorder 1, %s11
    %p166 = scmp.lt.s32.totalorder %s11, 3
    %p167 = pnand %p165, %p166
    %p168 = pneg %p167
    // Predicated region
    $region9: #{simple_block3d_forward.58} parent=5 // pred_check
      _
    $region10: #{simple_block3d_forward.58} parent=5 // pred_check_branch
      %170 = sbr.rel (%p167) target = $region12
    $region11: #{simple_block3d_forward.58} parent=5 // pred_region
      %s171 = ssub.s32 %s11, 1
      // Predicated region
      $region13: #{simple_block3d_forward.58} parent=11 // pred_check
        %p172 = pneg %p58
      $region14: #{simple_block3d_forward.58} parent=11 // pred_check_branch
        %174 = sbr.rel (%p172) target = $region16
      $region15: #{simple_block3d_forward.58} parent=11 // pred_region
        _
      $region16: #{simple_block3d_forward.58} parent=11 // pred_fallthru
        _
      // Predicated region
      $region17: #{simple_block3d_forward.58} parent=11 // pred_check
        %p175 = pneg %p79
      $region18: #{simple_block3d_forward.58} parent=11 // pred_check_branch
        %177 = sbr.rel (%p175) target = $region20
      $region19: #{simple_block3d_forward.58} parent=11 // pred_region
        _
      $region20: #{simple_block3d_forward.58} parent=11 // pred_fallthru
        _
    $region12: #{simple_block3d_forward.58} parent=5 // pred_fallthru
      _
    %p178 = scmp.lt.s32.totalorder %s11, 2
    // Predicated region
    $region21: #{simple_block3d_forward.58} parent=5 // pred_check
      %p179 = pneg %p178
    $region22: #{simple_block3d_forward.58} parent=5 // pred_check_branch
      %181 = sbr.rel (%p179) target = $region24
    $region23: #{simple_block3d_forward.58} parent=5 // pred_region
      // Predicated region
      $region25: #{simple_block3d_forward.58} parent=23 // pred_check
        %p182 = pneg %p31
      $region26: #{simple_block3d_forward.58} parent=23 // pred_check_branch
        %184 = sbr.rel (%p182) target = $region28
      $region27: #{simple_block3d_forward.58} parent=23 // pred_region
        %s185 = smul.u32 4, %s11
        %p186 = scmp.lt.s32.totalorder %s185, 7
        %s187 = scalar_select %p186, %s185, 7
        %s188 = smul.addr %s187, 8
        %s189 = scalar_lea.vmem %s0, %s188
        %s190 = smul.u32 4, %s11
      $region28: #{simple_block3d_forward.58} parent=23 // pred_fallthru
        _
      // Predicated region
      $region29: #{simple_block3d_forward.58} parent=23 // pred_check
        %p191 = pneg %p99
      $region30: #{simple_block3d_forward.58} parent=23 // pred_check_branch
        %193 = sbr.rel (%p191) target = $region32
      $region31: #{simple_block3d_forward.58} parent=23 // pred_region
        %s194 = smul.u32 4, %s11
        %p195 = scmp.lt.s32.totalorder %s194, 7
        %s196 = scalar_select %p195, %s194, 7
        %s197 = smul.addr %s196, 8
        %s198 = scalar_lea.vmem %s3, %s197
        %s199 = smul.u32 4, %s11
      $region32: #{simple_block3d_forward.58} parent=23 // pred_fallthru
        _
      // Predicated region
      $region33: #{simple_block3d_forward.58} parent=23 // pred_check
        %p200 = pneg %p125
      $region34: #{simple_block3d_forward.58} parent=23 // pred_check_branch
        %202 = sbr.rel (%p200) target = $region36
      $region35: #{simple_block3d_forward.58} parent=23 // pred_region
        %s203 = smul.u32 4, %s11
        %p204 = scmp.lt.s32.totalorder %s203, 7
        %s205 = scalar_select %p204, %s203, 7
        %s206 = smul.addr %s205, 8
        %s207 = scalar_lea.vmem %s4, %s206
        %s208 = smul.u32 4, %s11
      $region36: #{simple_block3d_forward.58} parent=23 // pred_fallthru
        _
    $region24: #{simple_block3d_forward.58} parent=5 // pred_fallthru
      _
    %p209 = scmp.le.s32.totalorder 1, %s11
    %p210 = scmp.lt.s32.totalorder %s11, 3
    %p211 = pnand %p209, %p210
    %p212 = pneg %p211
    // Predicated region
    $region37: #{simple_block3d_forward.58} parent=5 // pred_check
      _
    $region38: #{simple_block3d_forward.58} parent=5 // pred_check_branch
      %214 = sbr.rel (%p211) target = $region40
    $region39: #{simple_block3d_forward.58} parent=5 // pred_region
      %s215 = ssub.s32 %s11, 1
      %s216 = smul.u32 4, %s16
      %p217 = scmp.lt.s32.totalorder %s216, 7
      %s218 = scalar_select %p217, %s216, 7
      %s219 = smul.addr %s218, 8
      %s220 = scalar_lea.vmem %s0, %s219
      %p221 = pneg %p37
      %p222 = pneg %p34
      %p223 = pneg %p58
      %p224 = pneg %p55
      %p225 = pneg %p79
      %p226 = pneg %p76
      %s227 = smul.u32 4, %s16
      %p228 = scmp.lt.s32.totalorder %s227, 7
      %s229 = scalar_select %p228, %s227, 7
      %s230 = smul.addr %s229, 8
      %s231 = scalar_lea.vmem %s3, %s230
      %p232 = pneg %p105
      %p233 = pneg %p102
      %s234 = smul.u32 4, %s16
      %p235 = scmp.lt.s32.totalorder %s234, 7
      %s236 = scalar_select %p235, %s234, 7
      %s237 = smul.addr %s236, 8
      %s238 = scalar_lea.vmem %s4, %s237
      %p239 = pneg %p131
      %p240 = pneg %p128
      %p241 = pneg %p157
      %p242 = pneg %p154
      %s243 = smul.u32 4, %s16
      %p244 = scmp.lt.s32.totalorder %s243, 7
      %s245 = scalar_select %p244, %s243, 7
      %s246 = smul.addr %s245, 8
      %s247 = scalar_lea.vmem %s5, %s246
      %s248 = smul.u32 4, %s16
      %p249 = scmp.lt.s32.totalorder %s248, 7
      %s250 = scalar_select %p249, %s248, 7
      %s251 = smul.addr %s250, 8
      %s252 = scalar_lea.vmem %s0, %s251
      %s253 = smul.u32 4, %s16
      %s254 = smul.u32 4, %s16
      %p255 = scmp.lt.s32.totalorder %s254, 7
      %s256 = scalar_select %p255, %s254, 7
      %s257 = smul.addr %s256, 8
      %s258 = scalar_lea.vmem %s3, %s257
      %s259 = smul.u32 4, %s16
      %s260 = smul.u32 4, %s16
      %p261 = scmp.lt.s32.totalorder %s260, 7
      %s262 = scalar_select %p261, %s260, 7
      %s263 = smul.addr %s262, 8
      %s264 = scalar_lea.vmem %s4, %s263
      %s265 = smul.u32 4, %s16
      %s266 = smul.u32 4, %s16
      %p267 = scmp.lt.s32.totalorder %s266, 7
      %s268 = scalar_select %p267, %s266, 7
      %s269 = smul.addr %s268, 8
      %s270 = scalar_lea.vmem %s5, %s269
      %s271 = smul.u32 4, %s16
      %v273 = vld [vmem:[%s1] sm:$0xff]
      %v274 = vpack.c.bf16 %v273, %v273
      %v275 = vld [vmem:[%s252] sm:$0xff]
      %v276 = vld [vmem:[%s252 + $0x8] sm:$0xff]
      %v277 = vld [vmem:[%s252 + $0x10] sm:$0xff]
      %v278 = vld [vmem:[%s252 + $0x18] sm:$0xff]
      %v279 = vpack.c.bf16 %v275, %v275
      %v280 = vpack.c.bf16 %v276, %v276
      %v281 = vpack.c.bf16 %v277, %v277
      %v282 = vpack.c.bf16 %v278, %v278
      %v283 = vld [vmem:[%s2] sm:$0xff]
      %285 = vset.pattern.permute.xlu0 0
      %286 = vperm.xlu0 %285, %v283
      %v287 = vpop.permute.xlu0 %286
      %vm289 = vcmask 64512
      %v291 = vsel %vm289, %v274, 0
      %vm293 = vcmask 1043456
      %v295 = vsel %vm293, %v279, 0
      %v298 = vsel %vm293, %v280, 0
      %v301 = vsel %vm293, %v281, 0
      %v304 = vsel %vm293, %v282, 0
      %306 = vmatpush.bf16.msra.mxu0 0
      %307 = vmatpush.bf16.msra.mxu0 0
      %308 = vmatpush.bf16.msra.mxu0 0
      %309 = vmatpush.bf16.msra.mxu0 0
      %310 = vmatpush.bf16.msra.mxu0 0
      %311 = vmatpush.bf16.msra.mxu0 0
      %312 = vmatpush.bf16.msra.mxu0 0
      %313 = vmatpush.bf16.msra.mxu0 %v295
      %314 = vmatmul.bf16.gmra.mxu0 %v291
      %v315 = vpop.f32.mrf.mxu0
      %v316 = vadd.f32 %v287, %v315
      %v317 = vpop.f32.mrf.mxu0
      %318 = vdwg.mxu0
      %319 = vmatpush.bf16.msra.mxu0 0
      %320 = vmatpush.bf16.msra.mxu0 0
      %321 = vmatpush.bf16.msra.mxu0 0
      %322 = vmatpush.bf16.msra.mxu0 0
      %323 = vmatpush.bf16.msra.mxu0 0
      %324 = vmatpush.bf16.msra.mxu0 0
      %325 = vmatpush.bf16.msra.mxu0 0
      %326 = vmatpush.bf16.msra.mxu0 %v298
      %327 = vmatmul.bf16.gmra.mxu0 %v291
      %v328 = vpop.f32.mrf.mxu0
      %v329 = vadd.f32 %v287, %v328
      %v330 = vpop.f32.mrf.mxu0
      %331 = vdwg.mxu0
      %332 = vmatpush.bf16.msra.mxu0 0
      %333 = vmatpush.bf16.msra.mxu0 0
      %334 = vmatpush.bf16.msra.mxu0 0
      %335 = vmatpush.bf16.msra.mxu0 0
      %336 = vmatpush.bf16.msra.mxu0 0
      %337 = vmatpush.bf16.msra.mxu0 0
      %338 = vmatpush.bf16.msra.mxu0 0
      %339 = vmatpush.bf16.msra.mxu0 %v301
      %340 = vmatmul.bf16.gmra.mxu0 %v291
      %v341 = vpop.f32.mrf.mxu0
      %v342 = vadd.f32 %v287, %v341
      %v343 = vpop.f32.mrf.mxu0
      %344 = vdwg.mxu0
      %345 = vmatpush.bf16.msra.mxu0 0
      %346 = vmatpush.bf16.msra.mxu0 0
      %347 = vmatpush.bf16.msra.mxu0 0
      %348 = vmatpush.bf16.msra.mxu0 0
      %349 = vmatpush.bf16.msra.mxu0 0
      %350 = vmatpush.bf16.msra.mxu0 0
      %351 = vmatpush.bf16.msra.mxu0 0
      %352 = vmatpush.bf16.msra.mxu0 %v304
      %353 = vmatmul.bf16.gmra.mxu0 %v291
      %v354 = vpop.f32.mrf.mxu0
      %v355 = vadd.f32 %v287, %v354
      %v356 = vpop.f32.mrf.mxu0
      %357 = vdwg.mxu0
      %v358 = vld [vmem:[%s258] sm:$0xff]
      %v359 = vld [vmem:[%s258 + $0x8] sm:$0xff]
      %v360 = vld [vmem:[%s258 + $0x10] sm:$0xff]
      %v361 = vld [vmem:[%s258 + $0x18] sm:$0xff]
      %v362 = vadd.f32 %v316, %v358
      %v363 = vadd.f32 %v329, %v359
      %v364 = vadd.f32 %v342, %v360
      %v365 = vadd.f32 %v355, %v361
      %v366 = vld [vmem:[%s264] sm:$0xff]
      %v367 = vld [vmem:[%s264 + $0x8] sm:$0xff]
      %v368 = vld [vmem:[%s264 + $0x10] sm:$0xff]
      %v369 = vld [vmem:[%s264 + $0x18] sm:$0xff]
      %v370 = vadd.f32 %v362, %v366
      %v371 = vadd.f32 %v363, %v367
      %v372 = vadd.f32 %v364, %v368
      %v373 = vadd.f32 %v365, %v369
      %v374 = vmax.f32 %v370, 0.0
      %v375 = vmax.f32 %v371, 0.0
      %v376 = vmax.f32 %v372, 0.0
      %v377 = vmax.f32 %v373, 0.0
      %378 = vst [vmem:[%s270] sm:$0xff] %v374
      %379 = vst [vmem:[%s270 + $0x8] sm:$0xff] %v375
      %380 = vst [vmem:[%s270 + $0x10] sm:$0xff] %v376
      %381 = vst [vmem:[%s270 + $0x18] sm:$0xff] %v377
      %s382 = smul.u32 4, %s16
      %p383 = scmp.lt.s32.totalorder %s382, 7
      %s384 = scalar_select %p383, %s382, 7
      %s385 = smul.addr %s384, 8
      %s386 = scalar_lea.vmem %s5, %s385
      // Predicated region
      $region41: #{simple_block3d_forward.58} parent=39 // pred_check
        %p387 = pneg %p154
      $region42: #{simple_block3d_forward.58} parent=39 // pred_check_branch
        %389 = sbr.rel (%p387) target = $region44
      $region43: #{simple_block3d_forward.58} parent=39 // pred_region
        %s390 = smul.u32 4, %s16
      $region44: #{simple_block3d_forward.58} parent=39 // pred_fallthru
        _
    $region40: #{simple_block3d_forward.58} parent=5 // pred_fallthru
      _
    %p391 = scmp.le.s32.totalorder 2, %s11
    // Predicated region
    $region45: #{simple_block3d_forward.58} parent=5 // pred_check
      %p392 = pneg %p391
    $region46: #{simple_block3d_forward.58} parent=5 // pred_check_branch
      %394 = sbr.rel (%p392) target = $region48
    $region47: #{simple_block3d_forward.58} parent=5 // pred_region
      %s395 = ssub.s32 %s11, 2
      // Predicated region
      $region49: #{simple_block3d_forward.58} parent=47 // pred_check
        %p396 = pneg %p160
      $region50: #{simple_block3d_forward.58} parent=47 // pred_check_branch
        %398 = sbr.rel (%p396) target = $region52
      $region51: #{simple_block3d_forward.58} parent=47 // pred_region
        %s399 = smul.u32 4, %s17
        %p400 = scmp.lt.s32.totalorder %s399, 7
        %s401 = scalar_select %p400, %s399, 7
        %s402 = smul.addr %s401, 8
        %s403 = scalar_lea.vmem %s5, %s402
      $region52: #{simple_block3d_forward.58} parent=47 // pred_fallthru
        _
    $region48: #{simple_block3d_forward.58} parent=5 // pred_fallthru
      _
  $region6: #{simple_block3d_forward.58} parent=0 // loop_footer
    %s15 = sadd.s32 1, %s11
  $region7: #{simple_block3d_forward.58} parent=0 // loop_footer_branch
    %10 = sbr.rel target = $region3
  $region8: #{simple_block3d_forward.58} parent=0 // loop_exit
    _

// kernel: simple_block3d_forward.57
$region0: #{simple_block3d_forward.57}
  #allocation0 [shape = 'u32[]', space=smem, size = 0x4, offset = 0x4, fixed_abs, tag = 'smem constant byte address 0x4 - core index']
  #allocation1 [shape = 'u32[72,128]{1,0:T(1,128)}', space=vmem, size = 0x9000, scoped, tag = 'internal scratch']
  %s0 = inlined_call_operand.vmem [shape: bf16[432,1024], index: 0, kind: input, shape index: {}]
  %s1 = inlined_call_operand.vmem [shape: f32[8,432], index: 1, kind: input, shape index: {}]
  %s2 = inlined_call_operand.vmem [shape: f32[8,1], index: 2, kind: input, shape index: {}]
  %s3 = inlined_call_operand.vmem [shape: f32[8,1024], index: 3, kind: output, shape index: {}]
  %s4 = sld [smem:[#allocation0]]
  $region68: #{simple_block3d_forward.57} parent=0
    _
  %s6 = ssub.s32 1, %s4
  %s7 = scalar_select 0, %s6, %s4
  $region1: #{simple_block3d_forward.57} parent=0
    #allocation2 [shape = 'u8[884736]{0}', space=vmem, size = 0xd8000, scoped, tag = 'input window, operand 0']
    loop: start=0, step=1, limit=4
    $region2: #{simple_block3d_forward.57} parent=1 // loop_pre_header
      _
    $region3: #{simple_block3d_forward.57} parent=1 // loop_header
      %s9 = sphi 0, %s13
      %p10 = scmp.ge.s32.totalorder %s9, 4
      %s19 = sphi 0, %s21
      %s22 = sphi 0, %s19
      %s23 = sphi 0, %s22
      %s39 = sphi 0, %s23
      %s43 = sphi 0, %s43
      %s45 = sphi 0, %s43
      %s46 = sphi 0, %s45
      %s60 = sphi 0, %s46
      %s64 = sphi 0, %s64
      %s66 = sphi 0, %s64
      %s67 = sphi 0, %s66
      %s81 = sphi 0, %s67
      %s87 = sphi 0, %s89
      %s90 = sphi 0, %s87
      %s91 = sphi 0, %s90
      %s107 = sphi 0, %s91
    $region4: #{simple_block3d_forward.57} parent=1 // loop_header_branch
      %12 = sbr.rel (%p10) target = $region8
    $region5: #{simple_block3d_forward.57} parent=1 // loop_body
      %s14 = ssub.s32 %s9, 1
      %s15 = ssub.s32 %s9, 2
      %s16 = sadd.s32 %s9, 1
      %s17 = ssub.s32 %s9, %s16
      %p18 = scmp.eq.s32.totalorder %s17, 0
      %s20 = sadd.s32 %s19, 1
      %s21 = scalar_select %p18, %s19, %s20
      %p24 = pneg %p18
      %p25 = scmp.eq.s32.totalorder %s9, 1
      %p26 = por %p24, %p25
      %p27 = scmp.ne.s32.totalorder %s19, %s22
      %p28 = scmp.eq.s32.totalorder %s9, 0
      %p29 = por %p27, %p28
      %p30 = scmp.ne.s32.totalorder %s19, %s22
      %p31 = scmp.eq.s32.totalorder %s14, 1
      %p32 = por %p30, %p31
      %p33 = scmp.ne.s32.totalorder %s22, %s23
      %p34 = scmp.eq.s32.totalorder %s14, 0
      %p35 = por %p33, %p34
      %p36 = scmp.ne.s32.totalorder %s22, %s23
      %p37 = scmp.eq.s32.totalorder %s15, 1
      %p38 = por %p36, %p37
      %p40 = scmp.ne.s32.totalorder %s23, %s39
      %p41 = scmp.eq.s32.totalorder %s15, 0
      %p42 = por %p40, %p41
      %s44 = sadd.s32 %s43, 1
      %p47 = scmp.eq.s32.totalorder %s9, 1
      %p48 = scmp.ne.s32.totalorder %s43, %s45
      %p49 = scmp.eq.s32.totalorder %s9, 0
      %p50 = por %p48, %p49
      %p51 = scmp.ne.s32.totalorder %s43, %s45
      %p52 = scmp.eq.s32.totalorder %s14, 1
      %p53 = por %p51, %p52
      %p54 = scmp.ne.s32.totalorder %s45, %s46
      %p55 = scmp.eq.s32.totalorder %s14, 0
      %p56 = por %p54, %p55
      %p57 = scmp.ne.s32.totalorder %s45, %s46
      %p58 = scmp.eq.s32.totalorder %s15, 1
      %p59 = por %p57, %p58
      %p61 = scmp.ne.s32.totalorder %s46, %s60
      %p62 = scmp.eq.s32.totalorder %s15, 0
      %p63 = por %p61, %p62
      %s65 = sadd.s32 %s64, 1
      %p68 = scmp.eq.s32.totalorder %s9, 1
      %p69 = scmp.ne.s32.totalorder %s64, %s66
      %p70 = scmp.eq.s32.totalorder %s9, 0
      %p71 = por %p69, %p70
      %p72 = scmp.ne.s32.totalorder %s64, %s66
      %p73 = scmp.eq.s32.totalorder %s14, 1
      %p74 = por %p72, %p73
      %p75 = scmp.ne.s32.totalorder %s66, %s67
      %p76 = scmp.eq.s32.totalorder %s14, 0
      %p77 = por %p75, %p76
      %p78 = scmp.ne.s32.totalorder %s66, %s67
      %p79 = scmp.eq.s32.totalorder %s15, 1
      %p80 = por %p78, %p79
      %p82 = scmp.ne.s32.totalorder %s67, %s81
      %p83 = scmp.eq.s32.totalorder %s15, 0
      %p84 = por %p82, %p83
      %s85 = ssub.s32 %s9, %s16
      %p86 = scmp.eq.s32.totalorder %s85, 0
      %s88 = sadd.s32 %s87, 1
      %s89 = scalar_select %p86, %s87, %s88
      %p92 = pneg %p86
      %p93 = scmp.eq.s32.totalorder %s9, 1
      %p94 = por %p92, %p93
      %p95 = scmp.ne.s32.totalorder %s87, %s90
      %p96 = scmp.eq.s32.totalorder %s9, 0
      %p97 = por %p95, %p96
      %p98 = scmp.ne.s32.totalorder %s87, %s90
      %p99 = scmp.eq.s32.totalorder %s14, 1
      %p100 = por %p98, %p99
      %p101 = scmp.ne.s32.totalorder %s90, %s91
      %p102 = scmp.eq.s32.totalorder %s14, 0
      %p103 = por %p101, %p102
      %p104 = scmp.ne.s32.totalorder %s90, %s91
      %p105 = scmp.eq.s32.totalorder %s15, 1
      %p106 = por %p104, %p105
      %p108 = scmp.ne.s32.totalorder %s91, %s107
      %p109 = scmp.eq.s32.totalorder %s15, 0
      %p110 = por %p108, %p109
      %p111 = scmp.le.s32.totalorder 1, %s9
      %p112 = scmp.lt.s32.totalorder %s9, 3
      %p113 = pnand %p111, %p112
      %p114 = pneg %p113
      // Predicated region
      $region9: #{simple_block3d_forward.57} parent=5 // pred_check
        _
      $region10: #{simple_block3d_forward.57} parent=5 // pred_check_branch
        %116 = sbr.rel (%p113) target = $region12
      $region11: #{simple_block3d_forward.57} parent=5 // pred_region
        %s117 = ssub.s32 %s9, 1
        // Predicated region
        $region13: #{simple_block3d_forward.57} parent=11 // pred_check
          %p118 = pneg %p56
        $region14: #{simple_block3d_forward.57} parent=11 // pred_check_branch
          %120 = sbr.rel (%p118) target = $region16
        $region15: #{simple_block3d_forward.57} parent=11 // pred_region
          _
        $region16: #{simple_block3d_forward.57} parent=11 // pred_fallthru
          _
        // Predicated region
        $region17: #{simple_block3d_forward.57} parent=11 // pred_check
          %p121 = pneg %p77
        $region18: #{simple_block3d_forward.57} parent=11 // pred_check_branch
          %123 = sbr.rel (%p121) target = $region20
        $region19: #{simple_block3d_forward.57} parent=11 // pred_region
          _
        $region20: #{simple_block3d_forward.57} parent=11 // pred_fallthru
          _
      $region12: #{simple_block3d_forward.57} parent=5 // pred_fallthru
        _
      %p124 = scmp.lt.s32.totalorder %s9, 2
      // Predicated region
      $region21: #{simple_block3d_forward.57} parent=5 // pred_check
        %p125 = pneg %p124
      $region22: #{simple_block3d_forward.57} parent=5 // pred_check_branch
        %127 = sbr.rel (%p125) target = $region24
      $region23: #{simple_block3d_forward.57} parent=5 // pred_region
        // Predicated region
        $region25: #{simple_block3d_forward.57} parent=23 // pred_check
          %p128 = pneg %p29
        $region26: #{simple_block3d_forward.57} parent=23 // pred_check_branch
          %130 = sbr.rel (%p128) target = $region28
        $region27: #{simple_block3d_forward.57} parent=23 // pred_region
          %s131 = sand.u32 %s19, 1
          %s132 = sand.u32 %s19, 1
          %s133 = smul.addr %s132, 864
          %s134 = scalar_lea.vmem [#allocation2], %s133
          %s135 = smul.u32 4, %s9
          %s136 = smul.addr %s135, 4
          %s137 = scalar_lea.vmem %s0, %s136
          // Predicated region
          $region29: #{simple_block3d_forward.57} parent=27 // pred_check
            _
          $region30: #{simple_block3d_forward.57} parent=27 // pred_check_branch
            %139 = sbr.rel (0) target = $region32
          $region31: #{simple_block3d_forward.57} parent=27 // pred_region
            // Predicated region
            $region33: #{simple_block3d_forward.57} parent=31 // pred_check
              _
            $region34: #{simple_block3d_forward.57} parent=31 // pred_check_branch
              %141 = sbr.rel (0) target = $region36
            $region35: #{simple_block3d_forward.57} parent=31 // pred_region
              loop: start=0, step=1, limit=1
              $region37: #{simple_block3d_forward.57} parent=35 // loop_pre_header
                _
              $region38: #{simple_block3d_forward.57} parent=35 // loop_header
                %s143 = sphi 0, %s147
                %p144 = scmp.ge.s32.totalorder %s143, 1
                %s148 = sphi %s137, %s137
                %s149 = sphi %s134, %s134
              $region39: #{simple_block3d_forward.57} parent=35 // loop_header_branch
                %146 = sbr.rel (%p144) target = $region43
              $region40: #{simple_block3d_forward.57} parent=35 // loop_body
                %v150 = vld [vmem:[%s148] sm:$0xff]
                %151 = vst [vmem:[%s149] sm:$0xff] %v150
                %v152 = vld [vmem:[%s148 + $0x8] sm:$0xff]
                %153 = vst [vmem:[%s149 + $0x8] sm:$0xff] %v152
                %v154 = vld [vmem:[%s148 + $0x20] sm:$0xff]
                %155 = vst [vmem:[%s149 + $0x10] sm:$0xff] %v154
                %v156 = vld [vmem:[%s148 + $0x28] sm:$0xff]
                %157 = vst [vmem:[%s149 + $0x18] sm:$0xff] %v156
                %v158 = vld [vmem:[%s148 + $0x40] sm:$0xff]
                %159 = vst [vmem:[%s149 + $0x20] sm:$0xff] %v158
                %v160 = vld [vmem:[%s148 + $0x48] sm:$0xff]
                %161 = vst [vmem:[%s149 + $0x28] sm:$0xff] %v160
                %v162 = vld [vmem:[%s148 + $0x60] sm:$0xff]
                %163 = vst [vmem:[%s149 + $0x30] sm:$0xff] %v162
                %v164 = vld [vmem:[%s148 + $0x68] sm:$0xff]
                %165 = vst [vmem:[%s149 + $0x38] sm:$0xff] %v164
                %v166 = vld [vmem:[%s148 + $0x80] sm:$0xff]
                %167 = vst [vmem:[%s149 + $0x40] sm:$0xff] %v166
                %v168 = vld [vmem:[%s148 + $0x88] sm:$0xff]
                %169 = vst [vmem:[%s149 + $0x48] sm:$0xff] %v168
                %v170 = vld [vmem:[%s148 + $0xa0] sm:$0xff]
                %171 = vst [vmem:[%s149 + $0x50] sm:$0xff] %v170
                %v172 = vld [vmem:[%s148 + $0xa8] sm:$0xff]
                %173 = vst [vmem:[%s149 + $0x58] sm:$0xff] %v172
                %v174 = vld [vmem:[%s148 + $0xc0] sm:$0xff]
                %175 = vst [vmem:[%s149 + $0x60] sm:$0xff] %v174
                %v176 = vld [vmem:[%s148 + $0xc8] sm:$0xff]
                %177 = vst [vmem:[%s149 + $0x68] sm:$0xff] %v176
                %v178 = vld [vmem:[%s148 + $0xe0] sm:$0xff]
                %179 = vst [vmem:[%s149 + $0x70] sm:$0xff] %v178
                %v180 = vld [vmem:[%s148 + $0xe8] sm:$0xff]
                %181 = vst [vmem:[%s149 + $0x78] sm:$0xff] %v180
                %v182 = vld [vmem:[%s148 + $0x100] sm:$0xff]
                %183 = vst [vmem:[%s149 + $0x80] sm:$0xff] %v182
                %v184 = vld [vmem:[%s148 + $0x108] sm:$0xff]
                %185 = vst [vmem:[%s149 + $0x88] sm:$0xff] %v184
                %v186 = vld [vmem:[%s148 + $0x120] sm:$0xff]
                %187 = vst [vmem:[%s149 + $0x90] sm:$0xff] %v186
                %v188 = vld [vmem:[%s148 + $0x128] sm:$0xff]
                %189 = vst [vmem:[%s149 + $0x98] sm:$0xff] %v188
                %v190 = vld [vmem:[%s148 + $0x140] sm:$0xff]
                %191 = vst [vmem:[%s149 + $0xa0] sm:$0xff] %v190
                %v192 = vld [vmem:[%s148 + $0x148] sm:$0xff]
                %193 = vst [vmem:[%s149 + $0xa8] sm:$0xff] %v192
                %v194 = vld [vmem:[%s148 + $0x160] sm:$0xff]
                %195 = vst [vmem:[%s149 + $0xb0] sm:$0xff] %v194
                %v196 = vld [vmem:[%s148 + $0x168] sm:$0xff]
                %197 = vst [vmem:[%s149 + $0xb8] sm:$0xff] %v196
                %v198 = vld [vmem:[%s148 + $0x180] sm:$0xff]
                %199 = vst [vmem:[%s149 + $0xc0] sm:$0xff] %v198
                %v200 = vld [vmem:[%s148 + $0x188] sm:$0xff]
                %201 = vst [vmem:[%s149 + $0xc8] sm:$0xff] %v200
                %v202 = vld [vmem:[%s148 + $0x1a0] sm:$0xff]
                %203 = vst [vmem:[%s149 + $0xd0] sm:$0xff] %v202
                %v204 = vld [vmem:[%s148 + $0x1a8] sm:$0xff]
                %205 = vst [vmem:[%s149 + $0xd8] sm:$0xff] %v204
                %v206 = vld [vmem:[%s148 + $0x1c0] sm:$0xff]
                %207 = vst [vmem:[%s149 + $0xe0] sm:$0xff] %v206
                %v208 = vld [vmem:[%s148 + $0x1c8] sm:$0xff]
                %209 = vst [vmem:[%s149 + $0xe8] sm:$0xff] %v208
                %v210 = vld [vmem:[%s148 + $0x1e0] sm:$0xff]
                %211 = vst [vmem:[%s149 + $0xf0] sm:$0xff] %v210
                %v212 = vld [vmem:[%s148 + $0x1e8] sm:$0xff]
                %213 = vst [vmem:[%s149 + $0xf8] sm:$0xff] %v212
                %v214 = vld [vmem:[%s148 + $0x200] sm:$0xff]
                %215 = vst [vmem:[%s149 + $0x100] sm:$0xff] %v214
                %v216 = vld [vmem:[%s148 + $0x208] sm:$0xff]
                %217 = vst [vmem:[%s149 + $0x108] sm:$0xff] %v216
                %v218 = vld [vmem:[%s148 + $0x220] sm:$0xff]
                %219 = vst [vmem:[%s149 + $0x110] sm:$0xff] %v218
                %v220 = vld [vmem:[%s148 + $0x228] sm:$0xff]
                %221 = vst [vmem:[%s149 + $0x118] sm:$0xff] %v220
                %v222 = vld [vmem:[%s148 + $0x240] sm:$0xff]
                %223 = vst [vmem:[%s149 + $0x120] sm:$0xff] %v222
                %v224 = vld [vmem:[%s148 + $0x248] sm:$0xff]
                %225 = vst [vmem:[%s149 + $0x128] sm:$0xff] %v224
                %v226 = vld [vmem:[%s148 + $0x260] sm:$0xff]
                %227 = vst [vmem:[%s149 + $0x130] sm:$0xff] %v226
                %v228 = vld [vmem:[%s148 + $0x268] sm:$0xff]
                %229 = vst [vmem:[%s149 + $0x138] sm:$0xff] %v228
                %v230 = vld [vmem:[%s148 + $0x280] sm:$0xff]
                %231 = vst [vmem:[%s149 + $0x140] sm:$0xff] %v230
                %v232 = vld [vmem:[%s148 + $0x288] sm:$0xff]
                %233 = vst [vmem:[%s149 + $0x148] sm:$0xff] %v232
                %v234 = vld [vmem:[%s148 + $0x2a0] sm:$0xff]
                %235 = vst [vmem:[%s149 + $0x150] sm:$0xff] %v234
                %v236 = vld [vmem:[%s148 + $0x2a8] sm:$0xff]
                %237 = vst [vmem:[%s149 + $0x158] sm:$0xff] %v236
                %v238 = vld [vmem:[%s148 + $0x2c0] sm:$0xff]
                %239 = vst [vmem:[%s149 + $0x160] sm:$0xff] %v238
                %v240 = vld [vmem:[%s148 + $0x2c8] sm:$0xff]
                %241 = vst [vmem:[%s149 + $0x168] sm:$0xff] %v240
                %v242 = vld [vmem:[%s148 + $0x2e0] sm:$0xff]
                %243 = vst [vmem:[%s149 + $0x170] sm:$0xff] %v242
                %v244 = vld [vmem:[%s148 + $0x2e8] sm:$0xff]
                %245 = vst [vmem:[%s149 + $0x178] sm:$0xff] %v244
                %v246 = vld [vmem:[%s148 + $0x300] sm:$0xff]
                %247 = vst [vmem:[%s149 + $0x180] sm:$0xff] %v246
                %v248 = vld [vmem:[%s148 + $0x308] sm:$0xff]
                %249 = vst [vmem:[%s149 + $0x188] sm:$0xff] %v248
                %v250 = vld [vmem:[%s148 + $0x320] sm:$0xff]
                %251 = vst [vmem:[%s149 + $0x190] sm:$0xff] %v250
                %v252 = vld [vmem:[%s148 + $0x328] sm:$0xff]
                %253 = vst [vmem:[%s149 + $0x198] sm:$0xff] %v252
                %v254 = vld [vmem:[%s148 + $0x340] sm:$0xff]
                %255 = vst [vmem:[%s149 + $0x1a0] sm:$0xff] %v254
                %v256 = vld [vmem:[%s148 + $0x348] sm:$0xff]
                %257 = vst [vmem:[%s149 + $0x1a8] sm:$0xff] %v256
                %v258 = vld [vmem:[%s148 + $0x360] sm:$0xff]
                %259 = vst [vmem:[%s149 + $0x1b0] sm:$0xff] %v258
                %v260 = vld [vmem:[%s148 + $0x368] sm:$0xff]
                %261 = vst [vmem:[%s149 + $0x1b8] sm:$0xff] %v260
                %v262 = vld [vmem:[%s148 + $0x380] sm:$0xff]
                %263 = vst [vmem:[%s149 + $0x1c0] sm:$0xff] %v262
                %v264 = vld [vmem:[%s148 + $0x388] sm:$0xff]
                %265 = vst [vmem:[%s149 + $0x1c8] sm:$0xff] %v264
                %v266 = vld [vmem:[%s148 + $0x3a0] sm:$0xff]
                %267 = vst [vmem:[%s149 + $0x1d0] sm:$0xff] %v266
                %v268 = vld [vmem:[%s148 + $0x3a8] sm:$0xff]
                %269 = vst [vmem:[%s149 + $0x1d8] sm:$0xff] %v268
                %v270 = vld [vmem:[%s148 + $0x3c0] sm:$0xff]
                %271 = vst [vmem:[%s149 + $0x1e0] sm:$0xff] %v270
                %v272 = vld [vmem:[%s148 + $0x3c8] sm:$0xff]
                %273 = vst [vmem:[%s149 + $0x1e8] sm:$0xff] %v272
                %v274 = vld [vmem:[%s148 + $0x3e0] sm:$0xff]
                %275 = vst [vmem:[%s149 + $0x1f0] sm:$0xff] %v274
                %v276 = vld [vmem:[%s148 + $0x3e8] sm:$0xff]
                %277 = vst [vmem:[%s149 + $0x1f8] sm:$0xff] %v276
                %v278 = vld [vmem:[%s148 + $0x400] sm:$0xff]
                %279 = vst [vmem:[%s149 + $0x200] sm:$0xff] %v278
                %v280 = vld [vmem:[%s148 + $0x408] sm:$0xff]
                %281 = vst [vmem:[%s149 + $0x208] sm:$0xff] %v280
                %v282 = vld [vmem:[%s148 + $0x420] sm:$0xff]
                %283 = vst [vmem:[%s149 + $0x210] sm:$0xff] %v282
                %v284 = vld [vmem:[%s148 + $0x428] sm:$0xff]
                %285 = vst [vmem:[%s149 + $0x218] sm:$0xff] %v284
                %v286 = vld [vmem:[%s148 + $0x440] sm:$0xff]
                %287 = vst [vmem:[%s149 + $0x220] sm:$0xff] %v286
                %v288 = vld [vmem:[%s148 + $0x448] sm:$0xff]
                %289 = vst [vmem:[%s149 + $0x228] sm:$0xff] %v288
                %v290 = vld [vmem:[%s148 + $0x460] sm:$0xff]
                %291 = vst [vmem:[%s149 + $0x230] sm:$0xff] %v290
                %v292 = vld [vmem:[%s148 + $0x468] sm:$0xff]
                %293 = vst [vmem:[%s149 + $0x238] sm:$0xff] %v292
                %v294 = vld [vmem:[%s148 + $0x480] sm:$0xff]
                %295 = vst [vmem:[%s149 + $0x240] sm:$0xff] %v294
                %v296 = vld [vmem:[%s148 + $0x488] sm:$0xff]
                %297 = vst [vmem:[%s149 + $0x248] sm:$0xff] %v296
                %v298 = vld [vmem:[%s148 + $0x4a0] sm:$0xff]
                %299 = vst [vmem:[%s149 + $0x250] sm:$0xff] %v298
                %v300 = vld [vmem:[%s148 + $0x4a8] sm:$0xff]
                %301 = vst [vmem:[%s149 + $0x258] sm:$0xff] %v300
                %v302 = vld [vmem:[%s148 + $0x4c0] sm:$0xff]
                %303 = vst [vmem:[%s149 + $0x260] sm:$0xff] %v302
                %v304 = vld [vmem:[%s148 + $0x4c8] sm:$0xff]
                %305 = vst [vmem:[%s149 + $0x268] sm:$0xff] %v304
                %v306 = vld [vmem:[%s148 + $0x4e0] sm:$0xff]
                %307 = vst [vmem:[%s149 + $0x270] sm:$0xff] %v306
                %v308 = vld [vmem:[%s148 + $0x4e8] sm:$0xff]
                %309 = vst [vmem:[%s149 + $0x278] sm:$0xff] %v308
                %v310 = vld [vmem:[%s148 + $0x500] sm:$0xff]
                %311 = vst [vmem:[%s149 + $0x280] sm:$0xff] %v310
                %v312 = vld [vmem:[%s148 + $0x508] sm:$0xff]
                %313 = vst [vmem:[%s149 + $0x288] sm:$0xff] %v312
                %v314 = vld [vmem:[%s148 + $0x520] sm:$0xff]
                %315 = vst [vmem:[%s149 + $0x290] sm:$0xff] %v314
                %v316 = vld [vmem:[%s148 + $0x528] sm:$0xff]
                %317 = vst [vmem:[%s149 + $0x298] sm:$0xff] %v316
                %v318 = vld [vmem:[%s148 + $0x540] sm:$0xff]
                %319 = vst [vmem:[%s149 + $0x2a0] sm:$0xff] %v318
                %v320 = vld [vmem:[%s148 + $0x548] sm:$0xff]
                %321 = vst [vmem:[%s149 + $0x2a8] sm:$0xff] %v320
                %v322 = vld [vmem:[%s148 + $0x560] sm:$0xff]
                %323 = vst [vmem:[%s149 + $0x2b0] sm:$0xff] %v322
                %v324 = vld [vmem:[%s148 + $0x568] sm:$0xff]
                %325 = vst [vmem:[%s149 + $0x2b8] sm:$0xff] %v324
                %v326 = vld [vmem:[%s148 + $0x580] sm:$0xff]
                %327 = vst [vmem:[%s149 + $0x2c0] sm:$0xff] %v326
                %v328 = vld [vmem:[%s148 + $0x588] sm:$0xff]
                %329 = vst [vmem:[%s149 + $0x2c8] sm:$0xff] %v328
                %v330 = vld [vmem:[%s148 + $0x5a0] sm:$0xff]
                %331 = vst [vmem:[%s149 + $0x2d0] sm:$0xff] %v330
                %v332 = vld [vmem:[%s148 + $0x5a8] sm:$0xff]
                %333 = vst [vmem:[%s149 + $0x2d8] sm:$0xff] %v332
                %v334 = vld [vmem:[%s148 + $0x5c0] sm:$0xff]
                %335 = vst [vmem:[%s149 + $0x2e0] sm:$0xff] %v334
                %v336 = vld [vmem:[%s148 + $0x5c8] sm:$0xff]
                %337 = vst [vmem:[%s149 + $0x2e8] sm:$0xff] %v336
                %v338 = vld [vmem:[%s148 + $0x5e0] sm:$0xff]
                %339 = vst [vmem:[%s149 + $0x2f0] sm:$0xff] %v338
                %v340 = vld [vmem:[%s148 + $0x5e8] sm:$0xff]
                %341 = vst [vmem:[%s149 + $0x2f8] sm:$0xff] %v340
                %v342 = vld [vmem:[%s148 + $0x600] sm:$0xff]
                %343 = vst [vmem:[%s149 + $0x300] sm:$0xff] %v342
                %v344 = vld [vmem:[%s148 + $0x608] sm:$0xff]
                %345 = vst [vmem:[%s149 + $0x308] sm:$0xff] %v344
                %v346 = vld [vmem:[%s148 + $0x620] sm:$0xff]
                %347 = vst [vmem:[%s149 + $0x310] sm:$0xff] %v346
                %v348 = vld [vmem:[%s148 + $0x628] sm:$0xff]
                %349 = vst [vmem:[%s149 + $0x318] sm:$0xff] %v348
                %v350 = vld [vmem:[%s148 + $0x640] sm:$0xff]
                %351 = vst [vmem:[%s149 + $0x320] sm:$0xff] %v350
                %v352 = vld [vmem:[%s148 + $0x648] sm:$0xff]
                %353 = vst [vmem:[%s149 + $0x328] sm:$0xff] %v352
                %v354 = vld [vmem:[%s148 + $0x660] sm:$0xff]
                %355 = vst [vmem:[%s149 + $0x330] sm:$0xff] %v354
                %v356 = vld [vmem:[%s148 + $0x668] sm:$0xff]
                %357 = vst [vmem:[%s149 + $0x338] sm:$0xff] %v356
                %v358 = vld [vmem:[%s148 + $0x680] sm:$0xff]
                %359 = vst [vmem:[%s149 + $0x340] sm:$0xff] %v358
                %v360 = vld [vmem:[%s148 + $0x688] sm:$0xff]
                %361 = vst [vmem:[%s149 + $0x348] sm:$0xff] %v360
                %v362 = vld [vmem:[%s148 + $0x6a0] sm:$0xff]
                %363 = vst [vmem:[%s149 + $0x350] sm:$0xff] %v362
                %v364 = vld [vmem:[%s148 + $0x6a8] sm:$0xff]
                %365 = vst [vmem:[%s149 + $0x358] sm:$0xff] %v364
              $region41: #{simple_block3d_forward.57} parent=35 // loop_footer
                %s147 = sadd.s32 1, %s143
              $region42: #{simple_block3d_forward.57} parent=35 // loop_footer_branch
                %142 = sbr.rel target = $region38
              $region43: #{simple_block3d_forward.57} parent=35 // loop_exit
                _
            $region36: #{simple_block3d_forward.57} parent=31 // pred_fallthru
              _
            // Predicated region
            $region44: #{simple_block3d_forward.57} parent=31 // pred_check
              _
            $region45: #{simple_block3d_forward.57} parent=31 // pred_check_branch
              %367 = sbr.rel target = $region47
            $region46: #{simple_block3d_forward.57} parent=31 // pred_region
              _
            $region47: #{simple_block3d_forward.57} parent=31 // pred_fallthru
              _
          $region32: #{simple_block3d_forward.57} parent=27 // pred_fallthru
            _
          %368 = vnop
        $region28: #{simple_block3d_forward.57} parent=23 // pred_fallthru
          _
      $region24: #{simple_block3d_forward.57} parent=5 // pred_fallthru
        _
      %p369 = scmp.le.s32.totalorder 1, %s9
      %p370 = scmp.lt.s32.totalorder %s9, 3
      %p371 = pnand %p369, %p370
      %p372 = pneg %p371
      // Predicated region
      $region48: #{simple_block3d_forward.57} parent=5 // pred_check
        _
      $region49: #{simple_block3d_forward.57} parent=5 // pred_check_branch
        %374 = sbr.rel (%p371) target = $region51
      $region50: #{simple_block3d_forward.57} parent=5 // pred_region
        %s375 = ssub.s32 %s9, 1
        %s376 = sand.u32 %s22, 1
        %s377 = sand.u32 %s22, 1
        %s378 = smul.addr %s377, 864
        %s379 = scalar_lea.vmem [#allocation2], %s378
        // Predicated region
        $region52: #{simple_block3d_forward.57} parent=50 // pred_check
          %p380 = pneg %p35
        $region53: #{simple_block3d_forward.57} parent=50 // pred_check_branch
          %382 = sbr.rel (%p380) target = $region55
        $region54: #{simple_block3d_forward.57} parent=50 // pred_region
          _
        $region55: #{simple_block3d_forward.57} parent=50 // pred_fallthru
          _
        %s383 = sand.u32 %s22, 1
        %s384 = sand.u32 %s22, 1
        %s385 = smul.addr %s384, 864
        %s386 = scalar_lea.vmem [#allocation2], %s385
        %p387 = pneg %p35
        %p388 = pneg %p32
        %p389 = pneg %p56
        %p390 = pneg %p53
        %p391 = pneg %p77
        %p392 = pneg %p74
        %p393 = pneg %p103
        %p394 = pneg %p100
        %s395 = smul.u32 4, %s14
        %p396 = scmp.lt.s32.totalorder %s395, 7
        %s397 = scalar_select %p396, %s395, 7
        %s398 = smul.addr %s397, 8
        %s399 = scalar_lea.vmem %s3, %s398
        %s400 = smul.u32 4, %s14
        %s401 = smul.u32 4, %s14
        %p402 = scmp.lt.s32.totalorder %s401, 7
        %s403 = scalar_select %p402, %s401, 7
        %s404 = smul.addr %s403, 8
        %s405 = scalar_lea.vmem %s3, %s404
        %s406 = smul.u32 4, %s14
        %v408 = vld [vmem:[%s1] sm:$0xff]
        %v409 = vld [vmem:[%s1 + $0x8] sm:$0xff]
        %v410 = vld [vmem:[%s1 + $0x10] sm:$0xff]
        %v411 = vld [vmem:[%s1 + $0x18] sm:$0xff]
        %v412 = vpack.c.bf16 %v408, %v408
        %v413 = vpack.c.bf16 %v409, %v409
        %v414 = vpack.c.bf16 %v410, %v410
        %v415 = vpack.c.bf16 %v411, %v411
        %v416 = vld [vmem:[%s379] sm:$0xff]
        %v417 = vld [vmem:[%s379 + $0x8] sm:$0xff]
        %v418 = vld [vmem:[%s379 + $0x10] sm:$0xff]
        %v419 = vld [vmem:[%s379 + $0x18] sm:$0xff]
        %v420 = vld [vmem:[%s379 + $0x20] sm:$0xff]
        %v421 = vld [vmem:[%s379 + $0x28] sm:$0xff]
        %v422 = vld [vmem:[%s379 + $0x30] sm:$0xff]
        %v423 = vld [vmem:[%s379 + $0x38] sm:$0xff]
        %v424 = vld [vmem:[%s379 + $0x40] sm:$0xff]
        %v425 = vld [vmem:[%s379 + $0x48] sm:$0xff]
        %v426 = vld [vmem:[%s379 + $0x50] sm:$0xff]
        %v427 = vld [vmem:[%s379 + $0x58] sm:$0xff]
        %v428 = vld [vmem:[%s379 + $0x60] sm:$0xff]
        %v429 = vld [vmem:[%s379 + $0x68] sm:$0xff]
        %v430 = vld [vmem:[%s379 + $0x70] sm:$0xff]
        %v431 = vld [vmem:[%s379 + $0x78] sm:$0xff]
        %v432 = vld [vmem:[%s379 + $0x80] sm:$0xff]
        %v433 = vld [vmem:[%s379 + $0x88] sm:$0xff]
        %v434 = vld [vmem:[%s379 + $0x90] sm:$0xff]
        %v435 = vld [vmem:[%s379 + $0x98] sm:$0xff]
        %v436 = vld [vmem:[%s379 + $0xa0] sm:$0xff]
        %v437 = vld [vmem:[%s379 + $0xa8] sm:$0xff]
        %v438 = vld [vmem:[%s379 + $0xb0] sm:$0xff]
        %v439 = vld [vmem:[%s379 + $0xb8] sm:$0xff]
        %v440 = vld [vmem:[%s379 + $0xc0] sm:$0xff]
        %v441 = vld [vmem:[%s379 + $0xc8] sm:$0xff]
        %v442 = vld [vmem:[%s379 + $0xd0] sm:$0xff]
        %v443 = vld [vmem:[%s379 + $0xd8] sm:$0xff]
        %v444 = vld [vmem:[%s379 + $0xe0] sm:$0xff]
        %v445 = vld [vmem:[%s379 + $0xe8] sm:$0xff]
        %v446 = vld [vmem:[%s379 + $0xf0] sm:$0xff]
        %v447 = vld [vmem:[%s379 + $0xf8] sm:$0xff]
        %v448 = vld [vmem:[%s379 + $0x100] sm:$0xff]
        %v449 = vld [vmem:[%s379 + $0x108] sm:$0xff]
        %v450 = vld [vmem:[%s379 + $0x110] sm:$0xff]
        %v451 = vld [vmem:[%s379 + $0x118] sm:$0xff]
        %v452 = vld [vmem:[%s379 + $0x120] sm:$0xff]
        %v453 = vld [vmem:[%s379 + $0x128] sm:$0xff]
        %v454 = vld [vmem:[%s379 + $0x130] sm:$0xff]
        %v455 = vld [vmem:[%s379 + $0x138] sm:$0xff]
        %v456 = vld [vmem:[%s379 + $0x140] sm:$0xff]
        %v457 = vld [vmem:[%s379 + $0x148] sm:$0xff]
        %v458 = vld [vmem:[%s379 + $0x150] sm:$0xff]
        %v459 = vld [vmem:[%s379 + $0x158] sm:$0xff]
        %v460 = vld [vmem:[%s379 + $0x160] sm:$0xff]
        %v461 = vld [vmem:[%s379 + $0x168] sm:$0xff]
        %v462 = vld [vmem:[%s379 + $0x170] sm:$0xff]
        %v463 = vld [vmem:[%s379 + $0x178] sm:$0xff]
        %v464 = vld [vmem:[%s379 + $0x180] sm:$0xff]
        %v465 = vld [vmem:[%s379 + $0x188] sm:$0xff]
        %v466 = vld [vmem:[%s379 + $0x190] sm:$0xff]
        %v467 = vld [vmem:[%s379 + $0x198] sm:$0xff]
        %v468 = vld [vmem:[%s379 + $0x1a0] sm:$0xff]
        %v469 = vld [vmem:[%s379 + $0x1a8] sm:$0xff]
        %v470 = vld [vmem:[%s379 + $0x1b0] sm:$0xff]
        %v471 = vld [vmem:[%s379 + $0x1b8] sm:$0xff]
        %v472 = vld [vmem:[%s379 + $0x1c0] sm:$0xff]
        %v473 = vld [vmem:[%s379 + $0x1c8] sm:$0xff]
        %v474 = vld [vmem:[%s379 + $0x1d0] sm:$0xff]
        %v475 = vld [vmem:[%s379 + $0x1d8] sm:$0xff]
        %v476 = vld [vmem:[%s379 + $0x1e0] sm:$0xff]
        %v477 = vld [vmem:[%s379 + $0x1e8] sm:$0xff]
        %v478 = vld [vmem:[%s379 + $0x1f0] sm:$0xff]
        %v479 = vld [vmem:[%s379 + $0x1f8] sm:$0xff]
        %v480 = vld [vmem:[%s379 + $0x200] sm:$0xff]
        %v481 = vld [vmem:[%s379 + $0x208] sm:$0xff]
        %v482 = vld [vmem:[%s379 + $0x210] sm:$0xff]
        %v483 = vld [vmem:[%s379 + $0x218] sm:$0xff]
        %v484 = vld [vmem:[%s379 + $0x220] sm:$0xff]
        %v485 = vld [vmem:[%s379 + $0x228] sm:$0xff]
        %v486 = vld [vmem:[%s379 + $0x230] sm:$0xff]
        %v487 = vld [vmem:[%s379 + $0x238] sm:$0xff]
        %v488 = vld [vmem:[%s379 + $0x240] sm:$0xff]
        %v489 = vld [vmem:[%s379 + $0x248] sm:$0xff]
        %v490 = vld [vmem:[%s379 + $0x250] sm:$0xff]
        %v491 = vld [vmem:[%s379 + $0x258] sm:$0xff]
        %v492 = vld [vmem:[%s379 + $0x260] sm:$0xff]
        %v493 = vld [vmem:[%s379 + $0x268] sm:$0xff]
        %v494 = vld [vmem:[%s379 + $0x270] sm:$0xff]
        %v495 = vld [vmem:[%s379 + $0x278] sm:$0xff]
        %v496 = vld [vmem:[%s379 + $0x280] sm:$0xff]
        %v497 = vld [vmem:[%s379 + $0x288] sm:$0xff]
        %v498 = vld [vmem:[%s379 + $0x290] sm:$0xff]
        %v499 = vld [vmem:[%s379 + $0x298] sm:$0xff]
        %v500 = vld [vmem:[%s379 + $0x2a0] sm:$0xff]
        %v501 = vld [vmem:[%s379 + $0x2a8] sm:$0xff]
        %v502 = vld [vmem:[%s379 + $0x2b0] sm:$0xff]
        %v503 = vld [vmem:[%s379 + $0x2b8] sm:$0xff]
        %v504 = vld [vmem:[%s379 + $0x2c0] sm:$0xff]
        %v505 = vld [vmem:[%s379 + $0x2c8] sm:$0xff]
        %v506 = vld [vmem:[%s379 + $0x2d0] sm:$0xff]
        %v507 = vld [vmem:[%s379 + $0x2d8] sm:$0xff]
        %v508 = vld [vmem:[%s379 + $0x2e0] sm:$0xff]
        %v509 = vld [vmem:[%s379 + $0x2e8] sm:$0xff]
        %v510 = vld [vmem:[%s379 + $0x2f0] sm:$0xff]
        %v511 = vld [vmem:[%s379 + $0x2f8] sm:$0xff]
        %v512 = vld [vmem:[%s379 + $0x300] sm:$0xff]
        %v513 = vld [vmem:[%s379 + $0x308] sm:$0xff]
        %v514 = vld [vmem:[%s379 + $0x310] sm:$0xff]
        %v515 = vld [vmem:[%s379 + $0x318] sm:$0xff]
        %v516 = vld [vmem:[%s379 + $0x320] sm:$0xff]
        %v517 = vld [vmem:[%s379 + $0x328] sm:$0xff]
        %v518 = vld [vmem:[%s379 + $0x330] sm:$0xff]
        %v519 = vld [vmem:[%s379 + $0x338] sm:$0xff]
        %v520 = vld [vmem:[%s379 + $0x340] sm:$0xff]
        %v521 = vld [vmem:[%s379 + $0x348] sm:$0xff]
        %v522 = vld [vmem:[%s379 + $0x350] sm:$0xff]
        %v523 = vld [vmem:[%s379 + $0x358] sm:$0xff]
        %v524 = vld [vmem:[%s2] sm:$0xff]
        %526 = vset.pattern.permute.xlu0 0
        %527 = vperm.xlu0 %526, %v524
        %v528 = vpop.permute.xlu0 %527
        %v638 = vunpack.c.l.b16 %v416
        %v639 = vunpack.c.h.b16 %v416
        %v640 = vunpack.c.l.b16 %v417
        %v641 = vunpack.c.h.b16 %v417
        %v642 = vunpack.c.l.b16 %v418
        %v643 = vunpack.c.h.b16 %v418
        %v644 = vunpack.c.l.b16 %v419
        %v645 = vunpack.c.h.b16 %v419
        %v646 = vunpack.c.l.b16 %v420
        %v647 = vunpack.c.h.b16 %v420
        %v648 = vunpack.c.l.b16 %v421
        %v649 = vunpack.c.h.b16 %v421
        %v650 = vunpack.c.l.b16 %v422
        %v651 = vunpack.c.h.b16 %v422
        %v652 = vunpack.c.l.b16 %v423
        %v653 = vunpack.c.h.b16 %v423
        %v654 = vunpack.c.l.b16 %v424
        %v655 = vunpack.c.h.b16 %v424
        %v656 = vunpack.c.l.b16 %v425
        %v657 = vunpack.c.h.b16 %v425
        %v658 = vunpack.c.l.b16 %v426
        %v659 = vunpack.c.h.b16 %v426
        %v660 = vunpack.c.l.b16 %v427
        %v661 = vunpack.c.h.b16 %v427
        %v662 = vunpack.c.l.b16 %v428
        %v663 = vunpack.c.h.b16 %v428
        %v664 = vunpack.c.l.b16 %v429
        %v665 = vunpack.c.h.b16 %v429
        %v666 = vunpack.c.l.b16 %v430
        %v667 = vunpack.c.h.b16 %v430
        %v668 = vunpack.c.l.b16 %v431
        %v669 = vunpack.c.h.b16 %v431
        %v670 = vunpack.c.l.b16 %v432
        %v671 = vunpack.c.h.b16 %v432
        %v672 = vunpack.c.l.b16 %v433
        %v673 = vunpack.c.h.b16 %v433
        %v674 = vunpack.c.l.b16 %v434
        %v675 = vunpack.c.h.b16 %v434
        %v676 = vunpack.c.l.b16 %v435
        %v677 = vunpack.c.h.b16 %v435
        %v678 = vunpack.c.l.b16 %v436
        %v679 = vunpack.c.h.b16 %v436
        %v680 = vunpack.c.l.b16 %v437
        %v681 = vunpack.c.h.b16 %v437
        %v682 = vunpack.c.l.b16 %v438
        %v683 = vunpack.c.h.b16 %v438
        %v684 = vunpack.c.l.b16 %v439
        %v685 = vunpack.c.h.b16 %v439
        %v686 = vunpack.c.l.b16 %v440
        %v687 = vunpack.c.h.b16 %v440
        %v688 = vunpack.c.l.b16 %v441
        %v689 = vunpack.c.h.b16 %v441
        %v690 = vunpack.c.l.b16 %v442
        %v691 = vunpack.c.h.b16 %v442
        %v692 = vunpack.c.l.b16 %v443
        %v693 = vunpack.c.h.b16 %v443
        %v694 = vunpack.c.l.b16 %v444
        %v695 = vunpack.c.h.b16 %v444
        %v696 = vunpack.c.l.b16 %v445
        %v697 = vunpack.c.h.b16 %v445
        %v698 = vunpack.c.l.b16 %v446
        %v699 = vunpack.c.h.b16 %v446
        %v700 = vunpack.c.l.b16 %v447
        %v701 = vunpack.c.h.b16 %v447
        %v702 = vunpack.c.l.b16 %v448
        %v703 = vunpack.c.h.b16 %v448
        %v704 = vunpack.c.l.b16 %v449
        %v705 = vunpack.c.h.b16 %v449
        %v706 = vunpack.c.l.b16 %v450
        %v707 = vunpack.c.h.b16 %v450
        %v708 = vunpack.c.l.b16 %v451
        %v709 = vunpack.c.h.b16 %v451
        %v710 = vunpack.c.l.b16 %v452
        %v711 = vunpack.c.h.b16 %v452
        %v712 = vunpack.c.l.b16 %v453
        %v713 = vunpack.c.h.b16 %v453
        %v714 = vunpack.c.l.b16 %v454
        %v715 = vunpack.c.h.b16 %v454
        %v716 = vunpack.c.l.b16 %v455
        %v717 = vunpack.c.h.b16 %v455
        %v718 = vunpack.c.l.b16 %v456
        %v719 = vunpack.c.h.b16 %v456
        %v720 = vunpack.c.l.b16 %v457
        %v721 = vunpack.c.h.b16 %v457
        %v722 = vunpack.c.l.b16 %v458
        %v723 = vunpack.c.h.b16 %v458
        %v724 = vunpack.c.l.b16 %v459
        %v725 = vunpack.c.h.b16 %v459
        %v726 = vunpack.c.l.b16 %v460
        %v727 = vunpack.c.h.b16 %v460
        %v728 = vunpack.c.l.b16 %v461
        %v729 = vunpack.c.h.b16 %v461
        %v730 = vunpack.c.l.b16 %v462
        %v731 = vunpack.c.h.b16 %v462
        %v732 = vunpack.c.l.b16 %v463
        %v733 = vunpack.c.h.b16 %v463
        %v734 = vunpack.c.l.b16 %v464
        %v735 = vunpack.c.h.b16 %v464
        %v736 = vunpack.c.l.b16 %v465
        %v737 = vunpack.c.h.b16 %v465
        %v738 = vunpack.c.l.b16 %v466
        %v739 = vunpack.c.h.b16 %v466
        %v740 = vunpack.c.l.b16 %v467
        %v741 = vunpack.c.h.b16 %v467
        %v742 = vunpack.c.l.b16 %v468
        %v743 = vunpack.c.h.b16 %v468
        %v744 = vunpack.c.l.b16 %v469
        %v745 = vunpack.c.h.b16 %v469
        %v746 = vunpack.c.l.b16 %v470
        %v747 = vunpack.c.h.b16 %v470
        %v748 = vunpack.c.l.b16 %v471
        %v749 = vunpack.c.h.b16 %v471
        %v750 = vunpack.c.l.b16 %v472
        %v751 = vunpack.c.h.b16 %v472
        %v752 = vunpack.c.l.b16 %v473
        %v753 = vunpack.c.h.b16 %v473
        %v754 = vunpack.c.l.b16 %v474
        %v755 = vunpack.c.h.b16 %v474
        %v756 = vunpack.c.l.b16 %v475
        %v757 = vunpack.c.h.b16 %v475
        %v758 = vunpack.c.l.b16 %v476
        %v759 = vunpack.c.h.b16 %v476
        %v760 = vunpack.c.l.b16 %v477
        %v761 = vunpack.c.h.b16 %v477
        %v762 = vunpack.c.l.b16 %v478
        %v763 = vunpack.c.h.b16 %v478
        %v764 = vunpack.c.l.b16 %v479
        %v765 = vunpack.c.h.b16 %v479
        %v766 = vunpack.c.l.b16 %v480
        %v767 = vunpack.c.h.b16 %v480
        %v768 = vunpack.c.l.b16 %v481
        %v769 = vunpack.c.h.b16 %v481
        %v770 = vunpack.c.l.b16 %v482
        %v771 = vunpack.c.h.b16 %v482
        %v772 = vunpack.c.l.b16 %v483
        %v773 = vunpack.c.h.b16 %v483
        %v774 = vunpack.c.l.b16 %v484
        %v775 = vunpack.c.h.b16 %v484
        %v776 = vunpack.c.l.b16 %v485
        %v777 = vunpack.c.h.b16 %v485
        %v778 = vunpack.c.l.b16 %v486
        %v779 = vunpack.c.h.b16 %v486
        %v780 = vunpack.c.l.b16 %v487
        %v781 = vunpack.c.h.b16 %v487
        %v782 = vunpack.c.l.b16 %v488
        %v783 = vunpack.c.h.b16 %v488
        %v784 = vunpack.c.l.b16 %v489
        %v785 = vunpack.c.h.b16 %v489
        %v786 = vunpack.c.l.b16 %v490
        %v787 = vunpack.c.h.b16 %v490
        %v788 = vunpack.c.l.b16 %v491
        %v789 = vunpack.c.h.b16 %v491
        %v790 = vunpack.c.l.b16 %v492
        %v791 = vunpack.c.h.b16 %v492
        %v792 = vunpack.c.l.b16 %v493
        %v793 = vunpack.c.h.b16 %v493
        %v794 = vunpack.c.l.b16 %v494
        %v795 = vunpack.c.h.b16 %v494
        %v796 = vunpack.c.l.b16 %v495
        %v797 = vunpack.c.h.b16 %v495
        %v798 = vunpack.c.l.b16 %v496
        %v799 = vunpack.c.h.b16 %v496
        %v800 = vunpack.c.l.b16 %v497
        %v801 = vunpack.c.h.b16 %v497
        %v802 = vunpack.c.l.b16 %v498
        %v803 = vunpack.c.h.b16 %v498
        %v804 = vunpack.c.l.b16 %v499
        %v805 = vunpack.c.h.b16 %v499
        %v806 = vunpack.c.l.b16 %v500
        %v807 = vunpack.c.h.b16 %v500
        %v808 = vunpack.c.l.b16 %v501
        %v809 = vunpack.c.h.b16 %v501
        %v810 = vunpack.c.l.b16 %v502
        %v811 = vunpack.c.h.b16 %v502
        %v812 = vunpack.c.l.b16 %v503
        %v813 = vunpack.c.h.b16 %v503
        %v814 = vunpack.c.l.b16 %v504
        %v815 = vunpack.c.h.b16 %v504
        %v816 = vunpack.c.l.b16 %v505
        %v817 = vunpack.c.h.b16 %v505
        %v818 = vunpack.c.l.b16 %v506
        %v819 = vunpack.c.h.b16 %v506
        %v820 = vunpack.c.l.b16 %v507
        %v821 = vunpack.c.h.b16 %v507
        %v822 = vunpack.c.l.b16 %v508
        %v823 = vunpack.c.h.b16 %v508
        %v824 = vunpack.c.l.b16 %v509
        %v825 = vunpack.c.h.b16 %v509
        %v826 = vunpack.c.l.b16 %v510
        %v827 = vunpack.c.h.b16 %v510
        %v828 = vunpack.c.l.b16 %v511
        %v829 = vunpack.c.h.b16 %v511
        %v830 = vunpack.c.l.b16 %v512
        %v831 = vunpack.c.h.b16 %v512
        %v832 = vunpack.c.l.b16 %v513
        %v833 = vunpack.c.h.b16 %v513
        %v834 = vunpack.c.l.b16 %v514
        %v835 = vunpack.c.h.b16 %v514
        %v836 = vunpack.c.l.b16 %v515
        %v837 = vunpack.c.h.b16 %v515
        %v838 = vunpack.c.l.b16 %v516
        %v839 = vunpack.c.h.b16 %v516
        %v840 = vunpack.c.l.b16 %v517
        %v841 = vunpack.c.h.b16 %v517
        %v842 = vunpack.c.l.b16 %v518
        %v843 = vunpack.c.h.b16 %v518
        %v844 = vunpack.c.l.b16 %v519
        %v845 = vunpack.c.h.b16 %v519
        %v846 = vunpack.c.l.b16 %v520
        %v847 = vunpack.c.h.b16 %v520
        %v848 = vunpack.c.l.b16 %v521
        %v849 = vunpack.c.h.b16 %v521
        %v850 = vunpack.c.l.b16 %v522
        %v851 = vunpack.c.h.b16 %v522
        %v852 = vunpack.c.l.b16 %v523
        %v853 = vunpack.c.h.b16 %v523
        %v854 = vpack.c.b16 %v642, %v638
        %v855 = vpack.c.b16 %v643, %v639
        %v856 = vpack.c.b16 %v644, %v640
        %v857 = vpack.c.b16 %v645, %v641
        %v858 = vpack.c.b16 %v650, %v646
        %v859 = vpack.c.b16 %v651, %v647
        %v860 = vpack.c.b16 %v652, %v648
        %v861 = vpack.c.b16 %v653, %v649
        %v862 = vpack.c.b16 %v658, %v654
        %v863 = vpack.c.b16 %v659, %v655
        %v864 = vpack.c.b16 %v660, %v656
        %v865 = vpack.c.b16 %v661, %v657
        %v866 = vpack.c.b16 %v666, %v662
        %v867 = vpack.c.b16 %v667, %v663
        %v868 = vpack.c.b16 %v668, %v664
        %v869 = vpack.c.b16 %v669, %v665
        %v870 = vpack.c.b16 %v674, %v670
        %v871 = vpack.c.b16 %v675, %v671
        %v872 = vpack.c.b16 %v676, %v672
        %v873 = vpack.c.b16 %v677, %v673
        %v874 = vpack.c.b16 %v682, %v678
        %v875 = vpack.c.b16 %v683, %v679
        %v876 = vpack.c.b16 %v684, %v680
        %v877 = vpack.c.b16 %v685, %v681
        %v878 = vpack.c.b16 %v690, %v686
        %v879 = vpack.c.b16 %v691, %v687
        %v880 = vpack.c.b16 %v692, %v688
        %v881 = vpack.c.b16 %v693, %v689
        %v882 = vpack.c.b16 %v698, %v694
        %v883 = vpack.c.b16 %v699, %v695
        %v884 = vpack.c.b16 %v700, %v696
        %v885 = vpack.c.b16 %v701, %v697
        %v886 = vpack.c.b16 %v706, %v702
        %v887 = vpack.c.b16 %v707, %v703
        %v888 = vpack.c.b16 %v708, %v704
        %v889 = vpack.c.b16 %v709, %v705
        %v890 = vpack.c.b16 %v714, %v710
        %v891 = vpack.c.b16 %v715, %v711
        %v892 = vpack.c.b16 %v716, %v712
        %v893 = vpack.c.b16 %v717, %v713
        %v894 = vpack.c.b16 %v722, %v718
        %v895 = vpack.c.b16 %v723, %v719
        %v896 = vpack.c.b16 %v724, %v720
        %v897 = vpack.c.b16 %v725, %v721
        %v898 = vpack.c.b16 %v730, %v726
        %v899 = vpack.c.b16 %v731, %v727
        %v900 = vpack.c.b16 %v732, %v728
        %v901 = vpack.c.b16 %v733, %v729
        %v902 = vpack.c.b16 %v738, %v734
        %v903 = vpack.c.b16 %v739, %v735
        %v904 = vpack.c.b16 %v740, %v736
        %v905 = vpack.c.b16 %v741, %v737
        %v906 = vpack.c.b16 %v746, %v742
        %v907 = vpack.c.b16 %v747, %v743
        %v908 = vpack.c.b16 %v748, %v744
        %v909 = vpack.c.b16 %v749, %v745
        %v910 = vpack.c.b16 %v754, %v750
        %v911 = vpack.c.b16 %v755, %v751
        %v912 = vpack.c.b16 %v756, %v752
        %v913 = vpack.c.b16 %v757, %v753
        %v914 = vpack.c.b16 %v762, %v758
        %v915 = vpack.c.b16 %v763, %v759
        %v916 = vpack.c.b16 %v764, %v760
        %v917 = vpack.c.b16 %v765, %v761
        %v918 = vpack.c.b16 %v770, %v766
        %v919 = vpack.c.b16 %v771, %v767
        %v920 = vpack.c.b16 %v772, %v768
        %v921 = vpack.c.b16 %v773, %v769
        %v922 = vpack.c.b16 %v778, %v774
        %v923 = vpack.c.b16 %v779, %v775
        %v924 = vpack.c.b16 %v780, %v776
        %v925 = vpack.c.b16 %v781, %v777
        %v926 = vpack.c.b16 %v786, %v782
        %v927 = vpack.c.b16 %v787, %v783
        %v928 = vpack.c.b16 %v788, %v784
        %v929 = vpack.c.b16 %v789, %v785
        %v930 = vpack.c.b16 %v794, %v790
        %v931 = vpack.c.b16 %v795, %v791
        %v932 = vpack.c.b16 %v796, %v792
        %v933 = vpack.c.b16 %v797, %v793
        %v934 = vpack.c.b16 %v802, %v798
        %v935 = vpack.c.b16 %v803, %v799
        %v936 = vpack.c.b16 %v804, %v800
        %v937 = vpack.c.b16 %v805, %v801
        %v938 = vpack.c.b16 %v810, %v806
        %v939 = vpack.c.b16 %v811, %v807
        %v940 = vpack.c.b16 %v812, %v808
        %v941 = vpack.c.b16 %v813, %v809
        %v942 = vpack.c.b16 %v818, %v814
        %v943 = vpack.c.b16 %v819, %v815
        %v944 = vpack.c.b16 %v820, %v816
        %v945 = vpack.c.b16 %v821, %v817
        %v946 = vpack.c.b16 %v826, %v822
        %v947 = vpack.c.b16 %v827, %v823
        %v948 = vpack.c.b16 %v828, %v824
        %v949 = vpack.c.b16 %v829, %v825
        %v950 = vpack.c.b16 %v834, %v830
        %v951 = vpack.c.b16 %v835, %v831
        %v952 = vpack.c.b16 %v836, %v832
        %v953 = vpack.c.b16 %v837, %v833
        %v954 = vpack.c.b16 %v842, %v838
        %v955 = vpack.c.b16 %v843, %v839
        %v956 = vpack.c.b16 %v844, %v840
        %v957 = vpack.c.b16 %v845, %v841
        %v958 = vpack.c.b16 %v850, %v846
        %v959 = vpack.c.b16 %v851, %v847
        %v960 = vpack.c.b16 %v852, %v848
        %v961 = vpack.c.b16 %v853, %v849
        %vm1070 = vcmask 392192
        %v1072 = vsel %vm1070, %v415, 0
        %1074 = vmatpush.bf16.msra.mxu0 %v882
        %1075 = vmatpush.bf16.msra.mxu0 %v878
        %1076 = vmatpush.bf16.msra.mxu0 %v874
        %1077 = vmatpush.bf16.msra.mxu0 %v870
        %1078 = vmatpush.bf16.msra.mxu0 %v866
        %1079 = vmatpush.bf16.msra.mxu0 %v862
        %1080 = vmatpush.bf16.msra.mxu0 %v858
        %1081 = vmatpush.bf16.msra.mxu0 %v854
        %1082 = vmatmul.bf16.gmra.mxu0 %v412
        %v1083 = vpop.f32.mrf.mxu0
        %v1084 = vadd.f32 %v528, %v1083
        %v1085 = vpop.f32.mrf.mxu0
        %1086 = vdwg.mxu0
        %1087 = vmatpush.bf16.msra.mxu0 %v914
        %1088 = vmatpush.bf16.msra.mxu0 %v910
        %1089 = vmatpush.bf16.msra.mxu0 %v906
        %1090 = vmatpush.bf16.msra.mxu0 %v902
        %1091 = vmatpush.bf16.msra.mxu0 %v898
        %1092 = vmatpush.bf16.msra.mxu0 %v894
        %1093 = vmatpush.bf16.msra.mxu0 %v890
        %1094 = vmatpush.bf16.msra.mxu0 %v886
        %1095 = vmatmul.bf16.gmra.mxu0 %v413
        %v1096 = vpop.f32.mrf.mxu0
        %v1097 = vadd.f32 %v1084, %v1096
        %v1098 = vpop.f32.mrf.mxu0
        %1099 = vdwg.mxu0
        %1100 = vmatpush.bf16.msra.mxu0 %v946
        %1101 = vmatpush.bf16.msra.mxu0 %v942
        %1102 = vmatpush.bf16.msra.mxu0 %v938
        %1103 = vmatpush.bf16.msra.mxu0 %v934
        %1104 = vmatpush.bf16.msra.mxu0 %v930
        %1105 = vmatpush.bf16.msra.mxu0 %v926
        %1106 = vmatpush.bf16.msra.mxu0 %v922
        %1107 = vmatpush.bf16.msra.mxu0 %v918
        %1108 = vmatmul.bf16.gmra.mxu0 %v414
        %v1109 = vpop.f32.mrf.mxu0
        %v1110 = vadd.f32 %v1097, %v1109
        %v1111 = vpop.f32.mrf.mxu0
        %1112 = vdwg.mxu0
        %1113 = vmatpush.bf16.msra.mxu0 0
        %1114 = vmatpush.bf16.msra.mxu0 0
        %1115 = vmatpush.bf16.msra.mxu0 0
        %1116 = vmatpush.bf16.msra.mxu0 0
        %1117 = vmatpush.bf16.msra.mxu0 0
        %1118 = vmatpush.bf16.msra.mxu0 %v958
        %1119 = vmatpush.bf16.msra.mxu0 %v954
        %1120 = vmatpush.bf16.msra.mxu0 %v950
        %1121 = vmatmul.bf16.gmra.mxu0 %v1072
        %v1122 = vpop.f32.mrf.mxu0
        %v1123 = vadd.f32 %v1110, %v1122
        %v1124 = vpop.f32.mrf.mxu0
        %1125 = vdwg.mxu0
        %1126 = vmatpush.bf16.msra.mxu0 %v883
        %1127 = vmatpush.bf16.msra.mxu0 %v879
        %1128 = vmatpush.bf16.msra.mxu0 %v875
        %1129 = vmatpush.bf16.msra.mxu0 %v871
        %1130 = vmatpush.bf16.msra.mxu0 %v867
        %1131 = vmatpush.bf16.msra.mxu0 %v863
        %1132 = vmatpush.bf16.msra.mxu0 %v859
        %1133 = vmatpush.bf16.msra.mxu0 %v855
        %1134 = vmatmul.bf16.gmra.mxu0 %v412
        %v1135 = vpop.f32.mrf.mxu0
        %v1136 = vadd.f32 %v528, %v1135
        %v1137 = vpop.f32.mrf.mxu0
        %1138 = vdwg.mxu0
        %1139 = vmatpush.bf16.msra.mxu0 %v915
        %1140 = vmatpush.bf16.msra.mxu0 %v911
        %1141 = vmatpush.bf16.msra.mxu0 %v907
        %1142 = vmatpush.bf16.msra.mxu0 %v903
        %1143 = vmatpush.bf16.msra.mxu0 %v899
        %1144 = vmatpush.bf16.msra.mxu0 %v895
        %1145 = vmatpush.bf16.msra.mxu0 %v891
        %1146 = vmatpush.bf16.msra.mxu0 %v887
        %1147 = vmatmul.bf16.gmra.mxu0 %v413
        %v1148 = vpop.f32.mrf.mxu0
        %v1149 = vadd.f32 %v1136, %v1148
        %v1150 = vpop.f32.mrf.mxu0
        %1151 = vdwg.mxu0
        %1152 = vmatpush.bf16.msra.mxu0 %v947
        %1153 = vmatpush.bf16.msra.mxu0 %v943
        %1154 = vmatpush.bf16.msra.mxu0 %v939
        %1155 = vmatpush.bf16.msra.mxu0 %v935
        %1156 = vmatpush.bf16.msra.mxu0 %v931
        %1157 = vmatpush.bf16.msra.mxu0 %v927
        %1158 = vmatpush.bf16.msra.mxu0 %v923
        %1159 = vmatpush.bf16.msra.mxu0 %v919
        %1160 = vmatmul.bf16.gmra.mxu0 %v414
        %v1161 = vpop.f32.mrf.mxu0
        %v1162 = vadd.f32 %v1149, %v1161
        %v1163 = vpop.f32.mrf.mxu0
        %1164 = vdwg.mxu0
        %1165 = vmatpush.bf16.msra.mxu0 0
        %1166 = vmatpush.bf16.msra.mxu0 0
        %1167 = vmatpush.bf16.msra.mxu0 0
        %1168 = vmatpush.bf16.msra.mxu0 0
        %1169 = vmatpush.bf16.msra.mxu0 0
        %1170 = vmatpush.bf16.msra.mxu0 %v959
        %1171 = vmatpush.bf16.msra.mxu0 %v955
        %1172 = vmatpush.bf16.msra.mxu0 %v951
        %1173 = vmatmul.bf16.gmra.mxu0 %v1072
        %v1174 = vpop.f32.mrf.mxu0
        %v1175 = vadd.f32 %v1162, %v1174
        %v1176 = vpop.f32.mrf.mxu0
        %1177 = vdwg.mxu0
        %1178 = vmatpush.bf16.msra.mxu0 %v884
        %1179 = vmatpush.bf16.msra.mxu0 %v880
        %1180 = vmatpush.bf16.msra.mxu0 %v876
        %1181 = vmatpush.bf16.msra.mxu0 %v872
        %1182 = vmatpush.bf16.msra.mxu0 %v868
        %1183 = vmatpush.bf16.msra.mxu0 %v864
        %1184 = vmatpush.bf16.msra.mxu0 %v860
        %1185 = vmatpush.bf16.msra.mxu0 %v856
        %1186 = vmatmul.bf16.gmra.mxu0 %v412
        %v1187 = vpop.f32.mrf.mxu0
        %v1188 = vadd.f32 %v528, %v1187
        %v1189 = vpop.f32.mrf.mxu0
        %1190 = vdwg.mxu0
        %1191 = vmatpush.bf16.msra.mxu0 %v916
        %1192 = vmatpush.bf16.msra.mxu0 %v912
        %1193 = vmatpush.bf16.msra.mxu0 %v908
        %1194 = vmatpush.bf16.msra.mxu0 %v904
        %1195 = vmatpush.bf16.msra.mxu0 %v900
        %1196 = vmatpush.bf16.msra.mxu0 %v896
        %1197 = vmatpush.bf16.msra.mxu0 %v892
        %1198 = vmatpush.bf16.msra.mxu0 %v888
        %1199 = vmatmul.bf16.gmra.mxu0 %v413
        %v1200 = vpop.f32.mrf.mxu0
        %v1201 = vadd.f32 %v1188, %v1200
        %v1202 = vpop.f32.mrf.mxu0
        %1203 = vdwg.mxu0
        %1204 = vmatpush.bf16.msra.mxu0 %v948
        %1205 = vmatpush.bf16.msra.mxu0 %v944
        %1206 = vmatpush.bf16.msra.mxu0 %v940
        %1207 = vmatpush.bf16.msra.mxu0 %v936
        %1208 = vmatpush.bf16.msra.mxu0 %v932
        %1209 = vmatpush.bf16.msra.mxu0 %v928
        %1210 = vmatpush.bf16.msra.mxu0 %v924
        %1211 = vmatpush.bf16.msra.mxu0 %v920
        %1212 = vmatmul.bf16.gmra.mxu0 %v414
        %v1213 = vpop.f32.mrf.mxu0
        %v1214 = vadd.f32 %v1201, %v1213
        %v1215 = vpop.f32.mrf.mxu0
        %1216 = vdwg.mxu0
        %1217 = vmatpush.bf16.msra.mxu0 0
        %1218 = vmatpush.bf16.msra.mxu0 0
        %1219 = vmatpush.bf16.msra.mxu0 0
        %1220 = vmatpush.bf16.msra.mxu0 0
        %1221 = vmatpush.bf16.msra.mxu0 0
        %1222 = vmatpush.bf16.msra.mxu0 %v960
        %1223 = vmatpush.bf16.msra.mxu0 %v956
        %1224 = vmatpush.bf16.msra.mxu0 %v952
        %1225 = vmatmul.bf16.gmra.mxu0 %v1072
        %v1226 = vpop.f32.mrf.mxu0
        %v1227 = vadd.f32 %v1214, %v1226
        %v1228 = vpop.f32.mrf.mxu0
        %1229 = vdwg.mxu0
        %1230 = vmatpush.bf16.msra.mxu0 %v885
        %1231 = vmatpush.bf16.msra.mxu0 %v881
        %1232 = vmatpush.bf16.msra.mxu0 %v877
        %1233 = vmatpush.bf16.msra.mxu0 %v873
        %1234 = vmatpush.bf16.msra.mxu0 %v869
        %1235 = vmatpush.bf16.msra.mxu0 %v865
        %1236 = vmatpush.bf16.msra.mxu0 %v861
        %1237 = vmatpush.bf16.msra.mxu0 %v857
        %1238 = vmatmul.bf16.gmra.mxu0 %v412
        %v1239 = vpop.f32.mrf.mxu0
        %v1240 = vadd.f32 %v528, %v1239
        %v1241 = vpop.f32.mrf.mxu0
        %1242 = vdwg.mxu0
        %1243 = vmatpush.bf16.msra.mxu0 %v917
        %1244 = vmatpush.bf16.msra.mxu0 %v913
        %1245 = vmatpush.bf16.msra.mxu0 %v909
        %1246 = vmatpush.bf16.msra.mxu0 %v905
        %1247 = vmatpush.bf16.msra.mxu0 %v901
        %1248 = vmatpush.bf16.msra.mxu0 %v897
        %1249 = vmatpush.bf16.msra.mxu0 %v893
        %1250 = vmatpush.bf16.msra.mxu0 %v889
        %1251 = vmatmul.bf16.gmra.mxu0 %v413
        %v1252 = vpop.f32.mrf.mxu0
        %v1253 = vadd.f32 %v1240, %v1252
        %v1254 = vpop.f32.mrf.mxu0
        %1255 = vdwg.mxu0
        %1256 = vmatpush.bf16.msra.mxu0 %v949
        %1257 = vmatpush.bf16.msra.mxu0 %v945
        %1258 = vmatpush.bf16.msra.mxu0 %v941
        %1259 = vmatpush.bf16.msra.mxu0 %v937
        %1260 = vmatpush.bf16.msra.mxu0 %v933
        %1261 = vmatpush.bf16.msra.mxu0 %v929
        %1262 = vmatpush.bf16.msra.mxu0 %v925
        %1263 = vmatpush.bf16.msra.mxu0 %v921
        %1264 = vmatmul.bf16.gmra.mxu0 %v414
        %v1265 = vpop.f32.mrf.mxu0
        %v1266 = vadd.f32 %v1253, %v1265
        %v1267 = vpop.f32.mrf.mxu0
        %1268 = vdwg.mxu0
        %1269 = vmatpush.bf16.msra.mxu0 0
        %1270 = vmatpush.bf16.msra.mxu0 0
        %1271 = vmatpush.bf16.msra.mxu0 0
        %1272 = vmatpush.bf16.msra.mxu0 0
        %1273 = vmatpush.bf16.msra.mxu0 0
        %1274 = vmatpush.bf16.msra.mxu0 %v961
        %1275 = vmatpush.bf16.msra.mxu0 %v957
        %1276 = vmatpush.bf16.msra.mxu0 %v953
        %1277 = vmatmul.bf16.gmra.mxu0 %v1072
        %v1278 = vpop.f32.mrf.mxu0
        %v1279 = vadd.f32 %v1266, %v1278
        %v1280 = vpop.f32.mrf.mxu0
        %1281 = vdwg.mxu0
        %1282 = vst [vmem:[%s405] sm:$0xff] %v1123
        %1283 = vst [vmem:[%s405 + $0x8] sm:$0xff] %v1175
        %1284 = vst [vmem:[%s405 + $0x10] sm:$0xff] %v1227
        %1285 = vst [vmem:[%s405 + $0x18] sm:$0xff] %v1279
        %s1286 = smul.u32 4, %s14
        %p1287 = scmp.lt.s32.totalorder %s1286, 7
        %s1288 = scalar_select %p1287, %s1286, 7
        %s1289 = smul.addr %s1288, 8
        %s1290 = scalar_lea.vmem %s3, %s1289
        // Predicated region
        $region56: #{simple_block3d_forward.57} parent=50 // pred_check
          %p1291 = pneg %p100
        $region57: #{simple_block3d_forward.57} parent=50 // pred_check_branch
          %1293 = sbr.rel (%p1291) target = $region59
        $region58: #{simple_block3d_forward.57} parent=50 // pred_region
          %s1294 = smul.u32 4, %s14
        $region59: #{simple_block3d_forward.57} parent=50 // pred_fallthru
          _
      $region51: #{simple_block3d_forward.57} parent=5 // pred_fallthru
        _
      %p1295 = scmp.le.s32.totalorder 2, %s9
      // Predicated region
      $region60: #{simple_block3d_forward.57} parent=5 // pred_check
        %p1296 = pneg %p1295
      $region61: #{simple_block3d_forward.57} parent=5 // pred_check_branch
        %1298 = sbr.rel (%p1296) target = $region63
      $region62: #{simple_block3d_forward.57} parent=5 // pred_region
        %s1299 = ssub.s32 %s9, 2
        // Predicated region
        $region64: #{simple_block3d_forward.57} parent=62 // pred_check
          %p1300 = pneg %p106
        $region65: #{simple_block3d_forward.57} parent=62 // pred_check_branch
          %1302 = sbr.rel (%p1300) target = $region67
        $region66: #{simple_block3d_forward.57} parent=62 // pred_region
          %s1303 = smul.u32 4, %s15
          %p1304 = scmp.lt.s32.totalorder %s1303, 7
          %s1305 = scalar_select %p1304, %s1303, 7
          %s1306 = smul.addr %s1305, 8
          %s1307 = scalar_lea.vmem %s3, %s1306
        $region67: #{simple_block3d_forward.57} parent=62 // pred_fallthru
          _
      $region63: #{simple_block3d_forward.57} parent=5 // pred_fallthru
        _
    $region6: #{simple_block3d_forward.57} parent=1 // loop_footer
      %s13 = sadd.s32 1, %s9
    $region7: #{simple_block3d_forward.57} parent=1 // loop_footer_branch
      %8 = sbr.rel target = $region3
    $region8: #{simple_block3d_forward.57} parent=1 // loop_exit
      _

// kernel: simple_block3d_forward.81
$region0: #{simple_block3d_forward.81}
  #allocation0 [shape = 'u32[]', space=smem, size = 0x4, offset = 0x4, fixed_abs, tag = 'smem constant byte address 0x4 - core index']
  #allocation1 [shape = 'u32[72,128]{1,0:T(1,128)}', space=vmem, size = 0x9000, scoped, tag = 'internal scratch']
  %s0 = inlined_call_operand.vmem [shape: f32[8,1024], index: 0, kind: input, shape index: {}]
  %s1 = inlined_call_operand.vmem [shape: f32[128,8], index: 1, kind: input, shape index: {}]
  %s2 = inlined_call_operand.vmem [shape: f32[128,1], index: 2, kind: input, shape index: {}]
  %s3 = inlined_call_operand.vmem [shape: f32[8,128], index: 3, kind: input, shape index: {}]
  %s4 = inlined_call_operand.vmem [shape: f32[8,1], index: 4, kind: input, shape index: {}]
  %s5 = inlined_call_operand.vmem [shape: f32[8,1024], index: 5, kind: output, shape index: {}]
  %s6 = sld [smem:[#allocation0]]
  $region53: #{simple_block3d_forward.81} parent=0
    _
  %s8 = ssub.s32 1, %s6
  %s9 = scalar_select 0, %s8, %s6
  loop: start=0, step=1, limit=4
  $region2: #{simple_block3d_forward.81} parent=0 // loop_pre_header
    _
  $region3: #{simple_block3d_forward.81} parent=0 // loop_header
    %s11 = sphi 0, %s15
    %p12 = scmp.ge.s32.totalorder %s11, 4
    %s21 = sphi 0, %s23
    %s24 = sphi 0, %s21
    %s25 = sphi 0, %s24
    %s41 = sphi 0, %s25
    %s45 = sphi 0, %s45
    %s47 = sphi 0, %s45
    %s48 = sphi 0, %s47
    %s62 = sphi 0, %s48
    %s66 = sphi 0, %s66
    %s68 = sphi 0, %s66
    %s69 = sphi 0, %s68
    %s83 = sphi 0, %s69
    %s87 = sphi 0, %s87
    %s89 = sphi 0, %s87
    %s90 = sphi 0, %s89
    %s104 = sphi 0, %s90
    %s108 = sphi 0, %s108
    %s110 = sphi 0, %s108
    %s111 = sphi 0, %s110
    %s125 = sphi 0, %s111
    %s131 = sphi 0, %s133
    %s134 = sphi 0, %s131
    %s135 = sphi 0, %s134
    %s151 = sphi 0, %s135
  $region4: #{simple_block3d_forward.81} parent=0 // loop_header_branch
    %14 = sbr.rel (%p12) target = $region8
  $region5: #{simple_block3d_forward.81} parent=0 // loop_body
    %s16 = ssub.s32 %s11, 1
    %s17 = ssub.s32 %s11, 2
    %s18 = sadd.s32 %s11, 1
    %s19 = ssub.s32 %s11, %s18
    %p20 = scmp.eq.s32.totalorder %s19, 0
    %s22 = sadd.s32 %s21, 1
    %s23 = scalar_select %p20, %s21, %s22
    %p26 = pneg %p20
    %p27 = scmp.eq.s32.totalorder %s11, 1
    %p28 = por %p26, %p27
    %p29 = scmp.ne.s32.totalorder %s21, %s24
    %p30 = scmp.eq.s32.totalorder %s11, 0
    %p31 = por %p29, %p30
    %p32 = scmp.ne.s32.totalorder %s21, %s24
    %p33 = scmp.eq.s32.totalorder %s16, 1
    %p34 = por %p32, %p33
    %p35 = scmp.ne.s32.totalorder %s24, %s25
    %p36 = scmp.eq.s32.totalorder %s16, 0
    %p37 = por %p35, %p36
    %p38 = scmp.ne.s32.totalorder %s24, %s25
    %p39 = scmp.eq.s32.totalorder %s17, 1
    %p40 = por %p38, %p39
    %p42 = scmp.ne.s32.totalorder %s25, %s41
    %p43 = scmp.eq.s32.totalorder %s17, 0
    %p44 = por %p42, %p43
    %s46 = sadd.s32 %s45, 1
    %p49 = scmp.eq.s32.totalorder %s11, 1
    %p50 = scmp.ne.s32.totalorder %s45, %s47
    %p51 = scmp.eq.s32.totalorder %s11, 0
    %p52 = por %p50, %p51
    %p53 = scmp.ne.s32.totalorder %s45, %s47
    %p54 = scmp.eq.s32.totalorder %s16, 1
    %p55 = por %p53, %p54
    %p56 = scmp.ne.s32.totalorder %s47, %s48
    %p57 = scmp.eq.s32.totalorder %s16, 0
    %p58 = por %p56, %p57
    %p59 = scmp.ne.s32.totalorder %s47, %s48
    %p60 = scmp.eq.s32.totalorder %s17, 1
    %p61 = por %p59, %p60
    %p63 = scmp.ne.s32.totalorder %s48, %s62
    %p64 = scmp.eq.s32.totalorder %s17, 0
    %p65 = por %p63, %p64
    %s67 = sadd.s32 %s66, 1
    %p70 = scmp.eq.s32.totalorder %s11, 1
    %p71 = scmp.ne.s32.totalorder %s66, %s68
    %p72 = scmp.eq.s32.totalorder %s11, 0
    %p73 = por %p71, %p72
    %p74 = scmp.ne.s32.totalorder %s66, %s68
    %p75 = scmp.eq.s32.totalorder %s16, 1
    %p76 = por %p74, %p75
    %p77 = scmp.ne.s32.totalorder %s68, %s69
    %p78 = scmp.eq.s32.totalorder %s16, 0
    %p79 = por %p77, %p78
    %p80 = scmp.ne.s32.totalorder %s68, %s69
    %p81 = scmp.eq.s32.totalorder %s17, 1
    %p82 = por %p80, %p81
    %p84 = scmp.ne.s32.totalorder %s69, %s83
    %p85 = scmp.eq.s32.totalorder %s17, 0
    %p86 = por %p84, %p85
    %s88 = sadd.s32 %s87, 1
    %p91 = scmp.eq.s32.totalorder %s11, 1
    %p92 = scmp.ne.s32.totalorder %s87, %s89
    %p93 = scmp.eq.s32.totalorder %s11, 0
    %p94 = por %p92, %p93
    %p95 = scmp.ne.s32.totalorder %s87, %s89
    %p96 = scmp.eq.s32.totalorder %s16, 1
    %p97 = por %p95, %p96
    %p98 = scmp.ne.s32.totalorder %s89, %s90
    %p99 = scmp.eq.s32.totalorder %s16, 0
    %p100 = por %p98, %p99
    %p101 = scmp.ne.s32.totalorder %s89, %s90
    %p102 = scmp.eq.s32.totalorder %s17, 1
    %p103 = por %p101, %p102
    %p105 = scmp.ne.s32.totalorder %s90, %s104
    %p106 = scmp.eq.s32.totalorder %s17, 0
    %p107 = por %p105, %p106
    %s109 = sadd.s32 %s108, 1
    %p112 = scmp.eq.s32.totalorder %s11, 1
    %p113 = scmp.ne.s32.totalorder %s108, %s110
    %p114 = scmp.eq.s32.totalorder %s11, 0
    %p115 = por %p113, %p114
    %p116 = scmp.ne.s32.totalorder %s108, %s110
    %p117 = scmp.eq.s32.totalorder %s16, 1
    %p118 = por %p116, %p117
    %p119 = scmp.ne.s32.totalorder %s110, %s111
    %p120 = scmp.eq.s32.totalorder %s16, 0
    %p121 = por %p119, %p120
    %p122 = scmp.ne.s32.totalorder %s110, %s111
    %p123 = scmp.eq.s32.totalorder %s17, 1
    %p124 = por %p122, %p123
    %p126 = scmp.ne.s32.totalorder %s111, %s125
    %p127 = scmp.eq.s32.totalorder %s17, 0
    %p128 = por %p126, %p127
    %s129 = ssub.s32 %s11, %s18
    %p130 = scmp.eq.s32.totalorder %s129, 0
    %s132 = sadd.s32 %s131, 1
    %s133 = scalar_select %p130, %s131, %s132
    %p136 = pneg %p130
    %p137 = scmp.eq.s32.totalorder %s11, 1
    %p138 = por %p136, %p137
    %p139 = scmp.ne.s32.totalorder %s131, %s134
    %p140 = scmp.eq.s32.totalorder %s11, 0
    %p141 = por %p139, %p140
    %p142 = scmp.ne.s32.totalorder %s131, %s134
    %p143 = scmp.eq.s32.totalorder %s16, 1
    %p144 = por %p142, %p143
    %p145 = scmp.ne.s32.totalorder %s134, %s135
    %p146 = scmp.eq.s32.totalorder %s16, 0
    %p147 = por %p145, %p146
    %p148 = scmp.ne.s32.totalorder %s134, %s135
    %p149 = scmp.eq.s32.totalorder %s17, 1
    %p150 = por %p148, %p149
    %p152 = scmp.ne.s32.totalorder %s135, %s151
    %p153 = scmp.eq.s32.totalorder %s17, 0
    %p154 = por %p152, %p153
    %p155 = scmp.le.s32.totalorder 1, %s11
    %p156 = scmp.lt.s32.totalorder %s11, 3
    %p157 = pnand %p155, %p156
    %p158 = pneg %p157
    // Predicated region
    $region9: #{simple_block3d_forward.81} parent=5 // pred_check
      _
    $region10: #{simple_block3d_forward.81} parent=5 // pred_check_branch
      %160 = sbr.rel (%p157) target = $region12
    $region11: #{simple_block3d_forward.81} parent=5 // pred_region
      %s161 = ssub.s32 %s11, 1
      // Predicated region
      $region13: #{simple_block3d_forward.81} parent=11 // pred_check
        %p162 = pneg %p58
      $region14: #{simple_block3d_forward.81} parent=11 // pred_check_branch
        %164 = sbr.rel (%p162) target = $region16
      $region15: #{simple_block3d_forward.81} parent=11 // pred_region
        _
      $region16: #{simple_block3d_forward.81} parent=11 // pred_fallthru
        _
      // Predicated region
      $region17: #{simple_block3d_forward.81} parent=11 // pred_check
        %p165 = pneg %p79
      $region18: #{simple_block3d_forward.81} parent=11 // pred_check_branch
        %167 = sbr.rel (%p165) target = $region20
      $region19: #{simple_block3d_forward.81} parent=11 // pred_region
        _
      $region20: #{simple_block3d_forward.81} parent=11 // pred_fallthru
        _
      // Predicated region
      $region21: #{simple_block3d_forward.81} parent=11 // pred_check
        %p168 = pneg %p100
      $region22: #{simple_block3d_forward.81} parent=11 // pred_check_branch
        %170 = sbr.rel (%p168) target = $region24
      $region23: #{simple_block3d_forward.81} parent=11 // pred_region
        _
      $region24: #{simple_block3d_forward.81} parent=11 // pred_fallthru
        _
      // Predicated region
      $region25: #{simple_block3d_forward.81} parent=11 // pred_check
        %p171 = pneg %p121
      $region26: #{simple_block3d_forward.81} parent=11 // pred_check_branch
        %173 = sbr.rel (%p171) target = $region28
      $region27: #{simple_block3d_forward.81} parent=11 // pred_region
        _
      $region28: #{simple_block3d_forward.81} parent=11 // pred_fallthru
        _
    $region12: #{simple_block3d_forward.81} parent=5 // pred_fallthru
      _
    %p174 = scmp.lt.s32.totalorder %s11, 2
    // Predicated region
    $region29: #{simple_block3d_forward.81} parent=5 // pred_check
      %p175 = pneg %p174
    $region30: #{simple_block3d_forward.81} parent=5 // pred_check_branch
      %177 = sbr.rel (%p175) target = $region32
    $region31: #{simple_block3d_forward.81} parent=5 // pred_region
      // Predicated region
      $region33: #{simple_block3d_forward.81} parent=31 // pred_check
        %p178 = pneg %p31
      $region34: #{simple_block3d_forward.81} parent=31 // pred_check_branch
        %180 = sbr.rel (%p178) target = $region36
      $region35: #{simple_block3d_forward.81} parent=31 // pred_region
        %s181 = smul.u32 4, %s11
        %p182 = scmp.lt.s32.totalorder %s181, 7
        %s183 = scalar_select %p182, %s181, 7
        %s184 = smul.addr %s183, 8
        %s185 = scalar_lea.vmem %s0, %s184
        %s186 = smul.u32 4, %s11
      $region36: #{simple_block3d_forward.81} parent=31 // pred_fallthru
        _
    $region32: #{simple_block3d_forward.81} parent=5 // pred_fallthru
      _
    %p187 = scmp.le.s32.totalorder 1, %s11
    %p188 = scmp.lt.s32.totalorder %s11, 3
    %p189 = pnand %p187, %p188
    %p190 = pneg %p189
    // Predicated region
    $region37: #{simple_block3d_forward.81} parent=5 // pred_check
      _
    $region38: #{simple_block3d_forward.81} parent=5 // pred_check_branch
      %192 = sbr.rel (%p189) target = $region40
    $region39: #{simple_block3d_forward.81} parent=5 // pred_region
      %s193 = ssub.s32 %s11, 1
      %s194 = smul.u32 4, %s16
      %p195 = scmp.lt.s32.totalorder %s194, 7
      %s196 = scalar_select %p195, %s194, 7
      %s197 = smul.addr %s196, 8
      %s198 = scalar_lea.vmem %s0, %s197
      %p199 = pneg %p37
      %p200 = pneg %p34
      %p201 = pneg %p58
      %p202 = pneg %p55
      %p203 = pneg %p79
      %p204 = pneg %p76
      %p205 = pneg %p100
      %p206 = pneg %p97
      %p207 = pneg %p121
      %p208 = pneg %p118
      %p209 = pneg %p147
      %p210 = pneg %p144
      %s211 = smul.u32 4, %s16
      %p212 = scmp.lt.s32.totalorder %s211, 7
      %s213 = scalar_select %p212, %s211, 7
      %s214 = smul.addr %s213, 8
      %s215 = scalar_lea.vmem %s5, %s214
      %s216 = smul.u32 4, %s16
      %p217 = scmp.lt.s32.totalorder %s216, 7
      %s218 = scalar_select %p217, %s216, 7
      %s219 = smul.addr %s218, 8
      %s220 = scalar_lea.vmem %s0, %s219
      %s221 = smul.u32 4, %s16
      %s222 = smul.u32 4, %s16
      %p223 = scmp.lt.s32.totalorder %s222, 7
      %s224 = scalar_select %p223, %s222, 7
      %s225 = smul.addr %s224, 8
      %s226 = scalar_lea.vmem %s5, %s225
      %s227 = smul.u32 4, %s16
      %v229 = vld [vmem:[%s220] sm:$0xff]
      %v230 = vld [vmem:[%s220 + $0x8] sm:$0xff]
      %v231 = vld [vmem:[%s220 + $0x10] sm:$0xff]
      %v232 = vld [vmem:[%s220 + $0x18] sm:$0xff]
      %v233 = vpack.c.bf16 %v229, %v229
      %v234 = vpack.c.bf16 %v230, %v230
      %v235 = vpack.c.bf16 %v231, %v231
      %v236 = vpack.c.bf16 %v232, %v232
      %v237 = vld [vmem:[%s1] sm:$0xff]
      %v238 = vld [vmem:[%s1 + $0x8] sm:$0xff]
      %v239 = vld [vmem:[%s1 + $0x10] sm:$0xff]
      %v240 = vld [vmem:[%s1 + $0x18] sm:$0xff]
      %v241 = vld [vmem:[%s1 + $0x20] sm:$0xff]
      %v242 = vld [vmem:[%s1 + $0x28] sm:$0xff]
      %v243 = vld [vmem:[%s1 + $0x30] sm:$0xff]
      %v244 = vld [vmem:[%s1 + $0x38] sm:$0xff]
      %v245 = vld [vmem:[%s1 + $0x40] sm:$0xff]
      %v246 = vld [vmem:[%s1 + $0x48] sm:$0xff]
      %v247 = vld [vmem:[%s1 + $0x50] sm:$0xff]
      %v248 = vld [vmem:[%s1 + $0x58] sm:$0xff]
      %v249 = vld [vmem:[%s1 + $0x60] sm:$0xff]
      %v250 = vld [vmem:[%s1 + $0x68] sm:$0xff]
      %v251 = vld [vmem:[%s1 + $0x70] sm:$0xff]
      %v252 = vld [vmem:[%s1 + $0x78] sm:$0xff]
      %v253 = vpack.c.bf16 %v238, %v237
      %v254 = vpack.c.bf16 %v240, %v239
      %v255 = vpack.c.bf16 %v242, %v241
      %v256 = vpack.c.bf16 %v244, %v243
      %v257 = vpack.c.bf16 %v246, %v245
      %v258 = vpack.c.bf16 %v248, %v247
      %v259 = vpack.c.bf16 %v250, %v249
      %v260 = vpack.c.bf16 %v252, %v251
      %v261 = vld [vmem:[%s2] sm:$0xff]
      %v262 = vld [vmem:[%s2 + $0x8] sm:$0xff]
      %v263 = vld [vmem:[%s2 + $0x10] sm:$0xff]
      %v264 = vld [vmem:[%s2 + $0x18] sm:$0xff]
      %v265 = vld [vmem:[%s2 + $0x20] sm:$0xff]
      %v266 = vld [vmem:[%s2 + $0x28] sm:$0xff]
      %v267 = vld [vmem:[%s2 + $0x30] sm:$0xff]
      %v268 = vld [vmem:[%s2 + $0x38] sm:$0xff]
      %v269 = vld [vmem:[%s2 + $0x40] sm:$0xff]
      %v270 = vld [vmem:[%s2 + $0x48] sm:$0xff]
      %v271 = vld [vmem:[%s2 + $0x50] sm:$0xff]
      %v272 = vld [vmem:[%s2 + $0x58] sm:$0xff]
      %v273 = vld [vmem:[%s2 + $0x60] sm:$0xff]
      %v274 = vld [vmem:[%s2 + $0x68] sm:$0xff]
      %v275 = vld [vmem:[%s2 + $0x70] sm:$0xff]
      %v276 = vld [vmem:[%s2 + $0x78] sm:$0xff]
      %278 = vset.pattern.permute.xlu0 0
      %279 = vperm.xlu0 %278, %v261
      %v280 = vpop.permute.xlu0 %279
      %283 = vset.pattern.permute.xlu0 0
      %284 = vperm.xlu0 %283, %v262
      %v285 = vpop.permute.xlu0 %284
      %288 = vset.pattern.permute.xlu0 0
      %289 = vperm.xlu0 %288, %v263
      %v290 = vpop.permute.xlu0 %289
      %293 = vset.pattern.permute.xlu0 0
      %294 = vperm.xlu0 %293, %v264
      %v295 = vpop.permute.xlu0 %294
      %298 = vset.pattern.permute.xlu0 0
      %299 = vperm.xlu0 %298, %v265
      %v300 = vpop.permute.xlu0 %299
      %303 = vset.pattern.permute.xlu0 0
      %304 = vperm.xlu0 %303, %v266
      %v305 = vpop.permute.xlu0 %304
      %308 = vset.pattern.permute.xlu0 0
      %309 = vperm.xlu0 %308, %v267
      %v310 = vpop.permute.xlu0 %309
      %313 = vset.pattern.permute.xlu0 0
      %314 = vperm.xlu0 %313, %v268
      %v315 = vpop.permute.xlu0 %314
      %318 = vset.pattern.permute.xlu0 0
      %319 = vperm.xlu0 %318, %v269
      %v320 = vpop.permute.xlu0 %319
      %323 = vset.pattern.permute.xlu0 0
      %324 = vperm.xlu0 %323, %v270
      %v325 = vpop.permute.xlu0 %324
      %328 = vset.pattern.permute.xlu0 0
      %329 = vperm.xlu0 %328, %v271
      %v330 = vpop.permute.xlu0 %329
      %333 = vset.pattern.permute.xlu0 0
      %334 = vperm.xlu0 %333, %v272
      %v335 = vpop.permute.xlu0 %334
      %338 = vset.pattern.permute.xlu0 0
      %339 = vperm.xlu0 %338, %v273
      %v340 = vpop.permute.xlu0 %339
      %343 = vset.pattern.permute.xlu0 0
      %344 = vperm.xlu0 %343, %v274
      %v345 = vpop.permute.xlu0 %344
      %348 = vset.pattern.permute.xlu0 0
      %349 = vperm.xlu0 %348, %v275
      %v350 = vpop.permute.xlu0 %349
      %353 = vset.pattern.permute.xlu0 0
      %354 = vperm.xlu0 %353, %v276
      %v355 = vpop.permute.xlu0 %354
      %vm357 = vcmask 64512
      %v359 = vsel %vm357, %v253, 0
      %v362 = vsel %vm357, %v254, 0
      %v365 = vsel %vm357, %v255, 0
      %v368 = vsel %vm357, %v256, 0
      %v371 = vsel %vm357, %v257, 0
      %v374 = vsel %vm357, %v258, 0
      %v377 = vsel %vm357, %v259, 0
      %v380 = vsel %vm357, %v260, 0
      %vm382 = vcmask 1043456
      %v384 = vsel %vm382, %v233, 0
      %v387 = vsel %vm382, %v234, 0
      %v390 = vsel %vm382, %v235, 0
      %v393 = vsel %vm382, %v236, 0
      %395 = vmatpush.bf16.msra.mxu0 0
      %396 = vmatpush.bf16.msra.mxu0 0
      %397 = vmatpush.bf16.msra.mxu0 0
      %398 = vmatpush.bf16.msra.mxu0 0
      %399 = vmatpush.bf16.msra.mxu0 0
      %400 = vmatpush.bf16.msra.mxu0 0
      %401 = vmatpush.bf16.msra.mxu0 0
      %402 = vmatpush.bf16.msra.mxu0 %v384
      %403 = vmatmul.bf16.gmra.mxu0 %v359
      %v404 = vpop.f32.mrf.mxu0
      %v405 = vadd.f32 %v280, %v404
      %v406 = vpop.f32.mrf.mxu0
      %v407 = vadd.f32 %v285, %v406
      %408 = vmatmul.bf16.gmra.mxu0 %v362
      %v409 = vpop.f32.mrf.mxu0
      %v410 = vadd.f32 %v290, %v409
      %v411 = vpop.f32.mrf.mxu0
      %v412 = vadd.f32 %v295, %v411
      %413 = vmatmul.bf16.gmra.mxu0 %v365
      %v414 = vpop.f32.mrf.mxu0
      %v415 = vadd.f32 %v300, %v414
      %v416 = vpop.f32.mrf.mxu0
      %v417 = vadd.f32 %v305, %v416
      %418 = vmatmul.bf16.gmra.mxu0 %v368
      %v419 = vpop.f32.mrf.mxu0
      %v420 = vadd.f32 %v310, %v419
      %v421 = vpop.f32.mrf.mxu0
      %v422 = vadd.f32 %v315, %v421
      %423 = vmatmul.bf16.gmra.mxu0 %v371
      %v424 = vpop.f32.mrf.mxu0
      %v425 = vadd.f32 %v320, %v424
      %v426 = vpop.f32.mrf.mxu0
      %v427 = vadd.f32 %v325, %v426
      %428 = vmatmul.bf16.gmra.mxu0 %v374
      %v429 = vpop.f32.mrf.mxu0
      %v430 = vadd.f32 %v330, %v429
      %v431 = vpop.f32.mrf.mxu0
      %v432 = vadd.f32 %v335, %v431
      %433 = vmatmul.bf16.gmra.mxu0 %v377
      %v434 = vpop.f32.mrf.mxu0
      %v435 = vadd.f32 %v340, %v434
      %v436 = vpop.f32.mrf.mxu0
      %v437 = vadd.f32 %v345, %v436
      %438 = vmatmul.bf16.gmra.mxu0 %v380
      %v439 = vpop.f32.mrf.mxu0
      %v440 = vadd.f32 %v350, %v439
      %v441 = vpop.f32.mrf.mxu0
      %v442 = vadd.f32 %v355, %v441
      %443 = vdwg.mxu0
      %444 = vmatpush.bf16.msra.mxu0 0
      %445 = vmatpush.bf16.msra.mxu0 0
      %446 = vmatpush.bf16.msra.mxu0 0
      %447 = vmatpush.bf16.msra.mxu0 0
      %448 = vmatpush.bf16.msra.mxu0 0
      %449 = vmatpush.bf16.msra.mxu0 0
      %450 = vmatpush.bf16.msra.mxu0 0
      %451 = vmatpush.bf16.msra.mxu0 %v387
      %452 = vmatmul.bf16.gmra.mxu0 %v359
      %v453 = vpop.f32.mrf.mxu0
      %v454 = vadd.f32 %v280, %v453
      %v455 = vpop.f32.mrf.mxu0
      %v456 = vadd.f32 %v285, %v455
      %457 = vmatmul.bf16.gmra.mxu0 %v362
      %v458 = vpop.f32.mrf.mxu0
      %v459 = vadd.f32 %v290, %v458
      %v460 = vpop.f32.mrf.mxu0
      %v461 = vadd.f32 %v295, %v460
      %462 = vmatmul.bf16.gmra.mxu0 %v365
      %v463 = vpop.f32.mrf.mxu0
      %v464 = vadd.f32 %v300, %v463
      %v465 = vpop.f32.mrf.mxu0
      %v466 = vadd.f32 %v305, %v465
      %467 = vmatmul.bf16.gmra.mxu0 %v368
      %v468 = vpop.f32.mrf.mxu0
      %v469 = vadd.f32 %v310, %v468
      %v470 = vpop.f32.mrf.mxu0
      %v471 = vadd.f32 %v315, %v470
      %472 = vmatmul.bf16.gmra.mxu0 %v371
      %v473 = vpop.f32.mrf.mxu0
      %v474 = vadd.f32 %v320, %v473
      %v475 = vpop.f32.mrf.mxu0
      %v476 = vadd.f32 %v325, %v475
      %477 = vmatmul.bf16.gmra.mxu0 %v374
      %v478 = vpop.f32.mrf.mxu0
      %v479 = vadd.f32 %v330, %v478
      %v480 = vpop.f32.mrf.mxu0
      %v481 = vadd.f32 %v335, %v480
      %482 = vmatmul.bf16.gmra.mxu0 %v377
      %v483 = vpop.f32.mrf.mxu0
      %v484 = vadd.f32 %v340, %v483
      %v485 = vpop.f32.mrf.mxu0
      %v486 = vadd.f32 %v345, %v485
      %487 = vmatmul.bf16.gmra.mxu0 %v380
      %v488 = vpop.f32.mrf.mxu0
      %v489 = vadd.f32 %v350, %v488
      %v490 = vpop.f32.mrf.mxu0
      %v491 = vadd.f32 %v355, %v490
      %492 = vdwg.mxu0
      %493 = vmatpush.bf16.msra.mxu0 0
      %494 = vmatpush.bf16.msra.mxu0 0
      %495 = vmatpush.bf16.msra.mxu0 0
      %496 = vmatpush.bf16.msra.mxu0 0
      %497 = vmatpush.bf16.msra.mxu0 0
      %498 = vmatpush.bf16.msra.mxu0 0
      %499 = vmatpush.bf16.msra.mxu0 0
      %500 = vmatpush.bf16.msra.mxu0 %v390
      %501 = vmatmul.bf16.gmra.mxu0 %v359
      %v502 = vpop.f32.mrf.mxu0
      %v503 = vadd.f32 %v280, %v502
      %v504 = vpop.f32.mrf.mxu0
      %v505 = vadd.f32 %v285, %v504
      %506 = vmatmul.bf16.gmra.mxu0 %v362
      %v507 = vpop.f32.mrf.mxu0
      %v508 = vadd.f32 %v290, %v507
      %v509 = vpop.f32.mrf.mxu0
      %v510 = vadd.f32 %v295, %v509
      %511 = vmatmul.bf16.gmra.mxu0 %v365
      %v512 = vpop.f32.mrf.mxu0
      %v513 = vadd.f32 %v300, %v512
      %v514 = vpop.f32.mrf.mxu0
      %v515 = vadd.f32 %v305, %v514
      %516 = vmatmul.bf16.gmra.mxu0 %v368
      %v517 = vpop.f32.mrf.mxu0
      %v518 = vadd.f32 %v310, %v517
      %v519 = vpop.f32.mrf.mxu0
      %v520 = vadd.f32 %v315, %v519
      %521 = vmatmul.bf16.gmra.mxu0 %v371
      %v522 = vpop.f32.mrf.mxu0
      %v523 = vadd.f32 %v320, %v522
      %v524 = vpop.f32.mrf.mxu0
      %v525 = vadd.f32 %v325, %v524
      %526 = vmatmul.bf16.gmra.mxu0 %v374
      %v527 = vpop.f32.mrf.mxu0
      %v528 = vadd.f32 %v330, %v527
      %v529 = vpop.f32.mrf.mxu0
      %v530 = vadd.f32 %v335, %v529
      %531 = vmatmul.bf16.gmra.mxu0 %v377
      %v532 = vpop.f32.mrf.mxu0
      %v533 = vadd.f32 %v340, %v532
      %v534 = vpop.f32.mrf.mxu0
      %v535 = vadd.f32 %v345, %v534
      %536 = vmatmul.bf16.gmra.mxu0 %v380
      %v537 = vpop.f32.mrf.mxu0
      %v538 = vadd.f32 %v350, %v537
      %v539 = vpop.f32.mrf.mxu0
      %v540 = vadd.f32 %v355, %v539
      %541 = vdwg.mxu0
      %542 = vmatpush.bf16.msra.mxu0 0
      %543 = vmatpush.bf16.msra.mxu0 0
      %544 = vmatpush.bf16.msra.mxu0 0
      %545 = vmatpush.bf16.msra.mxu0 0
      %546 = vmatpush.bf16.msra.mxu0 0
      %547 = vmatpush.bf16.msra.mxu0 0
      %548 = vmatpush.bf16.msra.mxu0 0
      %549 = vmatpush.bf16.msra.mxu0 %v393
      %550 = vmatmul.bf16.gmra.mxu0 %v359
      %v551 = vpop.f32.mrf.mxu0
      %v552 = vadd.f32 %v280, %v551
      %v553 = vpop.f32.mrf.mxu0
      %v554 = vadd.f32 %v285, %v553
      %555 = vmatmul.bf16.gmra.mxu0 %v362
      %v556 = vpop.f32.mrf.mxu0
      %v557 = vadd.f32 %v290, %v556
      %v558 = vpop.f32.mrf.mxu0
      %v559 = vadd.f32 %v295, %v558
      %560 = vmatmul.bf16.gmra.mxu0 %v365
      %v561 = vpop.f32.mrf.mxu0
      %v562 = vadd.f32 %v300, %v561
      %v563 = vpop.f32.mrf.mxu0
      %v564 = vadd.f32 %v305, %v563
      %565 = vmatmul.bf16.gmra.mxu0 %v368
      %v566 = vpop.f32.mrf.mxu0
      %v567 = vadd.f32 %v310, %v566
      %v568 = vpop.f32.mrf.mxu0
      %v569 = vadd.f32 %v315, %v568
      %570 = vmatmul.bf16.gmra.mxu0 %v371
      %v571 = vpop.f32.mrf.mxu0
      %v572 = vadd.f32 %v320, %v571
      %v573 = vpop.f32.mrf.mxu0
      %v574 = vadd.f32 %v325, %v573
      %575 = vmatmul.bf16.gmra.mxu0 %v374
      %v576 = vpop.f32.mrf.mxu0
      %v577 = vadd.f32 %v330, %v576
      %v578 = vpop.f32.mrf.mxu0
      %v579 = vadd.f32 %v335, %v578
      %580 = vmatmul.bf16.gmra.mxu0 %v377
      %v581 = vpop.f32.mrf.mxu0
      %v582 = vadd.f32 %v340, %v581
      %v583 = vpop.f32.mrf.mxu0
      %v584 = vadd.f32 %v345, %v583
      %585 = vmatmul.bf16.gmra.mxu0 %v380
      %v586 = vpop.f32.mrf.mxu0
      %v587 = vadd.f32 %v350, %v586
      %v588 = vpop.f32.mrf.mxu0
      %v589 = vadd.f32 %v355, %v588
      %590 = vdwg.mxu0
      %v591 = vmax.f32 %v405, 0.0
      %v592 = vmax.f32 %v454, 0.0
      %v593 = vmax.f32 %v503, 0.0
      %v594 = vmax.f32 %v552, 0.0
      %v595 = vmax.f32 %v407, 0.0
      %v596 = vmax.f32 %v456, 0.0
      %v597 = vmax.f32 %v505, 0.0
      %v598 = vmax.f32 %v554, 0.0
      %v599 = vmax.f32 %v410, 0.0
      %v600 = vmax.f32 %v459, 0.0
      %v601 = vmax.f32 %v508, 0.0
      %v602 = vmax.f32 %v557, 0.0
      %v603 = vmax.f32 %v412, 0.0
      %v604 = vmax.f32 %v461, 0.0
      %v605 = vmax.f32 %v510, 0.0
      %v606 = vmax.f32 %v559, 0.0
      %v607 = vmax.f32 %v415, 0.0
      %v608 = vmax.f32 %v464, 0.0
      %v609 = vmax.f32 %v513, 0.0
      %v610 = vmax.f32 %v562, 0.0
      %v611 = vmax.f32 %v417, 0.0
      %v612 = vmax.f32 %v466, 0.0
      %v613 = vmax.f32 %v515, 0.0
      %v614 = vmax.f32 %v564, 0.0
      %v615 = vmax.f32 %v420, 0.0
      %v616 = vmax.f32 %v469, 0.0
      %v617 = vmax.f32 %v518, 0.0
      %v618 = vmax.f32 %v567, 0.0
      %v619 = vmax.f32 %v422, 0.0
      %v620 = vmax.f32 %v471, 0.0
      %v621 = vmax.f32 %v520, 0.0
      %v622 = vmax.f32 %v569, 0.0
      %v623 = vmax.f32 %v425, 0.0
      %v624 = vmax.f32 %v474, 0.0
      %v625 = vmax.f32 %v523, 0.0
      %v626 = vmax.f32 %v572, 0.0
      %v627 = vmax.f32 %v427, 0.0
      %v628 = vmax.f32 %v476, 0.0
      %v629 = vmax.f32 %v525, 0.0
      %v630 = vmax.f32 %v574, 0.0
      %v631 = vmax.f32 %v430, 0.0
      %v632 = vmax.f32 %v479, 0.0
      %v633 = vmax.f32 %v528, 0.0
      %v634 = vmax.f32 %v577, 0.0
      %v635 = vmax.f32 %v432, 0.0
      %v636 = vmax.f32 %v481, 0.0
      %v637 = vmax.f32 %v530, 0.0
      %v638 = vmax.f32 %v579, 0.0
      %v639 = vmax.f32 %v435, 0.0
      %v640 = vmax.f32 %v484, 0.0
      %v641 = vmax.f32 %v533, 0.0
      %v642 = vmax.f32 %v582, 0.0
      %v643 = vmax.f32 %v437, 0.0
      %v644 = vmax.f32 %v486, 0.0
      %v645 = vmax.f32 %v535, 0.0
      %v646 = vmax.f32 %v584, 0.0
      %v647 = vmax.f32 %v440, 0.0
      %v648 = vmax.f32 %v489, 0.0
      %v649 = vmax.f32 %v538, 0.0
      %v650 = vmax.f32 %v587, 0.0
      %v651 = vmax.f32 %v442, 0.0
      %v652 = vmax.f32 %v491, 0.0
      %v653 = vmax.f32 %v540, 0.0
      %v654 = vmax.f32 %v589, 0.0
      %v655 = vld [vmem:[%s3] sm:$0xff]
      %v656 = vpack.c.bf16 %v655, %v655
      %v657 = vpack.c.bf16 %v595, %v591
      %v658 = vpack.c.bf16 %v596, %v592
      %v659 = vpack.c.bf16 %v597, %v593
      %v660 = vpack.c.bf16 %v598, %v594
      %v661 = vpack.c.bf16 %v603, %v599
      %v662 = vpack.c.bf16 %v604, %v600
      %v663 = vpack.c.bf16 %v605, %v601
      %v664 = vpack.c.bf16 %v606, %v602
      %v665 = vpack.c.bf16 %v611, %v607
      %v666 = vpack.c.bf16 %v612, %v608
      %v667 = vpack.c.bf16 %v613, %v609
      %v668 = vpack.c.bf16 %v614, %v610
      %v669 = vpack.c.bf16 %v619, %v615
      %v670 = vpack.c.bf16 %v620, %v616
      %v671 = vpack.c.bf16 %v621, %v617
      %v672 = vpack.c.bf16 %v622, %v618
      %v673 = vpack.c.bf16 %v627, %v623
      %v674 = vpack.c.bf16 %v628, %v624
      %v675 = vpack.c.bf16 %v629, %v625
      %v676 = vpack.c.bf16 %v630, %v626
      %v677 = vpack.c.bf16 %v635, %v631
      %v678 = vpack.c.bf16 %v636, %v632
      %v679 = vpack.c.bf16 %v637, %v633
      %v680 = vpack.c.bf16 %v638, %v634
      %v681 = vpack.c.bf16 %v643, %v639
      %v682 = vpack.c.bf16 %v644, %v640
      %v683 = vpack.c.bf16 %v645, %v641
      %v684 = vpack.c.bf16 %v646, %v642
      %v685 = vpack.c.bf16 %v651, %v647
      %v686 = vpack.c.bf16 %v652, %v648
      %v687 = vpack.c.bf16 %v653, %v649
      %v688 = vpack.c.bf16 %v654, %v650
      %v689 = vld [vmem:[%s4] sm:$0xff]
      %691 = vset.pattern.permute.xlu0 0
      %692 = vperm.xlu0 %691, %v689
      %v693 = vpop.permute.xlu0 %692
      %695 = vmatpush.bf16.msra.mxu0 %v685
      %696 = vmatpush.bf16.msra.mxu0 %v681
      %697 = vmatpush.bf16.msra.mxu0 %v677
      %698 = vmatpush.bf16.msra.mxu0 %v673
      %699 = vmatpush.bf16.msra.mxu0 %v669
      %700 = vmatpush.bf16.msra.mxu0 %v665
      %701 = vmatpush.bf16.msra.mxu0 %v661
      %702 = vmatpush.bf16.msra.mxu0 %v657
      %703 = vmatmul.bf16.gmra.mxu0 %v656
      %v704 = vpop.f32.mrf.mxu0
      %v705 = vadd.f32 %v693, %v704
      %v706 = vpop.f32.mrf.mxu0
      %707 = vdwg.mxu0
      %708 = vmatpush.bf16.msra.mxu0 %v686
      %709 = vmatpush.bf16.msra.mxu0 %v682
      %710 = vmatpush.bf16.msra.mxu0 %v678
      %711 = vmatpush.bf16.msra.mxu0 %v674
      %712 = vmatpush.bf16.msra.mxu0 %v670
      %713 = vmatpush.bf16.msra.mxu0 %v666
      %714 = vmatpush.bf16.msra.mxu0 %v662
      %715 = vmatpush.bf16.msra.mxu0 %v658
      %716 = vmatmul.bf16.gmra.mxu0 %v656
      %v717 = vpop.f32.mrf.mxu0
      %v718 = vadd.f32 %v693, %v717
      %v719 = vpop.f32.mrf.mxu0
      %720 = vdwg.mxu0
      %721 = vmatpush.bf16.msra.mxu0 %v687
      %722 = vmatpush.bf16.msra.mxu0 %v683
      %723 = vmatpush.bf16.msra.mxu0 %v679
      %724 = vmatpush.bf16.msra.mxu0 %v675
      %725 = vmatpush.bf16.msra.mxu0 %v671
      %726 = vmatpush.bf16.msra.mxu0 %v667
      %727 = vmatpush.bf16.msra.mxu0 %v663
      %728 = vmatpush.bf16.msra.mxu0 %v659
      %729 = vmatmul.bf16.gmra.mxu0 %v656
      %v730 = vpop.f32.mrf.mxu0
      %v731 = vadd.f32 %v693, %v730
      %v732 = vpop.f32.mrf.mxu0
      %733 = vdwg.mxu0
      %734 = vmatpush.bf16.msra.mxu0 %v688
      %735 = vmatpush.bf16.msra.mxu0 %v684
      %736 = vmatpush.bf16.msra.mxu0 %v680
      %737 = vmatpush.bf16.msra.mxu0 %v676
      %738 = vmatpush.bf16.msra.mxu0 %v672
      %739 = vmatpush.bf16.msra.mxu0 %v668
      %740 = vmatpush.bf16.msra.mxu0 %v664
      %741 = vmatpush.bf16.msra.mxu0 %v660
      %742 = vmatmul.bf16.gmra.mxu0 %v656
      %v743 = vpop.f32.mrf.mxu0
      %v744 = vadd.f32 %v693, %v743
      %v745 = vpop.f32.mrf.mxu0
      %746 = vdwg.mxu0
      %747 = vst [vmem:[%s226] sm:$0xff] %v705
      %748 = vst [vmem:[%s226 + $0x8] sm:$0xff] %v718
      %749 = vst [vmem:[%s226 + $0x10] sm:$0xff] %v731
      %750 = vst [vmem:[%s226 + $0x18] sm:$0xff] %v744
      %s751 = smul.u32 4, %s16
      %p752 = scmp.lt.s32.totalorder %s751, 7
      %s753 = scalar_select %p752, %s751, 7
      %s754 = smul.addr %s753, 8
      %s755 = scalar_lea.vmem %s5, %s754
      // Predicated region
      $region41: #{simple_block3d_forward.81} parent=39 // pred_check
        %p756 = pneg %p144
      $region42: #{simple_block3d_forward.81} parent=39 // pred_check_branch
        %758 = sbr.rel (%p756) target = $region44
      $region43: #{simple_block3d_forward.81} parent=39 // pred_region
        %s759 = smul.u32 4, %s16
      $region44: #{simple_block3d_forward.81} parent=39 // pred_fallthru
        _
    $region40: #{simple_block3d_forward.81} parent=5 // pred_fallthru
      _
    %p760 = scmp.le.s32.totalorder 2, %s11
    // Predicated region
    $region45: #{simple_block3d_forward.81} parent=5 // pred_check
      %p761 = pneg %p760
    $region46: #{simple_block3d_forward.81} parent=5 // pred_check_branch
      %763 = sbr.rel (%p761) target = $region48
    $region47: #{simple_block3d_forward.81} parent=5 // pred_region
      %s764 = ssub.s32 %s11, 2
      // Predicated region
      $region49: #{simple_block3d_forward.81} parent=47 // pred_check
        %p765 = pneg %p150
      $region50: #{simple_block3d_forward.81} parent=47 // pred_check_branch
        %767 = sbr.rel (%p765) target = $region52
      $region51: #{simple_block3d_forward.81} parent=47 // pred_region
        %s768 = smul.u32 4, %s17
        %p769 = scmp.lt.s32.totalorder %s768, 7
        %s770 = scalar_select %p769, %s768, 7
        %s771 = smul.addr %s770, 8
        %s772 = scalar_lea.vmem %s5, %s771
      $region52: #{simple_block3d_forward.81} parent=47 // pred_fallthru
        _
    $region48: #{simple_block3d_forward.81} parent=5 // pred_fallthru
      _
  $region6: #{simple_block3d_forward.81} parent=0 // loop_footer
    %s15 = sadd.s32 1, %s11
  $region7: #{simple_block3d_forward.81} parent=0 // loop_footer_branch
    %10 = sbr.rel target = $region3
  $region8: #{simple_block3d_forward.81} parent=0 // loop_exit
    _

</llo_original>
